<compile_context>
chip_gen: v6e
topology: v6e:2x2x1
jax: 0.10.0
libtpu: 0.0.40
codegen_flags: <defaults>
</compile_context>

<pallas_src>
import functools
import math

import jax
import jax.numpy as jnp
import numpy as np
from jax.experimental import pallas as pl
from jax.experimental.pallas import tpu as pltpu


_POS_TILE = 128  # positions (board pairs) per grid step for large batches


# ------------------------------ fused kernel ------------------------------- #

def _eval_kernel(x_ref, n1_ref, b1_ref, n2_ref, b2_ref, wfc1_ref, bfc1_ref,
                 wft_ref, bft_ref, wl1_ref, bl1_ref, wl2_ref, bl2_ref,
                 wo_ref, bo_ref, o_ref, *, tp):
    """BoardModule (conv1/conv2/fc1) + NNUE head for one tile of `tp` positions."""
    relu = lambda v: jnp.maximum(v, 0.0)
    dot = functools.partial(jnp.dot, preferred_element_type=jnp.float32)

    # Board rows, boards stacked as [tp first-boards ; tp second-boards] -> (2*tp, 10).
    xs = [jnp.concatenate([x_ref[h, 0], x_ref[h, 1]], axis=0) for h in range(10)]

    # conv1 (1->32, 3x3, VALID) decomposed over the 3 kernel rows; output row s of the
    # 8x8 map for all boards, lane-dense in (ow, c) order: (2*tp, 256).
    h1 = []
    for s in range(8):
        acc = dot(xs[s], n1_ref[0])
        acc = acc + dot(xs[s + 1], n1_ref[1])
        acc = acc + dot(xs[s + 2], n1_ref[2])
        h1.append(relu(acc + b1_ref[...]))

    # conv2 (32->64, 3x3, VALID): output row r of the 6x6 map, (ow, c) lanes: (2*tp, 384).
    h2 = []
    for r in range(6):
        acc = dot(h1[r], n2_ref[0])
        acc = acc + dot(h1[r + 1], n2_ref[1])
        acc = acc + dot(h1[r + 2], n2_ref[2])
        h2.append(relu(acc + b2_ref[...]))

    # fc1 (2304 -> 128), accumulated over the 6 conv2 output rows: (2*tp, 128).
    acc = dot(h2[0], wfc1_ref[0])
    for r in range(1, 6):
        acc = acc + dot(h2[r], wfc1_ref[r])
    bf = relu(acc + bfc1_ref[...])

    # Pair concat (2*tp,128) -> (tp,256) realised as two matmul halves of ft.
    fa = bf[:tp]
    fb = bf[tp:]
    h = relu(dot(fa, wft_ref[0]) + dot(fb, wft_ref[1]) + bft_ref[...])
    # l1/l2/out are zero-padded to 128 lanes host-side: lane-dense matmuls + stores.
    h = relu(dot(h, wl1_ref[...]) + bl1_ref[...])
    h = relu(dot(h, wl2_ref[...]) + bl2_ref[...])
    o_ref[...] = (dot(h, wo_ref[...]) + bo_ref[...]).astype(o_ref.dtype)


def eval_model_forward(x_nchw, kp):
    """x_nchw: (2*B, 1, 10, 10) float32 -> (B, 1) float32."""
    n2b = x_nchw.shape[0]
    assert n2b % 2 == 0 and x_nchw.shape[1:] == (1, 10, 10)
    b = n2b // 2

    # (2B,1,10,10) -> (10 board-rows, 2 board-slots, B positions, 10 cols)
    xr = jnp.transpose(x_nchw.reshape(b, 2, 10, 10), (2, 1, 0, 3))

    if b <= _POS_TILE:
        tp, bp = b, b
    else:
        tp = _POS_TILE
        bp = math.ceil(b / tp) * tp
        xr = jnp.pad(xr, ((0, 0), (0, 0), (0, bp - b), (0, 0)))

    def const_spec(a):
        nd = a.ndim
        return pl.BlockSpec(a.shape, lambda i, nd=nd: (0,) * nd)

    weight_names = ("n1", "b1", "n2", "b2", "wfc1", "bfc1",
                    "wft", "bft", "wl1", "bl1", "wl2", "bl2", "wo", "bo")
    weights = [kp[k] for k in weight_names]

    out = pl.pallas_call(
        functools.partial(_eval_kernel, tp=tp),
        grid=(bp // tp,),
        in_specs=[pl.BlockSpec((10, 2, tp, 10), lambda i: (0, 0, i, 0))]
                 + [const_spec(w) for w in weights],
        out_specs=pl.BlockSpec((tp, 128), lambda i: (i, 0)),
        out_shape=jax.ShapeDtypeStruct((bp, 128), jnp.float32),
        compiler_params=pltpu.CompilerParams(
            dimension_semantics=("parallel",),
            vmem_limit_bytes=48 * 1024 * 1024,
        ),
    )(xr, *weights)

    return out[:b, :1]


# ------------------------------ parameter prep ----------------------------- #

def init_torch_params(key):
    """Deterministic params in PyTorch layouts (OIHW convs, (out,in) linears)."""
    ks = jax.random.split(key, 14)
    s = 0.1

    def rnd(k, shape):
        return s * jax.random.normal(k, shape, jnp.float32)

    return {
        "conv1.weight": rnd(ks[0], (32, 1, 3, 3)),   "conv1.bias": rnd(ks[1], (32,)),
        "conv2.weight": rnd(ks[2], (64, 32, 3, 3)),  "conv2.bias": rnd(ks[3], (64,)),
        "fc1.weight":   rnd(ks[4], (128, 64 * 6 * 6)), "fc1.bias": rnd(ks[5], (128,)),
        "ft.weight":    rnd(ks[6], (128, 256)),      "ft.bias":  rnd(ks[7], (128,)),
        "l1.weight":    rnd(ks[8], (32, 128)),       "l1.bias":  rnd(ks[9], (32,)),
        "l2.weight":    rnd(ks[10], (32, 32)),       "l2.bias":  rnd(ks[11], (32,)),
        "out.weight":   rnd(ks[12], (1, 32)),        "out.bias": rnd(ks[13], (1,)),
    }


def to_kernel_params(tpar):
    """Re-layout PyTorch params for the fused row-decomposed kernel (host-side, once)."""
    w1 = np.asarray(tpar["conv1.weight"])   # (32, 1, 3, 3)
    b1 = np.asarray(tpar["conv1.bias"])     # (32,)
    w2 = np.asarray(tpar["conv2.weight"])   # (64, 32, 3, 3)
    b2 = np.asarray(tpar["conv2.bias"])     # (64,)

    # conv1 row matrices: n1[i, w, ow*32 + c] = w1[c, 0, i, w - ow]  (0 <= w-ow < 3)
    n1 = np.zeros((3, 10, 8 * 32), np.float32)
    for i in range(3):
        for ow in range(8):
            for j in range(3):
                n1[i, ow + j, ow * 32:(ow + 1) * 32] = w1[:, 0, i, j]
    b1r = np.tile(b1, 8)[None, :].astype(np.float32)               # (1, 256)

    # conv2 row matrices: n2[i, w*32 + ci, ow*64 + co] = w2[co, ci, i, w - ow]
    n2 = np.zeros((3, 8 * 32, 6 * 64), np.float32)
    for i in range(3):
        for ow in range(6):
            for j in range(3):
                w = ow + j
                n2[i, w * 32:(w + 1) * 32, ow * 64:(ow + 1) * 64] = w2[:, :, i, j].T
    b2r = np.tile(b2, 6)[None, :].astype(np.float32)               # (1, 384)

    # fc1 consumes conv2 rows in (h, w, c) order: wfc1[r, w*64 + co, k] = fc1.w[k, co*36 + r*6 + w]
    fcw = np.asarray(tpar["fc1.weight"]).reshape(128, 64, 6, 6)    # (k, co, h, w)
    wfc1 = np.transpose(fcw, (2, 3, 1, 0)).reshape(6, 6 * 64, 128).astype(np.float32)
    bfc1 = np.asarray(tpar["fc1.bias"])[None, :].astype(np.float32)

    ftw = np.asarray(tpar["ft.weight"])                            # (128, 256)
    wft = np.stack([ftw[:, :128].T, ftw[:, 128:].T]).astype(np.float32)   # (2, 128, 128)
    bft = np.asarray(tpar["ft.bias"])[None, :].astype(np.float32)

    def pad_w(w):
        out = np.zeros((128, 128), np.float32)
        out[:w.shape[0], :w.shape[1]] = w
        return out

    def pad_b(bvec):
        out = np.zeros((1, 128), np.float32)
        out[0, :bvec.shape[0]] = bvec
        return out

    kp = {
        "n1": n1, "b1": b1r, "n2": n2, "b2": b2r,
        "wfc1": wfc1, "bfc1": bfc1, "wft": wft, "bft": bft,
        "wl1": pad_w(np.asarray(tpar["l1.weight"]).T),
        "bl1": pad_b(np.asarray(tpar["l1.bias"])),
        "wl2": pad_w(np.asarray(tpar["l2.weight"]).T),
        "bl2": pad_b(np.asarray(tpar["l2.bias"])),
        "wo":  pad_w(np.asarray(tpar["out.weight"]).T),
        "bo":  pad_b(np.asarray(tpar["out.bias"])),
    }
    return {k: jnp.asarray(v) for k, v in kp.items()}


# ----------------------------- pure-JAX reference --------------------------- #

def reference_forward(x_nchw, tpar):
    dn = ("NCHW", "OIHW", "NCHW")
    h = jax.lax.conv_general_dilated(x_nchw, tpar["conv1.weight"], (1, 1), "VALID",
                                     dimension_numbers=dn)
    h = jnp.maximum(h + tpar["conv1.bias"].reshape(1, -1, 1, 1), 0.0)
    h = jax.lax.conv_general_dilated(h, tpar["conv2.weight"], (1, 1), "VALID",
                                     dimension_numbers=dn)
    h = jnp.maximum(h + tpar["conv2.bias"].reshape(1, -1, 1, 1), 0.0)
    h = h.reshape(h.shape[0], -1)                            # NCHW flatten (c, h, w)
    h = jnp.maximum(h @ tpar["fc1.weight"].T + tpar["fc1.bias"], 0.0)
    f = h.reshape(-1, 256)                                   # pair concat (see TODO(synk))
    f = jnp.maximum(f @ tpar["ft.weight"].T + tpar["ft.bias"], 0.0)
    f = jnp.maximum(f @ tpar["l1.weight"].T + tpar["l1.bias"], 0.0)
    f = jnp.maximum(f @ tpar["l2.weight"].T + tpar["l2.bias"], 0.0)
    return f @ tpar["out.weight"].T + tpar["out.bias"]


# ---------------------------------- main ------------------------------------ #

if __name__ == "__main__":
    key = jax.random.PRNGKey(0)
    p_key, x_key = jax.random.split(key)

    torch_params = init_torch_params(p_key)
    kernel_params = to_kernel_params(torch_params)

    # 2 evaluated positions = 4 board planes of shape (1, 10, 10) (NCHW).
    x = jax.random.normal(x_key, (4, 1, 10, 10), jnp.float32)

    y = jax.block_until_ready(eval_model_forward(x, kernel_params))
    y_ref = reference_forward(x, torch_params)

    assert y.shape == (2, 1), y.shape
    assert jnp.allclose(y, y_ref, rtol=2e-3, atol=2e-3), (y, y_ref)

    print("KERNEL_OK")
</pallas_src>

<mosaic_0001>
module attributes {stable_mosaic.version = 11 : i64} {
  func.func @_eval_kernel(%arg0: i32, %arg1: memref<10x2x2x10xf32, #tpu.memory_space<vmem>>, %arg2: memref<3x10x256xf32, #tpu.memory_space<vmem>>, %arg3: memref<1x256xf32, #tpu.memory_space<vmem>>, %arg4: memref<3x256x384xf32, #tpu.memory_space<vmem>>, %arg5: memref<1x384xf32, #tpu.memory_space<vmem>>, %arg6: memref<6x384x128xf32, #tpu.memory_space<vmem>>, %arg7: memref<1x128xf32, #tpu.memory_space<vmem>>, %arg8: memref<2x128x128xf32, #tpu.memory_space<vmem>>, %arg9: memref<1x128xf32, #tpu.memory_space<vmem>>, %arg10: memref<128x128xf32, #tpu.memory_space<vmem>>, %arg11: memref<1x128xf32, #tpu.memory_space<vmem>>, %arg12: memref<128x128xf32, #tpu.memory_space<vmem>>, %arg13: memref<1x128xf32, #tpu.memory_space<vmem>>, %arg14: memref<128x128xf32, #tpu.memory_space<vmem>>, %arg15: memref<1x128xf32, #tpu.memory_space<vmem>>, %arg16: memref<2x128xf32, #tpu.memory_space<vmem>>) attributes {dimension_semantics = [#tpu.dimension_semantics<parallel>], iteration_bounds = array<i64: 1>, scalar_prefetch = 0 : i64, scratch_operands = 0 : i64, tpu.core_type = #tpu.core_type<tc>, window_params = [{transform_indices = @transform_0, window_bounds = array<i64: 10, 2, 2, 10>}, {pipeline_mode = #tpu.pipeline_mode<synchronous>, transform_indices = @transform_1, window_bounds = array<i64: 3, 10, 256>}, {pipeline_mode = #tpu.pipeline_mode<synchronous>, transform_indices = @transform_2, window_bounds = array<i64: 1, 256>}, {pipeline_mode = #tpu.pipeline_mode<synchronous>, transform_indices = @transform_3, window_bounds = array<i64: 3, 256, 384>}, {pipeline_mode = #tpu.pipeline_mode<synchronous>, transform_indices = @transform_4, window_bounds = array<i64: 1, 384>}, {pipeline_mode = #tpu.pipeline_mode<synchronous>, transform_indices = @transform_5, window_bounds = array<i64: 6, 384, 128>}, {pipeline_mode = #tpu.pipeline_mode<synchronous>, transform_indices = @transform_6, window_bounds = array<i64: 1, 128>}, {pipeline_mode = #tpu.pipeline_mode<synchronous>, transform_indices = @transform_7, window_bounds = array<i64: 2, 128, 128>}, {pipeline_mode = #tpu.pipeline_mode<synchronous>, transform_indices = @transform_8, window_bounds = array<i64: 1, 128>}, {pipeline_mode = #tpu.pipeline_mode<synchronous>, transform_indices = @transform_9, window_bounds = array<i64: 128, 128>}, {pipeline_mode = #tpu.pipeline_mode<synchronous>, transform_indices = @transform_10, window_bounds = array<i64: 1, 128>}, {pipeline_mode = #tpu.pipeline_mode<synchronous>, transform_indices = @transform_11, window_bounds = array<i64: 128, 128>}, {pipeline_mode = #tpu.pipeline_mode<synchronous>, transform_indices = @transform_12, window_bounds = array<i64: 1, 128>}, {pipeline_mode = #tpu.pipeline_mode<synchronous>, transform_indices = @transform_13, window_bounds = array<i64: 128, 128>}, {pipeline_mode = #tpu.pipeline_mode<synchronous>, transform_indices = @transform_14, window_bounds = array<i64: 1, 128>}, {transform_indices = @transform_15, window_bounds = array<i64: 2, 128>}]} {
    %c0 = arith.constant 0 : index
    %c0_0 = arith.constant 0 : index
    %c0_1 = arith.constant 0 : index
    %c0_2 = arith.constant 0 : index
    %0 = vector.load %arg1[%c0, %c0_0, %c0_1, %c0_2] : memref<10x2x2x10xf32, #tpu.memory_space<vmem>>, vector<1x1x2x10xf32>
    %1 = vector.shape_cast %0 : vector<1x1x2x10xf32> to vector<2x10xf32>
    %c0_3 = arith.constant 0 : index
    %c1 = arith.constant 1 : index
    %c0_4 = arith.constant 0 : index
    %c0_5 = arith.constant 0 : index
    %2 = vector.load %arg1[%c0_3, %c1, %c0_4, %c0_5] : memref<10x2x2x10xf32, #tpu.memory_space<vmem>>, vector<1x1x2x10xf32>
    %3 = vector.shape_cast %2 : vector<1x1x2x10xf32> to vector<2x10xf32>
    %4 = tpu.concatenate %1, %3 in 0 : vector<2x10xf32>, vector<2x10xf32> -> vector<4x10xf32>
    %c1_6 = arith.constant 1 : index
    %c0_7 = arith.constant 0 : index
    %c0_8 = arith.constant 0 : index
    %c0_9 = arith.constant 0 : index
    %5 = vector.load %arg1[%c1_6, %c0_7, %c0_8, %c0_9] : memref<10x2x2x10xf32, #tpu.memory_space<vmem>>, vector<1x1x2x10xf32>
    %6 = vector.shape_cast %5 : vector<1x1x2x10xf32> to vector<2x10xf32>
    %c1_10 = arith.constant 1 : index
    %c1_11 = arith.constant 1 : index
    %c0_12 = arith.constant 0 : index
    %c0_13 = arith.constant 0 : index
    %7 = vector.load %arg1[%c1_10, %c1_11, %c0_12, %c0_13] : memref<10x2x2x10xf32, #tpu.memory_space<vmem>>, vector<1x1x2x10xf32>
    %8 = vector.shape_cast %7 : vector<1x1x2x10xf32> to vector<2x10xf32>
    %9 = tpu.concatenate %6, %8 in 0 : vector<2x10xf32>, vector<2x10xf32> -> vector<4x10xf32>
    %c2 = arith.constant 2 : index
    %c0_14 = arith.constant 0 : index
    %c0_15 = arith.constant 0 : index
    %c0_16 = arith.constant 0 : index
    %10 = vector.load %arg1[%c2, %c0_14, %c0_15, %c0_16] : memref<10x2x2x10xf32, #tpu.memory_space<vmem>>, vector<1x1x2x10xf32>
    %11 = vector.shape_cast %10 : vector<1x1x2x10xf32> to vector<2x10xf32>
    %c2_17 = arith.constant 2 : index
    %c1_18 = arith.constant 1 : index
    %c0_19 = arith.constant 0 : index
    %c0_20 = arith.constant 0 : index
    %12 = vector.load %arg1[%c2_17, %c1_18, %c0_19, %c0_20] : memref<10x2x2x10xf32, #tpu.memory_space<vmem>>, vector<1x1x2x10xf32>
    %13 = vector.shape_cast %12 : vector<1x1x2x10xf32> to vector<2x10xf32>
    %14 = tpu.concatenate %11, %13 in 0 : vector<2x10xf32>, vector<2x10xf32> -> vector<4x10xf32>
    %c3 = arith.constant 3 : index
    %c0_21 = arith.constant 0 : index
    %c0_22 = arith.constant 0 : index
    %c0_23 = arith.constant 0 : index
    %15 = vector.load %arg1[%c3, %c0_21, %c0_22, %c0_23] : memref<10x2x2x10xf32, #tpu.memory_space<vmem>>, vector<1x1x2x10xf32>
    %16 = vector.shape_cast %15 : vector<1x1x2x10xf32> to vector<2x10xf32>
    %c3_24 = arith.constant 3 : index
    %c1_25 = arith.constant 1 : index
    %c0_26 = arith.constant 0 : index
    %c0_27 = arith.constant 0 : index
    %17 = vector.load %arg1[%c3_24, %c1_25, %c0_26, %c0_27] : memref<10x2x2x10xf32, #tpu.memory_space<vmem>>, vector<1x1x2x10xf32>
    %18 = vector.shape_cast %17 : vector<1x1x2x10xf32> to vector<2x10xf32>
    %19 = tpu.concatenate %16, %18 in 0 : vector<2x10xf32>, vector<2x10xf32> -> vector<4x10xf32>
    %c4 = arith.constant 4 : index
    %c0_28 = arith.constant 0 : index
    %c0_29 = arith.constant 0 : index
    %c0_30 = arith.constant 0 : index
    %20 = vector.load %arg1[%c4, %c0_28, %c0_29, %c0_30] : memref<10x2x2x10xf32, #tpu.memory_space<vmem>>, vector<1x1x2x10xf32>
    %21 = vector.shape_cast %20 : vector<1x1x2x10xf32> to vector<2x10xf32>
    %c4_31 = arith.constant 4 : index
    %c1_32 = arith.constant 1 : index
    %c0_33 = arith.constant 0 : index
    %c0_34 = arith.constant 0 : index
    %22 = vector.load %arg1[%c4_31, %c1_32, %c0_33, %c0_34] : memref<10x2x2x10xf32, #tpu.memory_space<vmem>>, vector<1x1x2x10xf32>
    %23 = vector.shape_cast %22 : vector<1x1x2x10xf32> to vector<2x10xf32>
    %24 = tpu.concatenate %21, %23 in 0 : vector<2x10xf32>, vector<2x10xf32> -> vector<4x10xf32>
    %c5 = arith.constant 5 : index
    %c0_35 = arith.constant 0 : index
    %c0_36 = arith.constant 0 : index
    %c0_37 = arith.constant 0 : index
    %25 = vector.load %arg1[%c5, %c0_35, %c0_36, %c0_37] : memref<10x2x2x10xf32, #tpu.memory_space<vmem>>, vector<1x1x2x10xf32>
    %26 = vector.shape_cast %25 : vector<1x1x2x10xf32> to vector<2x10xf32>
    %c5_38 = arith.constant 5 : index
    %c1_39 = arith.constant 1 : index
    %c0_40 = arith.constant 0 : index
    %c0_41 = arith.constant 0 : index
    %27 = vector.load %arg1[%c5_38, %c1_39, %c0_40, %c0_41] : memref<10x2x2x10xf32, #tpu.memory_space<vmem>>, vector<1x1x2x10xf32>
    %28 = vector.shape_cast %27 : vector<1x1x2x10xf32> to vector<2x10xf32>
    %29 = tpu.concatenate %26, %28 in 0 : vector<2x10xf32>, vector<2x10xf32> -> vector<4x10xf32>
    %c6 = arith.constant 6 : index
    %c0_42 = arith.constant 0 : index
    %c0_43 = arith.constant 0 : index
    %c0_44 = arith.constant 0 : index
    %30 = vector.load %arg1[%c6, %c0_42, %c0_43, %c0_44] : memref<10x2x2x10xf32, #tpu.memory_space<vmem>>, vector<1x1x2x10xf32>
    %31 = vector.shape_cast %30 : vector<1x1x2x10xf32> to vector<2x10xf32>
    %c6_45 = arith.constant 6 : index
    %c1_46 = arith.constant 1 : index
    %c0_47 = arith.constant 0 : index
    %c0_48 = arith.constant 0 : index
    %32 = vector.load %arg1[%c6_45, %c1_46, %c0_47, %c0_48] : memref<10x2x2x10xf32, #tpu.memory_space<vmem>>, vector<1x1x2x10xf32>
    %33 = vector.shape_cast %32 : vector<1x1x2x10xf32> to vector<2x10xf32>
    %34 = tpu.concatenate %31, %33 in 0 : vector<2x10xf32>, vector<2x10xf32> -> vector<4x10xf32>
    %c7 = arith.constant 7 : index
    %c0_49 = arith.constant 0 : index
    %c0_50 = arith.constant 0 : index
    %c0_51 = arith.constant 0 : index
    %35 = vector.load %arg1[%c7, %c0_49, %c0_50, %c0_51] : memref<10x2x2x10xf32, #tpu.memory_space<vmem>>, vector<1x1x2x10xf32>
    %36 = vector.shape_cast %35 : vector<1x1x2x10xf32> to vector<2x10xf32>
    %c7_52 = arith.constant 7 : index
    %c1_53 = arith.constant 1 : index
    %c0_54 = arith.constant 0 : index
    %c0_55 = arith.constant 0 : index
    %37 = vector.load %arg1[%c7_52, %c1_53, %c0_54, %c0_55] : memref<10x2x2x10xf32, #tpu.memory_space<vmem>>, vector<1x1x2x10xf32>
    %38 = vector.shape_cast %37 : vector<1x1x2x10xf32> to vector<2x10xf32>
    %39 = tpu.concatenate %36, %38 in 0 : vector<2x10xf32>, vector<2x10xf32> -> vector<4x10xf32>
    %c8 = arith.constant 8 : index
    %c0_56 = arith.constant 0 : index
    %c0_57 = arith.constant 0 : index
    %c0_58 = arith.constant 0 : index
    %40 = vector.load %arg1[%c8, %c0_56, %c0_57, %c0_58] : memref<10x2x2x10xf32, #tpu.memory_space<vmem>>, vector<1x1x2x10xf32>
    %41 = vector.shape_cast %40 : vector<1x1x2x10xf32> to vector<2x10xf32>
    %c8_59 = arith.constant 8 : index
    %c1_60 = arith.constant 1 : index
    %c0_61 = arith.constant 0 : index
    %c0_62 = arith.constant 0 : index
    %42 = vector.load %arg1[%c8_59, %c1_60, %c0_61, %c0_62] : memref<10x2x2x10xf32, #tpu.memory_space<vmem>>, vector<1x1x2x10xf32>
    %43 = vector.shape_cast %42 : vector<1x1x2x10xf32> to vector<2x10xf32>
    %44 = tpu.concatenate %41, %43 in 0 : vector<2x10xf32>, vector<2x10xf32> -> vector<4x10xf32>
    %c9 = arith.constant 9 : index
    %c0_63 = arith.constant 0 : index
    %c0_64 = arith.constant 0 : index
    %c0_65 = arith.constant 0 : index
    %45 = vector.load %arg1[%c9, %c0_63, %c0_64, %c0_65] : memref<10x2x2x10xf32, #tpu.memory_space<vmem>>, vector<1x1x2x10xf32>
    %46 = vector.shape_cast %45 : vector<1x1x2x10xf32> to vector<2x10xf32>
    %c9_66 = arith.constant 9 : index
    %c1_67 = arith.constant 1 : index
    %c0_68 = arith.constant 0 : index
    %c0_69 = arith.constant 0 : index
    %47 = vector.load %arg1[%c9_66, %c1_67, %c0_68, %c0_69] : memref<10x2x2x10xf32, #tpu.memory_space<vmem>>, vector<1x1x2x10xf32>
    %48 = vector.shape_cast %47 : vector<1x1x2x10xf32> to vector<2x10xf32>
    %49 = tpu.concatenate %46, %48 in 0 : vector<2x10xf32>, vector<2x10xf32> -> vector<4x10xf32>
    %c0_70 = arith.constant 0 : index
    %c0_71 = arith.constant 0 : index
    %c0_72 = arith.constant 0 : index
    %50 = vector.load %arg2[%c0_70, %c0_71, %c0_72] : memref<3x10x256xf32, #tpu.memory_space<vmem>>, vector<1x10x256xf32>
    %51 = vector.shape_cast %50 : vector<1x10x256xf32> to vector<10x256xf32>
    %cst = arith.constant dense<0.000000e+00> : vector<4x256xf32>
    %52 = tpu.matmul %4, %51, %cst {dimension_numbers = #tpu.dot_dimension_numbers<[1], [0], [0], [1], [0, 0, 1, 1], [], []>} : vector<4x10xf32>, vector<10x256xf32>, vector<4x256xf32> -> vector<4x256xf32>
    %c1_73 = arith.constant 1 : index
    %c0_74 = arith.constant 0 : index
    %c0_75 = arith.constant 0 : index
    %53 = vector.load %arg2[%c1_73, %c0_74, %c0_75] : memref<3x10x256xf32, #tpu.memory_space<vmem>>, vector<1x10x256xf32>
    %54 = vector.shape_cast %53 : vector<1x10x256xf32> to vector<10x256xf32>
    %cst_76 = arith.constant dense<0.000000e+00> : vector<4x256xf32>
    %55 = tpu.matmul %9, %54, %cst_76 {dimension_numbers = #tpu.dot_dimension_numbers<[1], [0], [0], [1], [0, 0, 1, 1], [], []>} : vector<4x10xf32>, vector<10x256xf32>, vector<4x256xf32> -> vector<4x256xf32>
    %56 = arith.addf %52, %55 : vector<4x256xf32>
    %c2_77 = arith.constant 2 : index
    %c0_78 = arith.constant 0 : index
    %c0_79 = arith.constant 0 : index
    %57 = vector.load %arg2[%c2_77, %c0_78, %c0_79] : memref<3x10x256xf32, #tpu.memory_space<vmem>>, vector<1x10x256xf32>
    %58 = vector.shape_cast %57 : vector<1x10x256xf32> to vector<10x256xf32>
    %cst_80 = arith.constant dense<0.000000e+00> : vector<4x256xf32>
    %59 = tpu.matmul %14, %58, %cst_80 {dimension_numbers = #tpu.dot_dimension_numbers<[1], [0], [0], [1], [0, 0, 1, 1], [], []>} : vector<4x10xf32>, vector<10x256xf32>, vector<4x256xf32> -> vector<4x256xf32>
    %60 = arith.addf %56, %59 : vector<4x256xf32>
    %c0_81 = arith.constant 0 : index
    %c0_82 = arith.constant 0 : index
    %61 = vector.load %arg3[%c0_81, %c0_82] : memref<1x256xf32, #tpu.memory_space<vmem>>, vector<1x256xf32>
    %62 = vector.broadcast %61 : vector<1x256xf32> to vector<4x256xf32>
    %63 = arith.addf %60, %62 : vector<4x256xf32>
    %cst_83 = arith.constant 0.000000e+00 : f32
    %64 = vector.broadcast %cst_83 : f32 to vector<4x256xf32>
    %65 = arith.maximumf %63, %64 : vector<4x256xf32>
    %c0_84 = arith.constant 0 : index
    %c0_85 = arith.constant 0 : index
    %c0_86 = arith.constant 0 : index
    %66 = vector.load %arg2[%c0_84, %c0_85, %c0_86] : memref<3x10x256xf32, #tpu.memory_space<vmem>>, vector<1x10x256xf32>
    %67 = vector.shape_cast %66 : vector<1x10x256xf32> to vector<10x256xf32>
    %cst_87 = arith.constant dense<0.000000e+00> : vector<4x256xf32>
    %68 = tpu.matmul %9, %67, %cst_87 {dimension_numbers = #tpu.dot_dimension_numbers<[1], [0], [0], [1], [0, 0, 1, 1], [], []>} : vector<4x10xf32>, vector<10x256xf32>, vector<4x256xf32> -> vector<4x256xf32>
    %c1_88 = arith.constant 1 : index
    %c0_89 = arith.constant 0 : index
    %c0_90 = arith.constant 0 : index
    %69 = vector.load %arg2[%c1_88, %c0_89, %c0_90] : memref<3x10x256xf32, #tpu.memory_space<vmem>>, vector<1x10x256xf32>
    %70 = vector.shape_cast %69 : vector<1x10x256xf32> to vector<10x256xf32>
    %cst_91 = arith.constant dense<0.000000e+00> : vector<4x256xf32>
    %71 = tpu.matmul %14, %70, %cst_91 {dimension_numbers = #tpu.dot_dimension_numbers<[1], [0], [0], [1], [0, 0, 1, 1], [], []>} : vector<4x10xf32>, vector<10x256xf32>, vector<4x256xf32> -> vector<4x256xf32>
    %72 = arith.addf %68, %71 : vector<4x256xf32>
    %c2_92 = arith.constant 2 : index
    %c0_93 = arith.constant 0 : index
    %c0_94 = arith.constant 0 : index
    %73 = vector.load %arg2[%c2_92, %c0_93, %c0_94] : memref<3x10x256xf32, #tpu.memory_space<vmem>>, vector<1x10x256xf32>
    %74 = vector.shape_cast %73 : vector<1x10x256xf32> to vector<10x256xf32>
    %cst_95 = arith.constant dense<0.000000e+00> : vector<4x256xf32>
    %75 = tpu.matmul %19, %74, %cst_95 {dimension_numbers = #tpu.dot_dimension_numbers<[1], [0], [0], [1], [0, 0, 1, 1], [], []>} : vector<4x10xf32>, vector<10x256xf32>, vector<4x256xf32> -> vector<4x256xf32>
    %76 = arith.addf %72, %75 : vector<4x256xf32>
    %c0_96 = arith.constant 0 : index
    %c0_97 = arith.constant 0 : index
    %77 = vector.load %arg3[%c0_96, %c0_97] : memref<1x256xf32, #tpu.memory_space<vmem>>, vector<1x256xf32>
    %78 = vector.broadcast %77 : vector<1x256xf32> to vector<4x256xf32>
    %79 = arith.addf %76, %78 : vector<4x256xf32>
    %cst_98 = arith.constant 0.000000e+00 : f32
    %80 = vector.broadcast %cst_98 : f32 to vector<4x256xf32>
    %81 = arith.maximumf %79, %80 : vector<4x256xf32>
    %c0_99 = arith.constant 0 : index
    %c0_100 = arith.constant 0 : index
    %c0_101 = arith.constant 0 : index
    %82 = vector.load %arg2[%c0_99, %c0_100, %c0_101] : memref<3x10x256xf32, #tpu.memory_space<vmem>>, vector<1x10x256xf32>
    %83 = vector.shape_cast %82 : vector<1x10x256xf32> to vector<10x256xf32>
    %cst_102 = arith.constant dense<0.000000e+00> : vector<4x256xf32>
    %84 = tpu.matmul %14, %83, %cst_102 {dimension_numbers = #tpu.dot_dimension_numbers<[1], [0], [0], [1], [0, 0, 1, 1], [], []>} : vector<4x10xf32>, vector<10x256xf32>, vector<4x256xf32> -> vector<4x256xf32>
    %c1_103 = arith.constant 1 : index
    %c0_104 = arith.constant 0 : index
    %c0_105 = arith.constant 0 : index
    %85 = vector.load %arg2[%c1_103, %c0_104, %c0_105] : memref<3x10x256xf32, #tpu.memory_space<vmem>>, vector<1x10x256xf32>
    %86 = vector.shape_cast %85 : vector<1x10x256xf32> to vector<10x256xf32>
    %cst_106 = arith.constant dense<0.000000e+00> : vector<4x256xf32>
    %87 = tpu.matmul %19, %86, %cst_106 {dimension_numbers = #tpu.dot_dimension_numbers<[1], [0], [0], [1], [0, 0, 1, 1], [], []>} : vector<4x10xf32>, vector<10x256xf32>, vector<4x256xf32> -> vector<4x256xf32>
    %88 = arith.addf %84, %87 : vector<4x256xf32>
    %c2_107 = arith.constant 2 : index
    %c0_108 = arith.constant 0 : index
    %c0_109 = arith.constant 0 : index
    %89 = vector.load %arg2[%c2_107, %c0_108, %c0_109] : memref<3x10x256xf32, #tpu.memory_space<vmem>>, vector<1x10x256xf32>
    %90 = vector.shape_cast %89 : vector<1x10x256xf32> to vector<10x256xf32>
    %cst_110 = arith.constant dense<0.000000e+00> : vector<4x256xf32>
    %91 = tpu.matmul %24, %90, %cst_110 {dimension_numbers = #tpu.dot_dimension_numbers<[1], [0], [0], [1], [0, 0, 1, 1], [], []>} : vector<4x10xf32>, vector<10x256xf32>, vector<4x256xf32> -> vector<4x256xf32>
    %92 = arith.addf %88, %91 : vector<4x256xf32>
    %c0_111 = arith.constant 0 : index
    %c0_112 = arith.constant 0 : index
    %93 = vector.load %arg3[%c0_111, %c0_112] : memref<1x256xf32, #tpu.memory_space<vmem>>, vector<1x256xf32>
    %94 = vector.broadcast %93 : vector<1x256xf32> to vector<4x256xf32>
    %95 = arith.addf %92, %94 : vector<4x256xf32>
    %cst_113 = arith.constant 0.000000e+00 : f32
    %96 = vector.broadcast %cst_113 : f32 to vector<4x256xf32>
    %97 = arith.maximumf %95, %96 : vector<4x256xf32>
    %c0_114 = arith.constant 0 : index
    %c0_115 = arith.constant 0 : index
    %c0_116 = arith.constant 0 : index
    %98 = vector.load %arg2[%c0_114, %c0_115, %c0_116] : memref<3x10x256xf32, #tpu.memory_space<vmem>>, vector<1x10x256xf32>
    %99 = vector.shape_cast %98 : vector<1x10x256xf32> to vector<10x256xf32>
    %cst_117 = arith.constant dense<0.000000e+00> : vector<4x256xf32>
    %100 = tpu.matmul %19, %99, %cst_117 {dimension_numbers = #tpu.dot_dimension_numbers<[1], [0], [0], [1], [0, 0, 1, 1], [], []>} : vector<4x10xf32>, vector<10x256xf32>, vector<4x256xf32> -> vector<4x256xf32>
    %c1_118 = arith.constant 1 : index
    %c0_119 = arith.constant 0 : index
    %c0_120 = arith.constant 0 : index
    %101 = vector.load %arg2[%c1_118, %c0_119, %c0_120] : memref<3x10x256xf32, #tpu.memory_space<vmem>>, vector<1x10x256xf32>
    %102 = vector.shape_cast %101 : vector<1x10x256xf32> to vector<10x256xf32>
    %cst_121 = arith.constant dense<0.000000e+00> : vector<4x256xf32>
    %103 = tpu.matmul %24, %102, %cst_121 {dimension_numbers = #tpu.dot_dimension_numbers<[1], [0], [0], [1], [0, 0, 1, 1], [], []>} : vector<4x10xf32>, vector<10x256xf32>, vector<4x256xf32> -> vector<4x256xf32>
    %104 = arith.addf %100, %103 : vector<4x256xf32>
    %c2_122 = arith.constant 2 : index
    %c0_123 = arith.constant 0 : index
    %c0_124 = arith.constant 0 : index
    %105 = vector.load %arg2[%c2_122, %c0_123, %c0_124] : memref<3x10x256xf32, #tpu.memory_space<vmem>>, vector<1x10x256xf32>
    %106 = vector.shape_cast %105 : vector<1x10x256xf32> to vector<10x256xf32>
    %cst_125 = arith.constant dense<0.000000e+00> : vector<4x256xf32>
    %107 = tpu.matmul %29, %106, %cst_125 {dimension_numbers = #tpu.dot_dimension_numbers<[1], [0], [0], [1], [0, 0, 1, 1], [], []>} : vector<4x10xf32>, vector<10x256xf32>, vector<4x256xf32> -> vector<4x256xf32>
    %108 = arith.addf %104, %107 : vector<4x256xf32>
    %c0_126 = arith.constant 0 : index
    %c0_127 = arith.constant 0 : index
    %109 = vector.load %arg3[%c0_126, %c0_127] : memref<1x256xf32, #tpu.memory_space<vmem>>, vector<1x256xf32>
    %110 = vector.broadcast %109 : vector<1x256xf32> to vector<4x256xf32>
    %111 = arith.addf %108, %110 : vector<4x256xf32>
    %cst_128 = arith.constant 0.000000e+00 : f32
    %112 = vector.broadcast %cst_128 : f32 to vector<4x256xf32>
    %113 = arith.maximumf %111, %112 : vector<4x256xf32>
    %c0_129 = arith.constant 0 : index
    %c0_130 = arith.constant 0 : index
    %c0_131 = arith.constant 0 : index
    %114 = vector.load %arg2[%c0_129, %c0_130, %c0_131] : memref<3x10x256xf32, #tpu.memory_space<vmem>>, vector<1x10x256xf32>
    %115 = vector.shape_cast %114 : vector<1x10x256xf32> to vector<10x256xf32>
    %cst_132 = arith.constant dense<0.000000e+00> : vector<4x256xf32>
    %116 = tpu.matmul %24, %115, %cst_132 {dimension_numbers = #tpu.dot_dimension_numbers<[1], [0], [0], [1], [0, 0, 1, 1], [], []>} : vector<4x10xf32>, vector<10x256xf32>, vector<4x256xf32> -> vector<4x256xf32>
    %c1_133 = arith.constant 1 : index
    %c0_134 = arith.constant 0 : index
    %c0_135 = arith.constant 0 : index
    %117 = vector.load %arg2[%c1_133, %c0_134, %c0_135] : memref<3x10x256xf32, #tpu.memory_space<vmem>>, vector<1x10x256xf32>
    %118 = vector.shape_cast %117 : vector<1x10x256xf32> to vector<10x256xf32>
    %cst_136 = arith.constant dense<0.000000e+00> : vector<4x256xf32>
    %119 = tpu.matmul %29, %118, %cst_136 {dimension_numbers = #tpu.dot_dimension_numbers<[1], [0], [0], [1], [0, 0, 1, 1], [], []>} : vector<4x10xf32>, vector<10x256xf32>, vector<4x256xf32> -> vector<4x256xf32>
    %120 = arith.addf %116, %119 : vector<4x256xf32>
    %c2_137 = arith.constant 2 : index
    %c0_138 = arith.constant 0 : index
    %c0_139 = arith.constant 0 : index
    %121 = vector.load %arg2[%c2_137, %c0_138, %c0_139] : memref<3x10x256xf32, #tpu.memory_space<vmem>>, vector<1x10x256xf32>
    %122 = vector.shape_cast %121 : vector<1x10x256xf32> to vector<10x256xf32>
    %cst_140 = arith.constant dense<0.000000e+00> : vector<4x256xf32>
    %123 = tpu.matmul %34, %122, %cst_140 {dimension_numbers = #tpu.dot_dimension_numbers<[1], [0], [0], [1], [0, 0, 1, 1], [], []>} : vector<4x10xf32>, vector<10x256xf32>, vector<4x256xf32> -> vector<4x256xf32>
    %124 = arith.addf %120, %123 : vector<4x256xf32>
    %c0_141 = arith.constant 0 : index
    %c0_142 = arith.constant 0 : index
    %125 = vector.load %arg3[%c0_141, %c0_142] : memref<1x256xf32, #tpu.memory_space<vmem>>, vector<1x256xf32>
    %126 = vector.broadcast %125 : vector<1x256xf32> to vector<4x256xf32>
    %127 = arith.addf %124, %126 : vector<4x256xf32>
    %cst_143 = arith.constant 0.000000e+00 : f32
    %128 = vector.broadcast %cst_143 : f32 to vector<4x256xf32>
    %129 = arith.maximumf %127, %128 : vector<4x256xf32>
    %c0_144 = arith.constant 0 : index
    %c0_145 = arith.constant 0 : index
    %c0_146 = arith.constant 0 : index
    %130 = vector.load %arg2[%c0_144, %c0_145, %c0_146] : memref<3x10x256xf32, #tpu.memory_space<vmem>>, vector<1x10x256xf32>
    %131 = vector.shape_cast %130 : vector<1x10x256xf32> to vector<10x256xf32>
    %cst_147 = arith.constant dense<0.000000e+00> : vector<4x256xf32>
    %132 = tpu.matmul %29, %131, %cst_147 {dimension_numbers = #tpu.dot_dimension_numbers<[1], [0], [0], [1], [0, 0, 1, 1], [], []>} : vector<4x10xf32>, vector<10x256xf32>, vector<4x256xf32> -> vector<4x256xf32>
    %c1_148 = arith.constant 1 : index
    %c0_149 = arith.constant 0 : index
    %c0_150 = arith.constant 0 : index
    %133 = vector.load %arg2[%c1_148, %c0_149, %c0_150] : memref<3x10x256xf32, #tpu.memory_space<vmem>>, vector<1x10x256xf32>
    %134 = vector.shape_cast %133 : vector<1x10x256xf32> to vector<10x256xf32>
    %cst_151 = arith.constant dense<0.000000e+00> : vector<4x256xf32>
    %135 = tpu.matmul %34, %134, %cst_151 {dimension_numbers = #tpu.dot_dimension_numbers<[1], [0], [0], [1], [0, 0, 1, 1], [], []>} : vector<4x10xf32>, vector<10x256xf32>, vector<4x256xf32> -> vector<4x256xf32>
    %136 = arith.addf %132, %135 : vector<4x256xf32>
    %c2_152 = arith.constant 2 : index
    %c0_153 = arith.constant 0 : index
    %c0_154 = arith.constant 0 : index
    %137 = vector.load %arg2[%c2_152, %c0_153, %c0_154] : memref<3x10x256xf32, #tpu.memory_space<vmem>>, vector<1x10x256xf32>
    %138 = vector.shape_cast %137 : vector<1x10x256xf32> to vector<10x256xf32>
    %cst_155 = arith.constant dense<0.000000e+00> : vector<4x256xf32>
    %139 = tpu.matmul %39, %138, %cst_155 {dimension_numbers = #tpu.dot_dimension_numbers<[1], [0], [0], [1], [0, 0, 1, 1], [], []>} : vector<4x10xf32>, vector<10x256xf32>, vector<4x256xf32> -> vector<4x256xf32>
    %140 = arith.addf %136, %139 : vector<4x256xf32>
    %c0_156 = arith.constant 0 : index
    %c0_157 = arith.constant 0 : index
    %141 = vector.load %arg3[%c0_156, %c0_157] : memref<1x256xf32, #tpu.memory_space<vmem>>, vector<1x256xf32>
    %142 = vector.broadcast %141 : vector<1x256xf32> to vector<4x256xf32>
    %143 = arith.addf %140, %142 : vector<4x256xf32>
    %cst_158 = arith.constant 0.000000e+00 : f32
    %144 = vector.broadcast %cst_158 : f32 to vector<4x256xf32>
    %145 = arith.maximumf %143, %144 : vector<4x256xf32>
    %c0_159 = arith.constant 0 : index
    %c0_160 = arith.constant 0 : index
    %c0_161 = arith.constant 0 : index
    %146 = vector.load %arg2[%c0_159, %c0_160, %c0_161] : memref<3x10x256xf32, #tpu.memory_space<vmem>>, vector<1x10x256xf32>
    %147 = vector.shape_cast %146 : vector<1x10x256xf32> to vector<10x256xf32>
    %cst_162 = arith.constant dense<0.000000e+00> : vector<4x256xf32>
    %148 = tpu.matmul %34, %147, %cst_162 {dimension_numbers = #tpu.dot_dimension_numbers<[1], [0], [0], [1], [0, 0, 1, 1], [], []>} : vector<4x10xf32>, vector<10x256xf32>, vector<4x256xf32> -> vector<4x256xf32>
    %c1_163 = arith.constant 1 : index
    %c0_164 = arith.constant 0 : index
    %c0_165 = arith.constant 0 : index
    %149 = vector.load %arg2[%c1_163, %c0_164, %c0_165] : memref<3x10x256xf32, #tpu.memory_space<vmem>>, vector<1x10x256xf32>
    %150 = vector.shape_cast %149 : vector<1x10x256xf32> to vector<10x256xf32>
    %cst_166 = arith.constant dense<0.000000e+00> : vector<4x256xf32>
    %151 = tpu.matmul %39, %150, %cst_166 {dimension_numbers = #tpu.dot_dimension_numbers<[1], [0], [0], [1], [0, 0, 1, 1], [], []>} : vector<4x10xf32>, vector<10x256xf32>, vector<4x256xf32> -> vector<4x256xf32>
    %152 = arith.addf %148, %151 : vector<4x256xf32>
    %c2_167 = arith.constant 2 : index
    %c0_168 = arith.constant 0 : index
    %c0_169 = arith.constant 0 : index
    %153 = vector.load %arg2[%c2_167, %c0_168, %c0_169] : memref<3x10x256xf32, #tpu.memory_space<vmem>>, vector<1x10x256xf32>
    %154 = vector.shape_cast %153 : vector<1x10x256xf32> to vector<10x256xf32>
    %cst_170 = arith.constant dense<0.000000e+00> : vector<4x256xf32>
    %155 = tpu.matmul %44, %154, %cst_170 {dimension_numbers = #tpu.dot_dimension_numbers<[1], [0], [0], [1], [0, 0, 1, 1], [], []>} : vector<4x10xf32>, vector<10x256xf32>, vector<4x256xf32> -> vector<4x256xf32>
    %156 = arith.addf %152, %155 : vector<4x256xf32>
    %c0_171 = arith.constant 0 : index
    %c0_172 = arith.constant 0 : index
    %157 = vector.load %arg3[%c0_171, %c0_172] : memref<1x256xf32, #tpu.memory_space<vmem>>, vector<1x256xf32>
    %158 = vector.broadcast %157 : vector<1x256xf32> to vector<4x256xf32>
    %159 = arith.addf %156, %158 : vector<4x256xf32>
    %cst_173 = arith.constant 0.000000e+00 : f32
    %160 = vector.broadcast %cst_173 : f32 to vector<4x256xf32>
    %161 = arith.maximumf %159, %160 : vector<4x256xf32>
    %c0_174 = arith.constant 0 : index
    %c0_175 = arith.constant 0 : index
    %c0_176 = arith.constant 0 : index
    %162 = vector.load %arg2[%c0_174, %c0_175, %c0_176] : memref<3x10x256xf32, #tpu.memory_space<vmem>>, vector<1x10x256xf32>
    %163 = vector.shape_cast %162 : vector<1x10x256xf32> to vector<10x256xf32>
    %cst_177 = arith.constant dense<0.000000e+00> : vector<4x256xf32>
    %164 = tpu.matmul %39, %163, %cst_177 {dimension_numbers = #tpu.dot_dimension_numbers<[1], [0], [0], [1], [0, 0, 1, 1], [], []>} : vector<4x10xf32>, vector<10x256xf32>, vector<4x256xf32> -> vector<4x256xf32>
    %c1_178 = arith.constant 1 : index
    %c0_179 = arith.constant 0 : index
    %c0_180 = arith.constant 0 : index
    %165 = vector.load %arg2[%c1_178, %c0_179, %c0_180] : memref<3x10x256xf32, #tpu.memory_space<vmem>>, vector<1x10x256xf32>
    %166 = vector.shape_cast %165 : vector<1x10x256xf32> to vector<10x256xf32>
    %cst_181 = arith.constant dense<0.000000e+00> : vector<4x256xf32>
    %167 = tpu.matmul %44, %166, %cst_181 {dimension_numbers = #tpu.dot_dimension_numbers<[1], [0], [0], [1], [0, 0, 1, 1], [], []>} : vector<4x10xf32>, vector<10x256xf32>, vector<4x256xf32> -> vector<4x256xf32>
    %168 = arith.addf %164, %167 : vector<4x256xf32>
    %c2_182 = arith.constant 2 : index
    %c0_183 = arith.constant 0 : index
    %c0_184 = arith.constant 0 : index
    %169 = vector.load %arg2[%c2_182, %c0_183, %c0_184] : memref<3x10x256xf32, #tpu.memory_space<vmem>>, vector<1x10x256xf32>
    %170 = vector.shape_cast %169 : vector<1x10x256xf32> to vector<10x256xf32>
    %cst_185 = arith.constant dense<0.000000e+00> : vector<4x256xf32>
    %171 = tpu.matmul %49, %170, %cst_185 {dimension_numbers = #tpu.dot_dimension_numbers<[1], [0], [0], [1], [0, 0, 1, 1], [], []>} : vector<4x10xf32>, vector<10x256xf32>, vector<4x256xf32> -> vector<4x256xf32>
    %172 = arith.addf %168, %171 : vector<4x256xf32>
    %c0_186 = arith.constant 0 : index
    %c0_187 = arith.constant 0 : index
    %173 = vector.load %arg3[%c0_186, %c0_187] : memref<1x256xf32, #tpu.memory_space<vmem>>, vector<1x256xf32>
    %174 = vector.broadcast %173 : vector<1x256xf32> to vector<4x256xf32>
    %175 = arith.addf %172, %174 : vector<4x256xf32>
    %cst_188 = arith.constant 0.000000e+00 : f32
    %176 = vector.broadcast %cst_188 : f32 to vector<4x256xf32>
    %177 = arith.maximumf %175, %176 : vector<4x256xf32>
    %c0_189 = arith.constant 0 : index
    %c0_190 = arith.constant 0 : index
    %c0_191 = arith.constant 0 : index
    %178 = vector.load %arg4[%c0_189, %c0_190, %c0_191] : memref<3x256x384xf32, #tpu.memory_space<vmem>>, vector<1x256x384xf32>
    %179 = vector.shape_cast %178 : vector<1x256x384xf32> to vector<256x384xf32>
    %cst_192 = arith.constant dense<0.000000e+00> : vector<4x384xf32>
    %180 = tpu.matmul %65, %179, %cst_192 {dimension_numbers = #tpu.dot_dimension_numbers<[1], [0], [0], [1], [0, 0, 1, 1], [], []>} : vector<4x256xf32>, vector<256x384xf32>, vector<4x384xf32> -> vector<4x384xf32>
    %c1_193 = arith.constant 1 : index
    %c0_194 = arith.constant 0 : index
    %c0_195 = arith.constant 0 : index
    %181 = vector.load %arg4[%c1_193, %c0_194, %c0_195] : memref<3x256x384xf32, #tpu.memory_space<vmem>>, vector<1x256x384xf32>
    %182 = vector.shape_cast %181 : vector<1x256x384xf32> to vector<256x384xf32>
    %cst_196 = arith.constant dense<0.000000e+00> : vector<4x384xf32>
    %183 = tpu.matmul %81, %182, %cst_196 {dimension_numbers = #tpu.dot_dimension_numbers<[1], [0], [0], [1], [0, 0, 1, 1], [], []>} : vector<4x256xf32>, vector<256x384xf32>, vector<4x384xf32> -> vector<4x384xf32>
    %184 = arith.addf %180, %183 : vector<4x384xf32>
    %c2_197 = arith.constant 2 : index
    %c0_198 = arith.constant 0 : index
    %c0_199 = arith.constant 0 : index
    %185 = vector.load %arg4[%c2_197, %c0_198, %c0_199] : memref<3x256x384xf32, #tpu.memory_space<vmem>>, vector<1x256x384xf32>
    %186 = vector.shape_cast %185 : vector<1x256x384xf32> to vector<256x384xf32>
    %cst_200 = arith.constant dense<0.000000e+00> : vector<4x384xf32>
    %187 = tpu.matmul %97, %186, %cst_200 {dimension_numbers = #tpu.dot_dimension_numbers<[1], [0], [0], [1], [0, 0, 1, 1], [], []>} : vector<4x256xf32>, vector<256x384xf32>, vector<4x384xf32> -> vector<4x384xf32>
    %188 = arith.addf %184, %187 : vector<4x384xf32>
    %c0_201 = arith.constant 0 : index
    %c0_202 = arith.constant 0 : index
    %189 = vector.load %arg5[%c0_201, %c0_202] : memref<1x384xf32, #tpu.memory_space<vmem>>, vector<1x384xf32>
    %190 = vector.broadcast %189 : vector<1x384xf32> to vector<4x384xf32>
    %191 = arith.addf %188, %190 : vector<4x384xf32>
    %cst_203 = arith.constant 0.000000e+00 : f32
    %192 = vector.broadcast %cst_203 : f32 to vector<4x384xf32>
    %193 = arith.maximumf %191, %192 : vector<4x384xf32>
    %c0_204 = arith.constant 0 : index
    %c0_205 = arith.constant 0 : index
    %c0_206 = arith.constant 0 : index
    %194 = vector.load %arg4[%c0_204, %c0_205, %c0_206] : memref<3x256x384xf32, #tpu.memory_space<vmem>>, vector<1x256x384xf32>
    %195 = vector.shape_cast %194 : vector<1x256x384xf32> to vector<256x384xf32>
    %cst_207 = arith.constant dense<0.000000e+00> : vector<4x384xf32>
    %196 = tpu.matmul %81, %195, %cst_207 {dimension_numbers = #tpu.dot_dimension_numbers<[1], [0], [0], [1], [0, 0, 1, 1], [], []>} : vector<4x256xf32>, vector<256x384xf32>, vector<4x384xf32> -> vector<4x384xf32>
    %c1_208 = arith.constant 1 : index
    %c0_209 = arith.constant 0 : index
    %c0_210 = arith.constant 0 : index
    %197 = vector.load %arg4[%c1_208, %c0_209, %c0_210] : memref<3x256x384xf32, #tpu.memory_space<vmem>>, vector<1x256x384xf32>
    %198 = vector.shape_cast %197 : vector<1x256x384xf32> to vector<256x384xf32>
    %cst_211 = arith.constant dense<0.000000e+00> : vector<4x384xf32>
    %199 = tpu.matmul %97, %198, %cst_211 {dimension_numbers = #tpu.dot_dimension_numbers<[1], [0], [0], [1], [0, 0, 1, 1], [], []>} : vector<4x256xf32>, vector<256x384xf32>, vector<4x384xf32> -> vector<4x384xf32>
    %200 = arith.addf %196, %199 : vector<4x384xf32>
    %c2_212 = arith.constant 2 : index
    %c0_213 = arith.constant 0 : index
    %c0_214 = arith.constant 0 : index
    %201 = vector.load %arg4[%c2_212, %c0_213, %c0_214] : memref<3x256x384xf32, #tpu.memory_space<vmem>>, vector<1x256x384xf32>
    %202 = vector.shape_cast %201 : vector<1x256x384xf32> to vector<256x384xf32>
    %cst_215 = arith.constant dense<0.000000e+00> : vector<4x384xf32>
    %203 = tpu.matmul %113, %202, %cst_215 {dimension_numbers = #tpu.dot_dimension_numbers<[1], [0], [0], [1], [0, 0, 1, 1], [], []>} : vector<4x256xf32>, vector<256x384xf32>, vector<4x384xf32> -> vector<4x384xf32>
    %204 = arith.addf %200, %203 : vector<4x384xf32>
    %c0_216 = arith.constant 0 : index
    %c0_217 = arith.constant 0 : index
    %205 = vector.load %arg5[%c0_216, %c0_217] : memref<1x384xf32, #tpu.memory_space<vmem>>, vector<1x384xf32>
    %206 = vector.broadcast %205 : vector<1x384xf32> to vector<4x384xf32>
    %207 = arith.addf %204, %206 : vector<4x384xf32>
    %cst_218 = arith.constant 0.000000e+00 : f32
    %208 = vector.broadcast %cst_218 : f32 to vector<4x384xf32>
    %209 = arith.maximumf %207, %208 : vector<4x384xf32>
    %c0_219 = arith.constant 0 : index
    %c0_220 = arith.constant 0 : index
    %c0_221 = arith.constant 0 : index
    %210 = vector.load %arg4[%c0_219, %c0_220, %c0_221] : memref<3x256x384xf32, #tpu.memory_space<vmem>>, vector<1x256x384xf32>
    %211 = vector.shape_cast %210 : vector<1x256x384xf32> to vector<256x384xf32>
    %cst_222 = arith.constant dense<0.000000e+00> : vector<4x384xf32>
    %212 = tpu.matmul %97, %211, %cst_222 {dimension_numbers = #tpu.dot_dimension_numbers<[1], [0], [0], [1], [0, 0, 1, 1], [], []>} : vector<4x256xf32>, vector<256x384xf32>, vector<4x384xf32> -> vector<4x384xf32>
    %c1_223 = arith.constant 1 : index
    %c0_224 = arith.constant 0 : index
    %c0_225 = arith.constant 0 : index
    %213 = vector.load %arg4[%c1_223, %c0_224, %c0_225] : memref<3x256x384xf32, #tpu.memory_space<vmem>>, vector<1x256x384xf32>
    %214 = vector.shape_cast %213 : vector<1x256x384xf32> to vector<256x384xf32>
    %cst_226 = arith.constant dense<0.000000e+00> : vector<4x384xf32>
    %215 = tpu.matmul %113, %214, %cst_226 {dimension_numbers = #tpu.dot_dimension_numbers<[1], [0], [0], [1], [0, 0, 1, 1], [], []>} : vector<4x256xf32>, vector<256x384xf32>, vector<4x384xf32> -> vector<4x384xf32>
    %216 = arith.addf %212, %215 : vector<4x384xf32>
    %c2_227 = arith.constant 2 : index
    %c0_228 = arith.constant 0 : index
    %c0_229 = arith.constant 0 : index
    %217 = vector.load %arg4[%c2_227, %c0_228, %c0_229] : memref<3x256x384xf32, #tpu.memory_space<vmem>>, vector<1x256x384xf32>
    %218 = vector.shape_cast %217 : vector<1x256x384xf32> to vector<256x384xf32>
    %cst_230 = arith.constant dense<0.000000e+00> : vector<4x384xf32>
    %219 = tpu.matmul %129, %218, %cst_230 {dimension_numbers = #tpu.dot_dimension_numbers<[1], [0], [0], [1], [0, 0, 1, 1], [], []>} : vector<4x256xf32>, vector<256x384xf32>, vector<4x384xf32> -> vector<4x384xf32>
    %220 = arith.addf %216, %219 : vector<4x384xf32>
    %c0_231 = arith.constant 0 : index
    %c0_232 = arith.constant 0 : index
    %221 = vector.load %arg5[%c0_231, %c0_232] : memref<1x384xf32, #tpu.memory_space<vmem>>, vector<1x384xf32>
    %222 = vector.broadcast %221 : vector<1x384xf32> to vector<4x384xf32>
    %223 = arith.addf %220, %222 : vector<4x384xf32>
    %cst_233 = arith.constant 0.000000e+00 : f32
    %224 = vector.broadcast %cst_233 : f32 to vector<4x384xf32>
    %225 = arith.maximumf %223, %224 : vector<4x384xf32>
    %c0_234 = arith.constant 0 : index
    %c0_235 = arith.constant 0 : index
    %c0_236 = arith.constant 0 : index
    %226 = vector.load %arg4[%c0_234, %c0_235, %c0_236] : memref<3x256x384xf32, #tpu.memory_space<vmem>>, vector<1x256x384xf32>
    %227 = vector.shape_cast %226 : vector<1x256x384xf32> to vector<256x384xf32>
    %cst_237 = arith.constant dense<0.000000e+00> : vector<4x384xf32>
    %228 = tpu.matmul %113, %227, %cst_237 {dimension_numbers = #tpu.dot_dimension_numbers<[1], [0], [0], [1], [0, 0, 1, 1], [], []>} : vector<4x256xf32>, vector<256x384xf32>, vector<4x384xf32> -> vector<4x384xf32>
    %c1_238 = arith.constant 1 : index
    %c0_239 = arith.constant 0 : index
    %c0_240 = arith.constant 0 : index
    %229 = vector.load %arg4[%c1_238, %c0_239, %c0_240] : memref<3x256x384xf32, #tpu.memory_space<vmem>>, vector<1x256x384xf32>
    %230 = vector.shape_cast %229 : vector<1x256x384xf32> to vector<256x384xf32>
    %cst_241 = arith.constant dense<0.000000e+00> : vector<4x384xf32>
    %231 = tpu.matmul %129, %230, %cst_241 {dimension_numbers = #tpu.dot_dimension_numbers<[1], [0], [0], [1], [0, 0, 1, 1], [], []>} : vector<4x256xf32>, vector<256x384xf32>, vector<4x384xf32> -> vector<4x384xf32>
    %232 = arith.addf %228, %231 : vector<4x384xf32>
    %c2_242 = arith.constant 2 : index
    %c0_243 = arith.constant 0 : index
    %c0_244 = arith.constant 0 : index
    %233 = vector.load %arg4[%c2_242, %c0_243, %c0_244] : memref<3x256x384xf32, #tpu.memory_space<vmem>>, vector<1x256x384xf32>
    %234 = vector.shape_cast %233 : vector<1x256x384xf32> to vector<256x384xf32>
    %cst_245 = arith.constant dense<0.000000e+00> : vector<4x384xf32>
    %235 = tpu.matmul %145, %234, %cst_245 {dimension_numbers = #tpu.dot_dimension_numbers<[1], [0], [0], [1], [0, 0, 1, 1], [], []>} : vector<4x256xf32>, vector<256x384xf32>, vector<4x384xf32> -> vector<4x384xf32>
    %236 = arith.addf %232, %235 : vector<4x384xf32>
    %c0_246 = arith.constant 0 : index
    %c0_247 = arith.constant 0 : index
    %237 = vector.load %arg5[%c0_246, %c0_247] : memref<1x384xf32, #tpu.memory_space<vmem>>, vector<1x384xf32>
    %238 = vector.broadcast %237 : vector<1x384xf32> to vector<4x384xf32>
    %239 = arith.addf %236, %238 : vector<4x384xf32>
    %cst_248 = arith.constant 0.000000e+00 : f32
    %240 = vector.broadcast %cst_248 : f32 to vector<4x384xf32>
    %241 = arith.maximumf %239, %240 : vector<4x384xf32>
    %c0_249 = arith.constant 0 : index
    %c0_250 = arith.constant 0 : index
    %c0_251 = arith.constant 0 : index
    %242 = vector.load %arg4[%c0_249, %c0_250, %c0_251] : memref<3x256x384xf32, #tpu.memory_space<vmem>>, vector<1x256x384xf32>
    %243 = vector.shape_cast %242 : vector<1x256x384xf32> to vector<256x384xf32>
    %cst_252 = arith.constant dense<0.000000e+00> : vector<4x384xf32>
    %244 = tpu.matmul %129, %243, %cst_252 {dimension_numbers = #tpu.dot_dimension_numbers<[1], [0], [0], [1], [0, 0, 1, 1], [], []>} : vector<4x256xf32>, vector<256x384xf32>, vector<4x384xf32> -> vector<4x384xf32>
    %c1_253 = arith.constant 1 : index
    %c0_254 = arith.constant 0 : index
    %c0_255 = arith.constant 0 : index
    %245 = vector.load %arg4[%c1_253, %c0_254, %c0_255] : memref<3x256x384xf32, #tpu.memory_space<vmem>>, vector<1x256x384xf32>
    %246 = vector.shape_cast %245 : vector<1x256x384xf32> to vector<256x384xf32>
    %cst_256 = arith.constant dense<0.000000e+00> : vector<4x384xf32>
    %247 = tpu.matmul %145, %246, %cst_256 {dimension_numbers = #tpu.dot_dimension_numbers<[1], [0], [0], [1], [0, 0, 1, 1], [], []>} : vector<4x256xf32>, vector<256x384xf32>, vector<4x384xf32> -> vector<4x384xf32>
    %248 = arith.addf %244, %247 : vector<4x384xf32>
    %c2_257 = arith.constant 2 : index
    %c0_258 = arith.constant 0 : index
    %c0_259 = arith.constant 0 : index
    %249 = vector.load %arg4[%c2_257, %c0_258, %c0_259] : memref<3x256x384xf32, #tpu.memory_space<vmem>>, vector<1x256x384xf32>
    %250 = vector.shape_cast %249 : vector<1x256x384xf32> to vector<256x384xf32>
    %cst_260 = arith.constant dense<0.000000e+00> : vector<4x384xf32>
    %251 = tpu.matmul %161, %250, %cst_260 {dimension_numbers = #tpu.dot_dimension_numbers<[1], [0], [0], [1], [0, 0, 1, 1], [], []>} : vector<4x256xf32>, vector<256x384xf32>, vector<4x384xf32> -> vector<4x384xf32>
    %252 = arith.addf %248, %251 : vector<4x384xf32>
    %c0_261 = arith.constant 0 : index
    %c0_262 = arith.constant 0 : index
    %253 = vector.load %arg5[%c0_261, %c0_262] : memref<1x384xf32, #tpu.memory_space<vmem>>, vector<1x384xf32>
    %254 = vector.broadcast %253 : vector<1x384xf32> to vector<4x384xf32>
    %255 = arith.addf %252, %254 : vector<4x384xf32>
    %cst_263 = arith.constant 0.000000e+00 : f32
    %256 = vector.broadcast %cst_263 : f32 to vector<4x384xf32>
    %257 = arith.maximumf %255, %256 : vector<4x384xf32>
    %c0_264 = arith.constant 0 : index
    %c0_265 = arith.constant 0 : index
    %c0_266 = arith.constant 0 : index
    %258 = vector.load %arg4[%c0_264, %c0_265, %c0_266] : memref<3x256x384xf32, #tpu.memory_space<vmem>>, vector<1x256x384xf32>
    %259 = vector.shape_cast %258 : vector<1x256x384xf32> to vector<256x384xf32>
    %cst_267 = arith.constant dense<0.000000e+00> : vector<4x384xf32>
    %260 = tpu.matmul %145, %259, %cst_267 {dimension_numbers = #tpu.dot_dimension_numbers<[1], [0], [0], [1], [0, 0, 1, 1], [], []>} : vector<4x256xf32>, vector<256x384xf32>, vector<4x384xf32> -> vector<4x384xf32>
    %c1_268 = arith.constant 1 : index
    %c0_269 = arith.constant 0 : index
    %c0_270 = arith.constant 0 : index
    %261 = vector.load %arg4[%c1_268, %c0_269, %c0_270] : memref<3x256x384xf32, #tpu.memory_space<vmem>>, vector<1x256x384xf32>
    %262 = vector.shape_cast %261 : vector<1x256x384xf32> to vector<256x384xf32>
    %cst_271 = arith.constant dense<0.000000e+00> : vector<4x384xf32>
    %263 = tpu.matmul %161, %262, %cst_271 {dimension_numbers = #tpu.dot_dimension_numbers<[1], [0], [0], [1], [0, 0, 1, 1], [], []>} : vector<4x256xf32>, vector<256x384xf32>, vector<4x384xf32> -> vector<4x384xf32>
    %264 = arith.addf %260, %263 : vector<4x384xf32>
    %c2_272 = arith.constant 2 : index
    %c0_273 = arith.constant 0 : index
    %c0_274 = arith.constant 0 : index
    %265 = vector.load %arg4[%c2_272, %c0_273, %c0_274] : memref<3x256x384xf32, #tpu.memory_space<vmem>>, vector<1x256x384xf32>
    %266 = vector.shape_cast %265 : vector<1x256x384xf32> to vector<256x384xf32>
    %cst_275 = arith.constant dense<0.000000e+00> : vector<4x384xf32>
    %267 = tpu.matmul %177, %266, %cst_275 {dimension_numbers = #tpu.dot_dimension_numbers<[1], [0], [0], [1], [0, 0, 1, 1], [], []>} : vector<4x256xf32>, vector<256x384xf32>, vector<4x384xf32> -> vector<4x384xf32>
    %268 = arith.addf %264, %267 : vector<4x384xf32>
    %c0_276 = arith.constant 0 : index
    %c0_277 = arith.constant 0 : index
    %269 = vector.load %arg5[%c0_276, %c0_277] : memref<1x384xf32, #tpu.memory_space<vmem>>, vector<1x384xf32>
    %270 = vector.broadcast %269 : vector<1x384xf32> to vector<4x384xf32>
    %271 = arith.addf %268, %270 : vector<4x384xf32>
    %cst_278 = arith.constant 0.000000e+00 : f32
    %272 = vector.broadcast %cst_278 : f32 to vector<4x384xf32>
    %273 = arith.maximumf %271, %272 : vector<4x384xf32>
    %c0_279 = arith.constant 0 : index
    %c0_280 = arith.constant 0 : index
    %c0_281 = arith.constant 0 : index
    %274 = vector.load %arg6[%c0_279, %c0_280, %c0_281] : memref<6x384x128xf32, #tpu.memory_space<vmem>>, vector<1x384x128xf32>
    %275 = vector.shape_cast %274 : vector<1x384x128xf32> to vector<384x128xf32>
    %cst_282 = arith.constant dense<0.000000e+00> : vector<4x128xf32>
    %276 = tpu.matmul %193, %275, %cst_282 {dimension_numbers = #tpu.dot_dimension_numbers<[1], [0], [0], [1], [0, 0, 1, 1], [], []>} : vector<4x384xf32>, vector<384x128xf32>, vector<4x128xf32> -> vector<4x128xf32>
    %c1_283 = arith.constant 1 : index
    %c0_284 = arith.constant 0 : index
    %c0_285 = arith.constant 0 : index
    %277 = vector.load %arg6[%c1_283, %c0_284, %c0_285] : memref<6x384x128xf32, #tpu.memory_space<vmem>>, vector<1x384x128xf32>
    %278 = vector.shape_cast %277 : vector<1x384x128xf32> to vector<384x128xf32>
    %cst_286 = arith.constant dense<0.000000e+00> : vector<4x128xf32>
    %279 = tpu.matmul %209, %278, %cst_286 {dimension_numbers = #tpu.dot_dimension_numbers<[1], [0], [0], [1], [0, 0, 1, 1], [], []>} : vector<4x384xf32>, vector<384x128xf32>, vector<4x128xf32> -> vector<4x128xf32>
    %280 = arith.addf %276, %279 : vector<4x128xf32>
    %c2_287 = arith.constant 2 : index
    %c0_288 = arith.constant 0 : index
    %c0_289 = arith.constant 0 : index
    %281 = vector.load %arg6[%c2_287, %c0_288, %c0_289] : memref<6x384x128xf32, #tpu.memory_space<vmem>>, vector<1x384x128xf32>
    %282 = vector.shape_cast %281 : vector<1x384x128xf32> to vector<384x128xf32>
    %cst_290 = arith.constant dense<0.000000e+00> : vector<4x128xf32>
    %283 = tpu.matmul %225, %282, %cst_290 {dimension_numbers = #tpu.dot_dimension_numbers<[1], [0], [0], [1], [0, 0, 1, 1], [], []>} : vector<4x384xf32>, vector<384x128xf32>, vector<4x128xf32> -> vector<4x128xf32>
    %284 = arith.addf %280, %283 : vector<4x128xf32>
    %c3_291 = arith.constant 3 : index
    %c0_292 = arith.constant 0 : index
    %c0_293 = arith.constant 0 : index
    %285 = vector.load %arg6[%c3_291, %c0_292, %c0_293] : memref<6x384x128xf32, #tpu.memory_space<vmem>>, vector<1x384x128xf32>
    %286 = vector.shape_cast %285 : vector<1x384x128xf32> to vector<384x128xf32>
    %cst_294 = arith.constant dense<0.000000e+00> : vector<4x128xf32>
    %287 = tpu.matmul %241, %286, %cst_294 {dimension_numbers = #tpu.dot_dimension_numbers<[1], [0], [0], [1], [0, 0, 1, 1], [], []>} : vector<4x384xf32>, vector<384x128xf32>, vector<4x128xf32> -> vector<4x128xf32>
    %288 = arith.addf %284, %287 : vector<4x128xf32>
    %c4_295 = arith.constant 4 : index
    %c0_296 = arith.constant 0 : index
    %c0_297 = arith.constant 0 : index
    %289 = vector.load %arg6[%c4_295, %c0_296, %c0_297] : memref<6x384x128xf32, #tpu.memory_space<vmem>>, vector<1x384x128xf32>
    %290 = vector.shape_cast %289 : vector<1x384x128xf32> to vector<384x128xf32>
    %cst_298 = arith.constant dense<0.000000e+00> : vector<4x128xf32>
    %291 = tpu.matmul %257, %290, %cst_298 {dimension_numbers = #tpu.dot_dimension_numbers<[1], [0], [0], [1], [0, 0, 1, 1], [], []>} : vector<4x384xf32>, vector<384x128xf32>, vector<4x128xf32> -> vector<4x128xf32>
    %292 = arith.addf %288, %291 : vector<4x128xf32>
    %c5_299 = arith.constant 5 : index
    %c0_300 = arith.constant 0 : index
    %c0_301 = arith.constant 0 : index
    %293 = vector.load %arg6[%c5_299, %c0_300, %c0_301] : memref<6x384x128xf32, #tpu.memory_space<vmem>>, vector<1x384x128xf32>
    %294 = vector.shape_cast %293 : vector<1x384x128xf32> to vector<384x128xf32>
    %cst_302 = arith.constant dense<0.000000e+00> : vector<4x128xf32>
    %295 = tpu.matmul %273, %294, %cst_302 {dimension_numbers = #tpu.dot_dimension_numbers<[1], [0], [0], [1], [0, 0, 1, 1], [], []>} : vector<4x384xf32>, vector<384x128xf32>, vector<4x128xf32> -> vector<4x128xf32>
    %296 = arith.addf %292, %295 : vector<4x128xf32>
    %c0_303 = arith.constant 0 : index
    %c0_304 = arith.constant 0 : index
    %297 = vector.load %arg7[%c0_303, %c0_304] : memref<1x128xf32, #tpu.memory_space<vmem>>, vector<1x128xf32>
    %298 = vector.broadcast %297 : vector<1x128xf32> to vector<4x128xf32>
    %299 = arith.addf %296, %298 : vector<4x128xf32>
    %cst_305 = arith.constant 0.000000e+00 : f32
    %300 = vector.broadcast %cst_305 : f32 to vector<4x128xf32>
    %301 = arith.maximumf %299, %300 : vector<4x128xf32>
    %302 = vector.extract_strided_slice %301 {offsets = [0, 0], sizes = [2, 128], strides = [1, 1]} : vector<4x128xf32> to vector<2x128xf32>
    %303 = vector.extract_strided_slice %301 {offsets = [2, 0], sizes = [2, 128], strides = [1, 1]} : vector<4x128xf32> to vector<2x128xf32>
    %c0_306 = arith.constant 0 : index
    %c0_307 = arith.constant 0 : index
    %c0_308 = arith.constant 0 : index
    %304 = vector.load %arg8[%c0_306, %c0_307, %c0_308] : memref<2x128x128xf32, #tpu.memory_space<vmem>>, vector<1x128x128xf32>
    %305 = vector.shape_cast %304 : vector<1x128x128xf32> to vector<128x128xf32>
    %cst_309 = arith.constant dense<0.000000e+00> : vector<2x128xf32>
    %306 = tpu.matmul %302, %305, %cst_309 {dimension_numbers = #tpu.dot_dimension_numbers<[1], [0], [0], [1], [0, 0, 1, 1], [], []>} : vector<2x128xf32>, vector<128x128xf32>, vector<2x128xf32> -> vector<2x128xf32>
    %c1_310 = arith.constant 1 : index
    %c0_311 = arith.constant 0 : index
    %c0_312 = arith.constant 0 : index
    %307 = vector.load %arg8[%c1_310, %c0_311, %c0_312] : memref<2x128x128xf32, #tpu.memory_space<vmem>>, vector<1x128x128xf32>
    %308 = vector.shape_cast %307 : vector<1x128x128xf32> to vector<128x128xf32>
    %cst_313 = arith.constant dense<0.000000e+00> : vector<2x128xf32>
    %309 = tpu.matmul %303, %308, %cst_313 {dimension_numbers = #tpu.dot_dimension_numbers<[1], [0], [0], [1], [0, 0, 1, 1], [], []>} : vector<2x128xf32>, vector<128x128xf32>, vector<2x128xf32> -> vector<2x128xf32>
    %310 = arith.addf %306, %309 : vector<2x128xf32>
    %c0_314 = arith.constant 0 : index
    %c0_315 = arith.constant 0 : index
    %311 = vector.load %arg9[%c0_314, %c0_315] : memref<1x128xf32, #tpu.memory_space<vmem>>, vector<1x128xf32>
    %312 = vector.broadcast %311 : vector<1x128xf32> to vector<2x128xf32>
    %313 = arith.addf %310, %312 : vector<2x128xf32>
    %cst_316 = arith.constant 0.000000e+00 : f32
    %314 = vector.broadcast %cst_316 : f32 to vector<2x128xf32>
    %315 = arith.maximumf %313, %314 : vector<2x128xf32>
    %c0_317 = arith.constant 0 : index
    %c0_318 = arith.constant 0 : index
    %316 = vector.load %arg10[%c0_317, %c0_318] : memref<128x128xf32, #tpu.memory_space<vmem>>, vector<128x128xf32>
    %cst_319 = arith.constant dense<0.000000e+00> : vector<2x128xf32>
    %317 = tpu.matmul %315, %316, %cst_319 {dimension_numbers = #tpu.dot_dimension_numbers<[1], [0], [0], [1], [0, 0, 1, 1], [], []>} : vector<2x128xf32>, vector<128x128xf32>, vector<2x128xf32> -> vector<2x128xf32>
    %c0_320 = arith.constant 0 : index
    %c0_321 = arith.constant 0 : index
    %318 = vector.load %arg11[%c0_320, %c0_321] : memref<1x128xf32, #tpu.memory_space<vmem>>, vector<1x128xf32>
    %319 = vector.broadcast %318 : vector<1x128xf32> to vector<2x128xf32>
    %320 = arith.addf %317, %319 : vector<2x128xf32>
    %cst_322 = arith.constant 0.000000e+00 : f32
    %321 = vector.broadcast %cst_322 : f32 to vector<2x128xf32>
    %322 = arith.maximumf %320, %321 : vector<2x128xf32>
    %c0_323 = arith.constant 0 : index
    %c0_324 = arith.constant 0 : index
    %323 = vector.load %arg12[%c0_323, %c0_324] : memref<128x128xf32, #tpu.memory_space<vmem>>, vector<128x128xf32>
    %cst_325 = arith.constant dense<0.000000e+00> : vector<2x128xf32>
    %324 = tpu.matmul %322, %323, %cst_325 {dimension_numbers = #tpu.dot_dimension_numbers<[1], [0], [0], [1], [0, 0, 1, 1], [], []>} : vector<2x128xf32>, vector<128x128xf32>, vector<2x128xf32> -> vector<2x128xf32>
    %c0_326 = arith.constant 0 : index
    %c0_327 = arith.constant 0 : index
    %325 = vector.load %arg13[%c0_326, %c0_327] : memref<1x128xf32, #tpu.memory_space<vmem>>, vector<1x128xf32>
    %326 = vector.broadcast %325 : vector<1x128xf32> to vector<2x128xf32>
    %327 = arith.addf %324, %326 : vector<2x128xf32>
    %cst_328 = arith.constant 0.000000e+00 : f32
    %328 = vector.broadcast %cst_328 : f32 to vector<2x128xf32>
    %329 = arith.maximumf %327, %328 : vector<2x128xf32>
    %c0_329 = arith.constant 0 : index
    %c0_330 = arith.constant 0 : index
    %330 = vector.load %arg14[%c0_329, %c0_330] : memref<128x128xf32, #tpu.memory_space<vmem>>, vector<128x128xf32>
    %cst_331 = arith.constant dense<0.000000e+00> : vector<2x128xf32>
    %331 = tpu.matmul %329, %330, %cst_331 {dimension_numbers = #tpu.dot_dimension_numbers<[1], [0], [0], [1], [0, 0, 1, 1], [], []>} : vector<2x128xf32>, vector<128x128xf32>, vector<2x128xf32> -> vector<2x128xf32>
    %c0_332 = arith.constant 0 : index
    %c0_333 = arith.constant 0 : index
    %332 = vector.load %arg15[%c0_332, %c0_333] : memref<1x128xf32, #tpu.memory_space<vmem>>, vector<1x128xf32>
    %333 = vector.broadcast %332 : vector<1x128xf32> to vector<2x128xf32>
    %334 = arith.addf %331, %333 : vector<2x128xf32>
    %c0_334 = arith.constant 0 : index
    %c0_335 = arith.constant 0 : index
    %335 = vector.load %arg16[%c0_334, %c0_335] : memref<2x128xf32, #tpu.memory_space<vmem>>, vector<2x128xf32>
    tpu.vector_store %arg16[%c0_334, %c0_335], %334 {strides = array<i32>} : memref<2x128xf32, #tpu.memory_space<vmem>>, vector<2x128xf32>,
    return
  }
  func.func @transform_0(%arg0: i32) -> (i32, i32, i32, i32) {
    %c0_i32 = arith.constant 0 : i32
    %c0_i32_0 = arith.constant 0 : i32
    %c0_i32_1 = arith.constant 0 : i32
    %c0_i32_2 = arith.constant 0 : i32
    return %c0_i32, %c0_i32_0, %arg0, %c0_i32_1 : i32, i32, i32, i32
  }
  func.func @transform_1(%arg0: i32) -> (i32, i32, i32) {
    %c0_i32 = arith.constant 0 : i32
    %c0_i32_0 = arith.constant 0 : i32
    %c0_i32_1 = arith.constant 0 : i32
    %c0_i32_2 = arith.constant 0 : i32
    return %c0_i32, %c0_i32_0, %c0_i32_1 : i32, i32, i32
  }
  func.func @transform_2(%arg0: i32) -> (i32, i32) {
    %c0_i32 = arith.constant 0 : i32
    %c0_i32_0 = arith.constant 0 : i32
    %c0_i32_1 = arith.constant 0 : i32
    return %c0_i32, %c0_i32_0 : i32, i32
  }
  func.func @transform_3(%arg0: i32) -> (i32, i32, i32) {
    %c0_i32 = arith.constant 0 : i32
    %c0_i32_0 = arith.constant 0 : i32
    %c0_i32_1 = arith.constant 0 : i32
    %c0_i32_2 = arith.constant 0 : i32
    return %c0_i32, %c0_i32_0, %c0_i32_1 : i32, i32, i32
  }
  func.func @transform_4(%arg0: i32) -> (i32, i32) {
    %c0_i32 = arith.constant 0 : i32
    %c0_i32_0 = arith.constant 0 : i32
    %c0_i32_1 = arith.constant 0 : i32
    return %c0_i32, %c0_i32_0 : i32, i32
  }
  func.func @transform_5(%arg0: i32) -> (i32, i32, i32) {
    %c0_i32 = arith.constant 0 : i32
    %c0_i32_0 = arith.constant 0 : i32
    %c0_i32_1 = arith.constant 0 : i32
    %c0_i32_2 = arith.constant 0 : i32
    return %c0_i32, %c0_i32_0, %c0_i32_1 : i32, i32, i32
  }
  func.func @transform_6(%arg0: i32) -> (i32, i32) {
    %c0_i32 = arith.constant 0 : i32
    %c0_i32_0 = arith.constant 0 : i32
    %c0_i32_1 = arith.constant 0 : i32
    return %c0_i32, %c0_i32_0 : i32, i32
  }
  func.func @transform_7(%arg0: i32) -> (i32, i32, i32) {
    %c0_i32 = arith.constant 0 : i32
    %c0_i32_0 = arith.constant 0 : i32
    %c0_i32_1 = arith.constant 0 : i32
    %c0_i32_2 = arith.constant 0 : i32
    return %c0_i32, %c0_i32_0, %c0_i32_1 : i32, i32, i32
  }
  func.func @transform_8(%arg0: i32) -> (i32, i32) {
    %c0_i32 = arith.constant 0 : i32
    %c0_i32_0 = arith.constant 0 : i32
    %c0_i32_1 = arith.constant 0 : i32
    return %c0_i32, %c0_i32_0 : i32, i32
  }
  func.func @transform_9(%arg0: i32) -> (i32, i32) {
    %c0_i32 = arith.constant 0 : i32
    %c0_i32_0 = arith.constant 0 : i32
    %c0_i32_1 = arith.constant 0 : i32
    return %c0_i32, %c0_i32_0 : i32, i32
  }
  func.func @transform_10(%arg0: i32) -> (i32, i32) {
    %c0_i32 = arith.constant 0 : i32
    %c0_i32_0 = arith.constant 0 : i32
    %c0_i32_1 = arith.constant 0 : i32
    return %c0_i32, %c0_i32_0 : i32, i32
  }
  func.func @transform_11(%arg0: i32) -> (i32, i32) {
    %c0_i32 = arith.constant 0 : i32
    %c0_i32_0 = arith.constant 0 : i32
    %c0_i32_1 = arith.constant 0 : i32
    return %c0_i32, %c0_i32_0 : i32, i32
  }
  func.func @transform_12(%arg0: i32) -> (i32, i32) {
    %c0_i32 = arith.constant 0 : i32
    %c0_i32_0 = arith.constant 0 : i32
    %c0_i32_1 = arith.constant 0 : i32
    return %c0_i32, %c0_i32_0 : i32, i32
  }
  func.func @transform_13(%arg0: i32) -> (i32, i32) {
    %c0_i32 = arith.constant 0 : i32
    %c0_i32_0 = arith.constant 0 : i32
    %c0_i32_1 = arith.constant 0 : i32
    return %c0_i32, %c0_i32_0 : i32, i32
  }
  func.func @transform_14(%arg0: i32) -> (i32, i32) {
    %c0_i32 = arith.constant 0 : i32
    %c0_i32_0 = arith.constant 0 : i32
    %c0_i32_1 = arith.constant 0 : i32
    return %c0_i32, %c0_i32_0 : i32, i32
  }
  func.func @transform_15(%arg0: i32) -> (i32, i32) {
    %c0_i32 = arith.constant 0 : i32
    %c0_i32_0 = arith.constant 0 : i32
    return %arg0, %c0_i32 : i32, i32
  }
}

</mosaic_0001>

<llo_original>
// kernel: tpu_custom_call.1
$region0: #{tpu_custom_call.1}
  #allocation0 [shape = 'u32[]', space=smem, size = 0x4, offset = 0x4, fixed_abs, tag = 'smem constant byte address 0x4 - core index']
  #allocation1 [shape = 'u32[144,128]{1,0:T(1,128)}', space=vmem, size = 0x12000, scoped, tag = 'internal scratch']
  %s0 = inlined_call_operand.hbm [shape: f32[10,2,2,10], index: 0, kind: input, shape index: {}]
  %s1 = inlined_call_operand.vmem [shape: f32[3,10,256], index: 1, kind: input, shape index: {}]
  %s2 = inlined_call_operand.hbm [shape: f32[1,256], index: 2, kind: input, shape index: {}]
  %s3 = inlined_call_operand.hbm [shape: f32[3,256,384], index: 3, kind: input, shape index: {}]
  %s4 = inlined_call_operand.hbm [shape: f32[1,384], index: 4, kind: input, shape index: {}]
  %s5 = inlined_call_operand.hbm [shape: f32[6,384,128], index: 5, kind: input, shape index: {}]
  %s6 = inlined_call_operand.hbm [shape: f32[1,128], index: 6, kind: input, shape index: {}]
  %s7 = inlined_call_operand.hbm [shape: f32[2,128,128], index: 7, kind: input, shape index: {}]
  %s8 = inlined_call_operand.hbm [shape: f32[1,128], index: 8, kind: input, shape index: {}]
  %s9 = inlined_call_operand.hbm [shape: f32[128,128], index: 9, kind: input, shape index: {}]
  %s10 = inlined_call_operand.hbm [shape: f32[1,128], index: 10, kind: input, shape index: {}]
  %s11 = inlined_call_operand.hbm [shape: f32[128,128], index: 11, kind: input, shape index: {}]
  %s12 = inlined_call_operand.hbm [shape: f32[1,128], index: 12, kind: input, shape index: {}]
  %s13 = inlined_call_operand.hbm [shape: f32[128,128], index: 13, kind: input, shape index: {}]
  %s14 = inlined_call_operand.hbm [shape: f32[1,128], index: 14, kind: input, shape index: {}]
  %s15 = inlined_call_operand.hbm [shape: f32[2,128], index: 15, kind: output, shape index: {}]
  %s16 = sld [smem:[#allocation0]]
  $region126: #{tpu_custom_call.1} parent=0
    _
  %s18 = ssub.s32 1, %s16
  %s19 = scalar_select 0, %s18, %s16
  $region1: #{tpu_custom_call.1} parent=0
    #allocation2 [shape = 'u8[20480]{0}', space=vmem, size = 0x5000, scoped, tag = 'input window, operand 0, single buffered']
    #allocation3 [shape = 's32[1]{0}', space=sflag, size = 0x4, scoped, tag = 'scoped memory for tpu_custom_call.1']
    #allocation4 [shape = 's32[1]{0}', space=sflag, size = 0x4, scoped, tag = 'scoped memory for tpu_custom_call.1']
    #allocation5 [shape = 'u8[1024]{0}', space=vmem, size = 0x400, scoped, tag = 'input window, operand 2, single buffered']
    #allocation6 [shape = 's32[1]{0}', space=sflag, size = 0x4, scoped, tag = 'scoped memory for tpu_custom_call.1']
    #allocation7 [shape = 'u8[1179648]{0}', space=vmem, size = 0x120000, scoped, tag = 'input window, operand 3, single buffered']
    #allocation8 [shape = 'u8[1536]{0}', space=vmem, size = 0x800, scoped, tag = 'input window, operand 4, single buffered']
    #allocation9 [shape = 's32[1]{0}', space=sflag, size = 0x4, scoped, tag = 'scoped memory for tpu_custom_call.1']
    #allocation10 [shape = 'u8[1179648]{0}', space=vmem, size = 0x120000, scoped, tag = 'input window, operand 5, single buffered']
    #allocation11 [shape = 'u8[512]{0}', space=vmem, size = 0x400, scoped, tag = 'input window, operand 6, single buffered']
    #allocation12 [shape = 's32[1]{0}', space=sflag, size = 0x4, scoped, tag = 'scoped memory for tpu_custom_call.1']
    #allocation13 [shape = 'u8[131072]{0}', space=vmem, size = 0x20000, scoped, tag = 'input window, operand 7, single buffered']
    #allocation14 [shape = 'u8[512]{0}', space=vmem, size = 0x400, scoped, tag = 'input window, operand 8, single buffered']
    #allocation15 [shape = 's32[1]{0}', space=sflag, size = 0x4, scoped, tag = 'scoped memory for tpu_custom_call.1']
    #allocation16 [shape = 'u8[65536]{0}', space=vmem, size = 0x10000, scoped, tag = 'input window, operand 9, single buffered']
    #allocation17 [shape = 'u8[512]{0}', space=vmem, size = 0x400, scoped, tag = 'input window, operand 10, single buffered']
    #allocation18 [shape = 's32[1]{0}', space=sflag, size = 0x4, scoped, tag = 'scoped memory for tpu_custom_call.1']
    #allocation19 [shape = 'u8[65536]{0}', space=vmem, size = 0x10000, scoped, tag = 'input window, operand 11, single buffered']
    #allocation20 [shape = 'u8[512]{0}', space=vmem, size = 0x400, scoped, tag = 'input window, operand 12, single buffered']
    #allocation21 [shape = 's32[1]{0}', space=sflag, size = 0x4, scoped, tag = 'scoped memory for tpu_custom_call.1']
    #allocation22 [shape = 'u8[65536]{0}', space=vmem, size = 0x10000, scoped, tag = 'input window, operand 13, single buffered']
    #allocation23 [shape = 'u8[512]{0}', space=vmem, size = 0x400, scoped, tag = 'input window, operand 14, single buffered']
    #allocation24 [shape = 's32[1]{0}', space=sflag, size = 0x4, scoped, tag = 'scoped memory for tpu_custom_call.1']
    #allocation25 [shape = 'u8[1024]{0}', space=vmem, size = 0x400, scoped, tag = 'output window, operand 0, single buffered']
    %20 = vsyncpa [#allocation3], 0
    %21 = vsyncpa [#allocation6], 0
    %22 = vsyncpa [#allocation9], 0
    %23 = vsyncpa [#allocation12], 0
    %24 = vsyncpa [#allocation15], 0
    %25 = vsyncpa [#allocation18], 0
    %26 = vsyncpa [#allocation21], 0
    %27 = vsyncpa [#allocation24], 0
    %28 = vsyncpa [#allocation4], 0
    // Predicated region
    $region2: #{tpu_custom_call.1} parent=1 // pred_check
      _
    $region3: #{tpu_custom_call.1} parent=1 // pred_check_branch
      %30 = sbr.rel (0) target = $region5
    $region4: #{tpu_custom_call.1} parent=1 // pred_region
      %s32 = ssub.s32 640, 640
      %33 = vsyncadd [#allocation3], %s32
      %s34 = sshll.u32 [#allocation2], 4
      %s35 = int_to_ptr.vmem [resolvable:$true] %s34
      %40 = dma.hbm_to_vmem [thread:$0]  %s0, 640, %s35, [#allocation3], 32, 32, 2
    $region5: #{tpu_custom_call.1} parent=1 // pred_fallthru
      _
    // Predicated region
    $region6: #{tpu_custom_call.1} parent=1 // pred_check
      _
    $region7: #{tpu_custom_call.1} parent=1 // pred_check_branch
      %42 = sbr.rel (0) target = $region9
    $region8: #{tpu_custom_call.1} parent=1 // pred_region
      _
    $region9: #{tpu_custom_call.1} parent=1 // pred_fallthru
      _
    // Predicated region
    $region10: #{tpu_custom_call.1} parent=1 // pred_check
      _
    $region11: #{tpu_custom_call.1} parent=1 // pred_check_branch
      %44 = sbr.rel (0) target = $region13
    $region12: #{tpu_custom_call.1} parent=1 // pred_region
      %s46 = ssub.s32 32, 32
      %47 = vsyncadd [#allocation6], %s46
      %s49 = sshll.u32 [#allocation5], 4
      %s50 = int_to_ptr.vmem [resolvable:$true] %s49
      %52 = dma.hbm_to_vmem [thread:$0]  %s2, 32, %s50, [#allocation6]
    $region13: #{tpu_custom_call.1} parent=1 // pred_fallthru
      _
    // Predicated region
    $region14: #{tpu_custom_call.1} parent=1 // pred_check
      _
    $region15: #{tpu_custom_call.1} parent=1 // pred_check_branch
      %54 = sbr.rel (0) target = $region17
    $region16: #{tpu_custom_call.1} parent=1 // pred_region
      %s56 = ssub.s32 36864, 36864
      %57 = vsyncadd [#allocation6], %s56
      %s58 = sshll.u32 [#allocation7], 4
      %s59 = int_to_ptr.vmem [resolvable:$true] %s58
      %64 = dma.hbm_to_vmem [thread:$0]  %s3, 36864, %s59, [#allocation6], 384, 384, 24
    $region17: #{tpu_custom_call.1} parent=1 // pred_fallthru
      _
    // Predicated region
    $region18: #{tpu_custom_call.1} parent=1 // pred_check
      _
    $region19: #{tpu_custom_call.1} parent=1 // pred_check_branch
      %66 = sbr.rel (0) target = $region21
    $region20: #{tpu_custom_call.1} parent=1 // pred_region
      %s68 = ssub.s32 48, 48
      %69 = vsyncadd [#allocation9], %s68
      %s71 = sshll.u32 [#allocation8], 4
      %s72 = int_to_ptr.vmem [resolvable:$true] %s71
      %74 = dma.hbm_to_vmem [thread:$0]  %s4, 48, %s72, [#allocation9]
    $region21: #{tpu_custom_call.1} parent=1 // pred_fallthru
      _
    // Predicated region
    $region22: #{tpu_custom_call.1} parent=1 // pred_check
      _
    $region23: #{tpu_custom_call.1} parent=1 // pred_check_branch
      %76 = sbr.rel (0) target = $region25
    $region24: #{tpu_custom_call.1} parent=1 // pred_region
      %s78 = ssub.s32 36864, 36864
      %79 = vsyncadd [#allocation9], %s78
      %s80 = sshll.u32 [#allocation10], 4
      %s81 = int_to_ptr.vmem [resolvable:$true] %s80
      %86 = dma.hbm_to_vmem [thread:$0]  %s5, 36864, %s81, [#allocation9], 128, 128, 8
    $region25: #{tpu_custom_call.1} parent=1 // pred_fallthru
      _
    // Predicated region
    $region26: #{tpu_custom_call.1} parent=1 // pred_check
      _
    $region27: #{tpu_custom_call.1} parent=1 // pred_check_branch
      %88 = sbr.rel (0) target = $region29
    $region28: #{tpu_custom_call.1} parent=1 // pred_region
      %s90 = ssub.s32 16, 16
      %91 = vsyncadd [#allocation12], %s90
      %s93 = sshll.u32 [#allocation11], 4
      %s94 = int_to_ptr.vmem [resolvable:$true] %s93
      %96 = dma.hbm_to_vmem [thread:$0]  %s6, 16, %s94, [#allocation12]
    $region29: #{tpu_custom_call.1} parent=1 // pred_fallthru
      _
    // Predicated region
    $region30: #{tpu_custom_call.1} parent=1 // pred_check
      _
    $region31: #{tpu_custom_call.1} parent=1 // pred_check_branch
      %98 = sbr.rel (0) target = $region33
    $region32: #{tpu_custom_call.1} parent=1 // pred_region
      %s100 = ssub.s32 4096, 4096
      %101 = vsyncadd [#allocation12], %s100
      %s102 = sshll.u32 [#allocation13], 4
      %s103 = int_to_ptr.vmem [resolvable:$true] %s102
      %108 = dma.hbm_to_vmem [thread:$0]  %s7, 4096, %s103, [#allocation12], 128, 128, 8
    $region33: #{tpu_custom_call.1} parent=1 // pred_fallthru
      _
    // Predicated region
    $region34: #{tpu_custom_call.1} parent=1 // pred_check
      _
    $region35: #{tpu_custom_call.1} parent=1 // pred_check_branch
      %110 = sbr.rel (0) target = $region37
    $region36: #{tpu_custom_call.1} parent=1 // pred_region
      %s112 = ssub.s32 16, 16
      %113 = vsyncadd [#allocation15], %s112
      %s115 = sshll.u32 [#allocation14], 4
      %s116 = int_to_ptr.vmem [resolvable:$true] %s115
      %118 = dma.hbm_to_vmem [thread:$0]  %s8, 16, %s116, [#allocation15]
    $region37: #{tpu_custom_call.1} parent=1 // pred_fallthru
      _
    // Predicated region
    $region38: #{tpu_custom_call.1} parent=1 // pred_check
      _
    $region39: #{tpu_custom_call.1} parent=1 // pred_check_branch
      %120 = sbr.rel (0) target = $region41
    $region40: #{tpu_custom_call.1} parent=1 // pred_region
      %s122 = ssub.s32 2048, 2048
      %123 = vsyncadd [#allocation15], %s122
      %s124 = sshll.u32 [#allocation16], 4
      %s125 = int_to_ptr.vmem [resolvable:$true] %s124
      %130 = dma.hbm_to_vmem [thread:$0]  %s9, 2048, %s125, [#allocation15], 128, 128, 8
    $region41: #{tpu_custom_call.1} parent=1 // pred_fallthru
      _
    // Predicated region
    $region42: #{tpu_custom_call.1} parent=1 // pred_check
      _
    $region43: #{tpu_custom_call.1} parent=1 // pred_check_branch
      %132 = sbr.rel (0) target = $region45
    $region44: #{tpu_custom_call.1} parent=1 // pred_region
      %s134 = ssub.s32 16, 16
      %135 = vsyncadd [#allocation18], %s134
      %s137 = sshll.u32 [#allocation17], 4
      %s138 = int_to_ptr.vmem [resolvable:$true] %s137
      %140 = dma.hbm_to_vmem [thread:$0]  %s10, 16, %s138, [#allocation18]
    $region45: #{tpu_custom_call.1} parent=1 // pred_fallthru
      _
    // Predicated region
    $region46: #{tpu_custom_call.1} parent=1 // pred_check
      _
    $region47: #{tpu_custom_call.1} parent=1 // pred_check_branch
      %142 = sbr.rel (0) target = $region49
    $region48: #{tpu_custom_call.1} parent=1 // pred_region
      %s144 = ssub.s32 2048, 2048
      %145 = vsyncadd [#allocation18], %s144
      %s146 = sshll.u32 [#allocation19], 4
      %s147 = int_to_ptr.vmem [resolvable:$true] %s146
      %152 = dma.hbm_to_vmem [thread:$0]  %s11, 2048, %s147, [#allocation18], 128, 128, 8
    $region49: #{tpu_custom_call.1} parent=1 // pred_fallthru
      _
    // Predicated region
    $region50: #{tpu_custom_call.1} parent=1 // pred_check
      _
    $region51: #{tpu_custom_call.1} parent=1 // pred_check_branch
      %154 = sbr.rel (0) target = $region53
    $region52: #{tpu_custom_call.1} parent=1 // pred_region
      %s156 = ssub.s32 16, 16
      %157 = vsyncadd [#allocation21], %s156
      %s159 = sshll.u32 [#allocation20], 4
      %s160 = int_to_ptr.vmem [resolvable:$true] %s159
      %162 = dma.hbm_to_vmem [thread:$0]  %s12, 16, %s160, [#allocation21]
    $region53: #{tpu_custom_call.1} parent=1 // pred_fallthru
      _
    // Predicated region
    $region54: #{tpu_custom_call.1} parent=1 // pred_check
      _
    $region55: #{tpu_custom_call.1} parent=1 // pred_check_branch
      %164 = sbr.rel (0) target = $region57
    $region56: #{tpu_custom_call.1} parent=1 // pred_region
      %s166 = ssub.s32 2048, 2048
      %167 = vsyncadd [#allocation21], %s166
      %s168 = sshll.u32 [#allocation22], 4
      %s169 = int_to_ptr.vmem [resolvable:$true] %s168
      %174 = dma.hbm_to_vmem [thread:$0]  %s13, 2048, %s169, [#allocation21], 128, 128, 8
    $region57: #{tpu_custom_call.1} parent=1 // pred_fallthru
      _
    // Predicated region
    $region58: #{tpu_custom_call.1} parent=1 // pred_check
      _
    $region59: #{tpu_custom_call.1} parent=1 // pred_check_branch
      %176 = sbr.rel (0) target = $region61
    $region60: #{tpu_custom_call.1} parent=1 // pred_region
      %s178 = ssub.s32 16, 16
      %179 = vsyncadd [#allocation24], %s178
      %s181 = sshll.u32 [#allocation23], 4
      %s182 = int_to_ptr.vmem [resolvable:$true] %s181
      %184 = dma.hbm_to_vmem [thread:$0]  %s14, 16, %s182, [#allocation24]
    $region61: #{tpu_custom_call.1} parent=1 // pred_fallthru
      _
    // Predicated region
    $region62: #{tpu_custom_call.1} parent=1 // pred_check
      _
    $region63: #{tpu_custom_call.1} parent=1 // pred_check_branch
      %186 = sbr.rel (0) target = $region65
    $region64: #{tpu_custom_call.1} parent=1 // pred_region
      %187 = dma.done [#allocation3], 640
    $region65: #{tpu_custom_call.1} parent=1 // pred_fallthru
      _
    // Predicated region
    $region66: #{tpu_custom_call.1} parent=1 // pred_check
      _
    $region67: #{tpu_custom_call.1} parent=1 // pred_check_branch
      %189 = sbr.rel (0) target = $region69
    $region68: #{tpu_custom_call.1} parent=1 // pred_region
      %190 = dma.done [#allocation6], 32
    $region69: #{tpu_custom_call.1} parent=1 // pred_fallthru
      _
    // Predicated region
    $region70: #{tpu_custom_call.1} parent=1 // pred_check
      _
    $region71: #{tpu_custom_call.1} parent=1 // pred_check_branch
      %192 = sbr.rel (0) target = $region73
    $region72: #{tpu_custom_call.1} parent=1 // pred_region
      %193 = dma.done [#allocation6], 36864
    $region73: #{tpu_custom_call.1} parent=1 // pred_fallthru
      _
    // Predicated region
    $region74: #{tpu_custom_call.1} parent=1 // pred_check
      _
    $region75: #{tpu_custom_call.1} parent=1 // pred_check_branch
      %195 = sbr.rel (0) target = $region77
    $region76: #{tpu_custom_call.1} parent=1 // pred_region
      %196 = dma.done [#allocation9], 48
    $region77: #{tpu_custom_call.1} parent=1 // pred_fallthru
      _
    // Predicated region
    $region78: #{tpu_custom_call.1} parent=1 // pred_check
      _
    $region79: #{tpu_custom_call.1} parent=1 // pred_check_branch
      %198 = sbr.rel (0) target = $region81
    $region80: #{tpu_custom_call.1} parent=1 // pred_region
      %199 = dma.done [#allocation9], 36864
    $region81: #{tpu_custom_call.1} parent=1 // pred_fallthru
      _
    // Predicated region
    $region82: #{tpu_custom_call.1} parent=1 // pred_check
      _
    $region83: #{tpu_custom_call.1} parent=1 // pred_check_branch
      %201 = sbr.rel (0) target = $region85
    $region84: #{tpu_custom_call.1} parent=1 // pred_region
      %202 = dma.done [#allocation12], 16
    $region85: #{tpu_custom_call.1} parent=1 // pred_fallthru
      _
    // Predicated region
    $region86: #{tpu_custom_call.1} parent=1 // pred_check
      _
    $region87: #{tpu_custom_call.1} parent=1 // pred_check_branch
      %204 = sbr.rel (0) target = $region89
    $region88: #{tpu_custom_call.1} parent=1 // pred_region
      %205 = dma.done [#allocation12], 4096
    $region89: #{tpu_custom_call.1} parent=1 // pred_fallthru
      _
    // Predicated region
    $region90: #{tpu_custom_call.1} parent=1 // pred_check
      _
    $region91: #{tpu_custom_call.1} parent=1 // pred_check_branch
      %207 = sbr.rel (0) target = $region93
    $region92: #{tpu_custom_call.1} parent=1 // pred_region
      %208 = dma.done [#allocation15], 16
    $region93: #{tpu_custom_call.1} parent=1 // pred_fallthru
      _
    // Predicated region
    $region94: #{tpu_custom_call.1} parent=1 // pred_check
      _
    $region95: #{tpu_custom_call.1} parent=1 // pred_check_branch
      %210 = sbr.rel (0) target = $region97
    $region96: #{tpu_custom_call.1} parent=1 // pred_region
      %211 = dma.done [#allocation15], 2048
    $region97: #{tpu_custom_call.1} parent=1 // pred_fallthru
      _
    // Predicated region
    $region98: #{tpu_custom_call.1} parent=1 // pred_check
      _
    $region99: #{tpu_custom_call.1} parent=1 // pred_check_branch
      %213 = sbr.rel (0) target = $region101
    $region100: #{tpu_custom_call.1} parent=1 // pred_region
      %214 = dma.done [#allocation18], 16
    $region101: #{tpu_custom_call.1} parent=1 // pred_fallthru
      _
    // Predicated region
    $region102: #{tpu_custom_call.1} parent=1 // pred_check
      _
    $region103: #{tpu_custom_call.1} parent=1 // pred_check_branch
      %216 = sbr.rel (0) target = $region105
    $region104: #{tpu_custom_call.1} parent=1 // pred_region
      %217 = dma.done [#allocation18], 2048
    $region105: #{tpu_custom_call.1} parent=1 // pred_fallthru
      _
    // Predicated region
    $region106: #{tpu_custom_call.1} parent=1 // pred_check
      _
    $region107: #{tpu_custom_call.1} parent=1 // pred_check_branch
      %219 = sbr.rel (0) target = $region109
    $region108: #{tpu_custom_call.1} parent=1 // pred_region
      %220 = dma.done [#allocation21], 16
    $region109: #{tpu_custom_call.1} parent=1 // pred_fallthru
      _
    // Predicated region
    $region110: #{tpu_custom_call.1} parent=1 // pred_check
      _
    $region111: #{tpu_custom_call.1} parent=1 // pred_check_branch
      %222 = sbr.rel (0) target = $region113
    $region112: #{tpu_custom_call.1} parent=1 // pred_region
      %223 = dma.done [#allocation21], 2048
    $region113: #{tpu_custom_call.1} parent=1 // pred_fallthru
      _
    // Predicated region
    $region114: #{tpu_custom_call.1} parent=1 // pred_check
      _
    $region115: #{tpu_custom_call.1} parent=1 // pred_check_branch
      %225 = sbr.rel (0) target = $region117
    $region116: #{tpu_custom_call.1} parent=1 // pred_region
      %226 = dma.done [#allocation24], 16
    $region117: #{tpu_custom_call.1} parent=1 // pred_fallthru
      _
    %v227 = vld [vmem:[#allocation2] sm:$0x3]
    %s228 = scalar_lea.vmem [#allocation2], 2
    %v229 = vld [vmem:[%s228] sm:$0x3]
    %v231 = vrot.slane %v229, 6
    %vm233 = vcmask 1041408
    %v234 = vsel %vm233, %v227, %v231
    %s235 = scalar_lea.vmem [#allocation2], 4
    %v236 = vld [vmem:[%s235] sm:$0x3]
    %s237 = scalar_lea.vmem [#allocation2], 6
    %v238 = vld [vmem:[%s237] sm:$0x3]
    %v240 = vrot.slane %v238, 6
    %v242 = vsel %vm233, %v236, %v240
    %s243 = scalar_lea.vmem [#allocation2], 8
    %v244 = vld [vmem:[%s243] sm:$0x3]
    %s245 = scalar_lea.vmem [#allocation2], 10
    %v246 = vld [vmem:[%s245] sm:$0x3]
    %v248 = vrot.slane %v246, 6
    %v250 = vsel %vm233, %v244, %v248
    %s251 = scalar_lea.vmem [#allocation2], 12
    %v252 = vld [vmem:[%s251] sm:$0x3]
    %s253 = scalar_lea.vmem [#allocation2], 14
    %v254 = vld [vmem:[%s253] sm:$0x3]
    %v256 = vrot.slane %v254, 6
    %v258 = vsel %vm233, %v252, %v256
    %s259 = scalar_lea.vmem [#allocation2], 16
    %v260 = vld [vmem:[%s259] sm:$0x3]
    %s261 = scalar_lea.vmem [#allocation2], 18
    %v262 = vld [vmem:[%s261] sm:$0x3]
    %v264 = vrot.slane %v262, 6
    %v266 = vsel %vm233, %v260, %v264
    %s267 = scalar_lea.vmem [#allocation2], 20
    %v268 = vld [vmem:[%s267] sm:$0x3]
    %s269 = scalar_lea.vmem [#allocation2], 22
    %v270 = vld [vmem:[%s269] sm:$0x3]
    %v272 = vrot.slane %v270, 6
    %v274 = vsel %vm233, %v268, %v272
    %s275 = scalar_lea.vmem [#allocation2], 24
    %v276 = vld [vmem:[%s275] sm:$0x3]
    %s277 = scalar_lea.vmem [#allocation2], 26
    %v278 = vld [vmem:[%s277] sm:$0x3]
    %v280 = vrot.slane %v278, 6
    %v282 = vsel %vm233, %v276, %v280
    %s283 = scalar_lea.vmem [#allocation2], 28
    %v284 = vld [vmem:[%s283] sm:$0x3]
    %s285 = scalar_lea.vmem [#allocation2], 30
    %v286 = vld [vmem:[%s285] sm:$0x3]
    %v288 = vrot.slane %v286, 6
    %v290 = vsel %vm233, %v284, %v288
    %s291 = scalar_lea.vmem [#allocation2], 32
    %v292 = vld [vmem:[%s291] sm:$0x3]
    %s293 = scalar_lea.vmem [#allocation2], 34
    %v294 = vld [vmem:[%s293] sm:$0x3]
    %v296 = vrot.slane %v294, 6
    %v298 = vsel %vm233, %v292, %v296
    %s299 = scalar_lea.vmem [#allocation2], 36
    %v300 = vld [vmem:[%s299] sm:$0x3]
    %s301 = scalar_lea.vmem [#allocation2], 38
    %v302 = vld [vmem:[%s301] sm:$0x3]
    %v304 = vrot.slane %v302, 6
    %v306 = vsel %vm233, %v300, %v304
    %v307 = vld [vmem:[%s1] sm:$0xff]
    %v308 = vld [vmem:[%s1 + $0x8] sm:$0xff]
    %v309 = vld [vmem:[%s1 + $0x10] sm:$0x3]
    %v310 = vld [vmem:[%s1 + $0x18] sm:$0x3]
    %s311 = scalar_lea.vmem %s1, 32
    %v312 = vld [vmem:[%s311] sm:$0xff]
    %v313 = vld [vmem:[%s311 + $0x8] sm:$0xff]
    %v314 = vld [vmem:[%s311 + $0x10] sm:$0x3]
    %v315 = vld [vmem:[%s311 + $0x18] sm:$0x3]
    %vm316 = vcmask 80896
    %v318 = vsel %vm316, %v242, 0
    %v321 = vsel %vm233, %v314, 0
    %v324 = vsel %vm233, %v315, 0
    %326 = vmatprep.subr.mxu0 0.0
    %327 = vmatpush1.msra.mxu0 0.0
    %328 = vmatprep.subr.mxu0 0.0
    %329 = vmatpush1.msra.mxu0 0.0
    %330 = vmatprep.subr.mxu0 0.0
    %331 = vmatpush1.msra.mxu0 0.0
    %332 = vmatprep.subr.mxu0 0.0
    %333 = vmatpush1.msra.mxu0 0.0
    %334 = vmatprep.subr.mxu0 0.0
    %335 = vmatpush1.msra.mxu0 0.0
    %336 = vmatprep.subr.mxu0 0.0
    %337 = vmatpush1.msra.mxu0 0.0
    %338 = vmatprep.subr.mxu0 0.0
    %339 = vmatpush1.msra.mxu0 0.0
    %340 = vmatprep.subr.mxu0 0.0
    %341 = vmatpush1.msra.mxu0 0.0
    %342 = vmatprep.subr.mxu0 0.0
    %343 = vmatpush1.msra.mxu0 0.0
    %344 = vmatprep.subr.mxu0 0.0
    %345 = vmatpush1.msra.mxu0 0.0
    %346 = vmatprep.subr.mxu0 0.0
    %347 = vmatpush1.msra.mxu0 0.0
    %348 = vmatprep.subr.mxu0 0.0
    %349 = vmatpush1.msra.mxu0 0.0
    %350 = vmatprep.subr.mxu0 0.0
    %351 = vmatpush1.msra.mxu0 0.0
    %352 = vmatprep.subr.mxu0 0.0
    %353 = vmatpush1.msra.mxu0 0.0
    %354 = vmatprep.subr.mxu0 %v324
    %355 = vmatpush1.msra.mxu0 %v321
    %356 = vmatprep.subr.mxu0 %v313
    %357 = vmatpush1.msra.mxu0 %v312
    %358 = vmatprep.subr.mxu0 0.0
    %359 = vmatpush2.msra.mxu0 0.0
    %360 = vmatprep.subr.mxu0 0.0
    %361 = vmatpush2.msra.mxu0 0.0
    %362 = vmatprep.subr.mxu0 0.0
    %363 = vmatpush2.msra.mxu0 0.0
    %364 = vmatprep.subr.mxu0 0.0
    %365 = vmatpush2.msra.mxu0 0.0
    %366 = vmatprep.subr.mxu0 0.0
    %367 = vmatpush2.msra.mxu0 0.0
    %368 = vmatprep.subr.mxu0 0.0
    %369 = vmatpush2.msra.mxu0 0.0
    %370 = vmatprep.subr.mxu0 0.0
    %371 = vmatpush2.msra.mxu0 0.0
    %372 = vmatprep.subr.mxu0 0.0
    %373 = vmatpush2.msra.mxu0 0.0
    %374 = vmatprep.subr.mxu0 0.0
    %375 = vmatpush2.msra.mxu0 0.0
    %376 = vmatprep.subr.mxu0 0.0
    %377 = vmatpush2.msra.mxu0 0.0
    %378 = vmatprep.subr.mxu0 0.0
    %379 = vmatpush2.msra.mxu0 0.0
    %380 = vmatprep.subr.mxu0 0.0
    %381 = vmatpush2.msra.mxu0 0.0
    %382 = vmatprep.subr.mxu0 0.0
    %383 = vmatpush2.msra.mxu0 0.0
    %384 = vmatprep.subr.mxu0 0.0
    %385 = vmatpush2.msra.mxu0 0.0
    %386 = vmatprep.subr.mxu0 0.0
    %387 = vmatpush2.msra.mxu0 0.0
    %388 = vmatprep.subr.mxu0 0.0
    %389 = vmatpush2.msra.mxu0 0.0
    %390 = vmatprep.mubr.f32.mxu0 0.0
    %391 = vmatmul.mubr.f32.gmra.mxu0 %v318
    %v392 = vpop.f32.mrf.mxu0
    %v393 = vadd.f32 0.0, %v392
    %v394 = vpop.f32.mrf.mxu0
    %v395 = vadd.f32 0.0, %v394
    %396 = vdwg.mxu0
    %v398 = vsel %vm316, %v234, 0
    %v401 = vsel %vm233, %v309, 0
    %v404 = vsel %vm233, %v310, 0
    %406 = vmatprep.subr.mxu0 0.0
    %407 = vmatpush1.msra.mxu0 0.0
    %408 = vmatprep.subr.mxu0 0.0
    %409 = vmatpush1.msra.mxu0 0.0
    %410 = vmatprep.subr.mxu0 0.0
    %411 = vmatpush1.msra.mxu0 0.0
    %412 = vmatprep.subr.mxu0 0.0
    %413 = vmatpush1.msra.mxu0 0.0
    %414 = vmatprep.subr.mxu0 0.0
    %415 = vmatpush1.msra.mxu0 0.0
    %416 = vmatprep.subr.mxu0 0.0
    %417 = vmatpush1.msra.mxu0 0.0
    %418 = vmatprep.subr.mxu0 0.0
    %419 = vmatpush1.msra.mxu0 0.0
    %420 = vmatprep.subr.mxu0 0.0
    %421 = vmatpush1.msra.mxu0 0.0
    %422 = vmatprep.subr.mxu0 0.0
    %423 = vmatpush1.msra.mxu0 0.0
    %424 = vmatprep.subr.mxu0 0.0
    %425 = vmatpush1.msra.mxu0 0.0
    %426 = vmatprep.subr.mxu0 0.0
    %427 = vmatpush1.msra.mxu0 0.0
    %428 = vmatprep.subr.mxu0 0.0
    %429 = vmatpush1.msra.mxu0 0.0
    %430 = vmatprep.subr.mxu0 0.0
    %431 = vmatpush1.msra.mxu0 0.0
    %432 = vmatprep.subr.mxu0 0.0
    %433 = vmatpush1.msra.mxu0 0.0
    %434 = vmatprep.subr.mxu0 %v404
    %435 = vmatpush1.msra.mxu0 %v401
    %436 = vmatprep.subr.mxu0 %v308
    %437 = vmatpush1.msra.mxu0 %v307
    %438 = vmatprep.subr.mxu0 0.0
    %439 = vmatpush2.msra.mxu0 0.0
    %440 = vmatprep.subr.mxu0 0.0
    %441 = vmatpush2.msra.mxu0 0.0
    %442 = vmatprep.subr.mxu0 0.0
    %443 = vmatpush2.msra.mxu0 0.0
    %444 = vmatprep.subr.mxu0 0.0
    %445 = vmatpush2.msra.mxu0 0.0
    %446 = vmatprep.subr.mxu0 0.0
    %447 = vmatpush2.msra.mxu0 0.0
    %448 = vmatprep.subr.mxu0 0.0
    %449 = vmatpush2.msra.mxu0 0.0
    %450 = vmatprep.subr.mxu0 0.0
    %451 = vmatpush2.msra.mxu0 0.0
    %452 = vmatprep.subr.mxu0 0.0
    %453 = vmatpush2.msra.mxu0 0.0
    %454 = vmatprep.subr.mxu0 0.0
    %455 = vmatpush2.msra.mxu0 0.0
    %456 = vmatprep.subr.mxu0 0.0
    %457 = vmatpush2.msra.mxu0 0.0
    %458 = vmatprep.subr.mxu0 0.0
    %459 = vmatpush2.msra.mxu0 0.0
    %460 = vmatprep.subr.mxu0 0.0
    %461 = vmatpush2.msra.mxu0 0.0
    %462 = vmatprep.subr.mxu0 0.0
    %463 = vmatpush2.msra.mxu0 0.0
    %464 = vmatprep.subr.mxu0 0.0
    %465 = vmatpush2.msra.mxu0 0.0
    %466 = vmatprep.subr.mxu0 0.0
    %467 = vmatpush2.msra.mxu0 0.0
    %468 = vmatprep.subr.mxu0 0.0
    %469 = vmatpush2.msra.mxu0 0.0
    %470 = vmatprep.mubr.f32.mxu0 0.0
    %471 = vmatmul.mubr.f32.gmra.mxu0 %v398
    %v472 = vpop.f32.mrf.mxu0
    %v473 = vadd.f32 %v393, %v472
    %v474 = vpop.f32.mrf.mxu0
    %v475 = vadd.f32 %v395, %v474
    %476 = vdwg.mxu0
    %s477 = scalar_lea.vmem %s1, 64
    %v478 = vld [vmem:[%s477] sm:$0xff]
    %v479 = vld [vmem:[%s477 + $0x8] sm:$0xff]
    %v480 = vld [vmem:[%s477 + $0x10] sm:$0x3]
    %v481 = vld [vmem:[%s477 + $0x18] sm:$0x3]
    %v483 = vsel %vm316, %v250, 0
    %v486 = vsel %vm233, %v480, 0
    %v489 = vsel %vm233, %v481, 0
    %491 = vmatprep.subr.mxu0 0.0
    %492 = vmatpush1.msra.mxu0 0.0
    %493 = vmatprep.subr.mxu0 0.0
    %494 = vmatpush1.msra.mxu0 0.0
    %495 = vmatprep.subr.mxu0 0.0
    %496 = vmatpush1.msra.mxu0 0.0
    %497 = vmatprep.subr.mxu0 0.0
    %498 = vmatpush1.msra.mxu0 0.0
    %499 = vmatprep.subr.mxu0 0.0
    %500 = vmatpush1.msra.mxu0 0.0
    %501 = vmatprep.subr.mxu0 0.0
    %502 = vmatpush1.msra.mxu0 0.0
    %503 = vmatprep.subr.mxu0 0.0
    %504 = vmatpush1.msra.mxu0 0.0
    %505 = vmatprep.subr.mxu0 0.0
    %506 = vmatpush1.msra.mxu0 0.0
    %507 = vmatprep.subr.mxu0 0.0
    %508 = vmatpush1.msra.mxu0 0.0
    %509 = vmatprep.subr.mxu0 0.0
    %510 = vmatpush1.msra.mxu0 0.0
    %511 = vmatprep.subr.mxu0 0.0
    %512 = vmatpush1.msra.mxu0 0.0
    %513 = vmatprep.subr.mxu0 0.0
    %514 = vmatpush1.msra.mxu0 0.0
    %515 = vmatprep.subr.mxu0 0.0
    %516 = vmatpush1.msra.mxu0 0.0
    %517 = vmatprep.subr.mxu0 0.0
    %518 = vmatpush1.msra.mxu0 0.0
    %519 = vmatprep.subr.mxu0 %v489
    %520 = vmatpush1.msra.mxu0 %v486
    %521 = vmatprep.subr.mxu0 %v479
    %522 = vmatpush1.msra.mxu0 %v478
    %523 = vmatprep.subr.mxu0 0.0
    %524 = vmatpush2.msra.mxu0 0.0
    %525 = vmatprep.subr.mxu0 0.0
    %526 = vmatpush2.msra.mxu0 0.0
    %527 = vmatprep.subr.mxu0 0.0
    %528 = vmatpush2.msra.mxu0 0.0
    %529 = vmatprep.subr.mxu0 0.0
    %530 = vmatpush2.msra.mxu0 0.0
    %531 = vmatprep.subr.mxu0 0.0
    %532 = vmatpush2.msra.mxu0 0.0
    %533 = vmatprep.subr.mxu0 0.0
    %534 = vmatpush2.msra.mxu0 0.0
    %535 = vmatprep.subr.mxu0 0.0
    %536 = vmatpush2.msra.mxu0 0.0
    %537 = vmatprep.subr.mxu0 0.0
    %538 = vmatpush2.msra.mxu0 0.0
    %539 = vmatprep.subr.mxu0 0.0
    %540 = vmatpush2.msra.mxu0 0.0
    %541 = vmatprep.subr.mxu0 0.0
    %542 = vmatpush2.msra.mxu0 0.0
    %543 = vmatprep.subr.mxu0 0.0
    %544 = vmatpush2.msra.mxu0 0.0
    %545 = vmatprep.subr.mxu0 0.0
    %546 = vmatpush2.msra.mxu0 0.0
    %547 = vmatprep.subr.mxu0 0.0
    %548 = vmatpush2.msra.mxu0 0.0
    %549 = vmatprep.subr.mxu0 0.0
    %550 = vmatpush2.msra.mxu0 0.0
    %551 = vmatprep.subr.mxu0 0.0
    %552 = vmatpush2.msra.mxu0 0.0
    %553 = vmatprep.subr.mxu0 0.0
    %554 = vmatpush2.msra.mxu0 0.0
    %555 = vmatprep.mubr.f32.mxu0 0.0
    %556 = vmatmul.mubr.f32.gmra.mxu0 %v483
    %v557 = vpop.f32.mrf.mxu0
    %v558 = vadd.f32 0.0, %v557
    %v559 = vpop.f32.mrf.mxu0
    %v560 = vadd.f32 0.0, %v559
    %561 = vdwg.mxu0
    %v562 = vadd.f32 %v473, %v558
    %v563 = vadd.f32 %v475, %v560
    %v564 = vld [vmem:[#allocation5] sm:$0x3]
    %v566 = vlaneseq
    %v567 = vshrl.u32 %v566, 7
    %v568 = vsub.s32 0, %v567
    %v569 = vrot.slane %v564, %v568
    %v570 = vlaneseq
    %v571 = vshrl.u32 %v570, 7
    %v572 = vsub.s32 1, %v571
    %v573 = vrot.slane %v564, %v572
    %v576 = vadd.f32 %v562, %v569
    %v577 = vadd.f32 %v563, %v573
    %v578 = vmax.f32 %v576, 0.0
    %v579 = vmax.f32 %v577, 0.0
    %580 = vmatprep.subr.mxu0 0.0
    %581 = vmatpush1.msra.mxu0 0.0
    %582 = vmatprep.subr.mxu0 0.0
    %583 = vmatpush1.msra.mxu0 0.0
    %584 = vmatprep.subr.mxu0 0.0
    %585 = vmatpush1.msra.mxu0 0.0
    %586 = vmatprep.subr.mxu0 0.0
    %587 = vmatpush1.msra.mxu0 0.0
    %588 = vmatprep.subr.mxu0 0.0
    %589 = vmatpush1.msra.mxu0 0.0
    %590 = vmatprep.subr.mxu0 0.0
    %591 = vmatpush1.msra.mxu0 0.0
    %592 = vmatprep.subr.mxu0 0.0
    %593 = vmatpush1.msra.mxu0 0.0
    %594 = vmatprep.subr.mxu0 0.0
    %595 = vmatpush1.msra.mxu0 0.0
    %596 = vmatprep.subr.mxu0 0.0
    %597 = vmatpush1.msra.mxu0 0.0
    %598 = vmatprep.subr.mxu0 0.0
    %599 = vmatpush1.msra.mxu0 0.0
    %600 = vmatprep.subr.mxu0 0.0
    %601 = vmatpush1.msra.mxu0 0.0
    %602 = vmatprep.subr.mxu0 0.0
    %603 = vmatpush1.msra.mxu0 0.0
    %604 = vmatprep.subr.mxu0 0.0
    %605 = vmatpush1.msra.mxu0 0.0
    %606 = vmatprep.subr.mxu0 0.0
    %607 = vmatpush1.msra.mxu0 0.0
    %608 = vmatprep.subr.mxu0 %v324
    %609 = vmatpush1.msra.mxu0 %v321
    %610 = vmatprep.subr.mxu0 %v313
    %611 = vmatpush1.msra.mxu0 %v312
    %612 = vmatprep.subr.mxu0 0.0
    %613 = vmatpush2.msra.mxu0 0.0
    %614 = vmatprep.subr.mxu0 0.0
    %615 = vmatpush2.msra.mxu0 0.0
    %616 = vmatprep.subr.mxu0 0.0
    %617 = vmatpush2.msra.mxu0 0.0
    %618 = vmatprep.subr.mxu0 0.0
    %619 = vmatpush2.msra.mxu0 0.0
    %620 = vmatprep.subr.mxu0 0.0
    %621 = vmatpush2.msra.mxu0 0.0
    %622 = vmatprep.subr.mxu0 0.0
    %623 = vmatpush2.msra.mxu0 0.0
    %624 = vmatprep.subr.mxu0 0.0
    %625 = vmatpush2.msra.mxu0 0.0
    %626 = vmatprep.subr.mxu0 0.0
    %627 = vmatpush2.msra.mxu0 0.0
    %628 = vmatprep.subr.mxu0 0.0
    %629 = vmatpush2.msra.mxu0 0.0
    %630 = vmatprep.subr.mxu0 0.0
    %631 = vmatpush2.msra.mxu0 0.0
    %632 = vmatprep.subr.mxu0 0.0
    %633 = vmatpush2.msra.mxu0 0.0
    %634 = vmatprep.subr.mxu0 0.0
    %635 = vmatpush2.msra.mxu0 0.0
    %636 = vmatprep.subr.mxu0 0.0
    %637 = vmatpush2.msra.mxu0 0.0
    %638 = vmatprep.subr.mxu0 0.0
    %639 = vmatpush2.msra.mxu0 0.0
    %640 = vmatprep.subr.mxu0 0.0
    %641 = vmatpush2.msra.mxu0 0.0
    %642 = vmatprep.subr.mxu0 0.0
    %643 = vmatpush2.msra.mxu0 0.0
    %644 = vmatprep.mubr.f32.mxu0 0.0
    %645 = vmatmul.mubr.f32.gmra.mxu0 %v483
    %v646 = vpop.f32.mrf.mxu0
    %v647 = vadd.f32 0.0, %v646
    %v648 = vpop.f32.mrf.mxu0
    %v649 = vadd.f32 0.0, %v648
    %650 = vdwg.mxu0
    %651 = vmatprep.subr.mxu0 0.0
    %652 = vmatpush1.msra.mxu0 0.0
    %653 = vmatprep.subr.mxu0 0.0
    %654 = vmatpush1.msra.mxu0 0.0
    %655 = vmatprep.subr.mxu0 0.0
    %656 = vmatpush1.msra.mxu0 0.0
    %657 = vmatprep.subr.mxu0 0.0
    %658 = vmatpush1.msra.mxu0 0.0
    %659 = vmatprep.subr.mxu0 0.0
    %660 = vmatpush1.msra.mxu0 0.0
    %661 = vmatprep.subr.mxu0 0.0
    %662 = vmatpush1.msra.mxu0 0.0
    %663 = vmatprep.subr.mxu0 0.0
    %664 = vmatpush1.msra.mxu0 0.0
    %665 = vmatprep.subr.mxu0 0.0
    %666 = vmatpush1.msra.mxu0 0.0
    %667 = vmatprep.subr.mxu0 0.0
    %668 = vmatpush1.msra.mxu0 0.0
    %669 = vmatprep.subr.mxu0 0.0
    %670 = vmatpush1.msra.mxu0 0.0
    %671 = vmatprep.subr.mxu0 0.0
    %672 = vmatpush1.msra.mxu0 0.0
    %673 = vmatprep.subr.mxu0 0.0
    %674 = vmatpush1.msra.mxu0 0.0
    %675 = vmatprep.subr.mxu0 0.0
    %676 = vmatpush1.msra.mxu0 0.0
    %677 = vmatprep.subr.mxu0 0.0
    %678 = vmatpush1.msra.mxu0 0.0
    %679 = vmatprep.subr.mxu0 %v404
    %680 = vmatpush1.msra.mxu0 %v401
    %681 = vmatprep.subr.mxu0 %v308
    %682 = vmatpush1.msra.mxu0 %v307
    %683 = vmatprep.subr.mxu0 0.0
    %684 = vmatpush2.msra.mxu0 0.0
    %685 = vmatprep.subr.mxu0 0.0
    %686 = vmatpush2.msra.mxu0 0.0
    %687 = vmatprep.subr.mxu0 0.0
    %688 = vmatpush2.msra.mxu0 0.0
    %689 = vmatprep.subr.mxu0 0.0
    %690 = vmatpush2.msra.mxu0 0.0
    %691 = vmatprep.subr.mxu0 0.0
    %692 = vmatpush2.msra.mxu0 0.0
    %693 = vmatprep.subr.mxu0 0.0
    %694 = vmatpush2.msra.mxu0 0.0
    %695 = vmatprep.subr.mxu0 0.0
    %696 = vmatpush2.msra.mxu0 0.0
    %697 = vmatprep.subr.mxu0 0.0
    %698 = vmatpush2.msra.mxu0 0.0
    %699 = vmatprep.subr.mxu0 0.0
    %700 = vmatpush2.msra.mxu0 0.0
    %701 = vmatprep.subr.mxu0 0.0
    %702 = vmatpush2.msra.mxu0 0.0
    %703 = vmatprep.subr.mxu0 0.0
    %704 = vmatpush2.msra.mxu0 0.0
    %705 = vmatprep.subr.mxu0 0.0
    %706 = vmatpush2.msra.mxu0 0.0
    %707 = vmatprep.subr.mxu0 0.0
    %708 = vmatpush2.msra.mxu0 0.0
    %709 = vmatprep.subr.mxu0 0.0
    %710 = vmatpush2.msra.mxu0 0.0
    %711 = vmatprep.subr.mxu0 0.0
    %712 = vmatpush2.msra.mxu0 0.0
    %713 = vmatprep.subr.mxu0 0.0
    %714 = vmatpush2.msra.mxu0 0.0
    %715 = vmatprep.mubr.f32.mxu0 0.0
    %716 = vmatmul.mubr.f32.gmra.mxu0 %v318
    %v717 = vpop.f32.mrf.mxu0
    %v718 = vadd.f32 %v647, %v717
    %v719 = vpop.f32.mrf.mxu0
    %v720 = vadd.f32 %v649, %v719
    %721 = vdwg.mxu0
    %v723 = vsel %vm316, %v258, 0
    %725 = vmatprep.subr.mxu0 0.0
    %726 = vmatpush1.msra.mxu0 0.0
    %727 = vmatprep.subr.mxu0 0.0
    %728 = vmatpush1.msra.mxu0 0.0
    %729 = vmatprep.subr.mxu0 0.0
    %730 = vmatpush1.msra.mxu0 0.0
    %731 = vmatprep.subr.mxu0 0.0
    %732 = vmatpush1.msra.mxu0 0.0
    %733 = vmatprep.subr.mxu0 0.0
    %734 = vmatpush1.msra.mxu0 0.0
    %735 = vmatprep.subr.mxu0 0.0
    %736 = vmatpush1.msra.mxu0 0.0
    %737 = vmatprep.subr.mxu0 0.0
    %738 = vmatpush1.msra.mxu0 0.0
    %739 = vmatprep.subr.mxu0 0.0
    %740 = vmatpush1.msra.mxu0 0.0
    %741 = vmatprep.subr.mxu0 0.0
    %742 = vmatpush1.msra.mxu0 0.0
    %743 = vmatprep.subr.mxu0 0.0
    %744 = vmatpush1.msra.mxu0 0.0
    %745 = vmatprep.subr.mxu0 0.0
    %746 = vmatpush1.msra.mxu0 0.0
    %747 = vmatprep.subr.mxu0 0.0
    %748 = vmatpush1.msra.mxu0 0.0
    %749 = vmatprep.subr.mxu0 0.0
    %750 = vmatpush1.msra.mxu0 0.0
    %751 = vmatprep.subr.mxu0 0.0
    %752 = vmatpush1.msra.mxu0 0.0
    %753 = vmatprep.subr.mxu0 %v489
    %754 = vmatpush1.msra.mxu0 %v486
    %755 = vmatprep.subr.mxu0 %v479
    %756 = vmatpush1.msra.mxu0 %v478
    %757 = vmatprep.subr.mxu0 0.0
    %758 = vmatpush2.msra.mxu0 0.0
    %759 = vmatprep.subr.mxu0 0.0
    %760 = vmatpush2.msra.mxu0 0.0
    %761 = vmatprep.subr.mxu0 0.0
    %762 = vmatpush2.msra.mxu0 0.0
    %763 = vmatprep.subr.mxu0 0.0
    %764 = vmatpush2.msra.mxu0 0.0
    %765 = vmatprep.subr.mxu0 0.0
    %766 = vmatpush2.msra.mxu0 0.0
    %767 = vmatprep.subr.mxu0 0.0
    %768 = vmatpush2.msra.mxu0 0.0
    %769 = vmatprep.subr.mxu0 0.0
    %770 = vmatpush2.msra.mxu0 0.0
    %771 = vmatprep.subr.mxu0 0.0
    %772 = vmatpush2.msra.mxu0 0.0
    %773 = vmatprep.subr.mxu0 0.0
    %774 = vmatpush2.msra.mxu0 0.0
    %775 = vmatprep.subr.mxu0 0.0
    %776 = vmatpush2.msra.mxu0 0.0
    %777 = vmatprep.subr.mxu0 0.0
    %778 = vmatpush2.msra.mxu0 0.0
    %779 = vmatprep.subr.mxu0 0.0
    %780 = vmatpush2.msra.mxu0 0.0
    %781 = vmatprep.subr.mxu0 0.0
    %782 = vmatpush2.msra.mxu0 0.0
    %783 = vmatprep.subr.mxu0 0.0
    %784 = vmatpush2.msra.mxu0 0.0
    %785 = vmatprep.subr.mxu0 0.0
    %786 = vmatpush2.msra.mxu0 0.0
    %787 = vmatprep.subr.mxu0 0.0
    %788 = vmatpush2.msra.mxu0 0.0
    %789 = vmatprep.mubr.f32.mxu0 0.0
    %790 = vmatmul.mubr.f32.gmra.mxu0 %v723
    %v791 = vpop.f32.mrf.mxu0
    %v792 = vadd.f32 0.0, %v791
    %v793 = vpop.f32.mrf.mxu0
    %v794 = vadd.f32 0.0, %v793
    %795 = vdwg.mxu0
    %v796 = vadd.f32 %v718, %v792
    %v797 = vadd.f32 %v720, %v794
    %v798 = vadd.f32 %v796, %v569
    %v799 = vadd.f32 %v797, %v573
    %v800 = vmax.f32 %v798, 0.0
    %v801 = vmax.f32 %v799, 0.0
    %802 = vmatprep.subr.mxu0 0.0
    %803 = vmatpush1.msra.mxu0 0.0
    %804 = vmatprep.subr.mxu0 0.0
    %805 = vmatpush1.msra.mxu0 0.0
    %806 = vmatprep.subr.mxu0 0.0
    %807 = vmatpush1.msra.mxu0 0.0
    %808 = vmatprep.subr.mxu0 0.0
    %809 = vmatpush1.msra.mxu0 0.0
    %810 = vmatprep.subr.mxu0 0.0
    %811 = vmatpush1.msra.mxu0 0.0
    %812 = vmatprep.subr.mxu0 0.0
    %813 = vmatpush1.msra.mxu0 0.0
    %814 = vmatprep.subr.mxu0 0.0
    %815 = vmatpush1.msra.mxu0 0.0
    %816 = vmatprep.subr.mxu0 0.0
    %817 = vmatpush1.msra.mxu0 0.0
    %818 = vmatprep.subr.mxu0 0.0
    %819 = vmatpush1.msra.mxu0 0.0
    %820 = vmatprep.subr.mxu0 0.0
    %821 = vmatpush1.msra.mxu0 0.0
    %822 = vmatprep.subr.mxu0 0.0
    %823 = vmatpush1.msra.mxu0 0.0
    %824 = vmatprep.subr.mxu0 0.0
    %825 = vmatpush1.msra.mxu0 0.0
    %826 = vmatprep.subr.mxu0 0.0
    %827 = vmatpush1.msra.mxu0 0.0
    %828 = vmatprep.subr.mxu0 0.0
    %829 = vmatpush1.msra.mxu0 0.0
    %830 = vmatprep.subr.mxu0 %v324
    %831 = vmatpush1.msra.mxu0 %v321
    %832 = vmatprep.subr.mxu0 %v313
    %833 = vmatpush1.msra.mxu0 %v312
    %834 = vmatprep.subr.mxu0 0.0
    %835 = vmatpush2.msra.mxu0 0.0
    %836 = vmatprep.subr.mxu0 0.0
    %837 = vmatpush2.msra.mxu0 0.0
    %838 = vmatprep.subr.mxu0 0.0
    %839 = vmatpush2.msra.mxu0 0.0
    %840 = vmatprep.subr.mxu0 0.0
    %841 = vmatpush2.msra.mxu0 0.0
    %842 = vmatprep.subr.mxu0 0.0
    %843 = vmatpush2.msra.mxu0 0.0
    %844 = vmatprep.subr.mxu0 0.0
    %845 = vmatpush2.msra.mxu0 0.0
    %846 = vmatprep.subr.mxu0 0.0
    %847 = vmatpush2.msra.mxu0 0.0
    %848 = vmatprep.subr.mxu0 0.0
    %849 = vmatpush2.msra.mxu0 0.0
    %850 = vmatprep.subr.mxu0 0.0
    %851 = vmatpush2.msra.mxu0 0.0
    %852 = vmatprep.subr.mxu0 0.0
    %853 = vmatpush2.msra.mxu0 0.0
    %854 = vmatprep.subr.mxu0 0.0
    %855 = vmatpush2.msra.mxu0 0.0
    %856 = vmatprep.subr.mxu0 0.0
    %857 = vmatpush2.msra.mxu0 0.0
    %858 = vmatprep.subr.mxu0 0.0
    %859 = vmatpush2.msra.mxu0 0.0
    %860 = vmatprep.subr.mxu0 0.0
    %861 = vmatpush2.msra.mxu0 0.0
    %862 = vmatprep.subr.mxu0 0.0
    %863 = vmatpush2.msra.mxu0 0.0
    %864 = vmatprep.subr.mxu0 0.0
    %865 = vmatpush2.msra.mxu0 0.0
    %866 = vmatprep.mubr.f32.mxu0 0.0
    %867 = vmatmul.mubr.f32.gmra.mxu0 %v723
    %v868 = vpop.f32.mrf.mxu0
    %v869 = vadd.f32 0.0, %v868
    %v870 = vpop.f32.mrf.mxu0
    %v871 = vadd.f32 0.0, %v870
    %872 = vdwg.mxu0
    %873 = vmatprep.subr.mxu0 0.0
    %874 = vmatpush1.msra.mxu0 0.0
    %875 = vmatprep.subr.mxu0 0.0
    %876 = vmatpush1.msra.mxu0 0.0
    %877 = vmatprep.subr.mxu0 0.0
    %878 = vmatpush1.msra.mxu0 0.0
    %879 = vmatprep.subr.mxu0 0.0
    %880 = vmatpush1.msra.mxu0 0.0
    %881 = vmatprep.subr.mxu0 0.0
    %882 = vmatpush1.msra.mxu0 0.0
    %883 = vmatprep.subr.mxu0 0.0
    %884 = vmatpush1.msra.mxu0 0.0
    %885 = vmatprep.subr.mxu0 0.0
    %886 = vmatpush1.msra.mxu0 0.0
    %887 = vmatprep.subr.mxu0 0.0
    %888 = vmatpush1.msra.mxu0 0.0
    %889 = vmatprep.subr.mxu0 0.0
    %890 = vmatpush1.msra.mxu0 0.0
    %891 = vmatprep.subr.mxu0 0.0
    %892 = vmatpush1.msra.mxu0 0.0
    %893 = vmatprep.subr.mxu0 0.0
    %894 = vmatpush1.msra.mxu0 0.0
    %895 = vmatprep.subr.mxu0 0.0
    %896 = vmatpush1.msra.mxu0 0.0
    %897 = vmatprep.subr.mxu0 0.0
    %898 = vmatpush1.msra.mxu0 0.0
    %899 = vmatprep.subr.mxu0 0.0
    %900 = vmatpush1.msra.mxu0 0.0
    %901 = vmatprep.subr.mxu0 %v404
    %902 = vmatpush1.msra.mxu0 %v401
    %903 = vmatprep.subr.mxu0 %v308
    %904 = vmatpush1.msra.mxu0 %v307
    %905 = vmatprep.subr.mxu0 0.0
    %906 = vmatpush2.msra.mxu0 0.0
    %907 = vmatprep.subr.mxu0 0.0
    %908 = vmatpush2.msra.mxu0 0.0
    %909 = vmatprep.subr.mxu0 0.0
    %910 = vmatpush2.msra.mxu0 0.0
    %911 = vmatprep.subr.mxu0 0.0
    %912 = vmatpush2.msra.mxu0 0.0
    %913 = vmatprep.subr.mxu0 0.0
    %914 = vmatpush2.msra.mxu0 0.0
    %915 = vmatprep.subr.mxu0 0.0
    %916 = vmatpush2.msra.mxu0 0.0
    %917 = vmatprep.subr.mxu0 0.0
    %918 = vmatpush2.msra.mxu0 0.0
    %919 = vmatprep.subr.mxu0 0.0
    %920 = vmatpush2.msra.mxu0 0.0
    %921 = vmatprep.subr.mxu0 0.0
    %922 = vmatpush2.msra.mxu0 0.0
    %923 = vmatprep.subr.mxu0 0.0
    %924 = vmatpush2.msra.mxu0 0.0
    %925 = vmatprep.subr.mxu0 0.0
    %926 = vmatpush2.msra.mxu0 0.0
    %927 = vmatprep.subr.mxu0 0.0
    %928 = vmatpush2.msra.mxu0 0.0
    %929 = vmatprep.subr.mxu0 0.0
    %930 = vmatpush2.msra.mxu0 0.0
    %931 = vmatprep.subr.mxu0 0.0
    %932 = vmatpush2.msra.mxu0 0.0
    %933 = vmatprep.subr.mxu0 0.0
    %934 = vmatpush2.msra.mxu0 0.0
    %935 = vmatprep.subr.mxu0 0.0
    %936 = vmatpush2.msra.mxu0 0.0
    %937 = vmatprep.mubr.f32.mxu0 0.0
    %938 = vmatmul.mubr.f32.gmra.mxu0 %v483
    %v939 = vpop.f32.mrf.mxu0
    %v940 = vadd.f32 %v869, %v939
    %v941 = vpop.f32.mrf.mxu0
    %v942 = vadd.f32 %v871, %v941
    %943 = vdwg.mxu0
    %v945 = vsel %vm316, %v266, 0
    %947 = vmatprep.subr.mxu0 0.0
    %948 = vmatpush1.msra.mxu0 0.0
    %949 = vmatprep.subr.mxu0 0.0
    %950 = vmatpush1.msra.mxu0 0.0
    %951 = vmatprep.subr.mxu0 0.0
    %952 = vmatpush1.msra.mxu0 0.0
    %953 = vmatprep.subr.mxu0 0.0
    %954 = vmatpush1.msra.mxu0 0.0
    %955 = vmatprep.subr.mxu0 0.0
    %956 = vmatpush1.msra.mxu0 0.0
    %957 = vmatprep.subr.mxu0 0.0
    %958 = vmatpush1.msra.mxu0 0.0
    %959 = vmatprep.subr.mxu0 0.0
    %960 = vmatpush1.msra.mxu0 0.0
    %961 = vmatprep.subr.mxu0 0.0
    %962 = vmatpush1.msra.mxu0 0.0
    %963 = vmatprep.subr.mxu0 0.0
    %964 = vmatpush1.msra.mxu0 0.0
    %965 = vmatprep.subr.mxu0 0.0
    %966 = vmatpush1.msra.mxu0 0.0
    %967 = vmatprep.subr.mxu0 0.0
    %968 = vmatpush1.msra.mxu0 0.0
    %969 = vmatprep.subr.mxu0 0.0
    %970 = vmatpush1.msra.mxu0 0.0
    %971 = vmatprep.subr.mxu0 0.0
    %972 = vmatpush1.msra.mxu0 0.0
    %973 = vmatprep.subr.mxu0 0.0
    %974 = vmatpush1.msra.mxu0 0.0
    %975 = vmatprep.subr.mxu0 %v489
    %976 = vmatpush1.msra.mxu0 %v486
    %977 = vmatprep.subr.mxu0 %v479
    %978 = vmatpush1.msra.mxu0 %v478
    %979 = vmatprep.subr.mxu0 0.0
    %980 = vmatpush2.msra.mxu0 0.0
    %981 = vmatprep.subr.mxu0 0.0
    %982 = vmatpush2.msra.mxu0 0.0
    %983 = vmatprep.subr.mxu0 0.0
    %984 = vmatpush2.msra.mxu0 0.0
    %985 = vmatprep.subr.mxu0 0.0
    %986 = vmatpush2.msra.mxu0 0.0
    %987 = vmatprep.subr.mxu0 0.0
    %988 = vmatpush2.msra.mxu0 0.0
    %989 = vmatprep.subr.mxu0 0.0
    %990 = vmatpush2.msra.mxu0 0.0
    %991 = vmatprep.subr.mxu0 0.0
    %992 = vmatpush2.msra.mxu0 0.0
    %993 = vmatprep.subr.mxu0 0.0
    %994 = vmatpush2.msra.mxu0 0.0
    %995 = vmatprep.subr.mxu0 0.0
    %996 = vmatpush2.msra.mxu0 0.0
    %997 = vmatprep.subr.mxu0 0.0
    %998 = vmatpush2.msra.mxu0 0.0
    %999 = vmatprep.subr.mxu0 0.0
    %1000 = vmatpush2.msra.mxu0 0.0
    %1001 = vmatprep.subr.mxu0 0.0
    %1002 = vmatpush2.msra.mxu0 0.0
    %1003 = vmatprep.subr.mxu0 0.0
    %1004 = vmatpush2.msra.mxu0 0.0
    %1005 = vmatprep.subr.mxu0 0.0
    %1006 = vmatpush2.msra.mxu0 0.0
    %1007 = vmatprep.subr.mxu0 0.0
    %1008 = vmatpush2.msra.mxu0 0.0
    %1009 = vmatprep.subr.mxu0 0.0
    %1010 = vmatpush2.msra.mxu0 0.0
    %1011 = vmatprep.mubr.f32.mxu0 0.0
    %1012 = vmatmul.mubr.f32.gmra.mxu0 %v945
    %v1013 = vpop.f32.mrf.mxu0
    %v1014 = vadd.f32 0.0, %v1013
    %v1015 = vpop.f32.mrf.mxu0
    %v1016 = vadd.f32 0.0, %v1015
    %1017 = vdwg.mxu0
    %v1018 = vadd.f32 %v940, %v1014
    %v1019 = vadd.f32 %v942, %v1016
    %v1020 = vadd.f32 %v1018, %v569
    %v1021 = vadd.f32 %v1019, %v573
    %v1022 = vmax.f32 %v1020, 0.0
    %v1023 = vmax.f32 %v1021, 0.0
    %1024 = vmatprep.subr.mxu0 0.0
    %1025 = vmatpush1.msra.mxu0 0.0
    %1026 = vmatprep.subr.mxu0 0.0
    %1027 = vmatpush1.msra.mxu0 0.0
    %1028 = vmatprep.subr.mxu0 0.0
    %1029 = vmatpush1.msra.mxu0 0.0
    %1030 = vmatprep.subr.mxu0 0.0
    %1031 = vmatpush1.msra.mxu0 0.0
    %1032 = vmatprep.subr.mxu0 0.0
    %1033 = vmatpush1.msra.mxu0 0.0
    %1034 = vmatprep.subr.mxu0 0.0
    %1035 = vmatpush1.msra.mxu0 0.0
    %1036 = vmatprep.subr.mxu0 0.0
    %1037 = vmatpush1.msra.mxu0 0.0
    %1038 = vmatprep.subr.mxu0 0.0
    %1039 = vmatpush1.msra.mxu0 0.0
    %1040 = vmatprep.subr.mxu0 0.0
    %1041 = vmatpush1.msra.mxu0 0.0
    %1042 = vmatprep.subr.mxu0 0.0
    %1043 = vmatpush1.msra.mxu0 0.0
    %1044 = vmatprep.subr.mxu0 0.0
    %1045 = vmatpush1.msra.mxu0 0.0
    %1046 = vmatprep.subr.mxu0 0.0
    %1047 = vmatpush1.msra.mxu0 0.0
    %1048 = vmatprep.subr.mxu0 0.0
    %1049 = vmatpush1.msra.mxu0 0.0
    %1050 = vmatprep.subr.mxu0 0.0
    %1051 = vmatpush1.msra.mxu0 0.0
    %1052 = vmatprep.subr.mxu0 %v324
    %1053 = vmatpush1.msra.mxu0 %v321
    %1054 = vmatprep.subr.mxu0 %v313
    %1055 = vmatpush1.msra.mxu0 %v312
    %1056 = vmatprep.subr.mxu0 0.0
    %1057 = vmatpush2.msra.mxu0 0.0
    %1058 = vmatprep.subr.mxu0 0.0
    %1059 = vmatpush2.msra.mxu0 0.0
    %1060 = vmatprep.subr.mxu0 0.0
    %1061 = vmatpush2.msra.mxu0 0.0
    %1062 = vmatprep.subr.mxu0 0.0
    %1063 = vmatpush2.msra.mxu0 0.0
    %1064 = vmatprep.subr.mxu0 0.0
    %1065 = vmatpush2.msra.mxu0 0.0
    %1066 = vmatprep.subr.mxu0 0.0
    %1067 = vmatpush2.msra.mxu0 0.0
    %1068 = vmatprep.subr.mxu0 0.0
    %1069 = vmatpush2.msra.mxu0 0.0
    %1070 = vmatprep.subr.mxu0 0.0
    %1071 = vmatpush2.msra.mxu0 0.0
    %1072 = vmatprep.subr.mxu0 0.0
    %1073 = vmatpush2.msra.mxu0 0.0
    %1074 = vmatprep.subr.mxu0 0.0
    %1075 = vmatpush2.msra.mxu0 0.0
    %1076 = vmatprep.subr.mxu0 0.0
    %1077 = vmatpush2.msra.mxu0 0.0
    %1078 = vmatprep.subr.mxu0 0.0
    %1079 = vmatpush2.msra.mxu0 0.0
    %1080 = vmatprep.subr.mxu0 0.0
    %1081 = vmatpush2.msra.mxu0 0.0
    %1082 = vmatprep.subr.mxu0 0.0
    %1083 = vmatpush2.msra.mxu0 0.0
    %1084 = vmatprep.subr.mxu0 0.0
    %1085 = vmatpush2.msra.mxu0 0.0
    %1086 = vmatprep.subr.mxu0 0.0
    %1087 = vmatpush2.msra.mxu0 0.0
    %1088 = vmatprep.mubr.f32.mxu0 0.0
    %1089 = vmatmul.mubr.f32.gmra.mxu0 %v945
    %v1090 = vpop.f32.mrf.mxu0
    %v1091 = vadd.f32 0.0, %v1090
    %v1092 = vpop.f32.mrf.mxu0
    %v1093 = vadd.f32 0.0, %v1092
    %1094 = vdwg.mxu0
    %1095 = vmatprep.subr.mxu0 0.0
    %1096 = vmatpush1.msra.mxu0 0.0
    %1097 = vmatprep.subr.mxu0 0.0
    %1098 = vmatpush1.msra.mxu0 0.0
    %1099 = vmatprep.subr.mxu0 0.0
    %1100 = vmatpush1.msra.mxu0 0.0
    %1101 = vmatprep.subr.mxu0 0.0
    %1102 = vmatpush1.msra.mxu0 0.0
    %1103 = vmatprep.subr.mxu0 0.0
    %1104 = vmatpush1.msra.mxu0 0.0
    %1105 = vmatprep.subr.mxu0 0.0
    %1106 = vmatpush1.msra.mxu0 0.0
    %1107 = vmatprep.subr.mxu0 0.0
    %1108 = vmatpush1.msra.mxu0 0.0
    %1109 = vmatprep.subr.mxu0 0.0
    %1110 = vmatpush1.msra.mxu0 0.0
    %1111 = vmatprep.subr.mxu0 0.0
    %1112 = vmatpush1.msra.mxu0 0.0
    %1113 = vmatprep.subr.mxu0 0.0
    %1114 = vmatpush1.msra.mxu0 0.0
    %1115 = vmatprep.subr.mxu0 0.0
    %1116 = vmatpush1.msra.mxu0 0.0
    %1117 = vmatprep.subr.mxu0 0.0
    %1118 = vmatpush1.msra.mxu0 0.0
    %1119 = vmatprep.subr.mxu0 0.0
    %1120 = vmatpush1.msra.mxu0 0.0
    %1121 = vmatprep.subr.mxu0 0.0
    %1122 = vmatpush1.msra.mxu0 0.0
    %1123 = vmatprep.subr.mxu0 %v404
    %1124 = vmatpush1.msra.mxu0 %v401
    %1125 = vmatprep.subr.mxu0 %v308
    %1126 = vmatpush1.msra.mxu0 %v307
    %1127 = vmatprep.subr.mxu0 0.0
    %1128 = vmatpush2.msra.mxu0 0.0
    %1129 = vmatprep.subr.mxu0 0.0
    %1130 = vmatpush2.msra.mxu0 0.0
    %1131 = vmatprep.subr.mxu0 0.0
    %1132 = vmatpush2.msra.mxu0 0.0
    %1133 = vmatprep.subr.mxu0 0.0
    %1134 = vmatpush2.msra.mxu0 0.0
    %1135 = vmatprep.subr.mxu0 0.0
    %1136 = vmatpush2.msra.mxu0 0.0
    %1137 = vmatprep.subr.mxu0 0.0
    %1138 = vmatpush2.msra.mxu0 0.0
    %1139 = vmatprep.subr.mxu0 0.0
    %1140 = vmatpush2.msra.mxu0 0.0
    %1141 = vmatprep.subr.mxu0 0.0
    %1142 = vmatpush2.msra.mxu0 0.0
    %1143 = vmatprep.subr.mxu0 0.0
    %1144 = vmatpush2.msra.mxu0 0.0
    %1145 = vmatprep.subr.mxu0 0.0
    %1146 = vmatpush2.msra.mxu0 0.0
    %1147 = vmatprep.subr.mxu0 0.0
    %1148 = vmatpush2.msra.mxu0 0.0
    %1149 = vmatprep.subr.mxu0 0.0
    %1150 = vmatpush2.msra.mxu0 0.0
    %1151 = vmatprep.subr.mxu0 0.0
    %1152 = vmatpush2.msra.mxu0 0.0
    %1153 = vmatprep.subr.mxu0 0.0
    %1154 = vmatpush2.msra.mxu0 0.0
    %1155 = vmatprep.subr.mxu0 0.0
    %1156 = vmatpush2.msra.mxu0 0.0
    %1157 = vmatprep.subr.mxu0 0.0
    %1158 = vmatpush2.msra.mxu0 0.0
    %1159 = vmatprep.mubr.f32.mxu0 0.0
    %1160 = vmatmul.mubr.f32.gmra.mxu0 %v723
    %v1161 = vpop.f32.mrf.mxu0
    %v1162 = vadd.f32 %v1091, %v1161
    %v1163 = vpop.f32.mrf.mxu0
    %v1164 = vadd.f32 %v1093, %v1163
    %1165 = vdwg.mxu0
    %v1167 = vsel %vm316, %v274, 0
    %1169 = vmatprep.subr.mxu0 0.0
    %1170 = vmatpush1.msra.mxu0 0.0
    %1171 = vmatprep.subr.mxu0 0.0
    %1172 = vmatpush1.msra.mxu0 0.0
    %1173 = vmatprep.subr.mxu0 0.0
    %1174 = vmatpush1.msra.mxu0 0.0
    %1175 = vmatprep.subr.mxu0 0.0
    %1176 = vmatpush1.msra.mxu0 0.0
    %1177 = vmatprep.subr.mxu0 0.0
    %1178 = vmatpush1.msra.mxu0 0.0
    %1179 = vmatprep.subr.mxu0 0.0
    %1180 = vmatpush1.msra.mxu0 0.0
    %1181 = vmatprep.subr.mxu0 0.0
    %1182 = vmatpush1.msra.mxu0 0.0
    %1183 = vmatprep.subr.mxu0 0.0
    %1184 = vmatpush1.msra.mxu0 0.0
    %1185 = vmatprep.subr.mxu0 0.0
    %1186 = vmatpush1.msra.mxu0 0.0
    %1187 = vmatprep.subr.mxu0 0.0
    %1188 = vmatpush1.msra.mxu0 0.0
    %1189 = vmatprep.subr.mxu0 0.0
    %1190 = vmatpush1.msra.mxu0 0.0
    %1191 = vmatprep.subr.mxu0 0.0
    %1192 = vmatpush1.msra.mxu0 0.0
    %1193 = vmatprep.subr.mxu0 0.0
    %1194 = vmatpush1.msra.mxu0 0.0
    %1195 = vmatprep.subr.mxu0 0.0
    %1196 = vmatpush1.msra.mxu0 0.0
    %1197 = vmatprep.subr.mxu0 %v489
    %1198 = vmatpush1.msra.mxu0 %v486
    %1199 = vmatprep.subr.mxu0 %v479
    %1200 = vmatpush1.msra.mxu0 %v478
    %1201 = vmatprep.subr.mxu0 0.0
    %1202 = vmatpush2.msra.mxu0 0.0
    %1203 = vmatprep.subr.mxu0 0.0
    %1204 = vmatpush2.msra.mxu0 0.0
    %1205 = vmatprep.subr.mxu0 0.0
    %1206 = vmatpush2.msra.mxu0 0.0
    %1207 = vmatprep.subr.mxu0 0.0
    %1208 = vmatpush2.msra.mxu0 0.0
    %1209 = vmatprep.subr.mxu0 0.0
    %1210 = vmatpush2.msra.mxu0 0.0
    %1211 = vmatprep.subr.mxu0 0.0
    %1212 = vmatpush2.msra.mxu0 0.0
    %1213 = vmatprep.subr.mxu0 0.0
    %1214 = vmatpush2.msra.mxu0 0.0
    %1215 = vmatprep.subr.mxu0 0.0
    %1216 = vmatpush2.msra.mxu0 0.0
    %1217 = vmatprep.subr.mxu0 0.0
    %1218 = vmatpush2.msra.mxu0 0.0
    %1219 = vmatprep.subr.mxu0 0.0
    %1220 = vmatpush2.msra.mxu0 0.0
    %1221 = vmatprep.subr.mxu0 0.0
    %1222 = vmatpush2.msra.mxu0 0.0
    %1223 = vmatprep.subr.mxu0 0.0
    %1224 = vmatpush2.msra.mxu0 0.0
    %1225 = vmatprep.subr.mxu0 0.0
    %1226 = vmatpush2.msra.mxu0 0.0
    %1227 = vmatprep.subr.mxu0 0.0
    %1228 = vmatpush2.msra.mxu0 0.0
    %1229 = vmatprep.subr.mxu0 0.0
    %1230 = vmatpush2.msra.mxu0 0.0
    %1231 = vmatprep.subr.mxu0 0.0
    %1232 = vmatpush2.msra.mxu0 0.0
    %1233 = vmatprep.mubr.f32.mxu0 0.0
    %1234 = vmatmul.mubr.f32.gmra.mxu0 %v1167
    %v1235 = vpop.f32.mrf.mxu0
    %v1236 = vadd.f32 0.0, %v1235
    %v1237 = vpop.f32.mrf.mxu0
    %v1238 = vadd.f32 0.0, %v1237
    %1239 = vdwg.mxu0
    %v1240 = vadd.f32 %v1162, %v1236
    %v1241 = vadd.f32 %v1164, %v1238
    %v1242 = vadd.f32 %v1240, %v569
    %v1243 = vadd.f32 %v1241, %v573
    %v1244 = vmax.f32 %v1242, 0.0
    %v1245 = vmax.f32 %v1243, 0.0
    %1246 = vmatprep.subr.mxu0 0.0
    %1247 = vmatpush1.msra.mxu0 0.0
    %1248 = vmatprep.subr.mxu0 0.0
    %1249 = vmatpush1.msra.mxu0 0.0
    %1250 = vmatprep.subr.mxu0 0.0
    %1251 = vmatpush1.msra.mxu0 0.0
    %1252 = vmatprep.subr.mxu0 0.0
    %1253 = vmatpush1.msra.mxu0 0.0
    %1254 = vmatprep.subr.mxu0 0.0
    %1255 = vmatpush1.msra.mxu0 0.0
    %1256 = vmatprep.subr.mxu0 0.0
    %1257 = vmatpush1.msra.mxu0 0.0
    %1258 = vmatprep.subr.mxu0 0.0
    %1259 = vmatpush1.msra.mxu0 0.0
    %1260 = vmatprep.subr.mxu0 0.0
    %1261 = vmatpush1.msra.mxu0 0.0
    %1262 = vmatprep.subr.mxu0 0.0
    %1263 = vmatpush1.msra.mxu0 0.0
    %1264 = vmatprep.subr.mxu0 0.0
    %1265 = vmatpush1.msra.mxu0 0.0
    %1266 = vmatprep.subr.mxu0 0.0
    %1267 = vmatpush1.msra.mxu0 0.0
    %1268 = vmatprep.subr.mxu0 0.0
    %1269 = vmatpush1.msra.mxu0 0.0
    %1270 = vmatprep.subr.mxu0 0.0
    %1271 = vmatpush1.msra.mxu0 0.0
    %1272 = vmatprep.subr.mxu0 0.0
    %1273 = vmatpush1.msra.mxu0 0.0
    %1274 = vmatprep.subr.mxu0 %v324
    %1275 = vmatpush1.msra.mxu0 %v321
    %1276 = vmatprep.subr.mxu0 %v313
    %1277 = vmatpush1.msra.mxu0 %v312
    %1278 = vmatprep.subr.mxu0 0.0
    %1279 = vmatpush2.msra.mxu0 0.0
    %1280 = vmatprep.subr.mxu0 0.0
    %1281 = vmatpush2.msra.mxu0 0.0
    %1282 = vmatprep.subr.mxu0 0.0
    %1283 = vmatpush2.msra.mxu0 0.0
    %1284 = vmatprep.subr.mxu0 0.0
    %1285 = vmatpush2.msra.mxu0 0.0
    %1286 = vmatprep.subr.mxu0 0.0
    %1287 = vmatpush2.msra.mxu0 0.0
    %1288 = vmatprep.subr.mxu0 0.0
    %1289 = vmatpush2.msra.mxu0 0.0
    %1290 = vmatprep.subr.mxu0 0.0
    %1291 = vmatpush2.msra.mxu0 0.0
    %1292 = vmatprep.subr.mxu0 0.0
    %1293 = vmatpush2.msra.mxu0 0.0
    %1294 = vmatprep.subr.mxu0 0.0
    %1295 = vmatpush2.msra.mxu0 0.0
    %1296 = vmatprep.subr.mxu0 0.0
    %1297 = vmatpush2.msra.mxu0 0.0
    %1298 = vmatprep.subr.mxu0 0.0
    %1299 = vmatpush2.msra.mxu0 0.0
    %1300 = vmatprep.subr.mxu0 0.0
    %1301 = vmatpush2.msra.mxu0 0.0
    %1302 = vmatprep.subr.mxu0 0.0
    %1303 = vmatpush2.msra.mxu0 0.0
    %1304 = vmatprep.subr.mxu0 0.0
    %1305 = vmatpush2.msra.mxu0 0.0
    %1306 = vmatprep.subr.mxu0 0.0
    %1307 = vmatpush2.msra.mxu0 0.0
    %1308 = vmatprep.subr.mxu0 0.0
    %1309 = vmatpush2.msra.mxu0 0.0
    %1310 = vmatprep.mubr.f32.mxu0 0.0
    %1311 = vmatmul.mubr.f32.gmra.mxu0 %v1167
    %v1312 = vpop.f32.mrf.mxu0
    %v1313 = vadd.f32 0.0, %v1312
    %v1314 = vpop.f32.mrf.mxu0
    %v1315 = vadd.f32 0.0, %v1314
    %1316 = vdwg.mxu0
    %1317 = vmatprep.subr.mxu0 0.0
    %1318 = vmatpush1.msra.mxu0 0.0
    %1319 = vmatprep.subr.mxu0 0.0
    %1320 = vmatpush1.msra.mxu0 0.0
    %1321 = vmatprep.subr.mxu0 0.0
    %1322 = vmatpush1.msra.mxu0 0.0
    %1323 = vmatprep.subr.mxu0 0.0
    %1324 = vmatpush1.msra.mxu0 0.0
    %1325 = vmatprep.subr.mxu0 0.0
    %1326 = vmatpush1.msra.mxu0 0.0
    %1327 = vmatprep.subr.mxu0 0.0
    %1328 = vmatpush1.msra.mxu0 0.0
    %1329 = vmatprep.subr.mxu0 0.0
    %1330 = vmatpush1.msra.mxu0 0.0
    %1331 = vmatprep.subr.mxu0 0.0
    %1332 = vmatpush1.msra.mxu0 0.0
    %1333 = vmatprep.subr.mxu0 0.0
    %1334 = vmatpush1.msra.mxu0 0.0
    %1335 = vmatprep.subr.mxu0 0.0
    %1336 = vmatpush1.msra.mxu0 0.0
    %1337 = vmatprep.subr.mxu0 0.0
    %1338 = vmatpush1.msra.mxu0 0.0
    %1339 = vmatprep.subr.mxu0 0.0
    %1340 = vmatpush1.msra.mxu0 0.0
    %1341 = vmatprep.subr.mxu0 0.0
    %1342 = vmatpush1.msra.mxu0 0.0
    %1343 = vmatprep.subr.mxu0 0.0
    %1344 = vmatpush1.msra.mxu0 0.0
    %1345 = vmatprep.subr.mxu0 %v404
    %1346 = vmatpush1.msra.mxu0 %v401
    %1347 = vmatprep.subr.mxu0 %v308
    %1348 = vmatpush1.msra.mxu0 %v307
    %1349 = vmatprep.subr.mxu0 0.0
    %1350 = vmatpush2.msra.mxu0 0.0
    %1351 = vmatprep.subr.mxu0 0.0
    %1352 = vmatpush2.msra.mxu0 0.0
    %1353 = vmatprep.subr.mxu0 0.0
    %1354 = vmatpush2.msra.mxu0 0.0
    %1355 = vmatprep.subr.mxu0 0.0
    %1356 = vmatpush2.msra.mxu0 0.0
    %1357 = vmatprep.subr.mxu0 0.0
    %1358 = vmatpush2.msra.mxu0 0.0
    %1359 = vmatprep.subr.mxu0 0.0
    %1360 = vmatpush2.msra.mxu0 0.0
    %1361 = vmatprep.subr.mxu0 0.0
    %1362 = vmatpush2.msra.mxu0 0.0
    %1363 = vmatprep.subr.mxu0 0.0
    %1364 = vmatpush2.msra.mxu0 0.0
    %1365 = vmatprep.subr.mxu0 0.0
    %1366 = vmatpush2.msra.mxu0 0.0
    %1367 = vmatprep.subr.mxu0 0.0
    %1368 = vmatpush2.msra.mxu0 0.0
    %1369 = vmatprep.subr.mxu0 0.0
    %1370 = vmatpush2.msra.mxu0 0.0
    %1371 = vmatprep.subr.mxu0 0.0
    %1372 = vmatpush2.msra.mxu0 0.0
    %1373 = vmatprep.subr.mxu0 0.0
    %1374 = vmatpush2.msra.mxu0 0.0
    %1375 = vmatprep.subr.mxu0 0.0
    %1376 = vmatpush2.msra.mxu0 0.0
    %1377 = vmatprep.subr.mxu0 0.0
    %1378 = vmatpush2.msra.mxu0 0.0
    %1379 = vmatprep.subr.mxu0 0.0
    %1380 = vmatpush2.msra.mxu0 0.0
    %1381 = vmatprep.mubr.f32.mxu0 0.0
    %1382 = vmatmul.mubr.f32.gmra.mxu0 %v945
    %v1383 = vpop.f32.mrf.mxu0
    %v1384 = vadd.f32 %v1313, %v1383
    %v1385 = vpop.f32.mrf.mxu0
    %v1386 = vadd.f32 %v1315, %v1385
    %1387 = vdwg.mxu0
    %v1389 = vsel %vm316, %v282, 0
    %1391 = vmatprep.subr.mxu0 0.0
    %1392 = vmatpush1.msra.mxu0 0.0
    %1393 = vmatprep.subr.mxu0 0.0
    %1394 = vmatpush1.msra.mxu0 0.0
    %1395 = vmatprep.subr.mxu0 0.0
    %1396 = vmatpush1.msra.mxu0 0.0
    %1397 = vmatprep.subr.mxu0 0.0
    %1398 = vmatpush1.msra.mxu0 0.0
    %1399 = vmatprep.subr.mxu0 0.0
    %1400 = vmatpush1.msra.mxu0 0.0
    %1401 = vmatprep.subr.mxu0 0.0
    %1402 = vmatpush1.msra.mxu0 0.0
    %1403 = vmatprep.subr.mxu0 0.0
    %1404 = vmatpush1.msra.mxu0 0.0
    %1405 = vmatprep.subr.mxu0 0.0
    %1406 = vmatpush1.msra.mxu0 0.0
    %1407 = vmatprep.subr.mxu0 0.0
    %1408 = vmatpush1.msra.mxu0 0.0
    %1409 = vmatprep.subr.mxu0 0.0
    %1410 = vmatpush1.msra.mxu0 0.0
    %1411 = vmatprep.subr.mxu0 0.0
    %1412 = vmatpush1.msra.mxu0 0.0
    %1413 = vmatprep.subr.mxu0 0.0
    %1414 = vmatpush1.msra.mxu0 0.0
    %1415 = vmatprep.subr.mxu0 0.0
    %1416 = vmatpush1.msra.mxu0 0.0
    %1417 = vmatprep.subr.mxu0 0.0
    %1418 = vmatpush1.msra.mxu0 0.0
    %1419 = vmatprep.subr.mxu0 %v489
    %1420 = vmatpush1.msra.mxu0 %v486
    %1421 = vmatprep.subr.mxu0 %v479
    %1422 = vmatpush1.msra.mxu0 %v478
    %1423 = vmatprep.subr.mxu0 0.0
    %1424 = vmatpush2.msra.mxu0 0.0
    %1425 = vmatprep.subr.mxu0 0.0
    %1426 = vmatpush2.msra.mxu0 0.0
    %1427 = vmatprep.subr.mxu0 0.0
    %1428 = vmatpush2.msra.mxu0 0.0
    %1429 = vmatprep.subr.mxu0 0.0
    %1430 = vmatpush2.msra.mxu0 0.0
    %1431 = vmatprep.subr.mxu0 0.0
    %1432 = vmatpush2.msra.mxu0 0.0
    %1433 = vmatprep.subr.mxu0 0.0
    %1434 = vmatpush2.msra.mxu0 0.0
    %1435 = vmatprep.subr.mxu0 0.0
    %1436 = vmatpush2.msra.mxu0 0.0
    %1437 = vmatprep.subr.mxu0 0.0
    %1438 = vmatpush2.msra.mxu0 0.0
    %1439 = vmatprep.subr.mxu0 0.0
    %1440 = vmatpush2.msra.mxu0 0.0
    %1441 = vmatprep.subr.mxu0 0.0
    %1442 = vmatpush2.msra.mxu0 0.0
    %1443 = vmatprep.subr.mxu0 0.0
    %1444 = vmatpush2.msra.mxu0 0.0
    %1445 = vmatprep.subr.mxu0 0.0
    %1446 = vmatpush2.msra.mxu0 0.0
    %1447 = vmatprep.subr.mxu0 0.0
    %1448 = vmatpush2.msra.mxu0 0.0
    %1449 = vmatprep.subr.mxu0 0.0
    %1450 = vmatpush2.msra.mxu0 0.0
    %1451 = vmatprep.subr.mxu0 0.0
    %1452 = vmatpush2.msra.mxu0 0.0
    %1453 = vmatprep.subr.mxu0 0.0
    %1454 = vmatpush2.msra.mxu0 0.0
    %1455 = vmatprep.mubr.f32.mxu0 0.0
    %1456 = vmatmul.mubr.f32.gmra.mxu0 %v1389
    %v1457 = vpop.f32.mrf.mxu0
    %v1458 = vadd.f32 0.0, %v1457
    %v1459 = vpop.f32.mrf.mxu0
    %v1460 = vadd.f32 0.0, %v1459
    %1461 = vdwg.mxu0
    %v1462 = vadd.f32 %v1384, %v1458
    %v1463 = vadd.f32 %v1386, %v1460
    %v1464 = vadd.f32 %v1462, %v569
    %v1465 = vadd.f32 %v1463, %v573
    %v1466 = vmax.f32 %v1464, 0.0
    %v1467 = vmax.f32 %v1465, 0.0
    %1468 = vmatprep.subr.mxu0 0.0
    %1469 = vmatpush1.msra.mxu0 0.0
    %1470 = vmatprep.subr.mxu0 0.0
    %1471 = vmatpush1.msra.mxu0 0.0
    %1472 = vmatprep.subr.mxu0 0.0
    %1473 = vmatpush1.msra.mxu0 0.0
    %1474 = vmatprep.subr.mxu0 0.0
    %1475 = vmatpush1.msra.mxu0 0.0
    %1476 = vmatprep.subr.mxu0 0.0
    %1477 = vmatpush1.msra.mxu0 0.0
    %1478 = vmatprep.subr.mxu0 0.0
    %1479 = vmatpush1.msra.mxu0 0.0
    %1480 = vmatprep.subr.mxu0 0.0
    %1481 = vmatpush1.msra.mxu0 0.0
    %1482 = vmatprep.subr.mxu0 0.0
    %1483 = vmatpush1.msra.mxu0 0.0
    %1484 = vmatprep.subr.mxu0 0.0
    %1485 = vmatpush1.msra.mxu0 0.0
    %1486 = vmatprep.subr.mxu0 0.0
    %1487 = vmatpush1.msra.mxu0 0.0
    %1488 = vmatprep.subr.mxu0 0.0
    %1489 = vmatpush1.msra.mxu0 0.0
    %1490 = vmatprep.subr.mxu0 0.0
    %1491 = vmatpush1.msra.mxu0 0.0
    %1492 = vmatprep.subr.mxu0 0.0
    %1493 = vmatpush1.msra.mxu0 0.0
    %1494 = vmatprep.subr.mxu0 0.0
    %1495 = vmatpush1.msra.mxu0 0.0
    %1496 = vmatprep.subr.mxu0 %v324
    %1497 = vmatpush1.msra.mxu0 %v321
    %1498 = vmatprep.subr.mxu0 %v313
    %1499 = vmatpush1.msra.mxu0 %v312
    %1500 = vmatprep.subr.mxu0 0.0
    %1501 = vmatpush2.msra.mxu0 0.0
    %1502 = vmatprep.subr.mxu0 0.0
    %1503 = vmatpush2.msra.mxu0 0.0
    %1504 = vmatprep.subr.mxu0 0.0
    %1505 = vmatpush2.msra.mxu0 0.0
    %1506 = vmatprep.subr.mxu0 0.0
    %1507 = vmatpush2.msra.mxu0 0.0
    %1508 = vmatprep.subr.mxu0 0.0
    %1509 = vmatpush2.msra.mxu0 0.0
    %1510 = vmatprep.subr.mxu0 0.0
    %1511 = vmatpush2.msra.mxu0 0.0
    %1512 = vmatprep.subr.mxu0 0.0
    %1513 = vmatpush2.msra.mxu0 0.0
    %1514 = vmatprep.subr.mxu0 0.0
    %1515 = vmatpush2.msra.mxu0 0.0
    %1516 = vmatprep.subr.mxu0 0.0
    %1517 = vmatpush2.msra.mxu0 0.0
    %1518 = vmatprep.subr.mxu0 0.0
    %1519 = vmatpush2.msra.mxu0 0.0
    %1520 = vmatprep.subr.mxu0 0.0
    %1521 = vmatpush2.msra.mxu0 0.0
    %1522 = vmatprep.subr.mxu0 0.0
    %1523 = vmatpush2.msra.mxu0 0.0
    %1524 = vmatprep.subr.mxu0 0.0
    %1525 = vmatpush2.msra.mxu0 0.0
    %1526 = vmatprep.subr.mxu0 0.0
    %1527 = vmatpush2.msra.mxu0 0.0
    %1528 = vmatprep.subr.mxu0 0.0
    %1529 = vmatpush2.msra.mxu0 0.0
    %1530 = vmatprep.subr.mxu0 0.0
    %1531 = vmatpush2.msra.mxu0 0.0
    %1532 = vmatprep.mubr.f32.mxu0 0.0
    %1533 = vmatmul.mubr.f32.gmra.mxu0 %v1389
    %v1534 = vpop.f32.mrf.mxu0
    %v1535 = vadd.f32 0.0, %v1534
    %v1536 = vpop.f32.mrf.mxu0
    %v1537 = vadd.f32 0.0, %v1536
    %1538 = vdwg.mxu0
    %1539 = vmatprep.subr.mxu0 0.0
    %1540 = vmatpush1.msra.mxu0 0.0
    %1541 = vmatprep.subr.mxu0 0.0
    %1542 = vmatpush1.msra.mxu0 0.0
    %1543 = vmatprep.subr.mxu0 0.0
    %1544 = vmatpush1.msra.mxu0 0.0
    %1545 = vmatprep.subr.mxu0 0.0
    %1546 = vmatpush1.msra.mxu0 0.0
    %1547 = vmatprep.subr.mxu0 0.0
    %1548 = vmatpush1.msra.mxu0 0.0
    %1549 = vmatprep.subr.mxu0 0.0
    %1550 = vmatpush1.msra.mxu0 0.0
    %1551 = vmatprep.subr.mxu0 0.0
    %1552 = vmatpush1.msra.mxu0 0.0
    %1553 = vmatprep.subr.mxu0 0.0
    %1554 = vmatpush1.msra.mxu0 0.0
    %1555 = vmatprep.subr.mxu0 0.0
    %1556 = vmatpush1.msra.mxu0 0.0
    %1557 = vmatprep.subr.mxu0 0.0
    %1558 = vmatpush1.msra.mxu0 0.0
    %1559 = vmatprep.subr.mxu0 0.0
    %1560 = vmatpush1.msra.mxu0 0.0
    %1561 = vmatprep.subr.mxu0 0.0
    %1562 = vmatpush1.msra.mxu0 0.0
    %1563 = vmatprep.subr.mxu0 0.0
    %1564 = vmatpush1.msra.mxu0 0.0
    %1565 = vmatprep.subr.mxu0 0.0
    %1566 = vmatpush1.msra.mxu0 0.0
    %1567 = vmatprep.subr.mxu0 %v404
    %1568 = vmatpush1.msra.mxu0 %v401
    %1569 = vmatprep.subr.mxu0 %v308
    %1570 = vmatpush1.msra.mxu0 %v307
    %1571 = vmatprep.subr.mxu0 0.0
    %1572 = vmatpush2.msra.mxu0 0.0
    %1573 = vmatprep.subr.mxu0 0.0
    %1574 = vmatpush2.msra.mxu0 0.0
    %1575 = vmatprep.subr.mxu0 0.0
    %1576 = vmatpush2.msra.mxu0 0.0
    %1577 = vmatprep.subr.mxu0 0.0
    %1578 = vmatpush2.msra.mxu0 0.0
    %1579 = vmatprep.subr.mxu0 0.0
    %1580 = vmatpush2.msra.mxu0 0.0
    %1581 = vmatprep.subr.mxu0 0.0
    %1582 = vmatpush2.msra.mxu0 0.0
    %1583 = vmatprep.subr.mxu0 0.0
    %1584 = vmatpush2.msra.mxu0 0.0
    %1585 = vmatprep.subr.mxu0 0.0
    %1586 = vmatpush2.msra.mxu0 0.0
    %1587 = vmatprep.subr.mxu0 0.0
    %1588 = vmatpush2.msra.mxu0 0.0
    %1589 = vmatprep.subr.mxu0 0.0
    %1590 = vmatpush2.msra.mxu0 0.0
    %1591 = vmatprep.subr.mxu0 0.0
    %1592 = vmatpush2.msra.mxu0 0.0
    %1593 = vmatprep.subr.mxu0 0.0
    %1594 = vmatpush2.msra.mxu0 0.0
    %1595 = vmatprep.subr.mxu0 0.0
    %1596 = vmatpush2.msra.mxu0 0.0
    %1597 = vmatprep.subr.mxu0 0.0
    %1598 = vmatpush2.msra.mxu0 0.0
    %1599 = vmatprep.subr.mxu0 0.0
    %1600 = vmatpush2.msra.mxu0 0.0
    %1601 = vmatprep.subr.mxu0 0.0
    %1602 = vmatpush2.msra.mxu0 0.0
    %1603 = vmatprep.mubr.f32.mxu0 0.0
    %1604 = vmatmul.mubr.f32.gmra.mxu0 %v1167
    %v1605 = vpop.f32.mrf.mxu0
    %v1606 = vadd.f32 %v1535, %v1605
    %v1607 = vpop.f32.mrf.mxu0
    %v1608 = vadd.f32 %v1537, %v1607
    %1609 = vdwg.mxu0
    %v1611 = vsel %vm316, %v290, 0
    %1613 = vmatprep.subr.mxu0 0.0
    %1614 = vmatpush1.msra.mxu0 0.0
    %1615 = vmatprep.subr.mxu0 0.0
    %1616 = vmatpush1.msra.mxu0 0.0
    %1617 = vmatprep.subr.mxu0 0.0
    %1618 = vmatpush1.msra.mxu0 0.0
    %1619 = vmatprep.subr.mxu0 0.0
    %1620 = vmatpush1.msra.mxu0 0.0
    %1621 = vmatprep.subr.mxu0 0.0
    %1622 = vmatpush1.msra.mxu0 0.0
    %1623 = vmatprep.subr.mxu0 0.0
    %1624 = vmatpush1.msra.mxu0 0.0
    %1625 = vmatprep.subr.mxu0 0.0
    %1626 = vmatpush1.msra.mxu0 0.0
    %1627 = vmatprep.subr.mxu0 0.0
    %1628 = vmatpush1.msra.mxu0 0.0
    %1629 = vmatprep.subr.mxu0 0.0
    %1630 = vmatpush1.msra.mxu0 0.0
    %1631 = vmatprep.subr.mxu0 0.0
    %1632 = vmatpush1.msra.mxu0 0.0
    %1633 = vmatprep.subr.mxu0 0.0
    %1634 = vmatpush1.msra.mxu0 0.0
    %1635 = vmatprep.subr.mxu0 0.0
    %1636 = vmatpush1.msra.mxu0 0.0
    %1637 = vmatprep.subr.mxu0 0.0
    %1638 = vmatpush1.msra.mxu0 0.0
    %1639 = vmatprep.subr.mxu0 0.0
    %1640 = vmatpush1.msra.mxu0 0.0
    %1641 = vmatprep.subr.mxu0 %v489
    %1642 = vmatpush1.msra.mxu0 %v486
    %1643 = vmatprep.subr.mxu0 %v479
    %1644 = vmatpush1.msra.mxu0 %v478
    %1645 = vmatprep.subr.mxu0 0.0
    %1646 = vmatpush2.msra.mxu0 0.0
    %1647 = vmatprep.subr.mxu0 0.0
    %1648 = vmatpush2.msra.mxu0 0.0
    %1649 = vmatprep.subr.mxu0 0.0
    %1650 = vmatpush2.msra.mxu0 0.0
    %1651 = vmatprep.subr.mxu0 0.0
    %1652 = vmatpush2.msra.mxu0 0.0
    %1653 = vmatprep.subr.mxu0 0.0
    %1654 = vmatpush2.msra.mxu0 0.0
    %1655 = vmatprep.subr.mxu0 0.0
    %1656 = vmatpush2.msra.mxu0 0.0
    %1657 = vmatprep.subr.mxu0 0.0
    %1658 = vmatpush2.msra.mxu0 0.0
    %1659 = vmatprep.subr.mxu0 0.0
    %1660 = vmatpush2.msra.mxu0 0.0
    %1661 = vmatprep.subr.mxu0 0.0
    %1662 = vmatpush2.msra.mxu0 0.0
    %1663 = vmatprep.subr.mxu0 0.0
    %1664 = vmatpush2.msra.mxu0 0.0
    %1665 = vmatprep.subr.mxu0 0.0
    %1666 = vmatpush2.msra.mxu0 0.0
    %1667 = vmatprep.subr.mxu0 0.0
    %1668 = vmatpush2.msra.mxu0 0.0
    %1669 = vmatprep.subr.mxu0 0.0
    %1670 = vmatpush2.msra.mxu0 0.0
    %1671 = vmatprep.subr.mxu0 0.0
    %1672 = vmatpush2.msra.mxu0 0.0
    %1673 = vmatprep.subr.mxu0 0.0
    %1674 = vmatpush2.msra.mxu0 0.0
    %1675 = vmatprep.subr.mxu0 0.0
    %1676 = vmatpush2.msra.mxu0 0.0
    %1677 = vmatprep.mubr.f32.mxu0 0.0
    %1678 = vmatmul.mubr.f32.gmra.mxu0 %v1611
    %v1679 = vpop.f32.mrf.mxu0
    %v1680 = vadd.f32 0.0, %v1679
    %v1681 = vpop.f32.mrf.mxu0
    %v1682 = vadd.f32 0.0, %v1681
    %1683 = vdwg.mxu0
    %v1684 = vadd.f32 %v1606, %v1680
    %v1685 = vadd.f32 %v1608, %v1682
    %v1686 = vadd.f32 %v1684, %v569
    %v1687 = vadd.f32 %v1685, %v573
    %v1688 = vmax.f32 %v1686, 0.0
    %v1689 = vmax.f32 %v1687, 0.0
    %1690 = vmatprep.subr.mxu0 0.0
    %1691 = vmatpush1.msra.mxu0 0.0
    %1692 = vmatprep.subr.mxu0 0.0
    %1693 = vmatpush1.msra.mxu0 0.0
    %1694 = vmatprep.subr.mxu0 0.0
    %1695 = vmatpush1.msra.mxu0 0.0
    %1696 = vmatprep.subr.mxu0 0.0
    %1697 = vmatpush1.msra.mxu0 0.0
    %1698 = vmatprep.subr.mxu0 0.0
    %1699 = vmatpush1.msra.mxu0 0.0
    %1700 = vmatprep.subr.mxu0 0.0
    %1701 = vmatpush1.msra.mxu0 0.0
    %1702 = vmatprep.subr.mxu0 0.0
    %1703 = vmatpush1.msra.mxu0 0.0
    %1704 = vmatprep.subr.mxu0 0.0
    %1705 = vmatpush1.msra.mxu0 0.0
    %1706 = vmatprep.subr.mxu0 0.0
    %1707 = vmatpush1.msra.mxu0 0.0
    %1708 = vmatprep.subr.mxu0 0.0
    %1709 = vmatpush1.msra.mxu0 0.0
    %1710 = vmatprep.subr.mxu0 0.0
    %1711 = vmatpush1.msra.mxu0 0.0
    %1712 = vmatprep.subr.mxu0 0.0
    %1713 = vmatpush1.msra.mxu0 0.0
    %1714 = vmatprep.subr.mxu0 0.0
    %1715 = vmatpush1.msra.mxu0 0.0
    %1716 = vmatprep.subr.mxu0 0.0
    %1717 = vmatpush1.msra.mxu0 0.0
    %1718 = vmatprep.subr.mxu0 %v324
    %1719 = vmatpush1.msra.mxu0 %v321
    %1720 = vmatprep.subr.mxu0 %v313
    %1721 = vmatpush1.msra.mxu0 %v312
    %1722 = vmatprep.subr.mxu0 0.0
    %1723 = vmatpush2.msra.mxu0 0.0
    %1724 = vmatprep.subr.mxu0 0.0
    %1725 = vmatpush2.msra.mxu0 0.0
    %1726 = vmatprep.subr.mxu0 0.0
    %1727 = vmatpush2.msra.mxu0 0.0
    %1728 = vmatprep.subr.mxu0 0.0
    %1729 = vmatpush2.msra.mxu0 0.0
    %1730 = vmatprep.subr.mxu0 0.0
    %1731 = vmatpush2.msra.mxu0 0.0
    %1732 = vmatprep.subr.mxu0 0.0
    %1733 = vmatpush2.msra.mxu0 0.0
    %1734 = vmatprep.subr.mxu0 0.0
    %1735 = vmatpush2.msra.mxu0 0.0
    %1736 = vmatprep.subr.mxu0 0.0
    %1737 = vmatpush2.msra.mxu0 0.0
    %1738 = vmatprep.subr.mxu0 0.0
    %1739 = vmatpush2.msra.mxu0 0.0
    %1740 = vmatprep.subr.mxu0 0.0
    %1741 = vmatpush2.msra.mxu0 0.0
    %1742 = vmatprep.subr.mxu0 0.0
    %1743 = vmatpush2.msra.mxu0 0.0
    %1744 = vmatprep.subr.mxu0 0.0
    %1745 = vmatpush2.msra.mxu0 0.0
    %1746 = vmatprep.subr.mxu0 0.0
    %1747 = vmatpush2.msra.mxu0 0.0
    %1748 = vmatprep.subr.mxu0 0.0
    %1749 = vmatpush2.msra.mxu0 0.0
    %1750 = vmatprep.subr.mxu0 0.0
    %1751 = vmatpush2.msra.mxu0 0.0
    %1752 = vmatprep.subr.mxu0 0.0
    %1753 = vmatpush2.msra.mxu0 0.0
    %1754 = vmatprep.mubr.f32.mxu0 0.0
    %1755 = vmatmul.mubr.f32.gmra.mxu0 %v1611
    %v1756 = vpop.f32.mrf.mxu0
    %v1757 = vadd.f32 0.0, %v1756
    %v1758 = vpop.f32.mrf.mxu0
    %v1759 = vadd.f32 0.0, %v1758
    %1760 = vdwg.mxu0
    %1761 = vmatprep.subr.mxu0 0.0
    %1762 = vmatpush1.msra.mxu0 0.0
    %1763 = vmatprep.subr.mxu0 0.0
    %1764 = vmatpush1.msra.mxu0 0.0
    %1765 = vmatprep.subr.mxu0 0.0
    %1766 = vmatpush1.msra.mxu0 0.0
    %1767 = vmatprep.subr.mxu0 0.0
    %1768 = vmatpush1.msra.mxu0 0.0
    %1769 = vmatprep.subr.mxu0 0.0
    %1770 = vmatpush1.msra.mxu0 0.0
    %1771 = vmatprep.subr.mxu0 0.0
    %1772 = vmatpush1.msra.mxu0 0.0
    %1773 = vmatprep.subr.mxu0 0.0
    %1774 = vmatpush1.msra.mxu0 0.0
    %1775 = vmatprep.subr.mxu0 0.0
    %1776 = vmatpush1.msra.mxu0 0.0
    %1777 = vmatprep.subr.mxu0 0.0
    %1778 = vmatpush1.msra.mxu0 0.0
    %1779 = vmatprep.subr.mxu0 0.0
    %1780 = vmatpush1.msra.mxu0 0.0
    %1781 = vmatprep.subr.mxu0 0.0
    %1782 = vmatpush1.msra.mxu0 0.0
    %1783 = vmatprep.subr.mxu0 0.0
    %1784 = vmatpush1.msra.mxu0 0.0
    %1785 = vmatprep.subr.mxu0 0.0
    %1786 = vmatpush1.msra.mxu0 0.0
    %1787 = vmatprep.subr.mxu0 0.0
    %1788 = vmatpush1.msra.mxu0 0.0
    %1789 = vmatprep.subr.mxu0 %v404
    %1790 = vmatpush1.msra.mxu0 %v401
    %1791 = vmatprep.subr.mxu0 %v308
    %1792 = vmatpush1.msra.mxu0 %v307
    %1793 = vmatprep.subr.mxu0 0.0
    %1794 = vmatpush2.msra.mxu0 0.0
    %1795 = vmatprep.subr.mxu0 0.0
    %1796 = vmatpush2.msra.mxu0 0.0
    %1797 = vmatprep.subr.mxu0 0.0
    %1798 = vmatpush2.msra.mxu0 0.0
    %1799 = vmatprep.subr.mxu0 0.0
    %1800 = vmatpush2.msra.mxu0 0.0
    %1801 = vmatprep.subr.mxu0 0.0
    %1802 = vmatpush2.msra.mxu0 0.0
    %1803 = vmatprep.subr.mxu0 0.0
    %1804 = vmatpush2.msra.mxu0 0.0
    %1805 = vmatprep.subr.mxu0 0.0
    %1806 = vmatpush2.msra.mxu0 0.0
    %1807 = vmatprep.subr.mxu0 0.0
    %1808 = vmatpush2.msra.mxu0 0.0
    %1809 = vmatprep.subr.mxu0 0.0
    %1810 = vmatpush2.msra.mxu0 0.0
    %1811 = vmatprep.subr.mxu0 0.0
    %1812 = vmatpush2.msra.mxu0 0.0
    %1813 = vmatprep.subr.mxu0 0.0
    %1814 = vmatpush2.msra.mxu0 0.0
    %1815 = vmatprep.subr.mxu0 0.0
    %1816 = vmatpush2.msra.mxu0 0.0
    %1817 = vmatprep.subr.mxu0 0.0
    %1818 = vmatpush2.msra.mxu0 0.0
    %1819 = vmatprep.subr.mxu0 0.0
    %1820 = vmatpush2.msra.mxu0 0.0
    %1821 = vmatprep.subr.mxu0 0.0
    %1822 = vmatpush2.msra.mxu0 0.0
    %1823 = vmatprep.subr.mxu0 0.0
    %1824 = vmatpush2.msra.mxu0 0.0
    %1825 = vmatprep.mubr.f32.mxu0 0.0
    %1826 = vmatmul.mubr.f32.gmra.mxu0 %v1389
    %v1827 = vpop.f32.mrf.mxu0
    %v1828 = vadd.f32 %v1757, %v1827
    %v1829 = vpop.f32.mrf.mxu0
    %v1830 = vadd.f32 %v1759, %v1829
    %1831 = vdwg.mxu0
    %v1833 = vsel %vm316, %v298, 0
    %1835 = vmatprep.subr.mxu0 0.0
    %1836 = vmatpush1.msra.mxu0 0.0
    %1837 = vmatprep.subr.mxu0 0.0
    %1838 = vmatpush1.msra.mxu0 0.0
    %1839 = vmatprep.subr.mxu0 0.0
    %1840 = vmatpush1.msra.mxu0 0.0
    %1841 = vmatprep.subr.mxu0 0.0
    %1842 = vmatpush1.msra.mxu0 0.0
    %1843 = vmatprep.subr.mxu0 0.0
    %1844 = vmatpush1.msra.mxu0 0.0
    %1845 = vmatprep.subr.mxu0 0.0
    %1846 = vmatpush1.msra.mxu0 0.0
    %1847 = vmatprep.subr.mxu0 0.0
    %1848 = vmatpush1.msra.mxu0 0.0
    %1849 = vmatprep.subr.mxu0 0.0
    %1850 = vmatpush1.msra.mxu0 0.0
    %1851 = vmatprep.subr.mxu0 0.0
    %1852 = vmatpush1.msra.mxu0 0.0
    %1853 = vmatprep.subr.mxu0 0.0
    %1854 = vmatpush1.msra.mxu0 0.0
    %1855 = vmatprep.subr.mxu0 0.0
    %1856 = vmatpush1.msra.mxu0 0.0
    %1857 = vmatprep.subr.mxu0 0.0
    %1858 = vmatpush1.msra.mxu0 0.0
    %1859 = vmatprep.subr.mxu0 0.0
    %1860 = vmatpush1.msra.mxu0 0.0
    %1861 = vmatprep.subr.mxu0 0.0
    %1862 = vmatpush1.msra.mxu0 0.0
    %1863 = vmatprep.subr.mxu0 %v489
    %1864 = vmatpush1.msra.mxu0 %v486
    %1865 = vmatprep.subr.mxu0 %v479
    %1866 = vmatpush1.msra.mxu0 %v478
    %1867 = vmatprep.subr.mxu0 0.0
    %1868 = vmatpush2.msra.mxu0 0.0
    %1869 = vmatprep.subr.mxu0 0.0
    %1870 = vmatpush2.msra.mxu0 0.0
    %1871 = vmatprep.subr.mxu0 0.0
    %1872 = vmatpush2.msra.mxu0 0.0
    %1873 = vmatprep.subr.mxu0 0.0
    %1874 = vmatpush2.msra.mxu0 0.0
    %1875 = vmatprep.subr.mxu0 0.0
    %1876 = vmatpush2.msra.mxu0 0.0
    %1877 = vmatprep.subr.mxu0 0.0
    %1878 = vmatpush2.msra.mxu0 0.0
    %1879 = vmatprep.subr.mxu0 0.0
    %1880 = vmatpush2.msra.mxu0 0.0
    %1881 = vmatprep.subr.mxu0 0.0
    %1882 = vmatpush2.msra.mxu0 0.0
    %1883 = vmatprep.subr.mxu0 0.0
    %1884 = vmatpush2.msra.mxu0 0.0
    %1885 = vmatprep.subr.mxu0 0.0
    %1886 = vmatpush2.msra.mxu0 0.0
    %1887 = vmatprep.subr.mxu0 0.0
    %1888 = vmatpush2.msra.mxu0 0.0
    %1889 = vmatprep.subr.mxu0 0.0
    %1890 = vmatpush2.msra.mxu0 0.0
    %1891 = vmatprep.subr.mxu0 0.0
    %1892 = vmatpush2.msra.mxu0 0.0
    %1893 = vmatprep.subr.mxu0 0.0
    %1894 = vmatpush2.msra.mxu0 0.0
    %1895 = vmatprep.subr.mxu0 0.0
    %1896 = vmatpush2.msra.mxu0 0.0
    %1897 = vmatprep.subr.mxu0 0.0
    %1898 = vmatpush2.msra.mxu0 0.0
    %1899 = vmatprep.mubr.f32.mxu0 0.0
    %1900 = vmatmul.mubr.f32.gmra.mxu0 %v1833
    %v1901 = vpop.f32.mrf.mxu0
    %v1902 = vadd.f32 0.0, %v1901
    %v1903 = vpop.f32.mrf.mxu0
    %v1904 = vadd.f32 0.0, %v1903
    %1905 = vdwg.mxu0
    %v1906 = vadd.f32 %v1828, %v1902
    %v1907 = vadd.f32 %v1830, %v1904
    %v1908 = vadd.f32 %v1906, %v569
    %v1909 = vadd.f32 %v1907, %v573
    %v1910 = vmax.f32 %v1908, 0.0
    %v1911 = vmax.f32 %v1909, 0.0
    %1912 = vmatprep.subr.mxu0 0.0
    %1913 = vmatpush1.msra.mxu0 0.0
    %1914 = vmatprep.subr.mxu0 0.0
    %1915 = vmatpush1.msra.mxu0 0.0
    %1916 = vmatprep.subr.mxu0 0.0
    %1917 = vmatpush1.msra.mxu0 0.0
    %1918 = vmatprep.subr.mxu0 0.0
    %1919 = vmatpush1.msra.mxu0 0.0
    %1920 = vmatprep.subr.mxu0 0.0
    %1921 = vmatpush1.msra.mxu0 0.0
    %1922 = vmatprep.subr.mxu0 0.0
    %1923 = vmatpush1.msra.mxu0 0.0
    %1924 = vmatprep.subr.mxu0 0.0
    %1925 = vmatpush1.msra.mxu0 0.0
    %1926 = vmatprep.subr.mxu0 0.0
    %1927 = vmatpush1.msra.mxu0 0.0
    %1928 = vmatprep.subr.mxu0 0.0
    %1929 = vmatpush1.msra.mxu0 0.0
    %1930 = vmatprep.subr.mxu0 0.0
    %1931 = vmatpush1.msra.mxu0 0.0
    %1932 = vmatprep.subr.mxu0 0.0
    %1933 = vmatpush1.msra.mxu0 0.0
    %1934 = vmatprep.subr.mxu0 0.0
    %1935 = vmatpush1.msra.mxu0 0.0
    %1936 = vmatprep.subr.mxu0 0.0
    %1937 = vmatpush1.msra.mxu0 0.0
    %1938 = vmatprep.subr.mxu0 0.0
    %1939 = vmatpush1.msra.mxu0 0.0
    %1940 = vmatprep.subr.mxu0 %v324
    %1941 = vmatpush1.msra.mxu0 %v321
    %1942 = vmatprep.subr.mxu0 %v313
    %1943 = vmatpush1.msra.mxu0 %v312
    %1944 = vmatprep.subr.mxu0 0.0
    %1945 = vmatpush2.msra.mxu0 0.0
    %1946 = vmatprep.subr.mxu0 0.0
    %1947 = vmatpush2.msra.mxu0 0.0
    %1948 = vmatprep.subr.mxu0 0.0
    %1949 = vmatpush2.msra.mxu0 0.0
    %1950 = vmatprep.subr.mxu0 0.0
    %1951 = vmatpush2.msra.mxu0 0.0
    %1952 = vmatprep.subr.mxu0 0.0
    %1953 = vmatpush2.msra.mxu0 0.0
    %1954 = vmatprep.subr.mxu0 0.0
    %1955 = vmatpush2.msra.mxu0 0.0
    %1956 = vmatprep.subr.mxu0 0.0
    %1957 = vmatpush2.msra.mxu0 0.0
    %1958 = vmatprep.subr.mxu0 0.0
    %1959 = vmatpush2.msra.mxu0 0.0
    %1960 = vmatprep.subr.mxu0 0.0
    %1961 = vmatpush2.msra.mxu0 0.0
    %1962 = vmatprep.subr.mxu0 0.0
    %1963 = vmatpush2.msra.mxu0 0.0
    %1964 = vmatprep.subr.mxu0 0.0
    %1965 = vmatpush2.msra.mxu0 0.0
    %1966 = vmatprep.subr.mxu0 0.0
    %1967 = vmatpush2.msra.mxu0 0.0
    %1968 = vmatprep.subr.mxu0 0.0
    %1969 = vmatpush2.msra.mxu0 0.0
    %1970 = vmatprep.subr.mxu0 0.0
    %1971 = vmatpush2.msra.mxu0 0.0
    %1972 = vmatprep.subr.mxu0 0.0
    %1973 = vmatpush2.msra.mxu0 0.0
    %1974 = vmatprep.subr.mxu0 0.0
    %1975 = vmatpush2.msra.mxu0 0.0
    %1976 = vmatprep.mubr.f32.mxu0 0.0
    %1977 = vmatmul.mubr.f32.gmra.mxu0 %v1833
    %v1978 = vpop.f32.mrf.mxu0
    %v1979 = vadd.f32 0.0, %v1978
    %v1980 = vpop.f32.mrf.mxu0
    %v1981 = vadd.f32 0.0, %v1980
    %1982 = vdwg.mxu0
    %1983 = vmatprep.subr.mxu0 0.0
    %1984 = vmatpush1.msra.mxu0 0.0
    %1985 = vmatprep.subr.mxu0 0.0
    %1986 = vmatpush1.msra.mxu0 0.0
    %1987 = vmatprep.subr.mxu0 0.0
    %1988 = vmatpush1.msra.mxu0 0.0
    %1989 = vmatprep.subr.mxu0 0.0
    %1990 = vmatpush1.msra.mxu0 0.0
    %1991 = vmatprep.subr.mxu0 0.0
    %1992 = vmatpush1.msra.mxu0 0.0
    %1993 = vmatprep.subr.mxu0 0.0
    %1994 = vmatpush1.msra.mxu0 0.0
    %1995 = vmatprep.subr.mxu0 0.0
    %1996 = vmatpush1.msra.mxu0 0.0
    %1997 = vmatprep.subr.mxu0 0.0
    %1998 = vmatpush1.msra.mxu0 0.0
    %1999 = vmatprep.subr.mxu0 0.0
    %2000 = vmatpush1.msra.mxu0 0.0
    %2001 = vmatprep.subr.mxu0 0.0
    %2002 = vmatpush1.msra.mxu0 0.0
    %2003 = vmatprep.subr.mxu0 0.0
    %2004 = vmatpush1.msra.mxu0 0.0
    %2005 = vmatprep.subr.mxu0 0.0
    %2006 = vmatpush1.msra.mxu0 0.0
    %2007 = vmatprep.subr.mxu0 0.0
    %2008 = vmatpush1.msra.mxu0 0.0
    %2009 = vmatprep.subr.mxu0 0.0
    %2010 = vmatpush1.msra.mxu0 0.0
    %2011 = vmatprep.subr.mxu0 %v404
    %2012 = vmatpush1.msra.mxu0 %v401
    %2013 = vmatprep.subr.mxu0 %v308
    %2014 = vmatpush1.msra.mxu0 %v307
    %2015 = vmatprep.subr.mxu0 0.0
    %2016 = vmatpush2.msra.mxu0 0.0
    %2017 = vmatprep.subr.mxu0 0.0
    %2018 = vmatpush2.msra.mxu0 0.0
    %2019 = vmatprep.subr.mxu0 0.0
    %2020 = vmatpush2.msra.mxu0 0.0
    %2021 = vmatprep.subr.mxu0 0.0
    %2022 = vmatpush2.msra.mxu0 0.0
    %2023 = vmatprep.subr.mxu0 0.0
    %2024 = vmatpush2.msra.mxu0 0.0
    %2025 = vmatprep.subr.mxu0 0.0
    %2026 = vmatpush2.msra.mxu0 0.0
    %2027 = vmatprep.subr.mxu0 0.0
    %2028 = vmatpush2.msra.mxu0 0.0
    %2029 = vmatprep.subr.mxu0 0.0
    %2030 = vmatpush2.msra.mxu0 0.0
    %2031 = vmatprep.subr.mxu0 0.0
    %2032 = vmatpush2.msra.mxu0 0.0
    %2033 = vmatprep.subr.mxu0 0.0
    %2034 = vmatpush2.msra.mxu0 0.0
    %2035 = vmatprep.subr.mxu0 0.0
    %2036 = vmatpush2.msra.mxu0 0.0
    %2037 = vmatprep.subr.mxu0 0.0
    %2038 = vmatpush2.msra.mxu0 0.0
    %2039 = vmatprep.subr.mxu0 0.0
    %2040 = vmatpush2.msra.mxu0 0.0
    %2041 = vmatprep.subr.mxu0 0.0
    %2042 = vmatpush2.msra.mxu0 0.0
    %2043 = vmatprep.subr.mxu0 0.0
    %2044 = vmatpush2.msra.mxu0 0.0
    %2045 = vmatprep.subr.mxu0 0.0
    %2046 = vmatpush2.msra.mxu0 0.0
    %2047 = vmatprep.mubr.f32.mxu0 0.0
    %2048 = vmatmul.mubr.f32.gmra.mxu0 %v1611
    %v2049 = vpop.f32.mrf.mxu0
    %v2050 = vadd.f32 %v1979, %v2049
    %v2051 = vpop.f32.mrf.mxu0
    %v2052 = vadd.f32 %v1981, %v2051
    %2053 = vdwg.mxu0
    %v2055 = vsel %vm316, %v306, 0
    %2057 = vmatprep.subr.mxu0 0.0
    %2058 = vmatpush1.msra.mxu0 0.0
    %2059 = vmatprep.subr.mxu0 0.0
    %2060 = vmatpush1.msra.mxu0 0.0
    %2061 = vmatprep.subr.mxu0 0.0
    %2062 = vmatpush1.msra.mxu0 0.0
    %2063 = vmatprep.subr.mxu0 0.0
    %2064 = vmatpush1.msra.mxu0 0.0
    %2065 = vmatprep.subr.mxu0 0.0
    %2066 = vmatpush1.msra.mxu0 0.0
    %2067 = vmatprep.subr.mxu0 0.0
    %2068 = vmatpush1.msra.mxu0 0.0
    %2069 = vmatprep.subr.mxu0 0.0
    %2070 = vmatpush1.msra.mxu0 0.0
    %2071 = vmatprep.subr.mxu0 0.0
    %2072 = vmatpush1.msra.mxu0 0.0
    %2073 = vmatprep.subr.mxu0 0.0
    %2074 = vmatpush1.msra.mxu0 0.0
    %2075 = vmatprep.subr.mxu0 0.0
    %2076 = vmatpush1.msra.mxu0 0.0
    %2077 = vmatprep.subr.mxu0 0.0
    %2078 = vmatpush1.msra.mxu0 0.0
    %2079 = vmatprep.subr.mxu0 0.0
    %2080 = vmatpush1.msra.mxu0 0.0
    %2081 = vmatprep.subr.mxu0 0.0
    %2082 = vmatpush1.msra.mxu0 0.0
    %2083 = vmatprep.subr.mxu0 0.0
    %2084 = vmatpush1.msra.mxu0 0.0
    %2085 = vmatprep.subr.mxu0 %v489
    %2086 = vmatpush1.msra.mxu0 %v486
    %2087 = vmatprep.subr.mxu0 %v479
    %2088 = vmatpush1.msra.mxu0 %v478
    %2089 = vmatprep.subr.mxu0 0.0
    %2090 = vmatpush2.msra.mxu0 0.0
    %2091 = vmatprep.subr.mxu0 0.0
    %2092 = vmatpush2.msra.mxu0 0.0
    %2093 = vmatprep.subr.mxu0 0.0
    %2094 = vmatpush2.msra.mxu0 0.0
    %2095 = vmatprep.subr.mxu0 0.0
    %2096 = vmatpush2.msra.mxu0 0.0
    %2097 = vmatprep.subr.mxu0 0.0
    %2098 = vmatpush2.msra.mxu0 0.0
    %2099 = vmatprep.subr.mxu0 0.0
    %2100 = vmatpush2.msra.mxu0 0.0
    %2101 = vmatprep.subr.mxu0 0.0
    %2102 = vmatpush2.msra.mxu0 0.0
    %2103 = vmatprep.subr.mxu0 0.0
    %2104 = vmatpush2.msra.mxu0 0.0
    %2105 = vmatprep.subr.mxu0 0.0
    %2106 = vmatpush2.msra.mxu0 0.0
    %2107 = vmatprep.subr.mxu0 0.0
    %2108 = vmatpush2.msra.mxu0 0.0
    %2109 = vmatprep.subr.mxu0 0.0
    %2110 = vmatpush2.msra.mxu0 0.0
    %2111 = vmatprep.subr.mxu0 0.0
    %2112 = vmatpush2.msra.mxu0 0.0
    %2113 = vmatprep.subr.mxu0 0.0
    %2114 = vmatpush2.msra.mxu0 0.0
    %2115 = vmatprep.subr.mxu0 0.0
    %2116 = vmatpush2.msra.mxu0 0.0
    %2117 = vmatprep.subr.mxu0 0.0
    %2118 = vmatpush2.msra.mxu0 0.0
    %2119 = vmatprep.subr.mxu0 0.0
    %2120 = vmatpush2.msra.mxu0 0.0
    %2121 = vmatprep.mubr.f32.mxu0 0.0
    %2122 = vmatmul.mubr.f32.gmra.mxu0 %v2055
    %v2123 = vpop.f32.mrf.mxu0
    %v2124 = vadd.f32 0.0, %v2123
    %v2125 = vpop.f32.mrf.mxu0
    %v2126 = vadd.f32 0.0, %v2125
    %2127 = vdwg.mxu0
    %v2128 = vadd.f32 %v2050, %v2124
    %v2129 = vadd.f32 %v2052, %v2126
    %v2130 = vadd.f32 %v2128, %v569
    %v2131 = vadd.f32 %v2129, %v573
    %v2132 = vmax.f32 %v2130, 0.0
    %v2133 = vmax.f32 %v2131, 0.0
    %v2134 = vld [vmem:[#allocation7] sm:$0xff]
    %v2135 = vld [vmem:[#allocation7 + $0x8] sm:$0xff]
    %v2136 = vld [vmem:[#allocation7 + $0x10] sm:$0xff]
    %v2137 = vld [vmem:[#allocation7 + $0x18] sm:$0xff]
    %v2138 = vld [vmem:[#allocation7 + $0x20] sm:$0xff]
    %v2139 = vld [vmem:[#allocation7 + $0x28] sm:$0xff]
    %v2140 = vld [vmem:[#allocation7 + $0x30] sm:$0xff]
    %v2141 = vld [vmem:[#allocation7 + $0x38] sm:$0xff]
    %v2142 = vld [vmem:[#allocation7 + $0x40] sm:$0xff]
    %v2143 = vld [vmem:[#allocation7 + $0x48] sm:$0xff]
    %v2144 = vld [vmem:[#allocation7 + $0x50] sm:$0xff]
    %v2145 = vld [vmem:[#allocation7 + $0x58] sm:$0xff]
    %v2146 = vld [vmem:[#allocation7 + $0x60] sm:$0xff]
    %v2147 = vld [vmem:[#allocation7 + $0x68] sm:$0xff]
    %v2148 = vld [vmem:[#allocation7 + $0x70] sm:$0xff]
    %v2149 = vld [vmem:[#allocation7 + $0x78] sm:$0xff]
    %v2150 = vld [vmem:[#allocation7 + $0x80] sm:$0xff]
    %v2151 = vld [vmem:[#allocation7 + $0x88] sm:$0xff]
    %v2152 = vld [vmem:[#allocation7 + $0x90] sm:$0xff]
    %v2153 = vld [vmem:[#allocation7 + $0x98] sm:$0xff]
    %v2154 = vld [vmem:[#allocation7 + $0xa0] sm:$0xff]
    %v2155 = vld [vmem:[#allocation7 + $0xa8] sm:$0xff]
    %v2156 = vld [vmem:[#allocation7 + $0xb0] sm:$0xff]
    %v2157 = vld [vmem:[#allocation7 + $0xb8] sm:$0xff]
    %v2158 = vld [vmem:[#allocation7 + $0xc0] sm:$0xff]
    %v2159 = vld [vmem:[#allocation7 + $0xc8] sm:$0xff]
    %v2160 = vld [vmem:[#allocation7 + $0xd0] sm:$0xff]
    %v2161 = vld [vmem:[#allocation7 + $0xd8] sm:$0xff]
    %v2162 = vld [vmem:[#allocation7 + $0xe0] sm:$0xff]
    %v2163 = vld [vmem:[#allocation7 + $0xe8] sm:$0xff]
    %v2164 = vld [vmem:[#allocation7 + $0xf0] sm:$0xff]
    %v2165 = vld [vmem:[#allocation7 + $0xf8] sm:$0xff]
    %v2166 = vld [vmem:[#allocation7 + $0x100] sm:$0xff]
    %v2167 = vld [vmem:[#allocation7 + $0x108] sm:$0xff]
    %v2168 = vld [vmem:[#allocation7 + $0x110] sm:$0xff]
    %v2169 = vld [vmem:[#allocation7 + $0x118] sm:$0xff]
    %v2170 = vld [vmem:[#allocation7 + $0x120] sm:$0xff]
    %v2171 = vld [vmem:[#allocation7 + $0x128] sm:$0xff]
    %v2172 = vld [vmem:[#allocation7 + $0x130] sm:$0xff]
    %v2173 = vld [vmem:[#allocation7 + $0x138] sm:$0xff]
    %v2174 = vld [vmem:[#allocation7 + $0x140] sm:$0xff]
    %v2175 = vld [vmem:[#allocation7 + $0x148] sm:$0xff]
    %v2176 = vld [vmem:[#allocation7 + $0x150] sm:$0xff]
    %v2177 = vld [vmem:[#allocation7 + $0x158] sm:$0xff]
    %v2178 = vld [vmem:[#allocation7 + $0x160] sm:$0xff]
    %v2179 = vld [vmem:[#allocation7 + $0x168] sm:$0xff]
    %v2180 = vld [vmem:[#allocation7 + $0x170] sm:$0xff]
    %v2181 = vld [vmem:[#allocation7 + $0x178] sm:$0xff]
    %v2182 = vld [vmem:[#allocation7 + $0x180] sm:$0xff]
    %v2183 = vld [vmem:[#allocation7 + $0x188] sm:$0xff]
    %v2184 = vld [vmem:[#allocation7 + $0x190] sm:$0xff]
    %v2185 = vld [vmem:[#allocation7 + $0x198] sm:$0xff]
    %v2186 = vld [vmem:[#allocation7 + $0x1a0] sm:$0xff]
    %v2187 = vld [vmem:[#allocation7 + $0x1a8] sm:$0xff]
    %v2188 = vld [vmem:[#allocation7 + $0x1b0] sm:$0xff]
    %v2189 = vld [vmem:[#allocation7 + $0x1b8] sm:$0xff]
    %v2190 = vld [vmem:[#allocation7 + $0x1c0] sm:$0xff]
    %v2191 = vld [vmem:[#allocation7 + $0x1c8] sm:$0xff]
    %v2192 = vld [vmem:[#allocation7 + $0x1d0] sm:$0xff]
    %v2193 = vld [vmem:[#allocation7 + $0x1d8] sm:$0xff]
    %v2194 = vld [vmem:[#allocation7 + $0x1e0] sm:$0xff]
    %v2195 = vld [vmem:[#allocation7 + $0x1e8] sm:$0xff]
    %v2196 = vld [vmem:[#allocation7 + $0x1f0] sm:$0xff]
    %v2197 = vld [vmem:[#allocation7 + $0x1f8] sm:$0xff]
    %v2198 = vld [vmem:[#allocation7 + $0x200] sm:$0xff]
    %v2199 = vld [vmem:[#allocation7 + $0x208] sm:$0xff]
    %v2200 = vld [vmem:[#allocation7 + $0x210] sm:$0xff]
    %v2201 = vld [vmem:[#allocation7 + $0x218] sm:$0xff]
    %v2202 = vld [vmem:[#allocation7 + $0x220] sm:$0xff]
    %v2203 = vld [vmem:[#allocation7 + $0x228] sm:$0xff]
    %v2204 = vld [vmem:[#allocation7 + $0x230] sm:$0xff]
    %v2205 = vld [vmem:[#allocation7 + $0x238] sm:$0xff]
    %v2206 = vld [vmem:[#allocation7 + $0x240] sm:$0xff]
    %v2207 = vld [vmem:[#allocation7 + $0x248] sm:$0xff]
    %v2208 = vld [vmem:[#allocation7 + $0x250] sm:$0xff]
    %v2209 = vld [vmem:[#allocation7 + $0x258] sm:$0xff]
    %v2210 = vld [vmem:[#allocation7 + $0x260] sm:$0xff]
    %v2211 = vld [vmem:[#allocation7 + $0x268] sm:$0xff]
    %v2212 = vld [vmem:[#allocation7 + $0x270] sm:$0xff]
    %v2213 = vld [vmem:[#allocation7 + $0x278] sm:$0xff]
    %v2214 = vld [vmem:[#allocation7 + $0x280] sm:$0xff]
    %v2215 = vld [vmem:[#allocation7 + $0x288] sm:$0xff]
    %v2216 = vld [vmem:[#allocation7 + $0x290] sm:$0xff]
    %v2217 = vld [vmem:[#allocation7 + $0x298] sm:$0xff]
    %v2218 = vld [vmem:[#allocation7 + $0x2a0] sm:$0xff]
    %v2219 = vld [vmem:[#allocation7 + $0x2a8] sm:$0xff]
    %v2220 = vld [vmem:[#allocation7 + $0x2b0] sm:$0xff]
    %v2221 = vld [vmem:[#allocation7 + $0x2b8] sm:$0xff]
    %v2222 = vld [vmem:[#allocation7 + $0x2c0] sm:$0xff]
    %v2223 = vld [vmem:[#allocation7 + $0x2c8] sm:$0xff]
    %v2224 = vld [vmem:[#allocation7 + $0x2d0] sm:$0xff]
    %v2225 = vld [vmem:[#allocation7 + $0x2d8] sm:$0xff]
    %v2226 = vld [vmem:[#allocation7 + $0x2e0] sm:$0xff]
    %v2227 = vld [vmem:[#allocation7 + $0x2e8] sm:$0xff]
    %v2228 = vld [vmem:[#allocation7 + $0x2f0] sm:$0xff]
    %v2229 = vld [vmem:[#allocation7 + $0x2f8] sm:$0xff]
    %s2230 = scalar_lea.vmem [#allocation7], 768
    %v2231 = vld [vmem:[%s2230] sm:$0xff]
    %v2232 = vld [vmem:[%s2230 + $0x8] sm:$0xff]
    %v2233 = vld [vmem:[%s2230 + $0x10] sm:$0xff]
    %v2234 = vld [vmem:[%s2230 + $0x18] sm:$0xff]
    %v2235 = vld [vmem:[%s2230 + $0x20] sm:$0xff]
    %v2236 = vld [vmem:[%s2230 + $0x28] sm:$0xff]
    %v2237 = vld [vmem:[%s2230 + $0x30] sm:$0xff]
    %v2238 = vld [vmem:[%s2230 + $0x38] sm:$0xff]
    %v2239 = vld [vmem:[%s2230 + $0x40] sm:$0xff]
    %v2240 = vld [vmem:[%s2230 + $0x48] sm:$0xff]
    %v2241 = vld [vmem:[%s2230 + $0x50] sm:$0xff]
    %v2242 = vld [vmem:[%s2230 + $0x58] sm:$0xff]
    %v2243 = vld [vmem:[%s2230 + $0x60] sm:$0xff]
    %v2244 = vld [vmem:[%s2230 + $0x68] sm:$0xff]
    %v2245 = vld [vmem:[%s2230 + $0x70] sm:$0xff]
    %v2246 = vld [vmem:[%s2230 + $0x78] sm:$0xff]
    %v2247 = vld [vmem:[%s2230 + $0x80] sm:$0xff]
    %v2248 = vld [vmem:[%s2230 + $0x88] sm:$0xff]
    %v2249 = vld [vmem:[%s2230 + $0x90] sm:$0xff]
    %v2250 = vld [vmem:[%s2230 + $0x98] sm:$0xff]
    %v2251 = vld [vmem:[%s2230 + $0xa0] sm:$0xff]
    %v2252 = vld [vmem:[%s2230 + $0xa8] sm:$0xff]
    %v2253 = vld [vmem:[%s2230 + $0xb0] sm:$0xff]
    %v2254 = vld [vmem:[%s2230 + $0xb8] sm:$0xff]
    %v2255 = vld [vmem:[%s2230 + $0xc0] sm:$0xff]
    %v2256 = vld [vmem:[%s2230 + $0xc8] sm:$0xff]
    %v2257 = vld [vmem:[%s2230 + $0xd0] sm:$0xff]
    %v2258 = vld [vmem:[%s2230 + $0xd8] sm:$0xff]
    %v2259 = vld [vmem:[%s2230 + $0xe0] sm:$0xff]
    %v2260 = vld [vmem:[%s2230 + $0xe8] sm:$0xff]
    %v2261 = vld [vmem:[%s2230 + $0xf0] sm:$0xff]
    %v2262 = vld [vmem:[%s2230 + $0xf8] sm:$0xff]
    %v2263 = vld [vmem:[%s2230 + $0x100] sm:$0xff]
    %v2264 = vld [vmem:[%s2230 + $0x108] sm:$0xff]
    %v2265 = vld [vmem:[%s2230 + $0x110] sm:$0xff]
    %v2266 = vld [vmem:[%s2230 + $0x118] sm:$0xff]
    %v2267 = vld [vmem:[%s2230 + $0x120] sm:$0xff]
    %v2268 = vld [vmem:[%s2230 + $0x128] sm:$0xff]
    %v2269 = vld [vmem:[%s2230 + $0x130] sm:$0xff]
    %v2270 = vld [vmem:[%s2230 + $0x138] sm:$0xff]
    %v2271 = vld [vmem:[%s2230 + $0x140] sm:$0xff]
    %v2272 = vld [vmem:[%s2230 + $0x148] sm:$0xff]
    %v2273 = vld [vmem:[%s2230 + $0x150] sm:$0xff]
    %v2274 = vld [vmem:[%s2230 + $0x158] sm:$0xff]
    %v2275 = vld [vmem:[%s2230 + $0x160] sm:$0xff]
    %v2276 = vld [vmem:[%s2230 + $0x168] sm:$0xff]
    %v2277 = vld [vmem:[%s2230 + $0x170] sm:$0xff]
    %v2278 = vld [vmem:[%s2230 + $0x178] sm:$0xff]
    %v2279 = vld [vmem:[%s2230 + $0x180] sm:$0xff]
    %v2280 = vld [vmem:[%s2230 + $0x188] sm:$0xff]
    %v2281 = vld [vmem:[%s2230 + $0x190] sm:$0xff]
    %v2282 = vld [vmem:[%s2230 + $0x198] sm:$0xff]
    %v2283 = vld [vmem:[%s2230 + $0x1a0] sm:$0xff]
    %v2284 = vld [vmem:[%s2230 + $0x1a8] sm:$0xff]
    %v2285 = vld [vmem:[%s2230 + $0x1b0] sm:$0xff]
    %v2286 = vld [vmem:[%s2230 + $0x1b8] sm:$0xff]
    %v2287 = vld [vmem:[%s2230 + $0x1c0] sm:$0xff]
    %v2288 = vld [vmem:[%s2230 + $0x1c8] sm:$0xff]
    %v2289 = vld [vmem:[%s2230 + $0x1d0] sm:$0xff]
    %v2290 = vld [vmem:[%s2230 + $0x1d8] sm:$0xff]
    %v2291 = vld [vmem:[%s2230 + $0x1e0] sm:$0xff]
    %v2292 = vld [vmem:[%s2230 + $0x1e8] sm:$0xff]
    %v2293 = vld [vmem:[%s2230 + $0x1f0] sm:$0xff]
    %v2294 = vld [vmem:[%s2230 + $0x1f8] sm:$0xff]
    %v2295 = vld [vmem:[%s2230 + $0x200] sm:$0xff]
    %v2296 = vld [vmem:[%s2230 + $0x208] sm:$0xff]
    %v2297 = vld [vmem:[%s2230 + $0x210] sm:$0xff]
    %v2298 = vld [vmem:[%s2230 + $0x218] sm:$0xff]
    %v2299 = vld [vmem:[%s2230 + $0x220] sm:$0xff]
    %v2300 = vld [vmem:[%s2230 + $0x228] sm:$0xff]
    %v2301 = vld [vmem:[%s2230 + $0x230] sm:$0xff]
    %v2302 = vld [vmem:[%s2230 + $0x238] sm:$0xff]
    %v2303 = vld [vmem:[%s2230 + $0x240] sm:$0xff]
    %v2304 = vld [vmem:[%s2230 + $0x248] sm:$0xff]
    %v2305 = vld [vmem:[%s2230 + $0x250] sm:$0xff]
    %v2306 = vld [vmem:[%s2230 + $0x258] sm:$0xff]
    %v2307 = vld [vmem:[%s2230 + $0x260] sm:$0xff]
    %v2308 = vld [vmem:[%s2230 + $0x268] sm:$0xff]
    %v2309 = vld [vmem:[%s2230 + $0x270] sm:$0xff]
    %v2310 = vld [vmem:[%s2230 + $0x278] sm:$0xff]
    %v2311 = vld [vmem:[%s2230 + $0x280] sm:$0xff]
    %v2312 = vld [vmem:[%s2230 + $0x288] sm:$0xff]
    %v2313 = vld [vmem:[%s2230 + $0x290] sm:$0xff]
    %v2314 = vld [vmem:[%s2230 + $0x298] sm:$0xff]
    %v2315 = vld [vmem:[%s2230 + $0x2a0] sm:$0xff]
    %v2316 = vld [vmem:[%s2230 + $0x2a8] sm:$0xff]
    %v2317 = vld [vmem:[%s2230 + $0x2b0] sm:$0xff]
    %v2318 = vld [vmem:[%s2230 + $0x2b8] sm:$0xff]
    %v2319 = vld [vmem:[%s2230 + $0x2c0] sm:$0xff]
    %v2320 = vld [vmem:[%s2230 + $0x2c8] sm:$0xff]
    %v2321 = vld [vmem:[%s2230 + $0x2d0] sm:$0xff]
    %v2322 = vld [vmem:[%s2230 + $0x2d8] sm:$0xff]
    %v2323 = vld [vmem:[%s2230 + $0x2e0] sm:$0xff]
    %v2324 = vld [vmem:[%s2230 + $0x2e8] sm:$0xff]
    %v2325 = vld [vmem:[%s2230 + $0x2f0] sm:$0xff]
    %v2326 = vld [vmem:[%s2230 + $0x2f8] sm:$0xff]
    %2327 = vmatprep.subr.mxu0 %v2277
    %2328 = vmatpush1.msra.mxu0 %v2276
    %2329 = vmatprep.subr.mxu0 %v2274
    %2330 = vmatpush1.msra.mxu0 %v2273
    %2331 = vmatprep.subr.mxu0 %v2271
    %2332 = vmatpush1.msra.mxu0 %v2270
    %2333 = vmatprep.subr.mxu0 %v2268
    %2334 = vmatpush1.msra.mxu0 %v2267
    %2335 = vmatprep.subr.mxu0 %v2265
    %2336 = vmatpush1.msra.mxu0 %v2264
    %2337 = vmatprep.subr.mxu0 %v2262
    %2338 = vmatpush1.msra.mxu0 %v2261
    %2339 = vmatprep.subr.mxu0 %v2259
    %2340 = vmatpush1.msra.mxu0 %v2258
    %2341 = vmatprep.subr.mxu0 %v2256
    %2342 = vmatpush1.msra.mxu0 %v2255
    %2343 = vmatprep.subr.mxu0 %v2253
    %2344 = vmatpush1.msra.mxu0 %v2252
    %2345 = vmatprep.subr.mxu0 %v2250
    %2346 = vmatpush1.msra.mxu0 %v2249
    %2347 = vmatprep.subr.mxu0 %v2247
    %2348 = vmatpush1.msra.mxu0 %v2246
    %2349 = vmatprep.subr.mxu0 %v2244
    %2350 = vmatpush1.msra.mxu0 %v2243
    %2351 = vmatprep.subr.mxu0 %v2241
    %2352 = vmatpush1.msra.mxu0 %v2240
    %2353 = vmatprep.subr.mxu0 %v2238
    %2354 = vmatpush1.msra.mxu0 %v2237
    %2355 = vmatprep.subr.mxu0 %v2235
    %2356 = vmatpush1.msra.mxu0 %v2234
    %2357 = vmatprep.subr.mxu0 %v2232
    %2358 = vmatpush1.msra.mxu0 %v2231
    %2359 = vmatprep.subr.mxu0 %v2325
    %2360 = vmatpush2.msra.mxu0 %v2324
    %2361 = vmatprep.subr.mxu0 %v2322
    %2362 = vmatpush2.msra.mxu0 %v2321
    %2363 = vmatprep.subr.mxu0 %v2319
    %2364 = vmatpush2.msra.mxu0 %v2318
    %2365 = vmatprep.subr.mxu0 %v2316
    %2366 = vmatpush2.msra.mxu0 %v2315
    %2367 = vmatprep.subr.mxu0 %v2313
    %2368 = vmatpush2.msra.mxu0 %v2312
    %2369 = vmatprep.subr.mxu0 %v2310
    %2370 = vmatpush2.msra.mxu0 %v2309
    %2371 = vmatprep.subr.mxu0 %v2307
    %2372 = vmatpush2.msra.mxu0 %v2306
    %2373 = vmatprep.subr.mxu0 %v2304
    %2374 = vmatpush2.msra.mxu0 %v2303
    %2375 = vmatprep.subr.mxu0 %v2301
    %2376 = vmatpush2.msra.mxu0 %v2300
    %2377 = vmatprep.subr.mxu0 %v2298
    %2378 = vmatpush2.msra.mxu0 %v2297
    %2379 = vmatprep.subr.mxu0 %v2295
    %2380 = vmatpush2.msra.mxu0 %v2294
    %2381 = vmatprep.subr.mxu0 %v2292
    %2382 = vmatpush2.msra.mxu0 %v2291
    %2383 = vmatprep.subr.mxu0 %v2289
    %2384 = vmatpush2.msra.mxu0 %v2288
    %2385 = vmatprep.subr.mxu0 %v2286
    %2386 = vmatpush2.msra.mxu0 %v2285
    %2387 = vmatprep.subr.mxu0 %v2283
    %2388 = vmatpush2.msra.mxu0 %v2282
    %2389 = vmatprep.subr.mxu0 %v2280
    %2390 = vmatpush2.msra.mxu0 %v2279
    %2391 = vmatprep.mubr.f32.mxu0 %v801
    %2392 = vmatmul.mubr.f32.gmra.mxu0 %v800
    %v2393 = vpop.f32.mrf.mxu0
    %v2394 = vadd.f32 0.0, %v2393
    %v2395 = vpop.f32.mrf.mxu0
    %v2396 = vadd.f32 0.0, %v2395
    %2397 = vdwg.mxu0
    %2398 = vmatprep.subr.mxu0 0.0
    %2399 = vmatpush1.msra.mxu0 %v2278
    %2400 = vmatprep.subr.mxu0 0.0
    %2401 = vmatpush1.msra.mxu0 %v2275
    %2402 = vmatprep.subr.mxu0 0.0
    %2403 = vmatpush1.msra.mxu0 %v2272
    %2404 = vmatprep.subr.mxu0 0.0
    %2405 = vmatpush1.msra.mxu0 %v2269
    %2406 = vmatprep.subr.mxu0 0.0
    %2407 = vmatpush1.msra.mxu0 %v2266
    %2408 = vmatprep.subr.mxu0 0.0
    %2409 = vmatpush1.msra.mxu0 %v2263
    %2410 = vmatprep.subr.mxu0 0.0
    %2411 = vmatpush1.msra.mxu0 %v2260
    %2412 = vmatprep.subr.mxu0 0.0
    %2413 = vmatpush1.msra.mxu0 %v2257
    %2414 = vmatprep.subr.mxu0 0.0
    %2415 = vmatpush1.msra.mxu0 %v2254
    %2416 = vmatprep.subr.mxu0 0.0
    %2417 = vmatpush1.msra.mxu0 %v2251
    %2418 = vmatprep.subr.mxu0 0.0
    %2419 = vmatpush1.msra.mxu0 %v2248
    %2420 = vmatprep.subr.mxu0 0.0
    %2421 = vmatpush1.msra.mxu0 %v2245
    %2422 = vmatprep.subr.mxu0 0.0
    %2423 = vmatpush1.msra.mxu0 %v2242
    %2424 = vmatprep.subr.mxu0 0.0
    %2425 = vmatpush1.msra.mxu0 %v2239
    %2426 = vmatprep.subr.mxu0 0.0
    %2427 = vmatpush1.msra.mxu0 %v2236
    %2428 = vmatprep.subr.mxu0 0.0
    %2429 = vmatpush1.msra.mxu0 %v2233
    %2430 = vmatprep.subr.mxu0 0.0
    %2431 = vmatpush2.msra.mxu0 %v2326
    %2432 = vmatprep.subr.mxu0 0.0
    %2433 = vmatpush2.msra.mxu0 %v2323
    %2434 = vmatprep.subr.mxu0 0.0
    %2435 = vmatpush2.msra.mxu0 %v2320
    %2436 = vmatprep.subr.mxu0 0.0
    %2437 = vmatpush2.msra.mxu0 %v2317
    %2438 = vmatprep.subr.mxu0 0.0
    %2439 = vmatpush2.msra.mxu0 %v2314
    %2440 = vmatprep.subr.mxu0 0.0
    %2441 = vmatpush2.msra.mxu0 %v2311
    %2442 = vmatprep.subr.mxu0 0.0
    %2443 = vmatpush2.msra.mxu0 %v2308
    %2444 = vmatprep.subr.mxu0 0.0
    %2445 = vmatpush2.msra.mxu0 %v2305
    %2446 = vmatprep.subr.mxu0 0.0
    %2447 = vmatpush2.msra.mxu0 %v2302
    %2448 = vmatprep.subr.mxu0 0.0
    %2449 = vmatpush2.msra.mxu0 %v2299
    %2450 = vmatprep.subr.mxu0 0.0
    %2451 = vmatpush2.msra.mxu0 %v2296
    %2452 = vmatprep.subr.mxu0 0.0
    %2453 = vmatpush2.msra.mxu0 %v2293
    %2454 = vmatprep.subr.mxu0 0.0
    %2455 = vmatpush2.msra.mxu0 %v2290
    %2456 = vmatprep.subr.mxu0 0.0
    %2457 = vmatpush2.msra.mxu0 %v2287
    %2458 = vmatprep.subr.mxu0 0.0
    %2459 = vmatpush2.msra.mxu0 %v2284
    %2460 = vmatprep.subr.mxu0 0.0
    %2461 = vmatpush2.msra.mxu0 %v2281
    %2462 = vmatprep.mubr.f32.mxu0 %v801
    %2463 = vmatmul.mubr.f32.gmra.mxu0 %v800
    %v2464 = vpop.f32.mrf.mxu0
    %v2465 = vadd.f32 0.0, %v2464
    %v2466 = vpop.f32.mrf.mxu0
    %2467 = vdwg.mxu0
    %2468 = vmatprep.subr.mxu0 %v2180
    %2469 = vmatpush1.msra.mxu0 %v2179
    %2470 = vmatprep.subr.mxu0 %v2177
    %2471 = vmatpush1.msra.mxu0 %v2176
    %2472 = vmatprep.subr.mxu0 %v2174
    %2473 = vmatpush1.msra.mxu0 %v2173
    %2474 = vmatprep.subr.mxu0 %v2171
    %2475 = vmatpush1.msra.mxu0 %v2170
    %2476 = vmatprep.subr.mxu0 %v2168
    %2477 = vmatpush1.msra.mxu0 %v2167
    %2478 = vmatprep.subr.mxu0 %v2165
    %2479 = vmatpush1.msra.mxu0 %v2164
    %2480 = vmatprep.subr.mxu0 %v2162
    %2481 = vmatpush1.msra.mxu0 %v2161
    %2482 = vmatprep.subr.mxu0 %v2159
    %2483 = vmatpush1.msra.mxu0 %v2158
    %2484 = vmatprep.subr.mxu0 %v2156
    %2485 = vmatpush1.msra.mxu0 %v2155
    %2486 = vmatprep.subr.mxu0 %v2153
    %2487 = vmatpush1.msra.mxu0 %v2152
    %2488 = vmatprep.subr.mxu0 %v2150
    %2489 = vmatpush1.msra.mxu0 %v2149
    %2490 = vmatprep.subr.mxu0 %v2147
    %2491 = vmatpush1.msra.mxu0 %v2146
    %2492 = vmatprep.subr.mxu0 %v2144
    %2493 = vmatpush1.msra.mxu0 %v2143
    %2494 = vmatprep.subr.mxu0 %v2141
    %2495 = vmatpush1.msra.mxu0 %v2140
    %2496 = vmatprep.subr.mxu0 %v2138
    %2497 = vmatpush1.msra.mxu0 %v2137
    %2498 = vmatprep.subr.mxu0 %v2135
    %2499 = vmatpush1.msra.mxu0 %v2134
    %2500 = vmatprep.subr.mxu0 %v2228
    %2501 = vmatpush2.msra.mxu0 %v2227
    %2502 = vmatprep.subr.mxu0 %v2225
    %2503 = vmatpush2.msra.mxu0 %v2224
    %2504 = vmatprep.subr.mxu0 %v2222
    %2505 = vmatpush2.msra.mxu0 %v2221
    %2506 = vmatprep.subr.mxu0 %v2219
    %2507 = vmatpush2.msra.mxu0 %v2218
    %2508 = vmatprep.subr.mxu0 %v2216
    %2509 = vmatpush2.msra.mxu0 %v2215
    %2510 = vmatprep.subr.mxu0 %v2213
    %2511 = vmatpush2.msra.mxu0 %v2212
    %2512 = vmatprep.subr.mxu0 %v2210
    %2513 = vmatpush2.msra.mxu0 %v2209
    %2514 = vmatprep.subr.mxu0 %v2207
    %2515 = vmatpush2.msra.mxu0 %v2206
    %2516 = vmatprep.subr.mxu0 %v2204
    %2517 = vmatpush2.msra.mxu0 %v2203
    %2518 = vmatprep.subr.mxu0 %v2201
    %2519 = vmatpush2.msra.mxu0 %v2200
    %2520 = vmatprep.subr.mxu0 %v2198
    %2521 = vmatpush2.msra.mxu0 %v2197
    %2522 = vmatprep.subr.mxu0 %v2195
    %2523 = vmatpush2.msra.mxu0 %v2194
    %2524 = vmatprep.subr.mxu0 %v2192
    %2525 = vmatpush2.msra.mxu0 %v2191
    %2526 = vmatprep.subr.mxu0 %v2189
    %2527 = vmatpush2.msra.mxu0 %v2188
    %2528 = vmatprep.subr.mxu0 %v2186
    %2529 = vmatpush2.msra.mxu0 %v2185
    %2530 = vmatprep.subr.mxu0 %v2183
    %2531 = vmatpush2.msra.mxu0 %v2182
    %2532 = vmatprep.mubr.f32.mxu0 %v579
    %2533 = vmatmul.mubr.f32.gmra.mxu0 %v578
    %v2534 = vpop.f32.mrf.mxu0
    %v2535 = vadd.f32 %v2394, %v2534
    %v2536 = vpop.f32.mrf.mxu0
    %v2537 = vadd.f32 %v2396, %v2536
    %2538 = vdwg.mxu0
    %2539 = vmatprep.subr.mxu0 0.0
    %2540 = vmatpush1.msra.mxu0 %v2181
    %2541 = vmatprep.subr.mxu0 0.0
    %2542 = vmatpush1.msra.mxu0 %v2178
    %2543 = vmatprep.subr.mxu0 0.0
    %2544 = vmatpush1.msra.mxu0 %v2175
    %2545 = vmatprep.subr.mxu0 0.0
    %2546 = vmatpush1.msra.mxu0 %v2172
    %2547 = vmatprep.subr.mxu0 0.0
    %2548 = vmatpush1.msra.mxu0 %v2169
    %2549 = vmatprep.subr.mxu0 0.0
    %2550 = vmatpush1.msra.mxu0 %v2166
    %2551 = vmatprep.subr.mxu0 0.0
    %2552 = vmatpush1.msra.mxu0 %v2163
    %2553 = vmatprep.subr.mxu0 0.0
    %2554 = vmatpush1.msra.mxu0 %v2160
    %2555 = vmatprep.subr.mxu0 0.0
    %2556 = vmatpush1.msra.mxu0 %v2157
    %2557 = vmatprep.subr.mxu0 0.0
    %2558 = vmatpush1.msra.mxu0 %v2154
    %2559 = vmatprep.subr.mxu0 0.0
    %2560 = vmatpush1.msra.mxu0 %v2151
    %2561 = vmatprep.subr.mxu0 0.0
    %2562 = vmatpush1.msra.mxu0 %v2148
    %2563 = vmatprep.subr.mxu0 0.0
    %2564 = vmatpush1.msra.mxu0 %v2145
    %2565 = vmatprep.subr.mxu0 0.0
    %2566 = vmatpush1.msra.mxu0 %v2142
    %2567 = vmatprep.subr.mxu0 0.0
    %2568 = vmatpush1.msra.mxu0 %v2139
    %2569 = vmatprep.subr.mxu0 0.0
    %2570 = vmatpush1.msra.mxu0 %v2136
    %2571 = vmatprep.subr.mxu0 0.0
    %2572 = vmatpush2.msra.mxu0 %v2229
    %2573 = vmatprep.subr.mxu0 0.0
    %2574 = vmatpush2.msra.mxu0 %v2226
    %2575 = vmatprep.subr.mxu0 0.0
    %2576 = vmatpush2.msra.mxu0 %v2223
    %2577 = vmatprep.subr.mxu0 0.0
    %2578 = vmatpush2.msra.mxu0 %v2220
    %2579 = vmatprep.subr.mxu0 0.0
    %2580 = vmatpush2.msra.mxu0 %v2217
    %2581 = vmatprep.subr.mxu0 0.0
    %2582 = vmatpush2.msra.mxu0 %v2214
    %2583 = vmatprep.subr.mxu0 0.0
    %2584 = vmatpush2.msra.mxu0 %v2211
    %2585 = vmatprep.subr.mxu0 0.0
    %2586 = vmatpush2.msra.mxu0 %v2208
    %2587 = vmatprep.subr.mxu0 0.0
    %2588 = vmatpush2.msra.mxu0 %v2205
    %2589 = vmatprep.subr.mxu0 0.0
    %2590 = vmatpush2.msra.mxu0 %v2202
    %2591 = vmatprep.subr.mxu0 0.0
    %2592 = vmatpush2.msra.mxu0 %v2199
    %2593 = vmatprep.subr.mxu0 0.0
    %2594 = vmatpush2.msra.mxu0 %v2196
    %2595 = vmatprep.subr.mxu0 0.0
    %2596 = vmatpush2.msra.mxu0 %v2193
    %2597 = vmatprep.subr.mxu0 0.0
    %2598 = vmatpush2.msra.mxu0 %v2190
    %2599 = vmatprep.subr.mxu0 0.0
    %2600 = vmatpush2.msra.mxu0 %v2187
    %2601 = vmatprep.subr.mxu0 0.0
    %2602 = vmatpush2.msra.mxu0 %v2184
    %2603 = vmatprep.mubr.f32.mxu0 %v579
    %2604 = vmatmul.mubr.f32.gmra.mxu0 %v578
    %v2605 = vpop.f32.mrf.mxu0
    %v2606 = vadd.f32 %v2465, %v2605
    %v2607 = vpop.f32.mrf.mxu0
    %2608 = vdwg.mxu0
    %s2609 = scalar_lea.vmem [#allocation7], 1536
    %v2610 = vld [vmem:[%s2609] sm:$0xff]
    %v2611 = vld [vmem:[%s2609 + $0x8] sm:$0xff]
    %v2612 = vld [vmem:[%s2609 + $0x10] sm:$0xff]
    %v2613 = vld [vmem:[%s2609 + $0x18] sm:$0xff]
    %v2614 = vld [vmem:[%s2609 + $0x20] sm:$0xff]
    %v2615 = vld [vmem:[%s2609 + $0x28] sm:$0xff]
    %v2616 = vld [vmem:[%s2609 + $0x30] sm:$0xff]
    %v2617 = vld [vmem:[%s2609 + $0x38] sm:$0xff]
    %v2618 = vld [vmem:[%s2609 + $0x40] sm:$0xff]
    %v2619 = vld [vmem:[%s2609 + $0x48] sm:$0xff]
    %v2620 = vld [vmem:[%s2609 + $0x50] sm:$0xff]
    %v2621 = vld [vmem:[%s2609 + $0x58] sm:$0xff]
    %v2622 = vld [vmem:[%s2609 + $0x60] sm:$0xff]
    %v2623 = vld [vmem:[%s2609 + $0x68] sm:$0xff]
    %v2624 = vld [vmem:[%s2609 + $0x70] sm:$0xff]
    %v2625 = vld [vmem:[%s2609 + $0x78] sm:$0xff]
    %v2626 = vld [vmem:[%s2609 + $0x80] sm:$0xff]
    %v2627 = vld [vmem:[%s2609 + $0x88] sm:$0xff]
    %v2628 = vld [vmem:[%s2609 + $0x90] sm:$0xff]
    %v2629 = vld [vmem:[%s2609 + $0x98] sm:$0xff]
    %v2630 = vld [vmem:[%s2609 + $0xa0] sm:$0xff]
    %v2631 = vld [vmem:[%s2609 + $0xa8] sm:$0xff]
    %v2632 = vld [vmem:[%s2609 + $0xb0] sm:$0xff]
    %v2633 = vld [vmem:[%s2609 + $0xb8] sm:$0xff]
    %v2634 = vld [vmem:[%s2609 + $0xc0] sm:$0xff]
    %v2635 = vld [vmem:[%s2609 + $0xc8] sm:$0xff]
    %v2636 = vld [vmem:[%s2609 + $0xd0] sm:$0xff]
    %v2637 = vld [vmem:[%s2609 + $0xd8] sm:$0xff]
    %v2638 = vld [vmem:[%s2609 + $0xe0] sm:$0xff]
    %v2639 = vld [vmem:[%s2609 + $0xe8] sm:$0xff]
    %v2640 = vld [vmem:[%s2609 + $0xf0] sm:$0xff]
    %v2641 = vld [vmem:[%s2609 + $0xf8] sm:$0xff]
    %v2642 = vld [vmem:[%s2609 + $0x100] sm:$0xff]
    %v2643 = vld [vmem:[%s2609 + $0x108] sm:$0xff]
    %v2644 = vld [vmem:[%s2609 + $0x110] sm:$0xff]
    %v2645 = vld [vmem:[%s2609 + $0x118] sm:$0xff]
    %v2646 = vld [vmem:[%s2609 + $0x120] sm:$0xff]
    %v2647 = vld [vmem:[%s2609 + $0x128] sm:$0xff]
    %v2648 = vld [vmem:[%s2609 + $0x130] sm:$0xff]
    %v2649 = vld [vmem:[%s2609 + $0x138] sm:$0xff]
    %v2650 = vld [vmem:[%s2609 + $0x140] sm:$0xff]
    %v2651 = vld [vmem:[%s2609 + $0x148] sm:$0xff]
    %v2652 = vld [vmem:[%s2609 + $0x150] sm:$0xff]
    %v2653 = vld [vmem:[%s2609 + $0x158] sm:$0xff]
    %v2654 = vld [vmem:[%s2609 + $0x160] sm:$0xff]
    %v2655 = vld [vmem:[%s2609 + $0x168] sm:$0xff]
    %v2656 = vld [vmem:[%s2609 + $0x170] sm:$0xff]
    %v2657 = vld [vmem:[%s2609 + $0x178] sm:$0xff]
    %v2658 = vld [vmem:[%s2609 + $0x180] sm:$0xff]
    %v2659 = vld [vmem:[%s2609 + $0x188] sm:$0xff]
    %v2660 = vld [vmem:[%s2609 + $0x190] sm:$0xff]
    %v2661 = vld [vmem:[%s2609 + $0x198] sm:$0xff]
    %v2662 = vld [vmem:[%s2609 + $0x1a0] sm:$0xff]
    %v2663 = vld [vmem:[%s2609 + $0x1a8] sm:$0xff]
    %v2664 = vld [vmem:[%s2609 + $0x1b0] sm:$0xff]
    %v2665 = vld [vmem:[%s2609 + $0x1b8] sm:$0xff]
    %v2666 = vld [vmem:[%s2609 + $0x1c0] sm:$0xff]
    %v2667 = vld [vmem:[%s2609 + $0x1c8] sm:$0xff]
    %v2668 = vld [vmem:[%s2609 + $0x1d0] sm:$0xff]
    %v2669 = vld [vmem:[%s2609 + $0x1d8] sm:$0xff]
    %v2670 = vld [vmem:[%s2609 + $0x1e0] sm:$0xff]
    %v2671 = vld [vmem:[%s2609 + $0x1e8] sm:$0xff]
    %v2672 = vld [vmem:[%s2609 + $0x1f0] sm:$0xff]
    %v2673 = vld [vmem:[%s2609 + $0x1f8] sm:$0xff]
    %v2674 = vld [vmem:[%s2609 + $0x200] sm:$0xff]
    %v2675 = vld [vmem:[%s2609 + $0x208] sm:$0xff]
    %v2676 = vld [vmem:[%s2609 + $0x210] sm:$0xff]
    %v2677 = vld [vmem:[%s2609 + $0x218] sm:$0xff]
    %v2678 = vld [vmem:[%s2609 + $0x220] sm:$0xff]
    %v2679 = vld [vmem:[%s2609 + $0x228] sm:$0xff]
    %v2680 = vld [vmem:[%s2609 + $0x230] sm:$0xff]
    %v2681 = vld [vmem:[%s2609 + $0x238] sm:$0xff]
    %v2682 = vld [vmem:[%s2609 + $0x240] sm:$0xff]
    %v2683 = vld [vmem:[%s2609 + $0x248] sm:$0xff]
    %v2684 = vld [vmem:[%s2609 + $0x250] sm:$0xff]
    %v2685 = vld [vmem:[%s2609 + $0x258] sm:$0xff]
    %v2686 = vld [vmem:[%s2609 + $0x260] sm:$0xff]
    %v2687 = vld [vmem:[%s2609 + $0x268] sm:$0xff]
    %v2688 = vld [vmem:[%s2609 + $0x270] sm:$0xff]
    %v2689 = vld [vmem:[%s2609 + $0x278] sm:$0xff]
    %v2690 = vld [vmem:[%s2609 + $0x280] sm:$0xff]
    %v2691 = vld [vmem:[%s2609 + $0x288] sm:$0xff]
    %v2692 = vld [vmem:[%s2609 + $0x290] sm:$0xff]
    %v2693 = vld [vmem:[%s2609 + $0x298] sm:$0xff]
    %v2694 = vld [vmem:[%s2609 + $0x2a0] sm:$0xff]
    %v2695 = vld [vmem:[%s2609 + $0x2a8] sm:$0xff]
    %v2696 = vld [vmem:[%s2609 + $0x2b0] sm:$0xff]
    %v2697 = vld [vmem:[%s2609 + $0x2b8] sm:$0xff]
    %v2698 = vld [vmem:[%s2609 + $0x2c0] sm:$0xff]
    %v2699 = vld [vmem:[%s2609 + $0x2c8] sm:$0xff]
    %v2700 = vld [vmem:[%s2609 + $0x2d0] sm:$0xff]
    %v2701 = vld [vmem:[%s2609 + $0x2d8] sm:$0xff]
    %v2702 = vld [vmem:[%s2609 + $0x2e0] sm:$0xff]
    %v2703 = vld [vmem:[%s2609 + $0x2e8] sm:$0xff]
    %v2704 = vld [vmem:[%s2609 + $0x2f0] sm:$0xff]
    %v2705 = vld [vmem:[%s2609 + $0x2f8] sm:$0xff]
    %2706 = vmatprep.subr.mxu0 %v2656
    %2707 = vmatpush1.msra.mxu0 %v2655
    %2708 = vmatprep.subr.mxu0 %v2653
    %2709 = vmatpush1.msra.mxu0 %v2652
    %2710 = vmatprep.subr.mxu0 %v2650
    %2711 = vmatpush1.msra.mxu0 %v2649
    %2712 = vmatprep.subr.mxu0 %v2647
    %2713 = vmatpush1.msra.mxu0 %v2646
    %2714 = vmatprep.subr.mxu0 %v2644
    %2715 = vmatpush1.msra.mxu0 %v2643
    %2716 = vmatprep.subr.mxu0 %v2641
    %2717 = vmatpush1.msra.mxu0 %v2640
    %2718 = vmatprep.subr.mxu0 %v2638
    %2719 = vmatpush1.msra.mxu0 %v2637
    %2720 = vmatprep.subr.mxu0 %v2635
    %2721 = vmatpush1.msra.mxu0 %v2634
    %2722 = vmatprep.subr.mxu0 %v2632
    %2723 = vmatpush1.msra.mxu0 %v2631
    %2724 = vmatprep.subr.mxu0 %v2629
    %2725 = vmatpush1.msra.mxu0 %v2628
    %2726 = vmatprep.subr.mxu0 %v2626
    %2727 = vmatpush1.msra.mxu0 %v2625
    %2728 = vmatprep.subr.mxu0 %v2623
    %2729 = vmatpush1.msra.mxu0 %v2622
    %2730 = vmatprep.subr.mxu0 %v2620
    %2731 = vmatpush1.msra.mxu0 %v2619
    %2732 = vmatprep.subr.mxu0 %v2617
    %2733 = vmatpush1.msra.mxu0 %v2616
    %2734 = vmatprep.subr.mxu0 %v2614
    %2735 = vmatpush1.msra.mxu0 %v2613
    %2736 = vmatprep.subr.mxu0 %v2611
    %2737 = vmatpush1.msra.mxu0 %v2610
    %2738 = vmatprep.subr.mxu0 %v2704
    %2739 = vmatpush2.msra.mxu0 %v2703
    %2740 = vmatprep.subr.mxu0 %v2701
    %2741 = vmatpush2.msra.mxu0 %v2700
    %2742 = vmatprep.subr.mxu0 %v2698
    %2743 = vmatpush2.msra.mxu0 %v2697
    %2744 = vmatprep.subr.mxu0 %v2695
    %2745 = vmatpush2.msra.mxu0 %v2694
    %2746 = vmatprep.subr.mxu0 %v2692
    %2747 = vmatpush2.msra.mxu0 %v2691
    %2748 = vmatprep.subr.mxu0 %v2689
    %2749 = vmatpush2.msra.mxu0 %v2688
    %2750 = vmatprep.subr.mxu0 %v2686
    %2751 = vmatpush2.msra.mxu0 %v2685
    %2752 = vmatprep.subr.mxu0 %v2683
    %2753 = vmatpush2.msra.mxu0 %v2682
    %2754 = vmatprep.subr.mxu0 %v2680
    %2755 = vmatpush2.msra.mxu0 %v2679
    %2756 = vmatprep.subr.mxu0 %v2677
    %2757 = vmatpush2.msra.mxu0 %v2676
    %2758 = vmatprep.subr.mxu0 %v2674
    %2759 = vmatpush2.msra.mxu0 %v2673
    %2760 = vmatprep.subr.mxu0 %v2671
    %2761 = vmatpush2.msra.mxu0 %v2670
    %2762 = vmatprep.subr.mxu0 %v2668
    %2763 = vmatpush2.msra.mxu0 %v2667
    %2764 = vmatprep.subr.mxu0 %v2665
    %2765 = vmatpush2.msra.mxu0 %v2664
    %2766 = vmatprep.subr.mxu0 %v2662
    %2767 = vmatpush2.msra.mxu0 %v2661
    %2768 = vmatprep.subr.mxu0 %v2659
    %2769 = vmatpush2.msra.mxu0 %v2658
    %2770 = vmatprep.mubr.f32.mxu0 %v1023
    %2771 = vmatmul.mubr.f32.gmra.mxu0 %v1022
    %v2772 = vpop.f32.mrf.mxu0
    %v2773 = vadd.f32 0.0, %v2772
    %v2774 = vpop.f32.mrf.mxu0
    %v2775 = vadd.f32 0.0, %v2774
    %2776 = vdwg.mxu0
    %2777 = vmatprep.subr.mxu0 0.0
    %2778 = vmatpush1.msra.mxu0 %v2657
    %2779 = vmatprep.subr.mxu0 0.0
    %2780 = vmatpush1.msra.mxu0 %v2654
    %2781 = vmatprep.subr.mxu0 0.0
    %2782 = vmatpush1.msra.mxu0 %v2651
    %2783 = vmatprep.subr.mxu0 0.0
    %2784 = vmatpush1.msra.mxu0 %v2648
    %2785 = vmatprep.subr.mxu0 0.0
    %2786 = vmatpush1.msra.mxu0 %v2645
    %2787 = vmatprep.subr.mxu0 0.0
    %2788 = vmatpush1.msra.mxu0 %v2642
    %2789 = vmatprep.subr.mxu0 0.0
    %2790 = vmatpush1.msra.mxu0 %v2639
    %2791 = vmatprep.subr.mxu0 0.0
    %2792 = vmatpush1.msra.mxu0 %v2636
    %2793 = vmatprep.subr.mxu0 0.0
    %2794 = vmatpush1.msra.mxu0 %v2633
    %2795 = vmatprep.subr.mxu0 0.0
    %2796 = vmatpush1.msra.mxu0 %v2630
    %2797 = vmatprep.subr.mxu0 0.0
    %2798 = vmatpush1.msra.mxu0 %v2627
    %2799 = vmatprep.subr.mxu0 0.0
    %2800 = vmatpush1.msra.mxu0 %v2624
    %2801 = vmatprep.subr.mxu0 0.0
    %2802 = vmatpush1.msra.mxu0 %v2621
    %2803 = vmatprep.subr.mxu0 0.0
    %2804 = vmatpush1.msra.mxu0 %v2618
    %2805 = vmatprep.subr.mxu0 0.0
    %2806 = vmatpush1.msra.mxu0 %v2615
    %2807 = vmatprep.subr.mxu0 0.0
    %2808 = vmatpush1.msra.mxu0 %v2612
    %2809 = vmatprep.subr.mxu0 0.0
    %2810 = vmatpush2.msra.mxu0 %v2705
    %2811 = vmatprep.subr.mxu0 0.0
    %2812 = vmatpush2.msra.mxu0 %v2702
    %2813 = vmatprep.subr.mxu0 0.0
    %2814 = vmatpush2.msra.mxu0 %v2699
    %2815 = vmatprep.subr.mxu0 0.0
    %2816 = vmatpush2.msra.mxu0 %v2696
    %2817 = vmatprep.subr.mxu0 0.0
    %2818 = vmatpush2.msra.mxu0 %v2693
    %2819 = vmatprep.subr.mxu0 0.0
    %2820 = vmatpush2.msra.mxu0 %v2690
    %2821 = vmatprep.subr.mxu0 0.0
    %2822 = vmatpush2.msra.mxu0 %v2687
    %2823 = vmatprep.subr.mxu0 0.0
    %2824 = vmatpush2.msra.mxu0 %v2684
    %2825 = vmatprep.subr.mxu0 0.0
    %2826 = vmatpush2.msra.mxu0 %v2681
    %2827 = vmatprep.subr.mxu0 0.0
    %2828 = vmatpush2.msra.mxu0 %v2678
    %2829 = vmatprep.subr.mxu0 0.0
    %2830 = vmatpush2.msra.mxu0 %v2675
    %2831 = vmatprep.subr.mxu0 0.0
    %2832 = vmatpush2.msra.mxu0 %v2672
    %2833 = vmatprep.subr.mxu0 0.0
    %2834 = vmatpush2.msra.mxu0 %v2669
    %2835 = vmatprep.subr.mxu0 0.0
    %2836 = vmatpush2.msra.mxu0 %v2666
    %2837 = vmatprep.subr.mxu0 0.0
    %2838 = vmatpush2.msra.mxu0 %v2663
    %2839 = vmatprep.subr.mxu0 0.0
    %2840 = vmatpush2.msra.mxu0 %v2660
    %2841 = vmatprep.mubr.f32.mxu0 %v1023
    %2842 = vmatmul.mubr.f32.gmra.mxu0 %v1022
    %v2843 = vpop.f32.mrf.mxu0
    %v2844 = vadd.f32 0.0, %v2843
    %v2845 = vpop.f32.mrf.mxu0
    %2846 = vdwg.mxu0
    %v2847 = vadd.f32 %v2535, %v2773
    %v2848 = vadd.f32 %v2537, %v2775
    %v2849 = vadd.f32 %v2606, %v2844
    %v2850 = vld [vmem:[#allocation8] sm:$0x7]
    %v2852 = vlaneseq
    %v2853 = vshrl.u32 %v2852, 7
    %v2854 = vsub.s32 0, %v2853
    %v2855 = vrot.slane %v2850, %v2854
    %v2856 = vlaneseq
    %v2857 = vshrl.u32 %v2856, 7
    %v2858 = vsub.s32 1, %v2857
    %v2859 = vrot.slane %v2850, %v2858
    %v2860 = vlaneseq
    %v2861 = vshrl.u32 %v2860, 7
    %v2862 = vsub.s32 2, %v2861
    %v2863 = vrot.slane %v2850, %v2862
    %v2867 = vadd.f32 %v2847, %v2855
    %v2868 = vadd.f32 %v2848, %v2859
    %v2869 = vadd.f32 %v2849, %v2863
    %v2870 = vmax.f32 %v2867, 0.0
    %v2871 = vmax.f32 %v2868, 0.0
    %v2872 = vmax.f32 %v2869, 0.0
    %2873 = vmatprep.subr.mxu0 %v2277
    %2874 = vmatpush1.msra.mxu0 %v2276
    %2875 = vmatprep.subr.mxu0 %v2274
    %2876 = vmatpush1.msra.mxu0 %v2273
    %2877 = vmatprep.subr.mxu0 %v2271
    %2878 = vmatpush1.msra.mxu0 %v2270
    %2879 = vmatprep.subr.mxu0 %v2268
    %2880 = vmatpush1.msra.mxu0 %v2267
    %2881 = vmatprep.subr.mxu0 %v2265
    %2882 = vmatpush1.msra.mxu0 %v2264
    %2883 = vmatprep.subr.mxu0 %v2262
    %2884 = vmatpush1.msra.mxu0 %v2261
    %2885 = vmatprep.subr.mxu0 %v2259
    %2886 = vmatpush1.msra.mxu0 %v2258
    %2887 = vmatprep.subr.mxu0 %v2256
    %2888 = vmatpush1.msra.mxu0 %v2255
    %2889 = vmatprep.subr.mxu0 %v2253
    %2890 = vmatpush1.msra.mxu0 %v2252
    %2891 = vmatprep.subr.mxu0 %v2250
    %2892 = vmatpush1.msra.mxu0 %v2249
    %2893 = vmatprep.subr.mxu0 %v2247
    %2894 = vmatpush1.msra.mxu0 %v2246
    %2895 = vmatprep.subr.mxu0 %v2244
    %2896 = vmatpush1.msra.mxu0 %v2243
    %2897 = vmatprep.subr.mxu0 %v2241
    %2898 = vmatpush1.msra.mxu0 %v2240
    %2899 = vmatprep.subr.mxu0 %v2238
    %2900 = vmatpush1.msra.mxu0 %v2237
    %2901 = vmatprep.subr.mxu0 %v2235
    %2902 = vmatpush1.msra.mxu0 %v2234
    %2903 = vmatprep.subr.mxu0 %v2232
    %2904 = vmatpush1.msra.mxu0 %v2231
    %2905 = vmatprep.subr.mxu0 %v2325
    %2906 = vmatpush2.msra.mxu0 %v2324
    %2907 = vmatprep.subr.mxu0 %v2322
    %2908 = vmatpush2.msra.mxu0 %v2321
    %2909 = vmatprep.subr.mxu0 %v2319
    %2910 = vmatpush2.msra.mxu0 %v2318
    %2911 = vmatprep.subr.mxu0 %v2316
    %2912 = vmatpush2.msra.mxu0 %v2315
    %2913 = vmatprep.subr.mxu0 %v2313
    %2914 = vmatpush2.msra.mxu0 %v2312
    %2915 = vmatprep.subr.mxu0 %v2310
    %2916 = vmatpush2.msra.mxu0 %v2309
    %2917 = vmatprep.subr.mxu0 %v2307
    %2918 = vmatpush2.msra.mxu0 %v2306
    %2919 = vmatprep.subr.mxu0 %v2304
    %2920 = vmatpush2.msra.mxu0 %v2303
    %2921 = vmatprep.subr.mxu0 %v2301
    %2922 = vmatpush2.msra.mxu0 %v2300
    %2923 = vmatprep.subr.mxu0 %v2298
    %2924 = vmatpush2.msra.mxu0 %v2297
    %2925 = vmatprep.subr.mxu0 %v2295
    %2926 = vmatpush2.msra.mxu0 %v2294
    %2927 = vmatprep.subr.mxu0 %v2292
    %2928 = vmatpush2.msra.mxu0 %v2291
    %2929 = vmatprep.subr.mxu0 %v2289
    %2930 = vmatpush2.msra.mxu0 %v2288
    %2931 = vmatprep.subr.mxu0 %v2286
    %2932 = vmatpush2.msra.mxu0 %v2285
    %2933 = vmatprep.subr.mxu0 %v2283
    %2934 = vmatpush2.msra.mxu0 %v2282
    %2935 = vmatprep.subr.mxu0 %v2280
    %2936 = vmatpush2.msra.mxu0 %v2279
    %2937 = vmatprep.mubr.f32.mxu0 %v1023
    %2938 = vmatmul.mubr.f32.gmra.mxu0 %v1022
    %v2939 = vpop.f32.mrf.mxu0
    %v2940 = vadd.f32 0.0, %v2939
    %v2941 = vpop.f32.mrf.mxu0
    %v2942 = vadd.f32 0.0, %v2941
    %2943 = vdwg.mxu0
    %2944 = vmatprep.subr.mxu0 0.0
    %2945 = vmatpush1.msra.mxu0 %v2278
    %2946 = vmatprep.subr.mxu0 0.0
    %2947 = vmatpush1.msra.mxu0 %v2275
    %2948 = vmatprep.subr.mxu0 0.0
    %2949 = vmatpush1.msra.mxu0 %v2272
    %2950 = vmatprep.subr.mxu0 0.0
    %2951 = vmatpush1.msra.mxu0 %v2269
    %2952 = vmatprep.subr.mxu0 0.0
    %2953 = vmatpush1.msra.mxu0 %v2266
    %2954 = vmatprep.subr.mxu0 0.0
    %2955 = vmatpush1.msra.mxu0 %v2263
    %2956 = vmatprep.subr.mxu0 0.0
    %2957 = vmatpush1.msra.mxu0 %v2260
    %2958 = vmatprep.subr.mxu0 0.0
    %2959 = vmatpush1.msra.mxu0 %v2257
    %2960 = vmatprep.subr.mxu0 0.0
    %2961 = vmatpush1.msra.mxu0 %v2254
    %2962 = vmatprep.subr.mxu0 0.0
    %2963 = vmatpush1.msra.mxu0 %v2251
    %2964 = vmatprep.subr.mxu0 0.0
    %2965 = vmatpush1.msra.mxu0 %v2248
    %2966 = vmatprep.subr.mxu0 0.0
    %2967 = vmatpush1.msra.mxu0 %v2245
    %2968 = vmatprep.subr.mxu0 0.0
    %2969 = vmatpush1.msra.mxu0 %v2242
    %2970 = vmatprep.subr.mxu0 0.0
    %2971 = vmatpush1.msra.mxu0 %v2239
    %2972 = vmatprep.subr.mxu0 0.0
    %2973 = vmatpush1.msra.mxu0 %v2236
    %2974 = vmatprep.subr.mxu0 0.0
    %2975 = vmatpush1.msra.mxu0 %v2233
    %2976 = vmatprep.subr.mxu0 0.0
    %2977 = vmatpush2.msra.mxu0 %v2326
    %2978 = vmatprep.subr.mxu0 0.0
    %2979 = vmatpush2.msra.mxu0 %v2323
    %2980 = vmatprep.subr.mxu0 0.0
    %2981 = vmatpush2.msra.mxu0 %v2320
    %2982 = vmatprep.subr.mxu0 0.0
    %2983 = vmatpush2.msra.mxu0 %v2317
    %2984 = vmatprep.subr.mxu0 0.0
    %2985 = vmatpush2.msra.mxu0 %v2314
    %2986 = vmatprep.subr.mxu0 0.0
    %2987 = vmatpush2.msra.mxu0 %v2311
    %2988 = vmatprep.subr.mxu0 0.0
    %2989 = vmatpush2.msra.mxu0 %v2308
    %2990 = vmatprep.subr.mxu0 0.0
    %2991 = vmatpush2.msra.mxu0 %v2305
    %2992 = vmatprep.subr.mxu0 0.0
    %2993 = vmatpush2.msra.mxu0 %v2302
    %2994 = vmatprep.subr.mxu0 0.0
    %2995 = vmatpush2.msra.mxu0 %v2299
    %2996 = vmatprep.subr.mxu0 0.0
    %2997 = vmatpush2.msra.mxu0 %v2296
    %2998 = vmatprep.subr.mxu0 0.0
    %2999 = vmatpush2.msra.mxu0 %v2293
    %3000 = vmatprep.subr.mxu0 0.0
    %3001 = vmatpush2.msra.mxu0 %v2290
    %3002 = vmatprep.subr.mxu0 0.0
    %3003 = vmatpush2.msra.mxu0 %v2287
    %3004 = vmatprep.subr.mxu0 0.0
    %3005 = vmatpush2.msra.mxu0 %v2284
    %3006 = vmatprep.subr.mxu0 0.0
    %3007 = vmatpush2.msra.mxu0 %v2281
    %3008 = vmatprep.mubr.f32.mxu0 %v1023
    %3009 = vmatmul.mubr.f32.gmra.mxu0 %v1022
    %v3010 = vpop.f32.mrf.mxu0
    %v3011 = vadd.f32 0.0, %v3010
    %v3012 = vpop.f32.mrf.mxu0
    %3013 = vdwg.mxu0
    %3014 = vmatprep.subr.mxu0 %v2180
    %3015 = vmatpush1.msra.mxu0 %v2179
    %3016 = vmatprep.subr.mxu0 %v2177
    %3017 = vmatpush1.msra.mxu0 %v2176
    %3018 = vmatprep.subr.mxu0 %v2174
    %3019 = vmatpush1.msra.mxu0 %v2173
    %3020 = vmatprep.subr.mxu0 %v2171
    %3021 = vmatpush1.msra.mxu0 %v2170
    %3022 = vmatprep.subr.mxu0 %v2168
    %3023 = vmatpush1.msra.mxu0 %v2167
    %3024 = vmatprep.subr.mxu0 %v2165
    %3025 = vmatpush1.msra.mxu0 %v2164
    %3026 = vmatprep.subr.mxu0 %v2162
    %3027 = vmatpush1.msra.mxu0 %v2161
    %3028 = vmatprep.subr.mxu0 %v2159
    %3029 = vmatpush1.msra.mxu0 %v2158
    %3030 = vmatprep.subr.mxu0 %v2156
    %3031 = vmatpush1.msra.mxu0 %v2155
    %3032 = vmatprep.subr.mxu0 %v2153
    %3033 = vmatpush1.msra.mxu0 %v2152
    %3034 = vmatprep.subr.mxu0 %v2150
    %3035 = vmatpush1.msra.mxu0 %v2149
    %3036 = vmatprep.subr.mxu0 %v2147
    %3037 = vmatpush1.msra.mxu0 %v2146
    %3038 = vmatprep.subr.mxu0 %v2144
    %3039 = vmatpush1.msra.mxu0 %v2143
    %3040 = vmatprep.subr.mxu0 %v2141
    %3041 = vmatpush1.msra.mxu0 %v2140
    %3042 = vmatprep.subr.mxu0 %v2138
    %3043 = vmatpush1.msra.mxu0 %v2137
    %3044 = vmatprep.subr.mxu0 %v2135
    %3045 = vmatpush1.msra.mxu0 %v2134
    %3046 = vmatprep.subr.mxu0 %v2228
    %3047 = vmatpush2.msra.mxu0 %v2227
    %3048 = vmatprep.subr.mxu0 %v2225
    %3049 = vmatpush2.msra.mxu0 %v2224
    %3050 = vmatprep.subr.mxu0 %v2222
    %3051 = vmatpush2.msra.mxu0 %v2221
    %3052 = vmatprep.subr.mxu0 %v2219
    %3053 = vmatpush2.msra.mxu0 %v2218
    %3054 = vmatprep.subr.mxu0 %v2216
    %3055 = vmatpush2.msra.mxu0 %v2215
    %3056 = vmatprep.subr.mxu0 %v2213
    %3057 = vmatpush2.msra.mxu0 %v2212
    %3058 = vmatprep.subr.mxu0 %v2210
    %3059 = vmatpush2.msra.mxu0 %v2209
    %3060 = vmatprep.subr.mxu0 %v2207
    %3061 = vmatpush2.msra.mxu0 %v2206
    %3062 = vmatprep.subr.mxu0 %v2204
    %3063 = vmatpush2.msra.mxu0 %v2203
    %3064 = vmatprep.subr.mxu0 %v2201
    %3065 = vmatpush2.msra.mxu0 %v2200
    %3066 = vmatprep.subr.mxu0 %v2198
    %3067 = vmatpush2.msra.mxu0 %v2197
    %3068 = vmatprep.subr.mxu0 %v2195
    %3069 = vmatpush2.msra.mxu0 %v2194
    %3070 = vmatprep.subr.mxu0 %v2192
    %3071 = vmatpush2.msra.mxu0 %v2191
    %3072 = vmatprep.subr.mxu0 %v2189
    %3073 = vmatpush2.msra.mxu0 %v2188
    %3074 = vmatprep.subr.mxu0 %v2186
    %3075 = vmatpush2.msra.mxu0 %v2185
    %3076 = vmatprep.subr.mxu0 %v2183
    %3077 = vmatpush2.msra.mxu0 %v2182
    %3078 = vmatprep.mubr.f32.mxu0 %v801
    %3079 = vmatmul.mubr.f32.gmra.mxu0 %v800
    %v3080 = vpop.f32.mrf.mxu0
    %v3081 = vadd.f32 %v2940, %v3080
    %v3082 = vpop.f32.mrf.mxu0
    %v3083 = vadd.f32 %v2942, %v3082
    %3084 = vdwg.mxu0
    %3085 = vmatprep.subr.mxu0 0.0
    %3086 = vmatpush1.msra.mxu0 %v2181
    %3087 = vmatprep.subr.mxu0 0.0
    %3088 = vmatpush1.msra.mxu0 %v2178
    %3089 = vmatprep.subr.mxu0 0.0
    %3090 = vmatpush1.msra.mxu0 %v2175
    %3091 = vmatprep.subr.mxu0 0.0
    %3092 = vmatpush1.msra.mxu0 %v2172
    %3093 = vmatprep.subr.mxu0 0.0
    %3094 = vmatpush1.msra.mxu0 %v2169
    %3095 = vmatprep.subr.mxu0 0.0
    %3096 = vmatpush1.msra.mxu0 %v2166
    %3097 = vmatprep.subr.mxu0 0.0
    %3098 = vmatpush1.msra.mxu0 %v2163
    %3099 = vmatprep.subr.mxu0 0.0
    %3100 = vmatpush1.msra.mxu0 %v2160
    %3101 = vmatprep.subr.mxu0 0.0
    %3102 = vmatpush1.msra.mxu0 %v2157
    %3103 = vmatprep.subr.mxu0 0.0
    %3104 = vmatpush1.msra.mxu0 %v2154
    %3105 = vmatprep.subr.mxu0 0.0
    %3106 = vmatpush1.msra.mxu0 %v2151
    %3107 = vmatprep.subr.mxu0 0.0
    %3108 = vmatpush1.msra.mxu0 %v2148
    %3109 = vmatprep.subr.mxu0 0.0
    %3110 = vmatpush1.msra.mxu0 %v2145
    %3111 = vmatprep.subr.mxu0 0.0
    %3112 = vmatpush1.msra.mxu0 %v2142
    %3113 = vmatprep.subr.mxu0 0.0
    %3114 = vmatpush1.msra.mxu0 %v2139
    %3115 = vmatprep.subr.mxu0 0.0
    %3116 = vmatpush1.msra.mxu0 %v2136
    %3117 = vmatprep.subr.mxu0 0.0
    %3118 = vmatpush2.msra.mxu0 %v2229
    %3119 = vmatprep.subr.mxu0 0.0
    %3120 = vmatpush2.msra.mxu0 %v2226
    %3121 = vmatprep.subr.mxu0 0.0
    %3122 = vmatpush2.msra.mxu0 %v2223
    %3123 = vmatprep.subr.mxu0 0.0
    %3124 = vmatpush2.msra.mxu0 %v2220
    %3125 = vmatprep.subr.mxu0 0.0
    %3126 = vmatpush2.msra.mxu0 %v2217
    %3127 = vmatprep.subr.mxu0 0.0
    %3128 = vmatpush2.msra.mxu0 %v2214
    %3129 = vmatprep.subr.mxu0 0.0
    %3130 = vmatpush2.msra.mxu0 %v2211
    %3131 = vmatprep.subr.mxu0 0.0
    %3132 = vmatpush2.msra.mxu0 %v2208
    %3133 = vmatprep.subr.mxu0 0.0
    %3134 = vmatpush2.msra.mxu0 %v2205
    %3135 = vmatprep.subr.mxu0 0.0
    %3136 = vmatpush2.msra.mxu0 %v2202
    %3137 = vmatprep.subr.mxu0 0.0
    %3138 = vmatpush2.msra.mxu0 %v2199
    %3139 = vmatprep.subr.mxu0 0.0
    %3140 = vmatpush2.msra.mxu0 %v2196
    %3141 = vmatprep.subr.mxu0 0.0
    %3142 = vmatpush2.msra.mxu0 %v2193
    %3143 = vmatprep.subr.mxu0 0.0
    %3144 = vmatpush2.msra.mxu0 %v2190
    %3145 = vmatprep.subr.mxu0 0.0
    %3146 = vmatpush2.msra.mxu0 %v2187
    %3147 = vmatprep.subr.mxu0 0.0
    %3148 = vmatpush2.msra.mxu0 %v2184
    %3149 = vmatprep.mubr.f32.mxu0 %v801
    %3150 = vmatmul.mubr.f32.gmra.mxu0 %v800
    %v3151 = vpop.f32.mrf.mxu0
    %v3152 = vadd.f32 %v3011, %v3151
    %v3153 = vpop.f32.mrf.mxu0
    %3154 = vdwg.mxu0
    %3155 = vmatprep.subr.mxu0 %v2656
    %3156 = vmatpush1.msra.mxu0 %v2655
    %3157 = vmatprep.subr.mxu0 %v2653
    %3158 = vmatpush1.msra.mxu0 %v2652
    %3159 = vmatprep.subr.mxu0 %v2650
    %3160 = vmatpush1.msra.mxu0 %v2649
    %3161 = vmatprep.subr.mxu0 %v2647
    %3162 = vmatpush1.msra.mxu0 %v2646
    %3163 = vmatprep.subr.mxu0 %v2644
    %3164 = vmatpush1.msra.mxu0 %v2643
    %3165 = vmatprep.subr.mxu0 %v2641
    %3166 = vmatpush1.msra.mxu0 %v2640
    %3167 = vmatprep.subr.mxu0 %v2638
    %3168 = vmatpush1.msra.mxu0 %v2637
    %3169 = vmatprep.subr.mxu0 %v2635
    %3170 = vmatpush1.msra.mxu0 %v2634
    %3171 = vmatprep.subr.mxu0 %v2632
    %3172 = vmatpush1.msra.mxu0 %v2631
    %3173 = vmatprep.subr.mxu0 %v2629
    %3174 = vmatpush1.msra.mxu0 %v2628
    %3175 = vmatprep.subr.mxu0 %v2626
    %3176 = vmatpush1.msra.mxu0 %v2625
    %3177 = vmatprep.subr.mxu0 %v2623
    %3178 = vmatpush1.msra.mxu0 %v2622
    %3179 = vmatprep.subr.mxu0 %v2620
    %3180 = vmatpush1.msra.mxu0 %v2619
    %3181 = vmatprep.subr.mxu0 %v2617
    %3182 = vmatpush1.msra.mxu0 %v2616
    %3183 = vmatprep.subr.mxu0 %v2614
    %3184 = vmatpush1.msra.mxu0 %v2613
    %3185 = vmatprep.subr.mxu0 %v2611
    %3186 = vmatpush1.msra.mxu0 %v2610
    %3187 = vmatprep.subr.mxu0 %v2704
    %3188 = vmatpush2.msra.mxu0 %v2703
    %3189 = vmatprep.subr.mxu0 %v2701
    %3190 = vmatpush2.msra.mxu0 %v2700
    %3191 = vmatprep.subr.mxu0 %v2698
    %3192 = vmatpush2.msra.mxu0 %v2697
    %3193 = vmatprep.subr.mxu0 %v2695
    %3194 = vmatpush2.msra.mxu0 %v2694
    %3195 = vmatprep.subr.mxu0 %v2692
    %3196 = vmatpush2.msra.mxu0 %v2691
    %3197 = vmatprep.subr.mxu0 %v2689
    %3198 = vmatpush2.msra.mxu0 %v2688
    %3199 = vmatprep.subr.mxu0 %v2686
    %3200 = vmatpush2.msra.mxu0 %v2685
    %3201 = vmatprep.subr.mxu0 %v2683
    %3202 = vmatpush2.msra.mxu0 %v2682
    %3203 = vmatprep.subr.mxu0 %v2680
    %3204 = vmatpush2.msra.mxu0 %v2679
    %3205 = vmatprep.subr.mxu0 %v2677
    %3206 = vmatpush2.msra.mxu0 %v2676
    %3207 = vmatprep.subr.mxu0 %v2674
    %3208 = vmatpush2.msra.mxu0 %v2673
    %3209 = vmatprep.subr.mxu0 %v2671
    %3210 = vmatpush2.msra.mxu0 %v2670
    %3211 = vmatprep.subr.mxu0 %v2668
    %3212 = vmatpush2.msra.mxu0 %v2667
    %3213 = vmatprep.subr.mxu0 %v2665
    %3214 = vmatpush2.msra.mxu0 %v2664
    %3215 = vmatprep.subr.mxu0 %v2662
    %3216 = vmatpush2.msra.mxu0 %v2661
    %3217 = vmatprep.subr.mxu0 %v2659
    %3218 = vmatpush2.msra.mxu0 %v2658
    %3219 = vmatprep.mubr.f32.mxu0 %v1245
    %3220 = vmatmul.mubr.f32.gmra.mxu0 %v1244
    %v3221 = vpop.f32.mrf.mxu0
    %v3222 = vadd.f32 0.0, %v3221
    %v3223 = vpop.f32.mrf.mxu0
    %v3224 = vadd.f32 0.0, %v3223
    %3225 = vdwg.mxu0
    %3226 = vmatprep.subr.mxu0 0.0
    %3227 = vmatpush1.msra.mxu0 %v2657
    %3228 = vmatprep.subr.mxu0 0.0
    %3229 = vmatpush1.msra.mxu0 %v2654
    %3230 = vmatprep.subr.mxu0 0.0
    %3231 = vmatpush1.msra.mxu0 %v2651
    %3232 = vmatprep.subr.mxu0 0.0
    %3233 = vmatpush1.msra.mxu0 %v2648
    %3234 = vmatprep.subr.mxu0 0.0
    %3235 = vmatpush1.msra.mxu0 %v2645
    %3236 = vmatprep.subr.mxu0 0.0
    %3237 = vmatpush1.msra.mxu0 %v2642
    %3238 = vmatprep.subr.mxu0 0.0
    %3239 = vmatpush1.msra.mxu0 %v2639
    %3240 = vmatprep.subr.mxu0 0.0
    %3241 = vmatpush1.msra.mxu0 %v2636
    %3242 = vmatprep.subr.mxu0 0.0
    %3243 = vmatpush1.msra.mxu0 %v2633
    %3244 = vmatprep.subr.mxu0 0.0
    %3245 = vmatpush1.msra.mxu0 %v2630
    %3246 = vmatprep.subr.mxu0 0.0
    %3247 = vmatpush1.msra.mxu0 %v2627
    %3248 = vmatprep.subr.mxu0 0.0
    %3249 = vmatpush1.msra.mxu0 %v2624
    %3250 = vmatprep.subr.mxu0 0.0
    %3251 = vmatpush1.msra.mxu0 %v2621
    %3252 = vmatprep.subr.mxu0 0.0
    %3253 = vmatpush1.msra.mxu0 %v2618
    %3254 = vmatprep.subr.mxu0 0.0
    %3255 = vmatpush1.msra.mxu0 %v2615
    %3256 = vmatprep.subr.mxu0 0.0
    %3257 = vmatpush1.msra.mxu0 %v2612
    %3258 = vmatprep.subr.mxu0 0.0
    %3259 = vmatpush2.msra.mxu0 %v2705
    %3260 = vmatprep.subr.mxu0 0.0
    %3261 = vmatpush2.msra.mxu0 %v2702
    %3262 = vmatprep.subr.mxu0 0.0
    %3263 = vmatpush2.msra.mxu0 %v2699
    %3264 = vmatprep.subr.mxu0 0.0
    %3265 = vmatpush2.msra.mxu0 %v2696
    %3266 = vmatprep.subr.mxu0 0.0
    %3267 = vmatpush2.msra.mxu0 %v2693
    %3268 = vmatprep.subr.mxu0 0.0
    %3269 = vmatpush2.msra.mxu0 %v2690
    %3270 = vmatprep.subr.mxu0 0.0
    %3271 = vmatpush2.msra.mxu0 %v2687
    %3272 = vmatprep.subr.mxu0 0.0
    %3273 = vmatpush2.msra.mxu0 %v2684
    %3274 = vmatprep.subr.mxu0 0.0
    %3275 = vmatpush2.msra.mxu0 %v2681
    %3276 = vmatprep.subr.mxu0 0.0
    %3277 = vmatpush2.msra.mxu0 %v2678
    %3278 = vmatprep.subr.mxu0 0.0
    %3279 = vmatpush2.msra.mxu0 %v2675
    %3280 = vmatprep.subr.mxu0 0.0
    %3281 = vmatpush2.msra.mxu0 %v2672
    %3282 = vmatprep.subr.mxu0 0.0
    %3283 = vmatpush2.msra.mxu0 %v2669
    %3284 = vmatprep.subr.mxu0 0.0
    %3285 = vmatpush2.msra.mxu0 %v2666
    %3286 = vmatprep.subr.mxu0 0.0
    %3287 = vmatpush2.msra.mxu0 %v2663
    %3288 = vmatprep.subr.mxu0 0.0
    %3289 = vmatpush2.msra.mxu0 %v2660
    %3290 = vmatprep.mubr.f32.mxu0 %v1245
    %3291 = vmatmul.mubr.f32.gmra.mxu0 %v1244
    %v3292 = vpop.f32.mrf.mxu0
    %v3293 = vadd.f32 0.0, %v3292
    %v3294 = vpop.f32.mrf.mxu0
    %3295 = vdwg.mxu0
    %v3296 = vadd.f32 %v3081, %v3222
    %v3297 = vadd.f32 %v3083, %v3224
    %v3298 = vadd.f32 %v3152, %v3293
    %v3299 = vadd.f32 %v3296, %v2855
    %v3300 = vadd.f32 %v3297, %v2859
    %v3301 = vadd.f32 %v3298, %v2863
    %v3302 = vmax.f32 %v3299, 0.0
    %v3303 = vmax.f32 %v3300, 0.0
    %v3304 = vmax.f32 %v3301, 0.0
    %3305 = vmatprep.subr.mxu0 %v2277
    %3306 = vmatpush1.msra.mxu0 %v2276
    %3307 = vmatprep.subr.mxu0 %v2274
    %3308 = vmatpush1.msra.mxu0 %v2273
    %3309 = vmatprep.subr.mxu0 %v2271
    %3310 = vmatpush1.msra.mxu0 %v2270
    %3311 = vmatprep.subr.mxu0 %v2268
    %3312 = vmatpush1.msra.mxu0 %v2267
    %3313 = vmatprep.subr.mxu0 %v2265
    %3314 = vmatpush1.msra.mxu0 %v2264
    %3315 = vmatprep.subr.mxu0 %v2262
    %3316 = vmatpush1.msra.mxu0 %v2261
    %3317 = vmatprep.subr.mxu0 %v2259
    %3318 = vmatpush1.msra.mxu0 %v2258
    %3319 = vmatprep.subr.mxu0 %v2256
    %3320 = vmatpush1.msra.mxu0 %v2255
    %3321 = vmatprep.subr.mxu0 %v2253
    %3322 = vmatpush1.msra.mxu0 %v2252
    %3323 = vmatprep.subr.mxu0 %v2250
    %3324 = vmatpush1.msra.mxu0 %v2249
    %3325 = vmatprep.subr.mxu0 %v2247
    %3326 = vmatpush1.msra.mxu0 %v2246
    %3327 = vmatprep.subr.mxu0 %v2244
    %3328 = vmatpush1.msra.mxu0 %v2243
    %3329 = vmatprep.subr.mxu0 %v2241
    %3330 = vmatpush1.msra.mxu0 %v2240
    %3331 = vmatprep.subr.mxu0 %v2238
    %3332 = vmatpush1.msra.mxu0 %v2237
    %3333 = vmatprep.subr.mxu0 %v2235
    %3334 = vmatpush1.msra.mxu0 %v2234
    %3335 = vmatprep.subr.mxu0 %v2232
    %3336 = vmatpush1.msra.mxu0 %v2231
    %3337 = vmatprep.subr.mxu0 %v2325
    %3338 = vmatpush2.msra.mxu0 %v2324
    %3339 = vmatprep.subr.mxu0 %v2322
    %3340 = vmatpush2.msra.mxu0 %v2321
    %3341 = vmatprep.subr.mxu0 %v2319
    %3342 = vmatpush2.msra.mxu0 %v2318
    %3343 = vmatprep.subr.mxu0 %v2316
    %3344 = vmatpush2.msra.mxu0 %v2315
    %3345 = vmatprep.subr.mxu0 %v2313
    %3346 = vmatpush2.msra.mxu0 %v2312
    %3347 = vmatprep.subr.mxu0 %v2310
    %3348 = vmatpush2.msra.mxu0 %v2309
    %3349 = vmatprep.subr.mxu0 %v2307
    %3350 = vmatpush2.msra.mxu0 %v2306
    %3351 = vmatprep.subr.mxu0 %v2304
    %3352 = vmatpush2.msra.mxu0 %v2303
    %3353 = vmatprep.subr.mxu0 %v2301
    %3354 = vmatpush2.msra.mxu0 %v2300
    %3355 = vmatprep.subr.mxu0 %v2298
    %3356 = vmatpush2.msra.mxu0 %v2297
    %3357 = vmatprep.subr.mxu0 %v2295
    %3358 = vmatpush2.msra.mxu0 %v2294
    %3359 = vmatprep.subr.mxu0 %v2292
    %3360 = vmatpush2.msra.mxu0 %v2291
    %3361 = vmatprep.subr.mxu0 %v2289
    %3362 = vmatpush2.msra.mxu0 %v2288
    %3363 = vmatprep.subr.mxu0 %v2286
    %3364 = vmatpush2.msra.mxu0 %v2285
    %3365 = vmatprep.subr.mxu0 %v2283
    %3366 = vmatpush2.msra.mxu0 %v2282
    %3367 = vmatprep.subr.mxu0 %v2280
    %3368 = vmatpush2.msra.mxu0 %v2279
    %3369 = vmatprep.mubr.f32.mxu0 %v1245
    %3370 = vmatmul.mubr.f32.gmra.mxu0 %v1244
    %v3371 = vpop.f32.mrf.mxu0
    %v3372 = vadd.f32 0.0, %v3371
    %v3373 = vpop.f32.mrf.mxu0
    %v3374 = vadd.f32 0.0, %v3373
    %3375 = vdwg.mxu0
    %3376 = vmatprep.subr.mxu0 0.0
    %3377 = vmatpush1.msra.mxu0 %v2278
    %3378 = vmatprep.subr.mxu0 0.0
    %3379 = vmatpush1.msra.mxu0 %v2275
    %3380 = vmatprep.subr.mxu0 0.0
    %3381 = vmatpush1.msra.mxu0 %v2272
    %3382 = vmatprep.subr.mxu0 0.0
    %3383 = vmatpush1.msra.mxu0 %v2269
    %3384 = vmatprep.subr.mxu0 0.0
    %3385 = vmatpush1.msra.mxu0 %v2266
    %3386 = vmatprep.subr.mxu0 0.0
    %3387 = vmatpush1.msra.mxu0 %v2263
    %3388 = vmatprep.subr.mxu0 0.0
    %3389 = vmatpush1.msra.mxu0 %v2260
    %3390 = vmatprep.subr.mxu0 0.0
    %3391 = vmatpush1.msra.mxu0 %v2257
    %3392 = vmatprep.subr.mxu0 0.0
    %3393 = vmatpush1.msra.mxu0 %v2254
    %3394 = vmatprep.subr.mxu0 0.0
    %3395 = vmatpush1.msra.mxu0 %v2251
    %3396 = vmatprep.subr.mxu0 0.0
    %3397 = vmatpush1.msra.mxu0 %v2248
    %3398 = vmatprep.subr.mxu0 0.0
    %3399 = vmatpush1.msra.mxu0 %v2245
    %3400 = vmatprep.subr.mxu0 0.0
    %3401 = vmatpush1.msra.mxu0 %v2242
    %3402 = vmatprep.subr.mxu0 0.0
    %3403 = vmatpush1.msra.mxu0 %v2239
    %3404 = vmatprep.subr.mxu0 0.0
    %3405 = vmatpush1.msra.mxu0 %v2236
    %3406 = vmatprep.subr.mxu0 0.0
    %3407 = vmatpush1.msra.mxu0 %v2233
    %3408 = vmatprep.subr.mxu0 0.0
    %3409 = vmatpush2.msra.mxu0 %v2326
    %3410 = vmatprep.subr.mxu0 0.0
    %3411 = vmatpush2.msra.mxu0 %v2323
    %3412 = vmatprep.subr.mxu0 0.0
    %3413 = vmatpush2.msra.mxu0 %v2320
    %3414 = vmatprep.subr.mxu0 0.0
    %3415 = vmatpush2.msra.mxu0 %v2317
    %3416 = vmatprep.subr.mxu0 0.0
    %3417 = vmatpush2.msra.mxu0 %v2314
    %3418 = vmatprep.subr.mxu0 0.0
    %3419 = vmatpush2.msra.mxu0 %v2311
    %3420 = vmatprep.subr.mxu0 0.0
    %3421 = vmatpush2.msra.mxu0 %v2308
    %3422 = vmatprep.subr.mxu0 0.0
    %3423 = vmatpush2.msra.mxu0 %v2305
    %3424 = vmatprep.subr.mxu0 0.0
    %3425 = vmatpush2.msra.mxu0 %v2302
    %3426 = vmatprep.subr.mxu0 0.0
    %3427 = vmatpush2.msra.mxu0 %v2299
    %3428 = vmatprep.subr.mxu0 0.0
    %3429 = vmatpush2.msra.mxu0 %v2296
    %3430 = vmatprep.subr.mxu0 0.0
    %3431 = vmatpush2.msra.mxu0 %v2293
    %3432 = vmatprep.subr.mxu0 0.0
    %3433 = vmatpush2.msra.mxu0 %v2290
    %3434 = vmatprep.subr.mxu0 0.0
    %3435 = vmatpush2.msra.mxu0 %v2287
    %3436 = vmatprep.subr.mxu0 0.0
    %3437 = vmatpush2.msra.mxu0 %v2284
    %3438 = vmatprep.subr.mxu0 0.0
    %3439 = vmatpush2.msra.mxu0 %v2281
    %3440 = vmatprep.mubr.f32.mxu0 %v1245
    %3441 = vmatmul.mubr.f32.gmra.mxu0 %v1244
    %v3442 = vpop.f32.mrf.mxu0
    %v3443 = vadd.f32 0.0, %v3442
    %v3444 = vpop.f32.mrf.mxu0
    %3445 = vdwg.mxu0
    %3446 = vmatprep.subr.mxu0 %v2180
    %3447 = vmatpush1.msra.mxu0 %v2179
    %3448 = vmatprep.subr.mxu0 %v2177
    %3449 = vmatpush1.msra.mxu0 %v2176
    %3450 = vmatprep.subr.mxu0 %v2174
    %3451 = vmatpush1.msra.mxu0 %v2173
    %3452 = vmatprep.subr.mxu0 %v2171
    %3453 = vmatpush1.msra.mxu0 %v2170
    %3454 = vmatprep.subr.mxu0 %v2168
    %3455 = vmatpush1.msra.mxu0 %v2167
    %3456 = vmatprep.subr.mxu0 %v2165
    %3457 = vmatpush1.msra.mxu0 %v2164
    %3458 = vmatprep.subr.mxu0 %v2162
    %3459 = vmatpush1.msra.mxu0 %v2161
    %3460 = vmatprep.subr.mxu0 %v2159
    %3461 = vmatpush1.msra.mxu0 %v2158
    %3462 = vmatprep.subr.mxu0 %v2156
    %3463 = vmatpush1.msra.mxu0 %v2155
    %3464 = vmatprep.subr.mxu0 %v2153
    %3465 = vmatpush1.msra.mxu0 %v2152
    %3466 = vmatprep.subr.mxu0 %v2150
    %3467 = vmatpush1.msra.mxu0 %v2149
    %3468 = vmatprep.subr.mxu0 %v2147
    %3469 = vmatpush1.msra.mxu0 %v2146
    %3470 = vmatprep.subr.mxu0 %v2144
    %3471 = vmatpush1.msra.mxu0 %v2143
    %3472 = vmatprep.subr.mxu0 %v2141
    %3473 = vmatpush1.msra.mxu0 %v2140
    %3474 = vmatprep.subr.mxu0 %v2138
    %3475 = vmatpush1.msra.mxu0 %v2137
    %3476 = vmatprep.subr.mxu0 %v2135
    %3477 = vmatpush1.msra.mxu0 %v2134
    %3478 = vmatprep.subr.mxu0 %v2228
    %3479 = vmatpush2.msra.mxu0 %v2227
    %3480 = vmatprep.subr.mxu0 %v2225
    %3481 = vmatpush2.msra.mxu0 %v2224
    %3482 = vmatprep.subr.mxu0 %v2222
    %3483 = vmatpush2.msra.mxu0 %v2221
    %3484 = vmatprep.subr.mxu0 %v2219
    %3485 = vmatpush2.msra.mxu0 %v2218
    %3486 = vmatprep.subr.mxu0 %v2216
    %3487 = vmatpush2.msra.mxu0 %v2215
    %3488 = vmatprep.subr.mxu0 %v2213
    %3489 = vmatpush2.msra.mxu0 %v2212
    %3490 = vmatprep.subr.mxu0 %v2210
    %3491 = vmatpush2.msra.mxu0 %v2209
    %3492 = vmatprep.subr.mxu0 %v2207
    %3493 = vmatpush2.msra.mxu0 %v2206
    %3494 = vmatprep.subr.mxu0 %v2204
    %3495 = vmatpush2.msra.mxu0 %v2203
    %3496 = vmatprep.subr.mxu0 %v2201
    %3497 = vmatpush2.msra.mxu0 %v2200
    %3498 = vmatprep.subr.mxu0 %v2198
    %3499 = vmatpush2.msra.mxu0 %v2197
    %3500 = vmatprep.subr.mxu0 %v2195
    %3501 = vmatpush2.msra.mxu0 %v2194
    %3502 = vmatprep.subr.mxu0 %v2192
    %3503 = vmatpush2.msra.mxu0 %v2191
    %3504 = vmatprep.subr.mxu0 %v2189
    %3505 = vmatpush2.msra.mxu0 %v2188
    %3506 = vmatprep.subr.mxu0 %v2186
    %3507 = vmatpush2.msra.mxu0 %v2185
    %3508 = vmatprep.subr.mxu0 %v2183
    %3509 = vmatpush2.msra.mxu0 %v2182
    %3510 = vmatprep.mubr.f32.mxu0 %v1023
    %3511 = vmatmul.mubr.f32.gmra.mxu0 %v1022
    %v3512 = vpop.f32.mrf.mxu0
    %v3513 = vadd.f32 %v3372, %v3512
    %v3514 = vpop.f32.mrf.mxu0
    %v3515 = vadd.f32 %v3374, %v3514
    %3516 = vdwg.mxu0
    %3517 = vmatprep.subr.mxu0 0.0
    %3518 = vmatpush1.msra.mxu0 %v2181
    %3519 = vmatprep.subr.mxu0 0.0
    %3520 = vmatpush1.msra.mxu0 %v2178
    %3521 = vmatprep.subr.mxu0 0.0
    %3522 = vmatpush1.msra.mxu0 %v2175
    %3523 = vmatprep.subr.mxu0 0.0
    %3524 = vmatpush1.msra.mxu0 %v2172
    %3525 = vmatprep.subr.mxu0 0.0
    %3526 = vmatpush1.msra.mxu0 %v2169
    %3527 = vmatprep.subr.mxu0 0.0
    %3528 = vmatpush1.msra.mxu0 %v2166
    %3529 = vmatprep.subr.mxu0 0.0
    %3530 = vmatpush1.msra.mxu0 %v2163
    %3531 = vmatprep.subr.mxu0 0.0
    %3532 = vmatpush1.msra.mxu0 %v2160
    %3533 = vmatprep.subr.mxu0 0.0
    %3534 = vmatpush1.msra.mxu0 %v2157
    %3535 = vmatprep.subr.mxu0 0.0
    %3536 = vmatpush1.msra.mxu0 %v2154
    %3537 = vmatprep.subr.mxu0 0.0
    %3538 = vmatpush1.msra.mxu0 %v2151
    %3539 = vmatprep.subr.mxu0 0.0
    %3540 = vmatpush1.msra.mxu0 %v2148
    %3541 = vmatprep.subr.mxu0 0.0
    %3542 = vmatpush1.msra.mxu0 %v2145
    %3543 = vmatprep.subr.mxu0 0.0
    %3544 = vmatpush1.msra.mxu0 %v2142
    %3545 = vmatprep.subr.mxu0 0.0
    %3546 = vmatpush1.msra.mxu0 %v2139
    %3547 = vmatprep.subr.mxu0 0.0
    %3548 = vmatpush1.msra.mxu0 %v2136
    %3549 = vmatprep.subr.mxu0 0.0
    %3550 = vmatpush2.msra.mxu0 %v2229
    %3551 = vmatprep.subr.mxu0 0.0
    %3552 = vmatpush2.msra.mxu0 %v2226
    %3553 = vmatprep.subr.mxu0 0.0
    %3554 = vmatpush2.msra.mxu0 %v2223
    %3555 = vmatprep.subr.mxu0 0.0
    %3556 = vmatpush2.msra.mxu0 %v2220
    %3557 = vmatprep.subr.mxu0 0.0
    %3558 = vmatpush2.msra.mxu0 %v2217
    %3559 = vmatprep.subr.mxu0 0.0
    %3560 = vmatpush2.msra.mxu0 %v2214
    %3561 = vmatprep.subr.mxu0 0.0
    %3562 = vmatpush2.msra.mxu0 %v2211
    %3563 = vmatprep.subr.mxu0 0.0
    %3564 = vmatpush2.msra.mxu0 %v2208
    %3565 = vmatprep.subr.mxu0 0.0
    %3566 = vmatpush2.msra.mxu0 %v2205
    %3567 = vmatprep.subr.mxu0 0.0
    %3568 = vmatpush2.msra.mxu0 %v2202
    %3569 = vmatprep.subr.mxu0 0.0
    %3570 = vmatpush2.msra.mxu0 %v2199
    %3571 = vmatprep.subr.mxu0 0.0
    %3572 = vmatpush2.msra.mxu0 %v2196
    %3573 = vmatprep.subr.mxu0 0.0
    %3574 = vmatpush2.msra.mxu0 %v2193
    %3575 = vmatprep.subr.mxu0 0.0
    %3576 = vmatpush2.msra.mxu0 %v2190
    %3577 = vmatprep.subr.mxu0 0.0
    %3578 = vmatpush2.msra.mxu0 %v2187
    %3579 = vmatprep.subr.mxu0 0.0
    %3580 = vmatpush2.msra.mxu0 %v2184
    %3581 = vmatprep.mubr.f32.mxu0 %v1023
    %3582 = vmatmul.mubr.f32.gmra.mxu0 %v1022
    %v3583 = vpop.f32.mrf.mxu0
    %v3584 = vadd.f32 %v3443, %v3583
    %v3585 = vpop.f32.mrf.mxu0
    %3586 = vdwg.mxu0
    %3587 = vmatprep.subr.mxu0 %v2656
    %3588 = vmatpush1.msra.mxu0 %v2655
    %3589 = vmatprep.subr.mxu0 %v2653
    %3590 = vmatpush1.msra.mxu0 %v2652
    %3591 = vmatprep.subr.mxu0 %v2650
    %3592 = vmatpush1.msra.mxu0 %v2649
    %3593 = vmatprep.subr.mxu0 %v2647
    %3594 = vmatpush1.msra.mxu0 %v2646
    %3595 = vmatprep.subr.mxu0 %v2644
    %3596 = vmatpush1.msra.mxu0 %v2643
    %3597 = vmatprep.subr.mxu0 %v2641
    %3598 = vmatpush1.msra.mxu0 %v2640
    %3599 = vmatprep.subr.mxu0 %v2638
    %3600 = vmatpush1.msra.mxu0 %v2637
    %3601 = vmatprep.subr.mxu0 %v2635
    %3602 = vmatpush1.msra.mxu0 %v2634
    %3603 = vmatprep.subr.mxu0 %v2632
    %3604 = vmatpush1.msra.mxu0 %v2631
    %3605 = vmatprep.subr.mxu0 %v2629
    %3606 = vmatpush1.msra.mxu0 %v2628
    %3607 = vmatprep.subr.mxu0 %v2626
    %3608 = vmatpush1.msra.mxu0 %v2625
    %3609 = vmatprep.subr.mxu0 %v2623
    %3610 = vmatpush1.msra.mxu0 %v2622
    %3611 = vmatprep.subr.mxu0 %v2620
    %3612 = vmatpush1.msra.mxu0 %v2619
    %3613 = vmatprep.subr.mxu0 %v2617
    %3614 = vmatpush1.msra.mxu0 %v2616
    %3615 = vmatprep.subr.mxu0 %v2614
    %3616 = vmatpush1.msra.mxu0 %v2613
    %3617 = vmatprep.subr.mxu0 %v2611
    %3618 = vmatpush1.msra.mxu0 %v2610
    %3619 = vmatprep.subr.mxu0 %v2704
    %3620 = vmatpush2.msra.mxu0 %v2703
    %3621 = vmatprep.subr.mxu0 %v2701
    %3622 = vmatpush2.msra.mxu0 %v2700
    %3623 = vmatprep.subr.mxu0 %v2698
    %3624 = vmatpush2.msra.mxu0 %v2697
    %3625 = vmatprep.subr.mxu0 %v2695
    %3626 = vmatpush2.msra.mxu0 %v2694
    %3627 = vmatprep.subr.mxu0 %v2692
    %3628 = vmatpush2.msra.mxu0 %v2691
    %3629 = vmatprep.subr.mxu0 %v2689
    %3630 = vmatpush2.msra.mxu0 %v2688
    %3631 = vmatprep.subr.mxu0 %v2686
    %3632 = vmatpush2.msra.mxu0 %v2685
    %3633 = vmatprep.subr.mxu0 %v2683
    %3634 = vmatpush2.msra.mxu0 %v2682
    %3635 = vmatprep.subr.mxu0 %v2680
    %3636 = vmatpush2.msra.mxu0 %v2679
    %3637 = vmatprep.subr.mxu0 %v2677
    %3638 = vmatpush2.msra.mxu0 %v2676
    %3639 = vmatprep.subr.mxu0 %v2674
    %3640 = vmatpush2.msra.mxu0 %v2673
    %3641 = vmatprep.subr.mxu0 %v2671
    %3642 = vmatpush2.msra.mxu0 %v2670
    %3643 = vmatprep.subr.mxu0 %v2668
    %3644 = vmatpush2.msra.mxu0 %v2667
    %3645 = vmatprep.subr.mxu0 %v2665
    %3646 = vmatpush2.msra.mxu0 %v2664
    %3647 = vmatprep.subr.mxu0 %v2662
    %3648 = vmatpush2.msra.mxu0 %v2661
    %3649 = vmatprep.subr.mxu0 %v2659
    %3650 = vmatpush2.msra.mxu0 %v2658
    %3651 = vmatprep.mubr.f32.mxu0 %v1467
    %3652 = vmatmul.mubr.f32.gmra.mxu0 %v1466
    %v3653 = vpop.f32.mrf.mxu0
    %v3654 = vadd.f32 0.0, %v3653
    %v3655 = vpop.f32.mrf.mxu0
    %v3656 = vadd.f32 0.0, %v3655
    %3657 = vdwg.mxu0
    %3658 = vmatprep.subr.mxu0 0.0
    %3659 = vmatpush1.msra.mxu0 %v2657
    %3660 = vmatprep.subr.mxu0 0.0
    %3661 = vmatpush1.msra.mxu0 %v2654
    %3662 = vmatprep.subr.mxu0 0.0
    %3663 = vmatpush1.msra.mxu0 %v2651
    %3664 = vmatprep.subr.mxu0 0.0
    %3665 = vmatpush1.msra.mxu0 %v2648
    %3666 = vmatprep.subr.mxu0 0.0
    %3667 = vmatpush1.msra.mxu0 %v2645
    %3668 = vmatprep.subr.mxu0 0.0
    %3669 = vmatpush1.msra.mxu0 %v2642
    %3670 = vmatprep.subr.mxu0 0.0
    %3671 = vmatpush1.msra.mxu0 %v2639
    %3672 = vmatprep.subr.mxu0 0.0
    %3673 = vmatpush1.msra.mxu0 %v2636
    %3674 = vmatprep.subr.mxu0 0.0
    %3675 = vmatpush1.msra.mxu0 %v2633
    %3676 = vmatprep.subr.mxu0 0.0
    %3677 = vmatpush1.msra.mxu0 %v2630
    %3678 = vmatprep.subr.mxu0 0.0
    %3679 = vmatpush1.msra.mxu0 %v2627
    %3680 = vmatprep.subr.mxu0 0.0
    %3681 = vmatpush1.msra.mxu0 %v2624
    %3682 = vmatprep.subr.mxu0 0.0
    %3683 = vmatpush1.msra.mxu0 %v2621
    %3684 = vmatprep.subr.mxu0 0.0
    %3685 = vmatpush1.msra.mxu0 %v2618
    %3686 = vmatprep.subr.mxu0 0.0
    %3687 = vmatpush1.msra.mxu0 %v2615
    %3688 = vmatprep.subr.mxu0 0.0
    %3689 = vmatpush1.msra.mxu0 %v2612
    %3690 = vmatprep.subr.mxu0 0.0
    %3691 = vmatpush2.msra.mxu0 %v2705
    %3692 = vmatprep.subr.mxu0 0.0
    %3693 = vmatpush2.msra.mxu0 %v2702
    %3694 = vmatprep.subr.mxu0 0.0
    %3695 = vmatpush2.msra.mxu0 %v2699
    %3696 = vmatprep.subr.mxu0 0.0
    %3697 = vmatpush2.msra.mxu0 %v2696
    %3698 = vmatprep.subr.mxu0 0.0
    %3699 = vmatpush2.msra.mxu0 %v2693
    %3700 = vmatprep.subr.mxu0 0.0
    %3701 = vmatpush2.msra.mxu0 %v2690
    %3702 = vmatprep.subr.mxu0 0.0
    %3703 = vmatpush2.msra.mxu0 %v2687
    %3704 = vmatprep.subr.mxu0 0.0
    %3705 = vmatpush2.msra.mxu0 %v2684
    %3706 = vmatprep.subr.mxu0 0.0
    %3707 = vmatpush2.msra.mxu0 %v2681
    %3708 = vmatprep.subr.mxu0 0.0
    %3709 = vmatpush2.msra.mxu0 %v2678
    %3710 = vmatprep.subr.mxu0 0.0
    %3711 = vmatpush2.msra.mxu0 %v2675
    %3712 = vmatprep.subr.mxu0 0.0
    %3713 = vmatpush2.msra.mxu0 %v2672
    %3714 = vmatprep.subr.mxu0 0.0
    %3715 = vmatpush2.msra.mxu0 %v2669
    %3716 = vmatprep.subr.mxu0 0.0
    %3717 = vmatpush2.msra.mxu0 %v2666
    %3718 = vmatprep.subr.mxu0 0.0
    %3719 = vmatpush2.msra.mxu0 %v2663
    %3720 = vmatprep.subr.mxu0 0.0
    %3721 = vmatpush2.msra.mxu0 %v2660
    %3722 = vmatprep.mubr.f32.mxu0 %v1467
    %3723 = vmatmul.mubr.f32.gmra.mxu0 %v1466
    %v3724 = vpop.f32.mrf.mxu0
    %v3725 = vadd.f32 0.0, %v3724
    %v3726 = vpop.f32.mrf.mxu0
    %3727 = vdwg.mxu0
    %v3728 = vadd.f32 %v3513, %v3654
    %v3729 = vadd.f32 %v3515, %v3656
    %v3730 = vadd.f32 %v3584, %v3725
    %v3731 = vadd.f32 %v3728, %v2855
    %v3732 = vadd.f32 %v3729, %v2859
    %v3733 = vadd.f32 %v3730, %v2863
    %v3734 = vmax.f32 %v3731, 0.0
    %v3735 = vmax.f32 %v3732, 0.0
    %v3736 = vmax.f32 %v3733, 0.0
    %3737 = vmatprep.subr.mxu0 %v2277
    %3738 = vmatpush1.msra.mxu0 %v2276
    %3739 = vmatprep.subr.mxu0 %v2274
    %3740 = vmatpush1.msra.mxu0 %v2273
    %3741 = vmatprep.subr.mxu0 %v2271
    %3742 = vmatpush1.msra.mxu0 %v2270
    %3743 = vmatprep.subr.mxu0 %v2268
    %3744 = vmatpush1.msra.mxu0 %v2267
    %3745 = vmatprep.subr.mxu0 %v2265
    %3746 = vmatpush1.msra.mxu0 %v2264
    %3747 = vmatprep.subr.mxu0 %v2262
    %3748 = vmatpush1.msra.mxu0 %v2261
    %3749 = vmatprep.subr.mxu0 %v2259
    %3750 = vmatpush1.msra.mxu0 %v2258
    %3751 = vmatprep.subr.mxu0 %v2256
    %3752 = vmatpush1.msra.mxu0 %v2255
    %3753 = vmatprep.subr.mxu0 %v2253
    %3754 = vmatpush1.msra.mxu0 %v2252
    %3755 = vmatprep.subr.mxu0 %v2250
    %3756 = vmatpush1.msra.mxu0 %v2249
    %3757 = vmatprep.subr.mxu0 %v2247
    %3758 = vmatpush1.msra.mxu0 %v2246
    %3759 = vmatprep.subr.mxu0 %v2244
    %3760 = vmatpush1.msra.mxu0 %v2243
    %3761 = vmatprep.subr.mxu0 %v2241
    %3762 = vmatpush1.msra.mxu0 %v2240
    %3763 = vmatprep.subr.mxu0 %v2238
    %3764 = vmatpush1.msra.mxu0 %v2237
    %3765 = vmatprep.subr.mxu0 %v2235
    %3766 = vmatpush1.msra.mxu0 %v2234
    %3767 = vmatprep.subr.mxu0 %v2232
    %3768 = vmatpush1.msra.mxu0 %v2231
    %3769 = vmatprep.subr.mxu0 %v2325
    %3770 = vmatpush2.msra.mxu0 %v2324
    %3771 = vmatprep.subr.mxu0 %v2322
    %3772 = vmatpush2.msra.mxu0 %v2321
    %3773 = vmatprep.subr.mxu0 %v2319
    %3774 = vmatpush2.msra.mxu0 %v2318
    %3775 = vmatprep.subr.mxu0 %v2316
    %3776 = vmatpush2.msra.mxu0 %v2315
    %3777 = vmatprep.subr.mxu0 %v2313
    %3778 = vmatpush2.msra.mxu0 %v2312
    %3779 = vmatprep.subr.mxu0 %v2310
    %3780 = vmatpush2.msra.mxu0 %v2309
    %3781 = vmatprep.subr.mxu0 %v2307
    %3782 = vmatpush2.msra.mxu0 %v2306
    %3783 = vmatprep.subr.mxu0 %v2304
    %3784 = vmatpush2.msra.mxu0 %v2303
    %3785 = vmatprep.subr.mxu0 %v2301
    %3786 = vmatpush2.msra.mxu0 %v2300
    %3787 = vmatprep.subr.mxu0 %v2298
    %3788 = vmatpush2.msra.mxu0 %v2297
    %3789 = vmatprep.subr.mxu0 %v2295
    %3790 = vmatpush2.msra.mxu0 %v2294
    %3791 = vmatprep.subr.mxu0 %v2292
    %3792 = vmatpush2.msra.mxu0 %v2291
    %3793 = vmatprep.subr.mxu0 %v2289
    %3794 = vmatpush2.msra.mxu0 %v2288
    %3795 = vmatprep.subr.mxu0 %v2286
    %3796 = vmatpush2.msra.mxu0 %v2285
    %3797 = vmatprep.subr.mxu0 %v2283
    %3798 = vmatpush2.msra.mxu0 %v2282
    %3799 = vmatprep.subr.mxu0 %v2280
    %3800 = vmatpush2.msra.mxu0 %v2279
    %3801 = vmatprep.mubr.f32.mxu0 %v1467
    %3802 = vmatmul.mubr.f32.gmra.mxu0 %v1466
    %v3803 = vpop.f32.mrf.mxu0
    %v3804 = vadd.f32 0.0, %v3803
    %v3805 = vpop.f32.mrf.mxu0
    %v3806 = vadd.f32 0.0, %v3805
    %3807 = vdwg.mxu0
    %3808 = vmatprep.subr.mxu0 0.0
    %3809 = vmatpush1.msra.mxu0 %v2278
    %3810 = vmatprep.subr.mxu0 0.0
    %3811 = vmatpush1.msra.mxu0 %v2275
    %3812 = vmatprep.subr.mxu0 0.0
    %3813 = vmatpush1.msra.mxu0 %v2272
    %3814 = vmatprep.subr.mxu0 0.0
    %3815 = vmatpush1.msra.mxu0 %v2269
    %3816 = vmatprep.subr.mxu0 0.0
    %3817 = vmatpush1.msra.mxu0 %v2266
    %3818 = vmatprep.subr.mxu0 0.0
    %3819 = vmatpush1.msra.mxu0 %v2263
    %3820 = vmatprep.subr.mxu0 0.0
    %3821 = vmatpush1.msra.mxu0 %v2260
    %3822 = vmatprep.subr.mxu0 0.0
    %3823 = vmatpush1.msra.mxu0 %v2257
    %3824 = vmatprep.subr.mxu0 0.0
    %3825 = vmatpush1.msra.mxu0 %v2254
    %3826 = vmatprep.subr.mxu0 0.0
    %3827 = vmatpush1.msra.mxu0 %v2251
    %3828 = vmatprep.subr.mxu0 0.0
    %3829 = vmatpush1.msra.mxu0 %v2248
    %3830 = vmatprep.subr.mxu0 0.0
    %3831 = vmatpush1.msra.mxu0 %v2245
    %3832 = vmatprep.subr.mxu0 0.0
    %3833 = vmatpush1.msra.mxu0 %v2242
    %3834 = vmatprep.subr.mxu0 0.0
    %3835 = vmatpush1.msra.mxu0 %v2239
    %3836 = vmatprep.subr.mxu0 0.0
    %3837 = vmatpush1.msra.mxu0 %v2236
    %3838 = vmatprep.subr.mxu0 0.0
    %3839 = vmatpush1.msra.mxu0 %v2233
    %3840 = vmatprep.subr.mxu0 0.0
    %3841 = vmatpush2.msra.mxu0 %v2326
    %3842 = vmatprep.subr.mxu0 0.0
    %3843 = vmatpush2.msra.mxu0 %v2323
    %3844 = vmatprep.subr.mxu0 0.0
    %3845 = vmatpush2.msra.mxu0 %v2320
    %3846 = vmatprep.subr.mxu0 0.0
    %3847 = vmatpush2.msra.mxu0 %v2317
    %3848 = vmatprep.subr.mxu0 0.0
    %3849 = vmatpush2.msra.mxu0 %v2314
    %3850 = vmatprep.subr.mxu0 0.0
    %3851 = vmatpush2.msra.mxu0 %v2311
    %3852 = vmatprep.subr.mxu0 0.0
    %3853 = vmatpush2.msra.mxu0 %v2308
    %3854 = vmatprep.subr.mxu0 0.0
    %3855 = vmatpush2.msra.mxu0 %v2305
    %3856 = vmatprep.subr.mxu0 0.0
    %3857 = vmatpush2.msra.mxu0 %v2302
    %3858 = vmatprep.subr.mxu0 0.0
    %3859 = vmatpush2.msra.mxu0 %v2299
    %3860 = vmatprep.subr.mxu0 0.0
    %3861 = vmatpush2.msra.mxu0 %v2296
    %3862 = vmatprep.subr.mxu0 0.0
    %3863 = vmatpush2.msra.mxu0 %v2293
    %3864 = vmatprep.subr.mxu0 0.0
    %3865 = vmatpush2.msra.mxu0 %v2290
    %3866 = vmatprep.subr.mxu0 0.0
    %3867 = vmatpush2.msra.mxu0 %v2287
    %3868 = vmatprep.subr.mxu0 0.0
    %3869 = vmatpush2.msra.mxu0 %v2284
    %3870 = vmatprep.subr.mxu0 0.0
    %3871 = vmatpush2.msra.mxu0 %v2281
    %3872 = vmatprep.mubr.f32.mxu0 %v1467
    %3873 = vmatmul.mubr.f32.gmra.mxu0 %v1466
    %v3874 = vpop.f32.mrf.mxu0
    %v3875 = vadd.f32 0.0, %v3874
    %v3876 = vpop.f32.mrf.mxu0
    %3877 = vdwg.mxu0
    %3878 = vmatprep.subr.mxu0 %v2180
    %3879 = vmatpush1.msra.mxu0 %v2179
    %3880 = vmatprep.subr.mxu0 %v2177
    %3881 = vmatpush1.msra.mxu0 %v2176
    %3882 = vmatprep.subr.mxu0 %v2174
    %3883 = vmatpush1.msra.mxu0 %v2173
    %3884 = vmatprep.subr.mxu0 %v2171
    %3885 = vmatpush1.msra.mxu0 %v2170
    %3886 = vmatprep.subr.mxu0 %v2168
    %3887 = vmatpush1.msra.mxu0 %v2167
    %3888 = vmatprep.subr.mxu0 %v2165
    %3889 = vmatpush1.msra.mxu0 %v2164
    %3890 = vmatprep.subr.mxu0 %v2162
    %3891 = vmatpush1.msra.mxu0 %v2161
    %3892 = vmatprep.subr.mxu0 %v2159
    %3893 = vmatpush1.msra.mxu0 %v2158
    %3894 = vmatprep.subr.mxu0 %v2156
    %3895 = vmatpush1.msra.mxu0 %v2155
    %3896 = vmatprep.subr.mxu0 %v2153
    %3897 = vmatpush1.msra.mxu0 %v2152
    %3898 = vmatprep.subr.mxu0 %v2150
    %3899 = vmatpush1.msra.mxu0 %v2149
    %3900 = vmatprep.subr.mxu0 %v2147
    %3901 = vmatpush1.msra.mxu0 %v2146
    %3902 = vmatprep.subr.mxu0 %v2144
    %3903 = vmatpush1.msra.mxu0 %v2143
    %3904 = vmatprep.subr.mxu0 %v2141
    %3905 = vmatpush1.msra.mxu0 %v2140
    %3906 = vmatprep.subr.mxu0 %v2138
    %3907 = vmatpush1.msra.mxu0 %v2137
    %3908 = vmatprep.subr.mxu0 %v2135
    %3909 = vmatpush1.msra.mxu0 %v2134
    %3910 = vmatprep.subr.mxu0 %v2228
    %3911 = vmatpush2.msra.mxu0 %v2227
    %3912 = vmatprep.subr.mxu0 %v2225
    %3913 = vmatpush2.msra.mxu0 %v2224
    %3914 = vmatprep.subr.mxu0 %v2222
    %3915 = vmatpush2.msra.mxu0 %v2221
    %3916 = vmatprep.subr.mxu0 %v2219
    %3917 = vmatpush2.msra.mxu0 %v2218
    %3918 = vmatprep.subr.mxu0 %v2216
    %3919 = vmatpush2.msra.mxu0 %v2215
    %3920 = vmatprep.subr.mxu0 %v2213
    %3921 = vmatpush2.msra.mxu0 %v2212
    %3922 = vmatprep.subr.mxu0 %v2210
    %3923 = vmatpush2.msra.mxu0 %v2209
    %3924 = vmatprep.subr.mxu0 %v2207
    %3925 = vmatpush2.msra.mxu0 %v2206
    %3926 = vmatprep.subr.mxu0 %v2204
    %3927 = vmatpush2.msra.mxu0 %v2203
    %3928 = vmatprep.subr.mxu0 %v2201
    %3929 = vmatpush2.msra.mxu0 %v2200
    %3930 = vmatprep.subr.mxu0 %v2198
    %3931 = vmatpush2.msra.mxu0 %v2197
    %3932 = vmatprep.subr.mxu0 %v2195
    %3933 = vmatpush2.msra.mxu0 %v2194
    %3934 = vmatprep.subr.mxu0 %v2192
    %3935 = vmatpush2.msra.mxu0 %v2191
    %3936 = vmatprep.subr.mxu0 %v2189
    %3937 = vmatpush2.msra.mxu0 %v2188
    %3938 = vmatprep.subr.mxu0 %v2186
    %3939 = vmatpush2.msra.mxu0 %v2185
    %3940 = vmatprep.subr.mxu0 %v2183
    %3941 = vmatpush2.msra.mxu0 %v2182
    %3942 = vmatprep.mubr.f32.mxu0 %v1245
    %3943 = vmatmul.mubr.f32.gmra.mxu0 %v1244
    %v3944 = vpop.f32.mrf.mxu0
    %v3945 = vadd.f32 %v3804, %v3944
    %v3946 = vpop.f32.mrf.mxu0
    %v3947 = vadd.f32 %v3806, %v3946
    %3948 = vdwg.mxu0
    %3949 = vmatprep.subr.mxu0 0.0
    %3950 = vmatpush1.msra.mxu0 %v2181
    %3951 = vmatprep.subr.mxu0 0.0
    %3952 = vmatpush1.msra.mxu0 %v2178
    %3953 = vmatprep.subr.mxu0 0.0
    %3954 = vmatpush1.msra.mxu0 %v2175
    %3955 = vmatprep.subr.mxu0 0.0
    %3956 = vmatpush1.msra.mxu0 %v2172
    %3957 = vmatprep.subr.mxu0 0.0
    %3958 = vmatpush1.msra.mxu0 %v2169
    %3959 = vmatprep.subr.mxu0 0.0
    %3960 = vmatpush1.msra.mxu0 %v2166
    %3961 = vmatprep.subr.mxu0 0.0
    %3962 = vmatpush1.msra.mxu0 %v2163
    %3963 = vmatprep.subr.mxu0 0.0
    %3964 = vmatpush1.msra.mxu0 %v2160
    %3965 = vmatprep.subr.mxu0 0.0
    %3966 = vmatpush1.msra.mxu0 %v2157
    %3967 = vmatprep.subr.mxu0 0.0
    %3968 = vmatpush1.msra.mxu0 %v2154
    %3969 = vmatprep.subr.mxu0 0.0
    %3970 = vmatpush1.msra.mxu0 %v2151
    %3971 = vmatprep.subr.mxu0 0.0
    %3972 = vmatpush1.msra.mxu0 %v2148
    %3973 = vmatprep.subr.mxu0 0.0
    %3974 = vmatpush1.msra.mxu0 %v2145
    %3975 = vmatprep.subr.mxu0 0.0
    %3976 = vmatpush1.msra.mxu0 %v2142
    %3977 = vmatprep.subr.mxu0 0.0
    %3978 = vmatpush1.msra.mxu0 %v2139
    %3979 = vmatprep.subr.mxu0 0.0
    %3980 = vmatpush1.msra.mxu0 %v2136
    %3981 = vmatprep.subr.mxu0 0.0
    %3982 = vmatpush2.msra.mxu0 %v2229
    %3983 = vmatprep.subr.mxu0 0.0
    %3984 = vmatpush2.msra.mxu0 %v2226
    %3985 = vmatprep.subr.mxu0 0.0
    %3986 = vmatpush2.msra.mxu0 %v2223
    %3987 = vmatprep.subr.mxu0 0.0
    %3988 = vmatpush2.msra.mxu0 %v2220
    %3989 = vmatprep.subr.mxu0 0.0
    %3990 = vmatpush2.msra.mxu0 %v2217
    %3991 = vmatprep.subr.mxu0 0.0
    %3992 = vmatpush2.msra.mxu0 %v2214
    %3993 = vmatprep.subr.mxu0 0.0
    %3994 = vmatpush2.msra.mxu0 %v2211
    %3995 = vmatprep.subr.mxu0 0.0
    %3996 = vmatpush2.msra.mxu0 %v2208
    %3997 = vmatprep.subr.mxu0 0.0
    %3998 = vmatpush2.msra.mxu0 %v2205
    %3999 = vmatprep.subr.mxu0 0.0
    %4000 = vmatpush2.msra.mxu0 %v2202
    %4001 = vmatprep.subr.mxu0 0.0
    %4002 = vmatpush2.msra.mxu0 %v2199
    %4003 = vmatprep.subr.mxu0 0.0
    %4004 = vmatpush2.msra.mxu0 %v2196
    %4005 = vmatprep.subr.mxu0 0.0
    %4006 = vmatpush2.msra.mxu0 %v2193
    %4007 = vmatprep.subr.mxu0 0.0
    %4008 = vmatpush2.msra.mxu0 %v2190
    %4009 = vmatprep.subr.mxu0 0.0
    %4010 = vmatpush2.msra.mxu0 %v2187
    %4011 = vmatprep.subr.mxu0 0.0
    %4012 = vmatpush2.msra.mxu0 %v2184
    %4013 = vmatprep.mubr.f32.mxu0 %v1245
    %4014 = vmatmul.mubr.f32.gmra.mxu0 %v1244
    %v4015 = vpop.f32.mrf.mxu0
    %v4016 = vadd.f32 %v3875, %v4015
    %v4017 = vpop.f32.mrf.mxu0
    %4018 = vdwg.mxu0
    %4019 = vmatprep.subr.mxu0 %v2656
    %4020 = vmatpush1.msra.mxu0 %v2655
    %4021 = vmatprep.subr.mxu0 %v2653
    %4022 = vmatpush1.msra.mxu0 %v2652
    %4023 = vmatprep.subr.mxu0 %v2650
    %4024 = vmatpush1.msra.mxu0 %v2649
    %4025 = vmatprep.subr.mxu0 %v2647
    %4026 = vmatpush1.msra.mxu0 %v2646
    %4027 = vmatprep.subr.mxu0 %v2644
    %4028 = vmatpush1.msra.mxu0 %v2643
    %4029 = vmatprep.subr.mxu0 %v2641
    %4030 = vmatpush1.msra.mxu0 %v2640
    %4031 = vmatprep.subr.mxu0 %v2638
    %4032 = vmatpush1.msra.mxu0 %v2637
    %4033 = vmatprep.subr.mxu0 %v2635
    %4034 = vmatpush1.msra.mxu0 %v2634
    %4035 = vmatprep.subr.mxu0 %v2632
    %4036 = vmatpush1.msra.mxu0 %v2631
    %4037 = vmatprep.subr.mxu0 %v2629
    %4038 = vmatpush1.msra.mxu0 %v2628
    %4039 = vmatprep.subr.mxu0 %v2626
    %4040 = vmatpush1.msra.mxu0 %v2625
    %4041 = vmatprep.subr.mxu0 %v2623
    %4042 = vmatpush1.msra.mxu0 %v2622
    %4043 = vmatprep.subr.mxu0 %v2620
    %4044 = vmatpush1.msra.mxu0 %v2619
    %4045 = vmatprep.subr.mxu0 %v2617
    %4046 = vmatpush1.msra.mxu0 %v2616
    %4047 = vmatprep.subr.mxu0 %v2614
    %4048 = vmatpush1.msra.mxu0 %v2613
    %4049 = vmatprep.subr.mxu0 %v2611
    %4050 = vmatpush1.msra.mxu0 %v2610
    %4051 = vmatprep.subr.mxu0 %v2704
    %4052 = vmatpush2.msra.mxu0 %v2703
    %4053 = vmatprep.subr.mxu0 %v2701
    %4054 = vmatpush2.msra.mxu0 %v2700
    %4055 = vmatprep.subr.mxu0 %v2698
    %4056 = vmatpush2.msra.mxu0 %v2697
    %4057 = vmatprep.subr.mxu0 %v2695
    %4058 = vmatpush2.msra.mxu0 %v2694
    %4059 = vmatprep.subr.mxu0 %v2692
    %4060 = vmatpush2.msra.mxu0 %v2691
    %4061 = vmatprep.subr.mxu0 %v2689
    %4062 = vmatpush2.msra.mxu0 %v2688
    %4063 = vmatprep.subr.mxu0 %v2686
    %4064 = vmatpush2.msra.mxu0 %v2685
    %4065 = vmatprep.subr.mxu0 %v2683
    %4066 = vmatpush2.msra.mxu0 %v2682
    %4067 = vmatprep.subr.mxu0 %v2680
    %4068 = vmatpush2.msra.mxu0 %v2679
    %4069 = vmatprep.subr.mxu0 %v2677
    %4070 = vmatpush2.msra.mxu0 %v2676
    %4071 = vmatprep.subr.mxu0 %v2674
    %4072 = vmatpush2.msra.mxu0 %v2673
    %4073 = vmatprep.subr.mxu0 %v2671
    %4074 = vmatpush2.msra.mxu0 %v2670
    %4075 = vmatprep.subr.mxu0 %v2668
    %4076 = vmatpush2.msra.mxu0 %v2667
    %4077 = vmatprep.subr.mxu0 %v2665
    %4078 = vmatpush2.msra.mxu0 %v2664
    %4079 = vmatprep.subr.mxu0 %v2662
    %4080 = vmatpush2.msra.mxu0 %v2661
    %4081 = vmatprep.subr.mxu0 %v2659
    %4082 = vmatpush2.msra.mxu0 %v2658
    %4083 = vmatprep.mubr.f32.mxu0 %v1689
    %4084 = vmatmul.mubr.f32.gmra.mxu0 %v1688
    %v4085 = vpop.f32.mrf.mxu0
    %v4086 = vadd.f32 0.0, %v4085
    %v4087 = vpop.f32.mrf.mxu0
    %v4088 = vadd.f32 0.0, %v4087
    %4089 = vdwg.mxu0
    %4090 = vmatprep.subr.mxu0 0.0
    %4091 = vmatpush1.msra.mxu0 %v2657
    %4092 = vmatprep.subr.mxu0 0.0
    %4093 = vmatpush1.msra.mxu0 %v2654
    %4094 = vmatprep.subr.mxu0 0.0
    %4095 = vmatpush1.msra.mxu0 %v2651
    %4096 = vmatprep.subr.mxu0 0.0
    %4097 = vmatpush1.msra.mxu0 %v2648
    %4098 = vmatprep.subr.mxu0 0.0
    %4099 = vmatpush1.msra.mxu0 %v2645
    %4100 = vmatprep.subr.mxu0 0.0
    %4101 = vmatpush1.msra.mxu0 %v2642
    %4102 = vmatprep.subr.mxu0 0.0
    %4103 = vmatpush1.msra.mxu0 %v2639
    %4104 = vmatprep.subr.mxu0 0.0
    %4105 = vmatpush1.msra.mxu0 %v2636
    %4106 = vmatprep.subr.mxu0 0.0
    %4107 = vmatpush1.msra.mxu0 %v2633
    %4108 = vmatprep.subr.mxu0 0.0
    %4109 = vmatpush1.msra.mxu0 %v2630
    %4110 = vmatprep.subr.mxu0 0.0
    %4111 = vmatpush1.msra.mxu0 %v2627
    %4112 = vmatprep.subr.mxu0 0.0
    %4113 = vmatpush1.msra.mxu0 %v2624
    %4114 = vmatprep.subr.mxu0 0.0
    %4115 = vmatpush1.msra.mxu0 %v2621
    %4116 = vmatprep.subr.mxu0 0.0
    %4117 = vmatpush1.msra.mxu0 %v2618
    %4118 = vmatprep.subr.mxu0 0.0
    %4119 = vmatpush1.msra.mxu0 %v2615
    %4120 = vmatprep.subr.mxu0 0.0
    %4121 = vmatpush1.msra.mxu0 %v2612
    %4122 = vmatprep.subr.mxu0 0.0
    %4123 = vmatpush2.msra.mxu0 %v2705
    %4124 = vmatprep.subr.mxu0 0.0
    %4125 = vmatpush2.msra.mxu0 %v2702
    %4126 = vmatprep.subr.mxu0 0.0
    %4127 = vmatpush2.msra.mxu0 %v2699
    %4128 = vmatprep.subr.mxu0 0.0
    %4129 = vmatpush2.msra.mxu0 %v2696
    %4130 = vmatprep.subr.mxu0 0.0
    %4131 = vmatpush2.msra.mxu0 %v2693
    %4132 = vmatprep.subr.mxu0 0.0
    %4133 = vmatpush2.msra.mxu0 %v2690
    %4134 = vmatprep.subr.mxu0 0.0
    %4135 = vmatpush2.msra.mxu0 %v2687
    %4136 = vmatprep.subr.mxu0 0.0
    %4137 = vmatpush2.msra.mxu0 %v2684
    %4138 = vmatprep.subr.mxu0 0.0
    %4139 = vmatpush2.msra.mxu0 %v2681
    %4140 = vmatprep.subr.mxu0 0.0
    %4141 = vmatpush2.msra.mxu0 %v2678
    %4142 = vmatprep.subr.mxu0 0.0
    %4143 = vmatpush2.msra.mxu0 %v2675
    %4144 = vmatprep.subr.mxu0 0.0
    %4145 = vmatpush2.msra.mxu0 %v2672
    %4146 = vmatprep.subr.mxu0 0.0
    %4147 = vmatpush2.msra.mxu0 %v2669
    %4148 = vmatprep.subr.mxu0 0.0
    %4149 = vmatpush2.msra.mxu0 %v2666
    %4150 = vmatprep.subr.mxu0 0.0
    %4151 = vmatpush2.msra.mxu0 %v2663
    %4152 = vmatprep.subr.mxu0 0.0
    %4153 = vmatpush2.msra.mxu0 %v2660
    %4154 = vmatprep.mubr.f32.mxu0 %v1689
    %4155 = vmatmul.mubr.f32.gmra.mxu0 %v1688
    %v4156 = vpop.f32.mrf.mxu0
    %v4157 = vadd.f32 0.0, %v4156
    %v4158 = vpop.f32.mrf.mxu0
    %4159 = vdwg.mxu0
    %v4160 = vadd.f32 %v3945, %v4086
    %v4161 = vadd.f32 %v3947, %v4088
    %v4162 = vadd.f32 %v4016, %v4157
    %v4163 = vadd.f32 %v4160, %v2855
    %v4164 = vadd.f32 %v4161, %v2859
    %v4165 = vadd.f32 %v4162, %v2863
    %v4166 = vmax.f32 %v4163, 0.0
    %v4167 = vmax.f32 %v4164, 0.0
    %v4168 = vmax.f32 %v4165, 0.0
    %4169 = vmatprep.subr.mxu0 %v2277
    %4170 = vmatpush1.msra.mxu0 %v2276
    %4171 = vmatprep.subr.mxu0 %v2274
    %4172 = vmatpush1.msra.mxu0 %v2273
    %4173 = vmatprep.subr.mxu0 %v2271
    %4174 = vmatpush1.msra.mxu0 %v2270
    %4175 = vmatprep.subr.mxu0 %v2268
    %4176 = vmatpush1.msra.mxu0 %v2267
    %4177 = vmatprep.subr.mxu0 %v2265
    %4178 = vmatpush1.msra.mxu0 %v2264
    %4179 = vmatprep.subr.mxu0 %v2262
    %4180 = vmatpush1.msra.mxu0 %v2261
    %4181 = vmatprep.subr.mxu0 %v2259
    %4182 = vmatpush1.msra.mxu0 %v2258
    %4183 = vmatprep.subr.mxu0 %v2256
    %4184 = vmatpush1.msra.mxu0 %v2255
    %4185 = vmatprep.subr.mxu0 %v2253
    %4186 = vmatpush1.msra.mxu0 %v2252
    %4187 = vmatprep.subr.mxu0 %v2250
    %4188 = vmatpush1.msra.mxu0 %v2249
    %4189 = vmatprep.subr.mxu0 %v2247
    %4190 = vmatpush1.msra.mxu0 %v2246
    %4191 = vmatprep.subr.mxu0 %v2244
    %4192 = vmatpush1.msra.mxu0 %v2243
    %4193 = vmatprep.subr.mxu0 %v2241
    %4194 = vmatpush1.msra.mxu0 %v2240
    %4195 = vmatprep.subr.mxu0 %v2238
    %4196 = vmatpush1.msra.mxu0 %v2237
    %4197 = vmatprep.subr.mxu0 %v2235
    %4198 = vmatpush1.msra.mxu0 %v2234
    %4199 = vmatprep.subr.mxu0 %v2232
    %4200 = vmatpush1.msra.mxu0 %v2231
    %4201 = vmatprep.subr.mxu0 %v2325
    %4202 = vmatpush2.msra.mxu0 %v2324
    %4203 = vmatprep.subr.mxu0 %v2322
    %4204 = vmatpush2.msra.mxu0 %v2321
    %4205 = vmatprep.subr.mxu0 %v2319
    %4206 = vmatpush2.msra.mxu0 %v2318
    %4207 = vmatprep.subr.mxu0 %v2316
    %4208 = vmatpush2.msra.mxu0 %v2315
    %4209 = vmatprep.subr.mxu0 %v2313
    %4210 = vmatpush2.msra.mxu0 %v2312
    %4211 = vmatprep.subr.mxu0 %v2310
    %4212 = vmatpush2.msra.mxu0 %v2309
    %4213 = vmatprep.subr.mxu0 %v2307
    %4214 = vmatpush2.msra.mxu0 %v2306
    %4215 = vmatprep.subr.mxu0 %v2304
    %4216 = vmatpush2.msra.mxu0 %v2303
    %4217 = vmatprep.subr.mxu0 %v2301
    %4218 = vmatpush2.msra.mxu0 %v2300
    %4219 = vmatprep.subr.mxu0 %v2298
    %4220 = vmatpush2.msra.mxu0 %v2297
    %4221 = vmatprep.subr.mxu0 %v2295
    %4222 = vmatpush2.msra.mxu0 %v2294
    %4223 = vmatprep.subr.mxu0 %v2292
    %4224 = vmatpush2.msra.mxu0 %v2291
    %4225 = vmatprep.subr.mxu0 %v2289
    %4226 = vmatpush2.msra.mxu0 %v2288
    %4227 = vmatprep.subr.mxu0 %v2286
    %4228 = vmatpush2.msra.mxu0 %v2285
    %4229 = vmatprep.subr.mxu0 %v2283
    %4230 = vmatpush2.msra.mxu0 %v2282
    %4231 = vmatprep.subr.mxu0 %v2280
    %4232 = vmatpush2.msra.mxu0 %v2279
    %4233 = vmatprep.mubr.f32.mxu0 %v1689
    %4234 = vmatmul.mubr.f32.gmra.mxu0 %v1688
    %v4235 = vpop.f32.mrf.mxu0
    %v4236 = vadd.f32 0.0, %v4235
    %v4237 = vpop.f32.mrf.mxu0
    %v4238 = vadd.f32 0.0, %v4237
    %4239 = vdwg.mxu0
    %4240 = vmatprep.subr.mxu0 0.0
    %4241 = vmatpush1.msra.mxu0 %v2278
    %4242 = vmatprep.subr.mxu0 0.0
    %4243 = vmatpush1.msra.mxu0 %v2275
    %4244 = vmatprep.subr.mxu0 0.0
    %4245 = vmatpush1.msra.mxu0 %v2272
    %4246 = vmatprep.subr.mxu0 0.0
    %4247 = vmatpush1.msra.mxu0 %v2269
    %4248 = vmatprep.subr.mxu0 0.0
    %4249 = vmatpush1.msra.mxu0 %v2266
    %4250 = vmatprep.subr.mxu0 0.0
    %4251 = vmatpush1.msra.mxu0 %v2263
    %4252 = vmatprep.subr.mxu0 0.0
    %4253 = vmatpush1.msra.mxu0 %v2260
    %4254 = vmatprep.subr.mxu0 0.0
    %4255 = vmatpush1.msra.mxu0 %v2257
    %4256 = vmatprep.subr.mxu0 0.0
    %4257 = vmatpush1.msra.mxu0 %v2254
    %4258 = vmatprep.subr.mxu0 0.0
    %4259 = vmatpush1.msra.mxu0 %v2251
    %4260 = vmatprep.subr.mxu0 0.0
    %4261 = vmatpush1.msra.mxu0 %v2248
    %4262 = vmatprep.subr.mxu0 0.0
    %4263 = vmatpush1.msra.mxu0 %v2245
    %4264 = vmatprep.subr.mxu0 0.0
    %4265 = vmatpush1.msra.mxu0 %v2242
    %4266 = vmatprep.subr.mxu0 0.0
    %4267 = vmatpush1.msra.mxu0 %v2239
    %4268 = vmatprep.subr.mxu0 0.0
    %4269 = vmatpush1.msra.mxu0 %v2236
    %4270 = vmatprep.subr.mxu0 0.0
    %4271 = vmatpush1.msra.mxu0 %v2233
    %4272 = vmatprep.subr.mxu0 0.0
    %4273 = vmatpush2.msra.mxu0 %v2326
    %4274 = vmatprep.subr.mxu0 0.0
    %4275 = vmatpush2.msra.mxu0 %v2323
    %4276 = vmatprep.subr.mxu0 0.0
    %4277 = vmatpush2.msra.mxu0 %v2320
    %4278 = vmatprep.subr.mxu0 0.0
    %4279 = vmatpush2.msra.mxu0 %v2317
    %4280 = vmatprep.subr.mxu0 0.0
    %4281 = vmatpush2.msra.mxu0 %v2314
    %4282 = vmatprep.subr.mxu0 0.0
    %4283 = vmatpush2.msra.mxu0 %v2311
    %4284 = vmatprep.subr.mxu0 0.0
    %4285 = vmatpush2.msra.mxu0 %v2308
    %4286 = vmatprep.subr.mxu0 0.0
    %4287 = vmatpush2.msra.mxu0 %v2305
    %4288 = vmatprep.subr.mxu0 0.0
    %4289 = vmatpush2.msra.mxu0 %v2302
    %4290 = vmatprep.subr.mxu0 0.0
    %4291 = vmatpush2.msra.mxu0 %v2299
    %4292 = vmatprep.subr.mxu0 0.0
    %4293 = vmatpush2.msra.mxu0 %v2296
    %4294 = vmatprep.subr.mxu0 0.0
    %4295 = vmatpush2.msra.mxu0 %v2293
    %4296 = vmatprep.subr.mxu0 0.0
    %4297 = vmatpush2.msra.mxu0 %v2290
    %4298 = vmatprep.subr.mxu0 0.0
    %4299 = vmatpush2.msra.mxu0 %v2287
    %4300 = vmatprep.subr.mxu0 0.0
    %4301 = vmatpush2.msra.mxu0 %v2284
    %4302 = vmatprep.subr.mxu0 0.0
    %4303 = vmatpush2.msra.mxu0 %v2281
    %4304 = vmatprep.mubr.f32.mxu0 %v1689
    %4305 = vmatmul.mubr.f32.gmra.mxu0 %v1688
    %v4306 = vpop.f32.mrf.mxu0
    %v4307 = vadd.f32 0.0, %v4306
    %v4308 = vpop.f32.mrf.mxu0
    %4309 = vdwg.mxu0
    %4310 = vmatprep.subr.mxu0 %v2180
    %4311 = vmatpush1.msra.mxu0 %v2179
    %4312 = vmatprep.subr.mxu0 %v2177
    %4313 = vmatpush1.msra.mxu0 %v2176
    %4314 = vmatprep.subr.mxu0 %v2174
    %4315 = vmatpush1.msra.mxu0 %v2173
    %4316 = vmatprep.subr.mxu0 %v2171
    %4317 = vmatpush1.msra.mxu0 %v2170
    %4318 = vmatprep.subr.mxu0 %v2168
    %4319 = vmatpush1.msra.mxu0 %v2167
    %4320 = vmatprep.subr.mxu0 %v2165
    %4321 = vmatpush1.msra.mxu0 %v2164
    %4322 = vmatprep.subr.mxu0 %v2162
    %4323 = vmatpush1.msra.mxu0 %v2161
    %4324 = vmatprep.subr.mxu0 %v2159
    %4325 = vmatpush1.msra.mxu0 %v2158
    %4326 = vmatprep.subr.mxu0 %v2156
    %4327 = vmatpush1.msra.mxu0 %v2155
    %4328 = vmatprep.subr.mxu0 %v2153
    %4329 = vmatpush1.msra.mxu0 %v2152
    %4330 = vmatprep.subr.mxu0 %v2150
    %4331 = vmatpush1.msra.mxu0 %v2149
    %4332 = vmatprep.subr.mxu0 %v2147
    %4333 = vmatpush1.msra.mxu0 %v2146
    %4334 = vmatprep.subr.mxu0 %v2144
    %4335 = vmatpush1.msra.mxu0 %v2143
    %4336 = vmatprep.subr.mxu0 %v2141
    %4337 = vmatpush1.msra.mxu0 %v2140
    %4338 = vmatprep.subr.mxu0 %v2138
    %4339 = vmatpush1.msra.mxu0 %v2137
    %4340 = vmatprep.subr.mxu0 %v2135
    %4341 = vmatpush1.msra.mxu0 %v2134
    %4342 = vmatprep.subr.mxu0 %v2228
    %4343 = vmatpush2.msra.mxu0 %v2227
    %4344 = vmatprep.subr.mxu0 %v2225
    %4345 = vmatpush2.msra.mxu0 %v2224
    %4346 = vmatprep.subr.mxu0 %v2222
    %4347 = vmatpush2.msra.mxu0 %v2221
    %4348 = vmatprep.subr.mxu0 %v2219
    %4349 = vmatpush2.msra.mxu0 %v2218
    %4350 = vmatprep.subr.mxu0 %v2216
    %4351 = vmatpush2.msra.mxu0 %v2215
    %4352 = vmatprep.subr.mxu0 %v2213
    %4353 = vmatpush2.msra.mxu0 %v2212
    %4354 = vmatprep.subr.mxu0 %v2210
    %4355 = vmatpush2.msra.mxu0 %v2209
    %4356 = vmatprep.subr.mxu0 %v2207
    %4357 = vmatpush2.msra.mxu0 %v2206
    %4358 = vmatprep.subr.mxu0 %v2204
    %4359 = vmatpush2.msra.mxu0 %v2203
    %4360 = vmatprep.subr.mxu0 %v2201
    %4361 = vmatpush2.msra.mxu0 %v2200
    %4362 = vmatprep.subr.mxu0 %v2198
    %4363 = vmatpush2.msra.mxu0 %v2197
    %4364 = vmatprep.subr.mxu0 %v2195
    %4365 = vmatpush2.msra.mxu0 %v2194
    %4366 = vmatprep.subr.mxu0 %v2192
    %4367 = vmatpush2.msra.mxu0 %v2191
    %4368 = vmatprep.subr.mxu0 %v2189
    %4369 = vmatpush2.msra.mxu0 %v2188
    %4370 = vmatprep.subr.mxu0 %v2186
    %4371 = vmatpush2.msra.mxu0 %v2185
    %4372 = vmatprep.subr.mxu0 %v2183
    %4373 = vmatpush2.msra.mxu0 %v2182
    %4374 = vmatprep.mubr.f32.mxu0 %v1467
    %4375 = vmatmul.mubr.f32.gmra.mxu0 %v1466
    %v4376 = vpop.f32.mrf.mxu0
    %v4377 = vadd.f32 %v4236, %v4376
    %v4378 = vpop.f32.mrf.mxu0
    %v4379 = vadd.f32 %v4238, %v4378
    %4380 = vdwg.mxu0
    %4381 = vmatprep.subr.mxu0 0.0
    %4382 = vmatpush1.msra.mxu0 %v2181
    %4383 = vmatprep.subr.mxu0 0.0
    %4384 = vmatpush1.msra.mxu0 %v2178
    %4385 = vmatprep.subr.mxu0 0.0
    %4386 = vmatpush1.msra.mxu0 %v2175
    %4387 = vmatprep.subr.mxu0 0.0
    %4388 = vmatpush1.msra.mxu0 %v2172
    %4389 = vmatprep.subr.mxu0 0.0
    %4390 = vmatpush1.msra.mxu0 %v2169
    %4391 = vmatprep.subr.mxu0 0.0
    %4392 = vmatpush1.msra.mxu0 %v2166
    %4393 = vmatprep.subr.mxu0 0.0
    %4394 = vmatpush1.msra.mxu0 %v2163
    %4395 = vmatprep.subr.mxu0 0.0
    %4396 = vmatpush1.msra.mxu0 %v2160
    %4397 = vmatprep.subr.mxu0 0.0
    %4398 = vmatpush1.msra.mxu0 %v2157
    %4399 = vmatprep.subr.mxu0 0.0
    %4400 = vmatpush1.msra.mxu0 %v2154
    %4401 = vmatprep.subr.mxu0 0.0
    %4402 = vmatpush1.msra.mxu0 %v2151
    %4403 = vmatprep.subr.mxu0 0.0
    %4404 = vmatpush1.msra.mxu0 %v2148
    %4405 = vmatprep.subr.mxu0 0.0
    %4406 = vmatpush1.msra.mxu0 %v2145
    %4407 = vmatprep.subr.mxu0 0.0
    %4408 = vmatpush1.msra.mxu0 %v2142
    %4409 = vmatprep.subr.mxu0 0.0
    %4410 = vmatpush1.msra.mxu0 %v2139
    %4411 = vmatprep.subr.mxu0 0.0
    %4412 = vmatpush1.msra.mxu0 %v2136
    %4413 = vmatprep.subr.mxu0 0.0
    %4414 = vmatpush2.msra.mxu0 %v2229
    %4415 = vmatprep.subr.mxu0 0.0
    %4416 = vmatpush2.msra.mxu0 %v2226
    %4417 = vmatprep.subr.mxu0 0.0
    %4418 = vmatpush2.msra.mxu0 %v2223
    %4419 = vmatprep.subr.mxu0 0.0
    %4420 = vmatpush2.msra.mxu0 %v2220
    %4421 = vmatprep.subr.mxu0 0.0
    %4422 = vmatpush2.msra.mxu0 %v2217
    %4423 = vmatprep.subr.mxu0 0.0
    %4424 = vmatpush2.msra.mxu0 %v2214
    %4425 = vmatprep.subr.mxu0 0.0
    %4426 = vmatpush2.msra.mxu0 %v2211
    %4427 = vmatprep.subr.mxu0 0.0
    %4428 = vmatpush2.msra.mxu0 %v2208
    %4429 = vmatprep.subr.mxu0 0.0
    %4430 = vmatpush2.msra.mxu0 %v2205
    %4431 = vmatprep.subr.mxu0 0.0
    %4432 = vmatpush2.msra.mxu0 %v2202
    %4433 = vmatprep.subr.mxu0 0.0
    %4434 = vmatpush2.msra.mxu0 %v2199
    %4435 = vmatprep.subr.mxu0 0.0
    %4436 = vmatpush2.msra.mxu0 %v2196
    %4437 = vmatprep.subr.mxu0 0.0
    %4438 = vmatpush2.msra.mxu0 %v2193
    %4439 = vmatprep.subr.mxu0 0.0
    %4440 = vmatpush2.msra.mxu0 %v2190
    %4441 = vmatprep.subr.mxu0 0.0
    %4442 = vmatpush2.msra.mxu0 %v2187
    %4443 = vmatprep.subr.mxu0 0.0
    %4444 = vmatpush2.msra.mxu0 %v2184
    %4445 = vmatprep.mubr.f32.mxu0 %v1467
    %4446 = vmatmul.mubr.f32.gmra.mxu0 %v1466
    %v4447 = vpop.f32.mrf.mxu0
    %v4448 = vadd.f32 %v4307, %v4447
    %v4449 = vpop.f32.mrf.mxu0
    %4450 = vdwg.mxu0
    %4451 = vmatprep.subr.mxu0 %v2656
    %4452 = vmatpush1.msra.mxu0 %v2655
    %4453 = vmatprep.subr.mxu0 %v2653
    %4454 = vmatpush1.msra.mxu0 %v2652
    %4455 = vmatprep.subr.mxu0 %v2650
    %4456 = vmatpush1.msra.mxu0 %v2649
    %4457 = vmatprep.subr.mxu0 %v2647
    %4458 = vmatpush1.msra.mxu0 %v2646
    %4459 = vmatprep.subr.mxu0 %v2644
    %4460 = vmatpush1.msra.mxu0 %v2643
    %4461 = vmatprep.subr.mxu0 %v2641
    %4462 = vmatpush1.msra.mxu0 %v2640
    %4463 = vmatprep.subr.mxu0 %v2638
    %4464 = vmatpush1.msra.mxu0 %v2637
    %4465 = vmatprep.subr.mxu0 %v2635
    %4466 = vmatpush1.msra.mxu0 %v2634
    %4467 = vmatprep.subr.mxu0 %v2632
    %4468 = vmatpush1.msra.mxu0 %v2631
    %4469 = vmatprep.subr.mxu0 %v2629
    %4470 = vmatpush1.msra.mxu0 %v2628
    %4471 = vmatprep.subr.mxu0 %v2626
    %4472 = vmatpush1.msra.mxu0 %v2625
    %4473 = vmatprep.subr.mxu0 %v2623
    %4474 = vmatpush1.msra.mxu0 %v2622
    %4475 = vmatprep.subr.mxu0 %v2620
    %4476 = vmatpush1.msra.mxu0 %v2619
    %4477 = vmatprep.subr.mxu0 %v2617
    %4478 = vmatpush1.msra.mxu0 %v2616
    %4479 = vmatprep.subr.mxu0 %v2614
    %4480 = vmatpush1.msra.mxu0 %v2613
    %4481 = vmatprep.subr.mxu0 %v2611
    %4482 = vmatpush1.msra.mxu0 %v2610
    %4483 = vmatprep.subr.mxu0 %v2704
    %4484 = vmatpush2.msra.mxu0 %v2703
    %4485 = vmatprep.subr.mxu0 %v2701
    %4486 = vmatpush2.msra.mxu0 %v2700
    %4487 = vmatprep.subr.mxu0 %v2698
    %4488 = vmatpush2.msra.mxu0 %v2697
    %4489 = vmatprep.subr.mxu0 %v2695
    %4490 = vmatpush2.msra.mxu0 %v2694
    %4491 = vmatprep.subr.mxu0 %v2692
    %4492 = vmatpush2.msra.mxu0 %v2691
    %4493 = vmatprep.subr.mxu0 %v2689
    %4494 = vmatpush2.msra.mxu0 %v2688
    %4495 = vmatprep.subr.mxu0 %v2686
    %4496 = vmatpush2.msra.mxu0 %v2685
    %4497 = vmatprep.subr.mxu0 %v2683
    %4498 = vmatpush2.msra.mxu0 %v2682
    %4499 = vmatprep.subr.mxu0 %v2680
    %4500 = vmatpush2.msra.mxu0 %v2679
    %4501 = vmatprep.subr.mxu0 %v2677
    %4502 = vmatpush2.msra.mxu0 %v2676
    %4503 = vmatprep.subr.mxu0 %v2674
    %4504 = vmatpush2.msra.mxu0 %v2673
    %4505 = vmatprep.subr.mxu0 %v2671
    %4506 = vmatpush2.msra.mxu0 %v2670
    %4507 = vmatprep.subr.mxu0 %v2668
    %4508 = vmatpush2.msra.mxu0 %v2667
    %4509 = vmatprep.subr.mxu0 %v2665
    %4510 = vmatpush2.msra.mxu0 %v2664
    %4511 = vmatprep.subr.mxu0 %v2662
    %4512 = vmatpush2.msra.mxu0 %v2661
    %4513 = vmatprep.subr.mxu0 %v2659
    %4514 = vmatpush2.msra.mxu0 %v2658
    %4515 = vmatprep.mubr.f32.mxu0 %v1911
    %4516 = vmatmul.mubr.f32.gmra.mxu0 %v1910
    %v4517 = vpop.f32.mrf.mxu0
    %v4518 = vadd.f32 0.0, %v4517
    %v4519 = vpop.f32.mrf.mxu0
    %v4520 = vadd.f32 0.0, %v4519
    %4521 = vdwg.mxu0
    %4522 = vmatprep.subr.mxu0 0.0
    %4523 = vmatpush1.msra.mxu0 %v2657
    %4524 = vmatprep.subr.mxu0 0.0
    %4525 = vmatpush1.msra.mxu0 %v2654
    %4526 = vmatprep.subr.mxu0 0.0
    %4527 = vmatpush1.msra.mxu0 %v2651
    %4528 = vmatprep.subr.mxu0 0.0
    %4529 = vmatpush1.msra.mxu0 %v2648
    %4530 = vmatprep.subr.mxu0 0.0
    %4531 = vmatpush1.msra.mxu0 %v2645
    %4532 = vmatprep.subr.mxu0 0.0
    %4533 = vmatpush1.msra.mxu0 %v2642
    %4534 = vmatprep.subr.mxu0 0.0
    %4535 = vmatpush1.msra.mxu0 %v2639
    %4536 = vmatprep.subr.mxu0 0.0
    %4537 = vmatpush1.msra.mxu0 %v2636
    %4538 = vmatprep.subr.mxu0 0.0
    %4539 = vmatpush1.msra.mxu0 %v2633
    %4540 = vmatprep.subr.mxu0 0.0
    %4541 = vmatpush1.msra.mxu0 %v2630
    %4542 = vmatprep.subr.mxu0 0.0
    %4543 = vmatpush1.msra.mxu0 %v2627
    %4544 = vmatprep.subr.mxu0 0.0
    %4545 = vmatpush1.msra.mxu0 %v2624
    %4546 = vmatprep.subr.mxu0 0.0
    %4547 = vmatpush1.msra.mxu0 %v2621
    %4548 = vmatprep.subr.mxu0 0.0
    %4549 = vmatpush1.msra.mxu0 %v2618
    %4550 = vmatprep.subr.mxu0 0.0
    %4551 = vmatpush1.msra.mxu0 %v2615
    %4552 = vmatprep.subr.mxu0 0.0
    %4553 = vmatpush1.msra.mxu0 %v2612
    %4554 = vmatprep.subr.mxu0 0.0
    %4555 = vmatpush2.msra.mxu0 %v2705
    %4556 = vmatprep.subr.mxu0 0.0
    %4557 = vmatpush2.msra.mxu0 %v2702
    %4558 = vmatprep.subr.mxu0 0.0
    %4559 = vmatpush2.msra.mxu0 %v2699
    %4560 = vmatprep.subr.mxu0 0.0
    %4561 = vmatpush2.msra.mxu0 %v2696
    %4562 = vmatprep.subr.mxu0 0.0
    %4563 = vmatpush2.msra.mxu0 %v2693
    %4564 = vmatprep.subr.mxu0 0.0
    %4565 = vmatpush2.msra.mxu0 %v2690
    %4566 = vmatprep.subr.mxu0 0.0
    %4567 = vmatpush2.msra.mxu0 %v2687
    %4568 = vmatprep.subr.mxu0 0.0
    %4569 = vmatpush2.msra.mxu0 %v2684
    %4570 = vmatprep.subr.mxu0 0.0
    %4571 = vmatpush2.msra.mxu0 %v2681
    %4572 = vmatprep.subr.mxu0 0.0
    %4573 = vmatpush2.msra.mxu0 %v2678
    %4574 = vmatprep.subr.mxu0 0.0
    %4575 = vmatpush2.msra.mxu0 %v2675
    %4576 = vmatprep.subr.mxu0 0.0
    %4577 = vmatpush2.msra.mxu0 %v2672
    %4578 = vmatprep.subr.mxu0 0.0
    %4579 = vmatpush2.msra.mxu0 %v2669
    %4580 = vmatprep.subr.mxu0 0.0
    %4581 = vmatpush2.msra.mxu0 %v2666
    %4582 = vmatprep.subr.mxu0 0.0
    %4583 = vmatpush2.msra.mxu0 %v2663
    %4584 = vmatprep.subr.mxu0 0.0
    %4585 = vmatpush2.msra.mxu0 %v2660
    %4586 = vmatprep.mubr.f32.mxu0 %v1911
    %4587 = vmatmul.mubr.f32.gmra.mxu0 %v1910
    %v4588 = vpop.f32.mrf.mxu0
    %v4589 = vadd.f32 0.0, %v4588
    %v4590 = vpop.f32.mrf.mxu0
    %4591 = vdwg.mxu0
    %v4592 = vadd.f32 %v4377, %v4518
    %v4593 = vadd.f32 %v4379, %v4520
    %v4594 = vadd.f32 %v4448, %v4589
    %v4595 = vadd.f32 %v4592, %v2855
    %v4596 = vadd.f32 %v4593, %v2859
    %v4597 = vadd.f32 %v4594, %v2863
    %v4598 = vmax.f32 %v4595, 0.0
    %v4599 = vmax.f32 %v4596, 0.0
    %v4600 = vmax.f32 %v4597, 0.0
    %4601 = vmatprep.subr.mxu0 %v2277
    %4602 = vmatpush1.msra.mxu0 %v2276
    %4603 = vmatprep.subr.mxu0 %v2274
    %4604 = vmatpush1.msra.mxu0 %v2273
    %4605 = vmatprep.subr.mxu0 %v2271
    %4606 = vmatpush1.msra.mxu0 %v2270
    %4607 = vmatprep.subr.mxu0 %v2268
    %4608 = vmatpush1.msra.mxu0 %v2267
    %4609 = vmatprep.subr.mxu0 %v2265
    %4610 = vmatpush1.msra.mxu0 %v2264
    %4611 = vmatprep.subr.mxu0 %v2262
    %4612 = vmatpush1.msra.mxu0 %v2261
    %4613 = vmatprep.subr.mxu0 %v2259
    %4614 = vmatpush1.msra.mxu0 %v2258
    %4615 = vmatprep.subr.mxu0 %v2256
    %4616 = vmatpush1.msra.mxu0 %v2255
    %4617 = vmatprep.subr.mxu0 %v2253
    %4618 = vmatpush1.msra.mxu0 %v2252
    %4619 = vmatprep.subr.mxu0 %v2250
    %4620 = vmatpush1.msra.mxu0 %v2249
    %4621 = vmatprep.subr.mxu0 %v2247
    %4622 = vmatpush1.msra.mxu0 %v2246
    %4623 = vmatprep.subr.mxu0 %v2244
    %4624 = vmatpush1.msra.mxu0 %v2243
    %4625 = vmatprep.subr.mxu0 %v2241
    %4626 = vmatpush1.msra.mxu0 %v2240
    %4627 = vmatprep.subr.mxu0 %v2238
    %4628 = vmatpush1.msra.mxu0 %v2237
    %4629 = vmatprep.subr.mxu0 %v2235
    %4630 = vmatpush1.msra.mxu0 %v2234
    %4631 = vmatprep.subr.mxu0 %v2232
    %4632 = vmatpush1.msra.mxu0 %v2231
    %4633 = vmatprep.subr.mxu0 %v2325
    %4634 = vmatpush2.msra.mxu0 %v2324
    %4635 = vmatprep.subr.mxu0 %v2322
    %4636 = vmatpush2.msra.mxu0 %v2321
    %4637 = vmatprep.subr.mxu0 %v2319
    %4638 = vmatpush2.msra.mxu0 %v2318
    %4639 = vmatprep.subr.mxu0 %v2316
    %4640 = vmatpush2.msra.mxu0 %v2315
    %4641 = vmatprep.subr.mxu0 %v2313
    %4642 = vmatpush2.msra.mxu0 %v2312
    %4643 = vmatprep.subr.mxu0 %v2310
    %4644 = vmatpush2.msra.mxu0 %v2309
    %4645 = vmatprep.subr.mxu0 %v2307
    %4646 = vmatpush2.msra.mxu0 %v2306
    %4647 = vmatprep.subr.mxu0 %v2304
    %4648 = vmatpush2.msra.mxu0 %v2303
    %4649 = vmatprep.subr.mxu0 %v2301
    %4650 = vmatpush2.msra.mxu0 %v2300
    %4651 = vmatprep.subr.mxu0 %v2298
    %4652 = vmatpush2.msra.mxu0 %v2297
    %4653 = vmatprep.subr.mxu0 %v2295
    %4654 = vmatpush2.msra.mxu0 %v2294
    %4655 = vmatprep.subr.mxu0 %v2292
    %4656 = vmatpush2.msra.mxu0 %v2291
    %4657 = vmatprep.subr.mxu0 %v2289
    %4658 = vmatpush2.msra.mxu0 %v2288
    %4659 = vmatprep.subr.mxu0 %v2286
    %4660 = vmatpush2.msra.mxu0 %v2285
    %4661 = vmatprep.subr.mxu0 %v2283
    %4662 = vmatpush2.msra.mxu0 %v2282
    %4663 = vmatprep.subr.mxu0 %v2280
    %4664 = vmatpush2.msra.mxu0 %v2279
    %4665 = vmatprep.mubr.f32.mxu0 %v1911
    %4666 = vmatmul.mubr.f32.gmra.mxu0 %v1910
    %v4667 = vpop.f32.mrf.mxu0
    %v4668 = vadd.f32 0.0, %v4667
    %v4669 = vpop.f32.mrf.mxu0
    %v4670 = vadd.f32 0.0, %v4669
    %4671 = vdwg.mxu0
    %4672 = vmatprep.subr.mxu0 0.0
    %4673 = vmatpush1.msra.mxu0 %v2278
    %4674 = vmatprep.subr.mxu0 0.0
    %4675 = vmatpush1.msra.mxu0 %v2275
    %4676 = vmatprep.subr.mxu0 0.0
    %4677 = vmatpush1.msra.mxu0 %v2272
    %4678 = vmatprep.subr.mxu0 0.0
    %4679 = vmatpush1.msra.mxu0 %v2269
    %4680 = vmatprep.subr.mxu0 0.0
    %4681 = vmatpush1.msra.mxu0 %v2266
    %4682 = vmatprep.subr.mxu0 0.0
    %4683 = vmatpush1.msra.mxu0 %v2263
    %4684 = vmatprep.subr.mxu0 0.0
    %4685 = vmatpush1.msra.mxu0 %v2260
    %4686 = vmatprep.subr.mxu0 0.0
    %4687 = vmatpush1.msra.mxu0 %v2257
    %4688 = vmatprep.subr.mxu0 0.0
    %4689 = vmatpush1.msra.mxu0 %v2254
    %4690 = vmatprep.subr.mxu0 0.0
    %4691 = vmatpush1.msra.mxu0 %v2251
    %4692 = vmatprep.subr.mxu0 0.0
    %4693 = vmatpush1.msra.mxu0 %v2248
    %4694 = vmatprep.subr.mxu0 0.0
    %4695 = vmatpush1.msra.mxu0 %v2245
    %4696 = vmatprep.subr.mxu0 0.0
    %4697 = vmatpush1.msra.mxu0 %v2242
    %4698 = vmatprep.subr.mxu0 0.0
    %4699 = vmatpush1.msra.mxu0 %v2239
    %4700 = vmatprep.subr.mxu0 0.0
    %4701 = vmatpush1.msra.mxu0 %v2236
    %4702 = vmatprep.subr.mxu0 0.0
    %4703 = vmatpush1.msra.mxu0 %v2233
    %4704 = vmatprep.subr.mxu0 0.0
    %4705 = vmatpush2.msra.mxu0 %v2326
    %4706 = vmatprep.subr.mxu0 0.0
    %4707 = vmatpush2.msra.mxu0 %v2323
    %4708 = vmatprep.subr.mxu0 0.0
    %4709 = vmatpush2.msra.mxu0 %v2320
    %4710 = vmatprep.subr.mxu0 0.0
    %4711 = vmatpush2.msra.mxu0 %v2317
    %4712 = vmatprep.subr.mxu0 0.0
    %4713 = vmatpush2.msra.mxu0 %v2314
    %4714 = vmatprep.subr.mxu0 0.0
    %4715 = vmatpush2.msra.mxu0 %v2311
    %4716 = vmatprep.subr.mxu0 0.0
    %4717 = vmatpush2.msra.mxu0 %v2308
    %4718 = vmatprep.subr.mxu0 0.0
    %4719 = vmatpush2.msra.mxu0 %v2305
    %4720 = vmatprep.subr.mxu0 0.0
    %4721 = vmatpush2.msra.mxu0 %v2302
    %4722 = vmatprep.subr.mxu0 0.0
    %4723 = vmatpush2.msra.mxu0 %v2299
    %4724 = vmatprep.subr.mxu0 0.0
    %4725 = vmatpush2.msra.mxu0 %v2296
    %4726 = vmatprep.subr.mxu0 0.0
    %4727 = vmatpush2.msra.mxu0 %v2293
    %4728 = vmatprep.subr.mxu0 0.0
    %4729 = vmatpush2.msra.mxu0 %v2290
    %4730 = vmatprep.subr.mxu0 0.0
    %4731 = vmatpush2.msra.mxu0 %v2287
    %4732 = vmatprep.subr.mxu0 0.0
    %4733 = vmatpush2.msra.mxu0 %v2284
    %4734 = vmatprep.subr.mxu0 0.0
    %4735 = vmatpush2.msra.mxu0 %v2281
    %4736 = vmatprep.mubr.f32.mxu0 %v1911
    %4737 = vmatmul.mubr.f32.gmra.mxu0 %v1910
    %v4738 = vpop.f32.mrf.mxu0
    %v4739 = vadd.f32 0.0, %v4738
    %v4740 = vpop.f32.mrf.mxu0
    %4741 = vdwg.mxu0
    %4742 = vmatprep.subr.mxu0 %v2180
    %4743 = vmatpush1.msra.mxu0 %v2179
    %4744 = vmatprep.subr.mxu0 %v2177
    %4745 = vmatpush1.msra.mxu0 %v2176
    %4746 = vmatprep.subr.mxu0 %v2174
    %4747 = vmatpush1.msra.mxu0 %v2173
    %4748 = vmatprep.subr.mxu0 %v2171
    %4749 = vmatpush1.msra.mxu0 %v2170
    %4750 = vmatprep.subr.mxu0 %v2168
    %4751 = vmatpush1.msra.mxu0 %v2167
    %4752 = vmatprep.subr.mxu0 %v2165
    %4753 = vmatpush1.msra.mxu0 %v2164
    %4754 = vmatprep.subr.mxu0 %v2162
    %4755 = vmatpush1.msra.mxu0 %v2161
    %4756 = vmatprep.subr.mxu0 %v2159
    %4757 = vmatpush1.msra.mxu0 %v2158
    %4758 = vmatprep.subr.mxu0 %v2156
    %4759 = vmatpush1.msra.mxu0 %v2155
    %4760 = vmatprep.subr.mxu0 %v2153
    %4761 = vmatpush1.msra.mxu0 %v2152
    %4762 = vmatprep.subr.mxu0 %v2150
    %4763 = vmatpush1.msra.mxu0 %v2149
    %4764 = vmatprep.subr.mxu0 %v2147
    %4765 = vmatpush1.msra.mxu0 %v2146
    %4766 = vmatprep.subr.mxu0 %v2144
    %4767 = vmatpush1.msra.mxu0 %v2143
    %4768 = vmatprep.subr.mxu0 %v2141
    %4769 = vmatpush1.msra.mxu0 %v2140
    %4770 = vmatprep.subr.mxu0 %v2138
    %4771 = vmatpush1.msra.mxu0 %v2137
    %4772 = vmatprep.subr.mxu0 %v2135
    %4773 = vmatpush1.msra.mxu0 %v2134
    %4774 = vmatprep.subr.mxu0 %v2228
    %4775 = vmatpush2.msra.mxu0 %v2227
    %4776 = vmatprep.subr.mxu0 %v2225
    %4777 = vmatpush2.msra.mxu0 %v2224
    %4778 = vmatprep.subr.mxu0 %v2222
    %4779 = vmatpush2.msra.mxu0 %v2221
    %4780 = vmatprep.subr.mxu0 %v2219
    %4781 = vmatpush2.msra.mxu0 %v2218
    %4782 = vmatprep.subr.mxu0 %v2216
    %4783 = vmatpush2.msra.mxu0 %v2215
    %4784 = vmatprep.subr.mxu0 %v2213
    %4785 = vmatpush2.msra.mxu0 %v2212
    %4786 = vmatprep.subr.mxu0 %v2210
    %4787 = vmatpush2.msra.mxu0 %v2209
    %4788 = vmatprep.subr.mxu0 %v2207
    %4789 = vmatpush2.msra.mxu0 %v2206
    %4790 = vmatprep.subr.mxu0 %v2204
    %4791 = vmatpush2.msra.mxu0 %v2203
    %4792 = vmatprep.subr.mxu0 %v2201
    %4793 = vmatpush2.msra.mxu0 %v2200
    %4794 = vmatprep.subr.mxu0 %v2198
    %4795 = vmatpush2.msra.mxu0 %v2197
    %4796 = vmatprep.subr.mxu0 %v2195
    %4797 = vmatpush2.msra.mxu0 %v2194
    %4798 = vmatprep.subr.mxu0 %v2192
    %4799 = vmatpush2.msra.mxu0 %v2191
    %4800 = vmatprep.subr.mxu0 %v2189
    %4801 = vmatpush2.msra.mxu0 %v2188
    %4802 = vmatprep.subr.mxu0 %v2186
    %4803 = vmatpush2.msra.mxu0 %v2185
    %4804 = vmatprep.subr.mxu0 %v2183
    %4805 = vmatpush2.msra.mxu0 %v2182
    %4806 = vmatprep.mubr.f32.mxu0 %v1689
    %4807 = vmatmul.mubr.f32.gmra.mxu0 %v1688
    %v4808 = vpop.f32.mrf.mxu0
    %v4809 = vadd.f32 %v4668, %v4808
    %v4810 = vpop.f32.mrf.mxu0
    %v4811 = vadd.f32 %v4670, %v4810
    %4812 = vdwg.mxu0
    %4813 = vmatprep.subr.mxu0 0.0
    %4814 = vmatpush1.msra.mxu0 %v2181
    %4815 = vmatprep.subr.mxu0 0.0
    %4816 = vmatpush1.msra.mxu0 %v2178
    %4817 = vmatprep.subr.mxu0 0.0
    %4818 = vmatpush1.msra.mxu0 %v2175
    %4819 = vmatprep.subr.mxu0 0.0
    %4820 = vmatpush1.msra.mxu0 %v2172
    %4821 = vmatprep.subr.mxu0 0.0
    %4822 = vmatpush1.msra.mxu0 %v2169
    %4823 = vmatprep.subr.mxu0 0.0
    %4824 = vmatpush1.msra.mxu0 %v2166
    %4825 = vmatprep.subr.mxu0 0.0
    %4826 = vmatpush1.msra.mxu0 %v2163
    %4827 = vmatprep.subr.mxu0 0.0
    %4828 = vmatpush1.msra.mxu0 %v2160
    %4829 = vmatprep.subr.mxu0 0.0
    %4830 = vmatpush1.msra.mxu0 %v2157
    %4831 = vmatprep.subr.mxu0 0.0
    %4832 = vmatpush1.msra.mxu0 %v2154
    %4833 = vmatprep.subr.mxu0 0.0
    %4834 = vmatpush1.msra.mxu0 %v2151
    %4835 = vmatprep.subr.mxu0 0.0
    %4836 = vmatpush1.msra.mxu0 %v2148
    %4837 = vmatprep.subr.mxu0 0.0
    %4838 = vmatpush1.msra.mxu0 %v2145
    %4839 = vmatprep.subr.mxu0 0.0
    %4840 = vmatpush1.msra.mxu0 %v2142
    %4841 = vmatprep.subr.mxu0 0.0
    %4842 = vmatpush1.msra.mxu0 %v2139
    %4843 = vmatprep.subr.mxu0 0.0
    %4844 = vmatpush1.msra.mxu0 %v2136
    %4845 = vmatprep.subr.mxu0 0.0
    %4846 = vmatpush2.msra.mxu0 %v2229
    %4847 = vmatprep.subr.mxu0 0.0
    %4848 = vmatpush2.msra.mxu0 %v2226
    %4849 = vmatprep.subr.mxu0 0.0
    %4850 = vmatpush2.msra.mxu0 %v2223
    %4851 = vmatprep.subr.mxu0 0.0
    %4852 = vmatpush2.msra.mxu0 %v2220
    %4853 = vmatprep.subr.mxu0 0.0
    %4854 = vmatpush2.msra.mxu0 %v2217
    %4855 = vmatprep.subr.mxu0 0.0
    %4856 = vmatpush2.msra.mxu0 %v2214
    %4857 = vmatprep.subr.mxu0 0.0
    %4858 = vmatpush2.msra.mxu0 %v2211
    %4859 = vmatprep.subr.mxu0 0.0
    %4860 = vmatpush2.msra.mxu0 %v2208
    %4861 = vmatprep.subr.mxu0 0.0
    %4862 = vmatpush2.msra.mxu0 %v2205
    %4863 = vmatprep.subr.mxu0 0.0
    %4864 = vmatpush2.msra.mxu0 %v2202
    %4865 = vmatprep.subr.mxu0 0.0
    %4866 = vmatpush2.msra.mxu0 %v2199
    %4867 = vmatprep.subr.mxu0 0.0
    %4868 = vmatpush2.msra.mxu0 %v2196
    %4869 = vmatprep.subr.mxu0 0.0
    %4870 = vmatpush2.msra.mxu0 %v2193
    %4871 = vmatprep.subr.mxu0 0.0
    %4872 = vmatpush2.msra.mxu0 %v2190
    %4873 = vmatprep.subr.mxu0 0.0
    %4874 = vmatpush2.msra.mxu0 %v2187
    %4875 = vmatprep.subr.mxu0 0.0
    %4876 = vmatpush2.msra.mxu0 %v2184
    %4877 = vmatprep.mubr.f32.mxu0 %v1689
    %4878 = vmatmul.mubr.f32.gmra.mxu0 %v1688
    %v4879 = vpop.f32.mrf.mxu0
    %v4880 = vadd.f32 %v4739, %v4879
    %v4881 = vpop.f32.mrf.mxu0
    %4882 = vdwg.mxu0
    %4883 = vmatprep.subr.mxu0 %v2656
    %4884 = vmatpush1.msra.mxu0 %v2655
    %4885 = vmatprep.subr.mxu0 %v2653
    %4886 = vmatpush1.msra.mxu0 %v2652
    %4887 = vmatprep.subr.mxu0 %v2650
    %4888 = vmatpush1.msra.mxu0 %v2649
    %4889 = vmatprep.subr.mxu0 %v2647
    %4890 = vmatpush1.msra.mxu0 %v2646
    %4891 = vmatprep.subr.mxu0 %v2644
    %4892 = vmatpush1.msra.mxu0 %v2643
    %4893 = vmatprep.subr.mxu0 %v2641
    %4894 = vmatpush1.msra.mxu0 %v2640
    %4895 = vmatprep.subr.mxu0 %v2638
    %4896 = vmatpush1.msra.mxu0 %v2637
    %4897 = vmatprep.subr.mxu0 %v2635
    %4898 = vmatpush1.msra.mxu0 %v2634
    %4899 = vmatprep.subr.mxu0 %v2632
    %4900 = vmatpush1.msra.mxu0 %v2631
    %4901 = vmatprep.subr.mxu0 %v2629
    %4902 = vmatpush1.msra.mxu0 %v2628
    %4903 = vmatprep.subr.mxu0 %v2626
    %4904 = vmatpush1.msra.mxu0 %v2625
    %4905 = vmatprep.subr.mxu0 %v2623
    %4906 = vmatpush1.msra.mxu0 %v2622
    %4907 = vmatprep.subr.mxu0 %v2620
    %4908 = vmatpush1.msra.mxu0 %v2619
    %4909 = vmatprep.subr.mxu0 %v2617
    %4910 = vmatpush1.msra.mxu0 %v2616
    %4911 = vmatprep.subr.mxu0 %v2614
    %4912 = vmatpush1.msra.mxu0 %v2613
    %4913 = vmatprep.subr.mxu0 %v2611
    %4914 = vmatpush1.msra.mxu0 %v2610
    %4915 = vmatprep.subr.mxu0 %v2704
    %4916 = vmatpush2.msra.mxu0 %v2703
    %4917 = vmatprep.subr.mxu0 %v2701
    %4918 = vmatpush2.msra.mxu0 %v2700
    %4919 = vmatprep.subr.mxu0 %v2698
    %4920 = vmatpush2.msra.mxu0 %v2697
    %4921 = vmatprep.subr.mxu0 %v2695
    %4922 = vmatpush2.msra.mxu0 %v2694
    %4923 = vmatprep.subr.mxu0 %v2692
    %4924 = vmatpush2.msra.mxu0 %v2691
    %4925 = vmatprep.subr.mxu0 %v2689
    %4926 = vmatpush2.msra.mxu0 %v2688
    %4927 = vmatprep.subr.mxu0 %v2686
    %4928 = vmatpush2.msra.mxu0 %v2685
    %4929 = vmatprep.subr.mxu0 %v2683
    %4930 = vmatpush2.msra.mxu0 %v2682
    %4931 = vmatprep.subr.mxu0 %v2680
    %4932 = vmatpush2.msra.mxu0 %v2679
    %4933 = vmatprep.subr.mxu0 %v2677
    %4934 = vmatpush2.msra.mxu0 %v2676
    %4935 = vmatprep.subr.mxu0 %v2674
    %4936 = vmatpush2.msra.mxu0 %v2673
    %4937 = vmatprep.subr.mxu0 %v2671
    %4938 = vmatpush2.msra.mxu0 %v2670
    %4939 = vmatprep.subr.mxu0 %v2668
    %4940 = vmatpush2.msra.mxu0 %v2667
    %4941 = vmatprep.subr.mxu0 %v2665
    %4942 = vmatpush2.msra.mxu0 %v2664
    %4943 = vmatprep.subr.mxu0 %v2662
    %4944 = vmatpush2.msra.mxu0 %v2661
    %4945 = vmatprep.subr.mxu0 %v2659
    %4946 = vmatpush2.msra.mxu0 %v2658
    %4947 = vmatprep.mubr.f32.mxu0 %v2133
    %4948 = vmatmul.mubr.f32.gmra.mxu0 %v2132
    %v4949 = vpop.f32.mrf.mxu0
    %v4950 = vadd.f32 0.0, %v4949
    %v4951 = vpop.f32.mrf.mxu0
    %v4952 = vadd.f32 0.0, %v4951
    %4953 = vdwg.mxu0
    %4954 = vmatprep.subr.mxu0 0.0
    %4955 = vmatpush1.msra.mxu0 %v2657
    %4956 = vmatprep.subr.mxu0 0.0
    %4957 = vmatpush1.msra.mxu0 %v2654
    %4958 = vmatprep.subr.mxu0 0.0
    %4959 = vmatpush1.msra.mxu0 %v2651
    %4960 = vmatprep.subr.mxu0 0.0
    %4961 = vmatpush1.msra.mxu0 %v2648
    %4962 = vmatprep.subr.mxu0 0.0
    %4963 = vmatpush1.msra.mxu0 %v2645
    %4964 = vmatprep.subr.mxu0 0.0
    %4965 = vmatpush1.msra.mxu0 %v2642
    %4966 = vmatprep.subr.mxu0 0.0
    %4967 = vmatpush1.msra.mxu0 %v2639
    %4968 = vmatprep.subr.mxu0 0.0
    %4969 = vmatpush1.msra.mxu0 %v2636
    %4970 = vmatprep.subr.mxu0 0.0
    %4971 = vmatpush1.msra.mxu0 %v2633
    %4972 = vmatprep.subr.mxu0 0.0
    %4973 = vmatpush1.msra.mxu0 %v2630
    %4974 = vmatprep.subr.mxu0 0.0
    %4975 = vmatpush1.msra.mxu0 %v2627
    %4976 = vmatprep.subr.mxu0 0.0
    %4977 = vmatpush1.msra.mxu0 %v2624
    %4978 = vmatprep.subr.mxu0 0.0
    %4979 = vmatpush1.msra.mxu0 %v2621
    %4980 = vmatprep.subr.mxu0 0.0
    %4981 = vmatpush1.msra.mxu0 %v2618
    %4982 = vmatprep.subr.mxu0 0.0
    %4983 = vmatpush1.msra.mxu0 %v2615
    %4984 = vmatprep.subr.mxu0 0.0
    %4985 = vmatpush1.msra.mxu0 %v2612
    %4986 = vmatprep.subr.mxu0 0.0
    %4987 = vmatpush2.msra.mxu0 %v2705
    %4988 = vmatprep.subr.mxu0 0.0
    %4989 = vmatpush2.msra.mxu0 %v2702
    %4990 = vmatprep.subr.mxu0 0.0
    %4991 = vmatpush2.msra.mxu0 %v2699
    %4992 = vmatprep.subr.mxu0 0.0
    %4993 = vmatpush2.msra.mxu0 %v2696
    %4994 = vmatprep.subr.mxu0 0.0
    %4995 = vmatpush2.msra.mxu0 %v2693
    %4996 = vmatprep.subr.mxu0 0.0
    %4997 = vmatpush2.msra.mxu0 %v2690
    %4998 = vmatprep.subr.mxu0 0.0
    %4999 = vmatpush2.msra.mxu0 %v2687
    %5000 = vmatprep.subr.mxu0 0.0
    %5001 = vmatpush2.msra.mxu0 %v2684
    %5002 = vmatprep.subr.mxu0 0.0
    %5003 = vmatpush2.msra.mxu0 %v2681
    %5004 = vmatprep.subr.mxu0 0.0
    %5005 = vmatpush2.msra.mxu0 %v2678
    %5006 = vmatprep.subr.mxu0 0.0
    %5007 = vmatpush2.msra.mxu0 %v2675
    %5008 = vmatprep.subr.mxu0 0.0
    %5009 = vmatpush2.msra.mxu0 %v2672
    %5010 = vmatprep.subr.mxu0 0.0
    %5011 = vmatpush2.msra.mxu0 %v2669
    %5012 = vmatprep.subr.mxu0 0.0
    %5013 = vmatpush2.msra.mxu0 %v2666
    %5014 = vmatprep.subr.mxu0 0.0
    %5015 = vmatpush2.msra.mxu0 %v2663
    %5016 = vmatprep.subr.mxu0 0.0
    %5017 = vmatpush2.msra.mxu0 %v2660
    %5018 = vmatprep.mubr.f32.mxu0 %v2133
    %5019 = vmatmul.mubr.f32.gmra.mxu0 %v2132
    %v5020 = vpop.f32.mrf.mxu0
    %v5021 = vadd.f32 0.0, %v5020
    %v5022 = vpop.f32.mrf.mxu0
    %5023 = vdwg.mxu0
    %v5024 = vadd.f32 %v4809, %v4950
    %v5025 = vadd.f32 %v4811, %v4952
    %v5026 = vadd.f32 %v4880, %v5021
    %v5027 = vadd.f32 %v5024, %v2855
    %v5028 = vadd.f32 %v5025, %v2859
    %v5029 = vadd.f32 %v5026, %v2863
    %v5030 = vmax.f32 %v5027, 0.0
    %v5031 = vmax.f32 %v5028, 0.0
    %v5032 = vmax.f32 %v5029, 0.0
    %v5033 = vld [vmem:[#allocation10] sm:$0xff]
    %v5034 = vld [vmem:[#allocation10 + $0x8] sm:$0xff]
    %v5035 = vld [vmem:[#allocation10 + $0x10] sm:$0xff]
    %v5036 = vld [vmem:[#allocation10 + $0x18] sm:$0xff]
    %v5037 = vld [vmem:[#allocation10 + $0x20] sm:$0xff]
    %v5038 = vld [vmem:[#allocation10 + $0x28] sm:$0xff]
    %v5039 = vld [vmem:[#allocation10 + $0x30] sm:$0xff]
    %v5040 = vld [vmem:[#allocation10 + $0x38] sm:$0xff]
    %v5041 = vld [vmem:[#allocation10 + $0x40] sm:$0xff]
    %v5042 = vld [vmem:[#allocation10 + $0x48] sm:$0xff]
    %v5043 = vld [vmem:[#allocation10 + $0x50] sm:$0xff]
    %v5044 = vld [vmem:[#allocation10 + $0x58] sm:$0xff]
    %v5045 = vld [vmem:[#allocation10 + $0x60] sm:$0xff]
    %v5046 = vld [vmem:[#allocation10 + $0x68] sm:$0xff]
    %v5047 = vld [vmem:[#allocation10 + $0x70] sm:$0xff]
    %v5048 = vld [vmem:[#allocation10 + $0x78] sm:$0xff]
    %v5049 = vld [vmem:[#allocation10 + $0x80] sm:$0xff]
    %v5050 = vld [vmem:[#allocation10 + $0x88] sm:$0xff]
    %v5051 = vld [vmem:[#allocation10 + $0x90] sm:$0xff]
    %v5052 = vld [vmem:[#allocation10 + $0x98] sm:$0xff]
    %v5053 = vld [vmem:[#allocation10 + $0xa0] sm:$0xff]
    %v5054 = vld [vmem:[#allocation10 + $0xa8] sm:$0xff]
    %v5055 = vld [vmem:[#allocation10 + $0xb0] sm:$0xff]
    %v5056 = vld [vmem:[#allocation10 + $0xb8] sm:$0xff]
    %v5057 = vld [vmem:[#allocation10 + $0xc0] sm:$0xff]
    %v5058 = vld [vmem:[#allocation10 + $0xc8] sm:$0xff]
    %v5059 = vld [vmem:[#allocation10 + $0xd0] sm:$0xff]
    %v5060 = vld [vmem:[#allocation10 + $0xd8] sm:$0xff]
    %v5061 = vld [vmem:[#allocation10 + $0xe0] sm:$0xff]
    %v5062 = vld [vmem:[#allocation10 + $0xe8] sm:$0xff]
    %v5063 = vld [vmem:[#allocation10 + $0xf0] sm:$0xff]
    %v5064 = vld [vmem:[#allocation10 + $0xf8] sm:$0xff]
    %v5065 = vld [vmem:[#allocation10 + $0x100] sm:$0xff]
    %v5066 = vld [vmem:[#allocation10 + $0x108] sm:$0xff]
    %v5067 = vld [vmem:[#allocation10 + $0x110] sm:$0xff]
    %v5068 = vld [vmem:[#allocation10 + $0x118] sm:$0xff]
    %v5069 = vld [vmem:[#allocation10 + $0x120] sm:$0xff]
    %v5070 = vld [vmem:[#allocation10 + $0x128] sm:$0xff]
    %v5071 = vld [vmem:[#allocation10 + $0x130] sm:$0xff]
    %v5072 = vld [vmem:[#allocation10 + $0x138] sm:$0xff]
    %v5073 = vld [vmem:[#allocation10 + $0x140] sm:$0xff]
    %v5074 = vld [vmem:[#allocation10 + $0x148] sm:$0xff]
    %v5075 = vld [vmem:[#allocation10 + $0x150] sm:$0xff]
    %v5076 = vld [vmem:[#allocation10 + $0x158] sm:$0xff]
    %v5077 = vld [vmem:[#allocation10 + $0x160] sm:$0xff]
    %v5078 = vld [vmem:[#allocation10 + $0x168] sm:$0xff]
    %v5079 = vld [vmem:[#allocation10 + $0x170] sm:$0xff]
    %v5080 = vld [vmem:[#allocation10 + $0x178] sm:$0xff]
    %s5081 = scalar_lea.vmem [#allocation10], 384
    %v5082 = vld [vmem:[%s5081] sm:$0xff]
    %v5083 = vld [vmem:[%s5081 + $0x8] sm:$0xff]
    %v5084 = vld [vmem:[%s5081 + $0x10] sm:$0xff]
    %v5085 = vld [vmem:[%s5081 + $0x18] sm:$0xff]
    %v5086 = vld [vmem:[%s5081 + $0x20] sm:$0xff]
    %v5087 = vld [vmem:[%s5081 + $0x28] sm:$0xff]
    %v5088 = vld [vmem:[%s5081 + $0x30] sm:$0xff]
    %v5089 = vld [vmem:[%s5081 + $0x38] sm:$0xff]
    %v5090 = vld [vmem:[%s5081 + $0x40] sm:$0xff]
    %v5091 = vld [vmem:[%s5081 + $0x48] sm:$0xff]
    %v5092 = vld [vmem:[%s5081 + $0x50] sm:$0xff]
    %v5093 = vld [vmem:[%s5081 + $0x58] sm:$0xff]
    %v5094 = vld [vmem:[%s5081 + $0x60] sm:$0xff]
    %v5095 = vld [vmem:[%s5081 + $0x68] sm:$0xff]
    %v5096 = vld [vmem:[%s5081 + $0x70] sm:$0xff]
    %v5097 = vld [vmem:[%s5081 + $0x78] sm:$0xff]
    %v5098 = vld [vmem:[%s5081 + $0x80] sm:$0xff]
    %v5099 = vld [vmem:[%s5081 + $0x88] sm:$0xff]
    %v5100 = vld [vmem:[%s5081 + $0x90] sm:$0xff]
    %v5101 = vld [vmem:[%s5081 + $0x98] sm:$0xff]
    %v5102 = vld [vmem:[%s5081 + $0xa0] sm:$0xff]
    %v5103 = vld [vmem:[%s5081 + $0xa8] sm:$0xff]
    %v5104 = vld [vmem:[%s5081 + $0xb0] sm:$0xff]
    %v5105 = vld [vmem:[%s5081 + $0xb8] sm:$0xff]
    %v5106 = vld [vmem:[%s5081 + $0xc0] sm:$0xff]
    %v5107 = vld [vmem:[%s5081 + $0xc8] sm:$0xff]
    %v5108 = vld [vmem:[%s5081 + $0xd0] sm:$0xff]
    %v5109 = vld [vmem:[%s5081 + $0xd8] sm:$0xff]
    %v5110 = vld [vmem:[%s5081 + $0xe0] sm:$0xff]
    %v5111 = vld [vmem:[%s5081 + $0xe8] sm:$0xff]
    %v5112 = vld [vmem:[%s5081 + $0xf0] sm:$0xff]
    %v5113 = vld [vmem:[%s5081 + $0xf8] sm:$0xff]
    %v5114 = vld [vmem:[%s5081 + $0x100] sm:$0xff]
    %v5115 = vld [vmem:[%s5081 + $0x108] sm:$0xff]
    %v5116 = vld [vmem:[%s5081 + $0x110] sm:$0xff]
    %v5117 = vld [vmem:[%s5081 + $0x118] sm:$0xff]
    %v5118 = vld [vmem:[%s5081 + $0x120] sm:$0xff]
    %v5119 = vld [vmem:[%s5081 + $0x128] sm:$0xff]
    %v5120 = vld [vmem:[%s5081 + $0x130] sm:$0xff]
    %v5121 = vld [vmem:[%s5081 + $0x138] sm:$0xff]
    %v5122 = vld [vmem:[%s5081 + $0x140] sm:$0xff]
    %v5123 = vld [vmem:[%s5081 + $0x148] sm:$0xff]
    %v5124 = vld [vmem:[%s5081 + $0x150] sm:$0xff]
    %v5125 = vld [vmem:[%s5081 + $0x158] sm:$0xff]
    %v5126 = vld [vmem:[%s5081 + $0x160] sm:$0xff]
    %v5127 = vld [vmem:[%s5081 + $0x168] sm:$0xff]
    %v5128 = vld [vmem:[%s5081 + $0x170] sm:$0xff]
    %v5129 = vld [vmem:[%s5081 + $0x178] sm:$0xff]
    %5130 = vmatprep.subr.mxu0 0.0
    %5131 = vmatpush1.msra.mxu0 %v5097
    %5132 = vmatprep.subr.mxu0 0.0
    %5133 = vmatpush1.msra.mxu0 %v5096
    %5134 = vmatprep.subr.mxu0 0.0
    %5135 = vmatpush1.msra.mxu0 %v5095
    %5136 = vmatprep.subr.mxu0 0.0
    %5137 = vmatpush1.msra.mxu0 %v5094
    %5138 = vmatprep.subr.mxu0 0.0
    %5139 = vmatpush1.msra.mxu0 %v5093
    %5140 = vmatprep.subr.mxu0 0.0
    %5141 = vmatpush1.msra.mxu0 %v5092
    %5142 = vmatprep.subr.mxu0 0.0
    %5143 = vmatpush1.msra.mxu0 %v5091
    %5144 = vmatprep.subr.mxu0 0.0
    %5145 = vmatpush1.msra.mxu0 %v5090
    %5146 = vmatprep.subr.mxu0 0.0
    %5147 = vmatpush1.msra.mxu0 %v5089
    %5148 = vmatprep.subr.mxu0 0.0
    %5149 = vmatpush1.msra.mxu0 %v5088
    %5150 = vmatprep.subr.mxu0 0.0
    %5151 = vmatpush1.msra.mxu0 %v5087
    %5152 = vmatprep.subr.mxu0 0.0
    %5153 = vmatpush1.msra.mxu0 %v5086
    %5154 = vmatprep.subr.mxu0 0.0
    %5155 = vmatpush1.msra.mxu0 %v5085
    %5156 = vmatprep.subr.mxu0 0.0
    %5157 = vmatpush1.msra.mxu0 %v5084
    %5158 = vmatprep.subr.mxu0 0.0
    %5159 = vmatpush1.msra.mxu0 %v5083
    %5160 = vmatprep.subr.mxu0 0.0
    %5161 = vmatpush1.msra.mxu0 %v5082
    %5162 = vmatprep.subr.mxu0 0.0
    %5163 = vmatpush2.msra.mxu0 %v5113
    %5164 = vmatprep.subr.mxu0 0.0
    %5165 = vmatpush2.msra.mxu0 %v5112
    %5166 = vmatprep.subr.mxu0 0.0
    %5167 = vmatpush2.msra.mxu0 %v5111
    %5168 = vmatprep.subr.mxu0 0.0
    %5169 = vmatpush2.msra.mxu0 %v5110
    %5170 = vmatprep.subr.mxu0 0.0
    %5171 = vmatpush2.msra.mxu0 %v5109
    %5172 = vmatprep.subr.mxu0 0.0
    %5173 = vmatpush2.msra.mxu0 %v5108
    %5174 = vmatprep.subr.mxu0 0.0
    %5175 = vmatpush2.msra.mxu0 %v5107
    %5176 = vmatprep.subr.mxu0 0.0
    %5177 = vmatpush2.msra.mxu0 %v5106
    %5178 = vmatprep.subr.mxu0 0.0
    %5179 = vmatpush2.msra.mxu0 %v5105
    %5180 = vmatprep.subr.mxu0 0.0
    %5181 = vmatpush2.msra.mxu0 %v5104
    %5182 = vmatprep.subr.mxu0 0.0
    %5183 = vmatpush2.msra.mxu0 %v5103
    %5184 = vmatprep.subr.mxu0 0.0
    %5185 = vmatpush2.msra.mxu0 %v5102
    %5186 = vmatprep.subr.mxu0 0.0
    %5187 = vmatpush2.msra.mxu0 %v5101
    %5188 = vmatprep.subr.mxu0 0.0
    %5189 = vmatpush2.msra.mxu0 %v5100
    %5190 = vmatprep.subr.mxu0 0.0
    %5191 = vmatpush2.msra.mxu0 %v5099
    %5192 = vmatprep.subr.mxu0 0.0
    %5193 = vmatpush2.msra.mxu0 %v5098
    %5194 = vmatprep.mubr.f32.mxu0 %v3303
    %5195 = vmatmul.mubr.f32.gmra.mxu0 %v3302
    %v5196 = vpop.f32.mrf.mxu0
    %v5197 = vadd.f32 0.0, %v5196
    %v5198 = vpop.f32.mrf.mxu0
    %5199 = vdwg.mxu0
    %5200 = vmatprep.subr.mxu0 0.0
    %5201 = vmatpush1.msra.mxu0 %v5129
    %5202 = vmatprep.subr.mxu0 0.0
    %5203 = vmatpush1.msra.mxu0 %v5128
    %5204 = vmatprep.subr.mxu0 0.0
    %5205 = vmatpush1.msra.mxu0 %v5127
    %5206 = vmatprep.subr.mxu0 0.0
    %5207 = vmatpush1.msra.mxu0 %v5126
    %5208 = vmatprep.subr.mxu0 0.0
    %5209 = vmatpush1.msra.mxu0 %v5125
    %5210 = vmatprep.subr.mxu0 0.0
    %5211 = vmatpush1.msra.mxu0 %v5124
    %5212 = vmatprep.subr.mxu0 0.0
    %5213 = vmatpush1.msra.mxu0 %v5123
    %5214 = vmatprep.subr.mxu0 0.0
    %5215 = vmatpush1.msra.mxu0 %v5122
    %5216 = vmatprep.subr.mxu0 0.0
    %5217 = vmatpush1.msra.mxu0 %v5121
    %5218 = vmatprep.subr.mxu0 0.0
    %5219 = vmatpush1.msra.mxu0 %v5120
    %5220 = vmatprep.subr.mxu0 0.0
    %5221 = vmatpush1.msra.mxu0 %v5119
    %5222 = vmatprep.subr.mxu0 0.0
    %5223 = vmatpush1.msra.mxu0 %v5118
    %5224 = vmatprep.subr.mxu0 0.0
    %5225 = vmatpush1.msra.mxu0 %v5117
    %5226 = vmatprep.subr.mxu0 0.0
    %5227 = vmatpush1.msra.mxu0 %v5116
    %5228 = vmatprep.subr.mxu0 0.0
    %5229 = vmatpush1.msra.mxu0 %v5115
    %5230 = vmatprep.subr.mxu0 0.0
    %5231 = vmatpush1.msra.mxu0 %v5114
    %5232 = vmatprep.subr.mxu0 0.0
    %5233 = vmatpush2.msra.mxu0 0.0
    %5234 = vmatprep.subr.mxu0 0.0
    %5235 = vmatpush2.msra.mxu0 0.0
    %5236 = vmatprep.subr.mxu0 0.0
    %5237 = vmatpush2.msra.mxu0 0.0
    %5238 = vmatprep.subr.mxu0 0.0
    %5239 = vmatpush2.msra.mxu0 0.0
    %5240 = vmatprep.subr.mxu0 0.0
    %5241 = vmatpush2.msra.mxu0 0.0
    %5242 = vmatprep.subr.mxu0 0.0
    %5243 = vmatpush2.msra.mxu0 0.0
    %5244 = vmatprep.subr.mxu0 0.0
    %5245 = vmatpush2.msra.mxu0 0.0
    %5246 = vmatprep.subr.mxu0 0.0
    %5247 = vmatpush2.msra.mxu0 0.0
    %5248 = vmatprep.subr.mxu0 0.0
    %5249 = vmatpush2.msra.mxu0 0.0
    %5250 = vmatprep.subr.mxu0 0.0
    %5251 = vmatpush2.msra.mxu0 0.0
    %5252 = vmatprep.subr.mxu0 0.0
    %5253 = vmatpush2.msra.mxu0 0.0
    %5254 = vmatprep.subr.mxu0 0.0
    %5255 = vmatpush2.msra.mxu0 0.0
    %5256 = vmatprep.subr.mxu0 0.0
    %5257 = vmatpush2.msra.mxu0 0.0
    %5258 = vmatprep.subr.mxu0 0.0
    %5259 = vmatpush2.msra.mxu0 0.0
    %5260 = vmatprep.subr.mxu0 0.0
    %5261 = vmatpush2.msra.mxu0 0.0
    %5262 = vmatprep.subr.mxu0 0.0
    %5263 = vmatpush2.msra.mxu0 0.0
    %5264 = vmatprep.mubr.f32.mxu0 0.0
    %5265 = vmatmul.mubr.f32.gmra.mxu0 %v3304
    %v5266 = vpop.f32.mrf.mxu0
    %v5267 = vadd.f32 %v5197, %v5266
    %v5268 = vpop.f32.mrf.mxu0
    %5269 = vdwg.mxu0
    %5270 = vmatprep.subr.mxu0 0.0
    %5271 = vmatpush1.msra.mxu0 %v5048
    %5272 = vmatprep.subr.mxu0 0.0
    %5273 = vmatpush1.msra.mxu0 %v5047
    %5274 = vmatprep.subr.mxu0 0.0
    %5275 = vmatpush1.msra.mxu0 %v5046
    %5276 = vmatprep.subr.mxu0 0.0
    %5277 = vmatpush1.msra.mxu0 %v5045
    %5278 = vmatprep.subr.mxu0 0.0
    %5279 = vmatpush1.msra.mxu0 %v5044
    %5280 = vmatprep.subr.mxu0 0.0
    %5281 = vmatpush1.msra.mxu0 %v5043
    %5282 = vmatprep.subr.mxu0 0.0
    %5283 = vmatpush1.msra.mxu0 %v5042
    %5284 = vmatprep.subr.mxu0 0.0
    %5285 = vmatpush1.msra.mxu0 %v5041
    %5286 = vmatprep.subr.mxu0 0.0
    %5287 = vmatpush1.msra.mxu0 %v5040
    %5288 = vmatprep.subr.mxu0 0.0
    %5289 = vmatpush1.msra.mxu0 %v5039
    %5290 = vmatprep.subr.mxu0 0.0
    %5291 = vmatpush1.msra.mxu0 %v5038
    %5292 = vmatprep.subr.mxu0 0.0
    %5293 = vmatpush1.msra.mxu0 %v5037
    %5294 = vmatprep.subr.mxu0 0.0
    %5295 = vmatpush1.msra.mxu0 %v5036
    %5296 = vmatprep.subr.mxu0 0.0
    %5297 = vmatpush1.msra.mxu0 %v5035
    %5298 = vmatprep.subr.mxu0 0.0
    %5299 = vmatpush1.msra.mxu0 %v5034
    %5300 = vmatprep.subr.mxu0 0.0
    %5301 = vmatpush1.msra.mxu0 %v5033
    %5302 = vmatprep.subr.mxu0 0.0
    %5303 = vmatpush2.msra.mxu0 %v5064
    %5304 = vmatprep.subr.mxu0 0.0
    %5305 = vmatpush2.msra.mxu0 %v5063
    %5306 = vmatprep.subr.mxu0 0.0
    %5307 = vmatpush2.msra.mxu0 %v5062
    %5308 = vmatprep.subr.mxu0 0.0
    %5309 = vmatpush2.msra.mxu0 %v5061
    %5310 = vmatprep.subr.mxu0 0.0
    %5311 = vmatpush2.msra.mxu0 %v5060
    %5312 = vmatprep.subr.mxu0 0.0
    %5313 = vmatpush2.msra.mxu0 %v5059
    %5314 = vmatprep.subr.mxu0 0.0
    %5315 = vmatpush2.msra.mxu0 %v5058
    %5316 = vmatprep.subr.mxu0 0.0
    %5317 = vmatpush2.msra.mxu0 %v5057
    %5318 = vmatprep.subr.mxu0 0.0
    %5319 = vmatpush2.msra.mxu0 %v5056
    %5320 = vmatprep.subr.mxu0 0.0
    %5321 = vmatpush2.msra.mxu0 %v5055
    %5322 = vmatprep.subr.mxu0 0.0
    %5323 = vmatpush2.msra.mxu0 %v5054
    %5324 = vmatprep.subr.mxu0 0.0
    %5325 = vmatpush2.msra.mxu0 %v5053
    %5326 = vmatprep.subr.mxu0 0.0
    %5327 = vmatpush2.msra.mxu0 %v5052
    %5328 = vmatprep.subr.mxu0 0.0
    %5329 = vmatpush2.msra.mxu0 %v5051
    %5330 = vmatprep.subr.mxu0 0.0
    %5331 = vmatpush2.msra.mxu0 %v5050
    %5332 = vmatprep.subr.mxu0 0.0
    %5333 = vmatpush2.msra.mxu0 %v5049
    %5334 = vmatprep.mubr.f32.mxu0 %v2871
    %5335 = vmatmul.mubr.f32.gmra.mxu0 %v2870
    %v5336 = vpop.f32.mrf.mxu0
    %v5337 = vadd.f32 %v5267, %v5336
    %v5338 = vpop.f32.mrf.mxu0
    %5339 = vdwg.mxu0
    %5340 = vmatprep.subr.mxu0 0.0
    %5341 = vmatpush1.msra.mxu0 %v5080
    %5342 = vmatprep.subr.mxu0 0.0
    %5343 = vmatpush1.msra.mxu0 %v5079
    %5344 = vmatprep.subr.mxu0 0.0
    %5345 = vmatpush1.msra.mxu0 %v5078
    %5346 = vmatprep.subr.mxu0 0.0
    %5347 = vmatpush1.msra.mxu0 %v5077
    %5348 = vmatprep.subr.mxu0 0.0
    %5349 = vmatpush1.msra.mxu0 %v5076
    %5350 = vmatprep.subr.mxu0 0.0
    %5351 = vmatpush1.msra.mxu0 %v5075
    %5352 = vmatprep.subr.mxu0 0.0
    %5353 = vmatpush1.msra.mxu0 %v5074
    %5354 = vmatprep.subr.mxu0 0.0
    %5355 = vmatpush1.msra.mxu0 %v5073
    %5356 = vmatprep.subr.mxu0 0.0
    %5357 = vmatpush1.msra.mxu0 %v5072
    %5358 = vmatprep.subr.mxu0 0.0
    %5359 = vmatpush1.msra.mxu0 %v5071
    %5360 = vmatprep.subr.mxu0 0.0
    %5361 = vmatpush1.msra.mxu0 %v5070
    %5362 = vmatprep.subr.mxu0 0.0
    %5363 = vmatpush1.msra.mxu0 %v5069
    %5364 = vmatprep.subr.mxu0 0.0
    %5365 = vmatpush1.msra.mxu0 %v5068
    %5366 = vmatprep.subr.mxu0 0.0
    %5367 = vmatpush1.msra.mxu0 %v5067
    %5368 = vmatprep.subr.mxu0 0.0
    %5369 = vmatpush1.msra.mxu0 %v5066
    %5370 = vmatprep.subr.mxu0 0.0
    %5371 = vmatpush1.msra.mxu0 %v5065
    %5372 = vmatprep.subr.mxu0 0.0
    %5373 = vmatpush2.msra.mxu0 0.0
    %5374 = vmatprep.subr.mxu0 0.0
    %5375 = vmatpush2.msra.mxu0 0.0
    %5376 = vmatprep.subr.mxu0 0.0
    %5377 = vmatpush2.msra.mxu0 0.0
    %5378 = vmatprep.subr.mxu0 0.0
    %5379 = vmatpush2.msra.mxu0 0.0
    %5380 = vmatprep.subr.mxu0 0.0
    %5381 = vmatpush2.msra.mxu0 0.0
    %5382 = vmatprep.subr.mxu0 0.0
    %5383 = vmatpush2.msra.mxu0 0.0
    %5384 = vmatprep.subr.mxu0 0.0
    %5385 = vmatpush2.msra.mxu0 0.0
    %5386 = vmatprep.subr.mxu0 0.0
    %5387 = vmatpush2.msra.mxu0 0.0
    %5388 = vmatprep.subr.mxu0 0.0
    %5389 = vmatpush2.msra.mxu0 0.0
    %5390 = vmatprep.subr.mxu0 0.0
    %5391 = vmatpush2.msra.mxu0 0.0
    %5392 = vmatprep.subr.mxu0 0.0
    %5393 = vmatpush2.msra.mxu0 0.0
    %5394 = vmatprep.subr.mxu0 0.0
    %5395 = vmatpush2.msra.mxu0 0.0
    %5396 = vmatprep.subr.mxu0 0.0
    %5397 = vmatpush2.msra.mxu0 0.0
    %5398 = vmatprep.subr.mxu0 0.0
    %5399 = vmatpush2.msra.mxu0 0.0
    %5400 = vmatprep.subr.mxu0 0.0
    %5401 = vmatpush2.msra.mxu0 0.0
    %5402 = vmatprep.subr.mxu0 0.0
    %5403 = vmatpush2.msra.mxu0 0.0
    %5404 = vmatprep.mubr.f32.mxu0 0.0
    %5405 = vmatmul.mubr.f32.gmra.mxu0 %v2872
    %v5406 = vpop.f32.mrf.mxu0
    %v5407 = vadd.f32 %v5337, %v5406
    %v5408 = vpop.f32.mrf.mxu0
    %5409 = vdwg.mxu0
    %s5410 = scalar_lea.vmem [#allocation10], 768
    %v5411 = vld [vmem:[%s5410] sm:$0xff]
    %v5412 = vld [vmem:[%s5410 + $0x8] sm:$0xff]
    %v5413 = vld [vmem:[%s5410 + $0x10] sm:$0xff]
    %v5414 = vld [vmem:[%s5410 + $0x18] sm:$0xff]
    %v5415 = vld [vmem:[%s5410 + $0x20] sm:$0xff]
    %v5416 = vld [vmem:[%s5410 + $0x28] sm:$0xff]
    %v5417 = vld [vmem:[%s5410 + $0x30] sm:$0xff]
    %v5418 = vld [vmem:[%s5410 + $0x38] sm:$0xff]
    %v5419 = vld [vmem:[%s5410 + $0x40] sm:$0xff]
    %v5420 = vld [vmem:[%s5410 + $0x48] sm:$0xff]
    %v5421 = vld [vmem:[%s5410 + $0x50] sm:$0xff]
    %v5422 = vld [vmem:[%s5410 + $0x58] sm:$0xff]
    %v5423 = vld [vmem:[%s5410 + $0x60] sm:$0xff]
    %v5424 = vld [vmem:[%s5410 + $0x68] sm:$0xff]
    %v5425 = vld [vmem:[%s5410 + $0x70] sm:$0xff]
    %v5426 = vld [vmem:[%s5410 + $0x78] sm:$0xff]
    %v5427 = vld [vmem:[%s5410 + $0x80] sm:$0xff]
    %v5428 = vld [vmem:[%s5410 + $0x88] sm:$0xff]
    %v5429 = vld [vmem:[%s5410 + $0x90] sm:$0xff]
    %v5430 = vld [vmem:[%s5410 + $0x98] sm:$0xff]
    %v5431 = vld [vmem:[%s5410 + $0xa0] sm:$0xff]
    %v5432 = vld [vmem:[%s5410 + $0xa8] sm:$0xff]
    %v5433 = vld [vmem:[%s5410 + $0xb0] sm:$0xff]
    %v5434 = vld [vmem:[%s5410 + $0xb8] sm:$0xff]
    %v5435 = vld [vmem:[%s5410 + $0xc0] sm:$0xff]
    %v5436 = vld [vmem:[%s5410 + $0xc8] sm:$0xff]
    %v5437 = vld [vmem:[%s5410 + $0xd0] sm:$0xff]
    %v5438 = vld [vmem:[%s5410 + $0xd8] sm:$0xff]
    %v5439 = vld [vmem:[%s5410 + $0xe0] sm:$0xff]
    %v5440 = vld [vmem:[%s5410 + $0xe8] sm:$0xff]
    %v5441 = vld [vmem:[%s5410 + $0xf0] sm:$0xff]
    %v5442 = vld [vmem:[%s5410 + $0xf8] sm:$0xff]
    %v5443 = vld [vmem:[%s5410 + $0x100] sm:$0xff]
    %v5444 = vld [vmem:[%s5410 + $0x108] sm:$0xff]
    %v5445 = vld [vmem:[%s5410 + $0x110] sm:$0xff]
    %v5446 = vld [vmem:[%s5410 + $0x118] sm:$0xff]
    %v5447 = vld [vmem:[%s5410 + $0x120] sm:$0xff]
    %v5448 = vld [vmem:[%s5410 + $0x128] sm:$0xff]
    %v5449 = vld [vmem:[%s5410 + $0x130] sm:$0xff]
    %v5450 = vld [vmem:[%s5410 + $0x138] sm:$0xff]
    %v5451 = vld [vmem:[%s5410 + $0x140] sm:$0xff]
    %v5452 = vld [vmem:[%s5410 + $0x148] sm:$0xff]
    %v5453 = vld [vmem:[%s5410 + $0x150] sm:$0xff]
    %v5454 = vld [vmem:[%s5410 + $0x158] sm:$0xff]
    %v5455 = vld [vmem:[%s5410 + $0x160] sm:$0xff]
    %v5456 = vld [vmem:[%s5410 + $0x168] sm:$0xff]
    %v5457 = vld [vmem:[%s5410 + $0x170] sm:$0xff]
    %v5458 = vld [vmem:[%s5410 + $0x178] sm:$0xff]
    %5459 = vmatprep.subr.mxu0 0.0
    %5460 = vmatpush1.msra.mxu0 %v5426
    %5461 = vmatprep.subr.mxu0 0.0
    %5462 = vmatpush1.msra.mxu0 %v5425
    %5463 = vmatprep.subr.mxu0 0.0
    %5464 = vmatpush1.msra.mxu0 %v5424
    %5465 = vmatprep.subr.mxu0 0.0
    %5466 = vmatpush1.msra.mxu0 %v5423
    %5467 = vmatprep.subr.mxu0 0.0
    %5468 = vmatpush1.msra.mxu0 %v5422
    %5469 = vmatprep.subr.mxu0 0.0
    %5470 = vmatpush1.msra.mxu0 %v5421
    %5471 = vmatprep.subr.mxu0 0.0
    %5472 = vmatpush1.msra.mxu0 %v5420
    %5473 = vmatprep.subr.mxu0 0.0
    %5474 = vmatpush1.msra.mxu0 %v5419
    %5475 = vmatprep.subr.mxu0 0.0
    %5476 = vmatpush1.msra.mxu0 %v5418
    %5477 = vmatprep.subr.mxu0 0.0
    %5478 = vmatpush1.msra.mxu0 %v5417
    %5479 = vmatprep.subr.mxu0 0.0
    %5480 = vmatpush1.msra.mxu0 %v5416
    %5481 = vmatprep.subr.mxu0 0.0
    %5482 = vmatpush1.msra.mxu0 %v5415
    %5483 = vmatprep.subr.mxu0 0.0
    %5484 = vmatpush1.msra.mxu0 %v5414
    %5485 = vmatprep.subr.mxu0 0.0
    %5486 = vmatpush1.msra.mxu0 %v5413
    %5487 = vmatprep.subr.mxu0 0.0
    %5488 = vmatpush1.msra.mxu0 %v5412
    %5489 = vmatprep.subr.mxu0 0.0
    %5490 = vmatpush1.msra.mxu0 %v5411
    %5491 = vmatprep.subr.mxu0 0.0
    %5492 = vmatpush2.msra.mxu0 %v5442
    %5493 = vmatprep.subr.mxu0 0.0
    %5494 = vmatpush2.msra.mxu0 %v5441
    %5495 = vmatprep.subr.mxu0 0.0
    %5496 = vmatpush2.msra.mxu0 %v5440
    %5497 = vmatprep.subr.mxu0 0.0
    %5498 = vmatpush2.msra.mxu0 %v5439
    %5499 = vmatprep.subr.mxu0 0.0
    %5500 = vmatpush2.msra.mxu0 %v5438
    %5501 = vmatprep.subr.mxu0 0.0
    %5502 = vmatpush2.msra.mxu0 %v5437
    %5503 = vmatprep.subr.mxu0 0.0
    %5504 = vmatpush2.msra.mxu0 %v5436
    %5505 = vmatprep.subr.mxu0 0.0
    %5506 = vmatpush2.msra.mxu0 %v5435
    %5507 = vmatprep.subr.mxu0 0.0
    %5508 = vmatpush2.msra.mxu0 %v5434
    %5509 = vmatprep.subr.mxu0 0.0
    %5510 = vmatpush2.msra.mxu0 %v5433
    %5511 = vmatprep.subr.mxu0 0.0
    %5512 = vmatpush2.msra.mxu0 %v5432
    %5513 = vmatprep.subr.mxu0 0.0
    %5514 = vmatpush2.msra.mxu0 %v5431
    %5515 = vmatprep.subr.mxu0 0.0
    %5516 = vmatpush2.msra.mxu0 %v5430
    %5517 = vmatprep.subr.mxu0 0.0
    %5518 = vmatpush2.msra.mxu0 %v5429
    %5519 = vmatprep.subr.mxu0 0.0
    %5520 = vmatpush2.msra.mxu0 %v5428
    %5521 = vmatprep.subr.mxu0 0.0
    %5522 = vmatpush2.msra.mxu0 %v5427
    %5523 = vmatprep.mubr.f32.mxu0 %v3735
    %5524 = vmatmul.mubr.f32.gmra.mxu0 %v3734
    %v5525 = vpop.f32.mrf.mxu0
    %v5526 = vadd.f32 0.0, %v5525
    %v5527 = vpop.f32.mrf.mxu0
    %5528 = vdwg.mxu0
    %5529 = vmatprep.subr.mxu0 0.0
    %5530 = vmatpush1.msra.mxu0 %v5458
    %5531 = vmatprep.subr.mxu0 0.0
    %5532 = vmatpush1.msra.mxu0 %v5457
    %5533 = vmatprep.subr.mxu0 0.0
    %5534 = vmatpush1.msra.mxu0 %v5456
    %5535 = vmatprep.subr.mxu0 0.0
    %5536 = vmatpush1.msra.mxu0 %v5455
    %5537 = vmatprep.subr.mxu0 0.0
    %5538 = vmatpush1.msra.mxu0 %v5454
    %5539 = vmatprep.subr.mxu0 0.0
    %5540 = vmatpush1.msra.mxu0 %v5453
    %5541 = vmatprep.subr.mxu0 0.0
    %5542 = vmatpush1.msra.mxu0 %v5452
    %5543 = vmatprep.subr.mxu0 0.0
    %5544 = vmatpush1.msra.mxu0 %v5451
    %5545 = vmatprep.subr.mxu0 0.0
    %5546 = vmatpush1.msra.mxu0 %v5450
    %5547 = vmatprep.subr.mxu0 0.0
    %5548 = vmatpush1.msra.mxu0 %v5449
    %5549 = vmatprep.subr.mxu0 0.0
    %5550 = vmatpush1.msra.mxu0 %v5448
    %5551 = vmatprep.subr.mxu0 0.0
    %5552 = vmatpush1.msra.mxu0 %v5447
    %5553 = vmatprep.subr.mxu0 0.0
    %5554 = vmatpush1.msra.mxu0 %v5446
    %5555 = vmatprep.subr.mxu0 0.0
    %5556 = vmatpush1.msra.mxu0 %v5445
    %5557 = vmatprep.subr.mxu0 0.0
    %5558 = vmatpush1.msra.mxu0 %v5444
    %5559 = vmatprep.subr.mxu0 0.0
    %5560 = vmatpush1.msra.mxu0 %v5443
    %5561 = vmatprep.subr.mxu0 0.0
    %5562 = vmatpush2.msra.mxu0 0.0
    %5563 = vmatprep.subr.mxu0 0.0
    %5564 = vmatpush2.msra.mxu0 0.0
    %5565 = vmatprep.subr.mxu0 0.0
    %5566 = vmatpush2.msra.mxu0 0.0
    %5567 = vmatprep.subr.mxu0 0.0
    %5568 = vmatpush2.msra.mxu0 0.0
    %5569 = vmatprep.subr.mxu0 0.0
    %5570 = vmatpush2.msra.mxu0 0.0
    %5571 = vmatprep.subr.mxu0 0.0
    %5572 = vmatpush2.msra.mxu0 0.0
    %5573 = vmatprep.subr.mxu0 0.0
    %5574 = vmatpush2.msra.mxu0 0.0
    %5575 = vmatprep.subr.mxu0 0.0
    %5576 = vmatpush2.msra.mxu0 0.0
    %5577 = vmatprep.subr.mxu0 0.0
    %5578 = vmatpush2.msra.mxu0 0.0
    %5579 = vmatprep.subr.mxu0 0.0
    %5580 = vmatpush2.msra.mxu0 0.0
    %5581 = vmatprep.subr.mxu0 0.0
    %5582 = vmatpush2.msra.mxu0 0.0
    %5583 = vmatprep.subr.mxu0 0.0
    %5584 = vmatpush2.msra.mxu0 0.0
    %5585 = vmatprep.subr.mxu0 0.0
    %5586 = vmatpush2.msra.mxu0 0.0
    %5587 = vmatprep.subr.mxu0 0.0
    %5588 = vmatpush2.msra.mxu0 0.0
    %5589 = vmatprep.subr.mxu0 0.0
    %5590 = vmatpush2.msra.mxu0 0.0
    %5591 = vmatprep.subr.mxu0 0.0
    %5592 = vmatpush2.msra.mxu0 0.0
    %5593 = vmatprep.mubr.f32.mxu0 0.0
    %5594 = vmatmul.mubr.f32.gmra.mxu0 %v3736
    %v5595 = vpop.f32.mrf.mxu0
    %v5596 = vadd.f32 %v5526, %v5595
    %v5597 = vpop.f32.mrf.mxu0
    %5598 = vdwg.mxu0
    %v5599 = vadd.f32 %v5407, %v5596
    %s5600 = scalar_lea.vmem [#allocation10], 1152
    %v5601 = vld [vmem:[%s5600] sm:$0xff]
    %v5602 = vld [vmem:[%s5600 + $0x8] sm:$0xff]
    %v5603 = vld [vmem:[%s5600 + $0x10] sm:$0xff]
    %v5604 = vld [vmem:[%s5600 + $0x18] sm:$0xff]
    %v5605 = vld [vmem:[%s5600 + $0x20] sm:$0xff]
    %v5606 = vld [vmem:[%s5600 + $0x28] sm:$0xff]
    %v5607 = vld [vmem:[%s5600 + $0x30] sm:$0xff]
    %v5608 = vld [vmem:[%s5600 + $0x38] sm:$0xff]
    %v5609 = vld [vmem:[%s5600 + $0x40] sm:$0xff]
    %v5610 = vld [vmem:[%s5600 + $0x48] sm:$0xff]
    %v5611 = vld [vmem:[%s5600 + $0x50] sm:$0xff]
    %v5612 = vld [vmem:[%s5600 + $0x58] sm:$0xff]
    %v5613 = vld [vmem:[%s5600 + $0x60] sm:$0xff]
    %v5614 = vld [vmem:[%s5600 + $0x68] sm:$0xff]
    %v5615 = vld [vmem:[%s5600 + $0x70] sm:$0xff]
    %v5616 = vld [vmem:[%s5600 + $0x78] sm:$0xff]
    %v5617 = vld [vmem:[%s5600 + $0x80] sm:$0xff]
    %v5618 = vld [vmem:[%s5600 + $0x88] sm:$0xff]
    %v5619 = vld [vmem:[%s5600 + $0x90] sm:$0xff]
    %v5620 = vld [vmem:[%s5600 + $0x98] sm:$0xff]
    %v5621 = vld [vmem:[%s5600 + $0xa0] sm:$0xff]
    %v5622 = vld [vmem:[%s5600 + $0xa8] sm:$0xff]
    %v5623 = vld [vmem:[%s5600 + $0xb0] sm:$0xff]
    %v5624 = vld [vmem:[%s5600 + $0xb8] sm:$0xff]
    %v5625 = vld [vmem:[%s5600 + $0xc0] sm:$0xff]
    %v5626 = vld [vmem:[%s5600 + $0xc8] sm:$0xff]
    %v5627 = vld [vmem:[%s5600 + $0xd0] sm:$0xff]
    %v5628 = vld [vmem:[%s5600 + $0xd8] sm:$0xff]
    %v5629 = vld [vmem:[%s5600 + $0xe0] sm:$0xff]
    %v5630 = vld [vmem:[%s5600 + $0xe8] sm:$0xff]
    %v5631 = vld [vmem:[%s5600 + $0xf0] sm:$0xff]
    %v5632 = vld [vmem:[%s5600 + $0xf8] sm:$0xff]
    %v5633 = vld [vmem:[%s5600 + $0x100] sm:$0xff]
    %v5634 = vld [vmem:[%s5600 + $0x108] sm:$0xff]
    %v5635 = vld [vmem:[%s5600 + $0x110] sm:$0xff]
    %v5636 = vld [vmem:[%s5600 + $0x118] sm:$0xff]
    %v5637 = vld [vmem:[%s5600 + $0x120] sm:$0xff]
    %v5638 = vld [vmem:[%s5600 + $0x128] sm:$0xff]
    %v5639 = vld [vmem:[%s5600 + $0x130] sm:$0xff]
    %v5640 = vld [vmem:[%s5600 + $0x138] sm:$0xff]
    %v5641 = vld [vmem:[%s5600 + $0x140] sm:$0xff]
    %v5642 = vld [vmem:[%s5600 + $0x148] sm:$0xff]
    %v5643 = vld [vmem:[%s5600 + $0x150] sm:$0xff]
    %v5644 = vld [vmem:[%s5600 + $0x158] sm:$0xff]
    %v5645 = vld [vmem:[%s5600 + $0x160] sm:$0xff]
    %v5646 = vld [vmem:[%s5600 + $0x168] sm:$0xff]
    %v5647 = vld [vmem:[%s5600 + $0x170] sm:$0xff]
    %v5648 = vld [vmem:[%s5600 + $0x178] sm:$0xff]
    %5649 = vmatprep.subr.mxu0 0.0
    %5650 = vmatpush1.msra.mxu0 %v5616
    %5651 = vmatprep.subr.mxu0 0.0
    %5652 = vmatpush1.msra.mxu0 %v5615
    %5653 = vmatprep.subr.mxu0 0.0
    %5654 = vmatpush1.msra.mxu0 %v5614
    %5655 = vmatprep.subr.mxu0 0.0
    %5656 = vmatpush1.msra.mxu0 %v5613
    %5657 = vmatprep.subr.mxu0 0.0
    %5658 = vmatpush1.msra.mxu0 %v5612
    %5659 = vmatprep.subr.mxu0 0.0
    %5660 = vmatpush1.msra.mxu0 %v5611
    %5661 = vmatprep.subr.mxu0 0.0
    %5662 = vmatpush1.msra.mxu0 %v5610
    %5663 = vmatprep.subr.mxu0 0.0
    %5664 = vmatpush1.msra.mxu0 %v5609
    %5665 = vmatprep.subr.mxu0 0.0
    %5666 = vmatpush1.msra.mxu0 %v5608
    %5667 = vmatprep.subr.mxu0 0.0
    %5668 = vmatpush1.msra.mxu0 %v5607
    %5669 = vmatprep.subr.mxu0 0.0
    %5670 = vmatpush1.msra.mxu0 %v5606
    %5671 = vmatprep.subr.mxu0 0.0
    %5672 = vmatpush1.msra.mxu0 %v5605
    %5673 = vmatprep.subr.mxu0 0.0
    %5674 = vmatpush1.msra.mxu0 %v5604
    %5675 = vmatprep.subr.mxu0 0.0
    %5676 = vmatpush1.msra.mxu0 %v5603
    %5677 = vmatprep.subr.mxu0 0.0
    %5678 = vmatpush1.msra.mxu0 %v5602
    %5679 = vmatprep.subr.mxu0 0.0
    %5680 = vmatpush1.msra.mxu0 %v5601
    %5681 = vmatprep.subr.mxu0 0.0
    %5682 = vmatpush2.msra.mxu0 %v5632
    %5683 = vmatprep.subr.mxu0 0.0
    %5684 = vmatpush2.msra.mxu0 %v5631
    %5685 = vmatprep.subr.mxu0 0.0
    %5686 = vmatpush2.msra.mxu0 %v5630
    %5687 = vmatprep.subr.mxu0 0.0
    %5688 = vmatpush2.msra.mxu0 %v5629
    %5689 = vmatprep.subr.mxu0 0.0
    %5690 = vmatpush2.msra.mxu0 %v5628
    %5691 = vmatprep.subr.mxu0 0.0
    %5692 = vmatpush2.msra.mxu0 %v5627
    %5693 = vmatprep.subr.mxu0 0.0
    %5694 = vmatpush2.msra.mxu0 %v5626
    %5695 = vmatprep.subr.mxu0 0.0
    %5696 = vmatpush2.msra.mxu0 %v5625
    %5697 = vmatprep.subr.mxu0 0.0
    %5698 = vmatpush2.msra.mxu0 %v5624
    %5699 = vmatprep.subr.mxu0 0.0
    %5700 = vmatpush2.msra.mxu0 %v5623
    %5701 = vmatprep.subr.mxu0 0.0
    %5702 = vmatpush2.msra.mxu0 %v5622
    %5703 = vmatprep.subr.mxu0 0.0
    %5704 = vmatpush2.msra.mxu0 %v5621
    %5705 = vmatprep.subr.mxu0 0.0
    %5706 = vmatpush2.msra.mxu0 %v5620
    %5707 = vmatprep.subr.mxu0 0.0
    %5708 = vmatpush2.msra.mxu0 %v5619
    %5709 = vmatprep.subr.mxu0 0.0
    %5710 = vmatpush2.msra.mxu0 %v5618
    %5711 = vmatprep.subr.mxu0 0.0
    %5712 = vmatpush2.msra.mxu0 %v5617
    %5713 = vmatprep.mubr.f32.mxu0 %v4167
    %5714 = vmatmul.mubr.f32.gmra.mxu0 %v4166
    %v5715 = vpop.f32.mrf.mxu0
    %v5716 = vadd.f32 0.0, %v5715
    %v5717 = vpop.f32.mrf.mxu0
    %5718 = vdwg.mxu0
    %5719 = vmatprep.subr.mxu0 0.0
    %5720 = vmatpush1.msra.mxu0 %v5648
    %5721 = vmatprep.subr.mxu0 0.0
    %5722 = vmatpush1.msra.mxu0 %v5647
    %5723 = vmatprep.subr.mxu0 0.0
    %5724 = vmatpush1.msra.mxu0 %v5646
    %5725 = vmatprep.subr.mxu0 0.0
    %5726 = vmatpush1.msra.mxu0 %v5645
    %5727 = vmatprep.subr.mxu0 0.0
    %5728 = vmatpush1.msra.mxu0 %v5644
    %5729 = vmatprep.subr.mxu0 0.0
    %5730 = vmatpush1.msra.mxu0 %v5643
    %5731 = vmatprep.subr.mxu0 0.0
    %5732 = vmatpush1.msra.mxu0 %v5642
    %5733 = vmatprep.subr.mxu0 0.0
    %5734 = vmatpush1.msra.mxu0 %v5641
    %5735 = vmatprep.subr.mxu0 0.0
    %5736 = vmatpush1.msra.mxu0 %v5640
    %5737 = vmatprep.subr.mxu0 0.0
    %5738 = vmatpush1.msra.mxu0 %v5639
    %5739 = vmatprep.subr.mxu0 0.0
    %5740 = vmatpush1.msra.mxu0 %v5638
    %5741 = vmatprep.subr.mxu0 0.0
    %5742 = vmatpush1.msra.mxu0 %v5637
    %5743 = vmatprep.subr.mxu0 0.0
    %5744 = vmatpush1.msra.mxu0 %v5636
    %5745 = vmatprep.subr.mxu0 0.0
    %5746 = vmatpush1.msra.mxu0 %v5635
    %5747 = vmatprep.subr.mxu0 0.0
    %5748 = vmatpush1.msra.mxu0 %v5634
    %5749 = vmatprep.subr.mxu0 0.0
    %5750 = vmatpush1.msra.mxu0 %v5633
    %5751 = vmatprep.subr.mxu0 0.0
    %5752 = vmatpush2.msra.mxu0 0.0
    %5753 = vmatprep.subr.mxu0 0.0
    %5754 = vmatpush2.msra.mxu0 0.0
    %5755 = vmatprep.subr.mxu0 0.0
    %5756 = vmatpush2.msra.mxu0 0.0
    %5757 = vmatprep.subr.mxu0 0.0
    %5758 = vmatpush2.msra.mxu0 0.0
    %5759 = vmatprep.subr.mxu0 0.0
    %5760 = vmatpush2.msra.mxu0 0.0
    %5761 = vmatprep.subr.mxu0 0.0
    %5762 = vmatpush2.msra.mxu0 0.0
    %5763 = vmatprep.subr.mxu0 0.0
    %5764 = vmatpush2.msra.mxu0 0.0
    %5765 = vmatprep.subr.mxu0 0.0
    %5766 = vmatpush2.msra.mxu0 0.0
    %5767 = vmatprep.subr.mxu0 0.0
    %5768 = vmatpush2.msra.mxu0 0.0
    %5769 = vmatprep.subr.mxu0 0.0
    %5770 = vmatpush2.msra.mxu0 0.0
    %5771 = vmatprep.subr.mxu0 0.0
    %5772 = vmatpush2.msra.mxu0 0.0
    %5773 = vmatprep.subr.mxu0 0.0
    %5774 = vmatpush2.msra.mxu0 0.0
    %5775 = vmatprep.subr.mxu0 0.0
    %5776 = vmatpush2.msra.mxu0 0.0
    %5777 = vmatprep.subr.mxu0 0.0
    %5778 = vmatpush2.msra.mxu0 0.0
    %5779 = vmatprep.subr.mxu0 0.0
    %5780 = vmatpush2.msra.mxu0 0.0
    %5781 = vmatprep.subr.mxu0 0.0
    %5782 = vmatpush2.msra.mxu0 0.0
    %5783 = vmatprep.mubr.f32.mxu0 0.0
    %5784 = vmatmul.mubr.f32.gmra.mxu0 %v4168
    %v5785 = vpop.f32.mrf.mxu0
    %v5786 = vadd.f32 %v5716, %v5785
    %v5787 = vpop.f32.mrf.mxu0
    %5788 = vdwg.mxu0
    %v5789 = vadd.f32 %v5599, %v5786
    %s5790 = scalar_lea.vmem [#allocation10], 1536
    %v5791 = vld [vmem:[%s5790] sm:$0xff]
    %v5792 = vld [vmem:[%s5790 + $0x8] sm:$0xff]
    %v5793 = vld [vmem:[%s5790 + $0x10] sm:$0xff]
    %v5794 = vld [vmem:[%s5790 + $0x18] sm:$0xff]
    %v5795 = vld [vmem:[%s5790 + $0x20] sm:$0xff]
    %v5796 = vld [vmem:[%s5790 + $0x28] sm:$0xff]
    %v5797 = vld [vmem:[%s5790 + $0x30] sm:$0xff]
    %v5798 = vld [vmem:[%s5790 + $0x38] sm:$0xff]
    %v5799 = vld [vmem:[%s5790 + $0x40] sm:$0xff]
    %v5800 = vld [vmem:[%s5790 + $0x48] sm:$0xff]
    %v5801 = vld [vmem:[%s5790 + $0x50] sm:$0xff]
    %v5802 = vld [vmem:[%s5790 + $0x58] sm:$0xff]
    %v5803 = vld [vmem:[%s5790 + $0x60] sm:$0xff]
    %v5804 = vld [vmem:[%s5790 + $0x68] sm:$0xff]
    %v5805 = vld [vmem:[%s5790 + $0x70] sm:$0xff]
    %v5806 = vld [vmem:[%s5790 + $0x78] sm:$0xff]
    %v5807 = vld [vmem:[%s5790 + $0x80] sm:$0xff]
    %v5808 = vld [vmem:[%s5790 + $0x88] sm:$0xff]
    %v5809 = vld [vmem:[%s5790 + $0x90] sm:$0xff]
    %v5810 = vld [vmem:[%s5790 + $0x98] sm:$0xff]
    %v5811 = vld [vmem:[%s5790 + $0xa0] sm:$0xff]
    %v5812 = vld [vmem:[%s5790 + $0xa8] sm:$0xff]
    %v5813 = vld [vmem:[%s5790 + $0xb0] sm:$0xff]
    %v5814 = vld [vmem:[%s5790 + $0xb8] sm:$0xff]
    %v5815 = vld [vmem:[%s5790 + $0xc0] sm:$0xff]
    %v5816 = vld [vmem:[%s5790 + $0xc8] sm:$0xff]
    %v5817 = vld [vmem:[%s5790 + $0xd0] sm:$0xff]
    %v5818 = vld [vmem:[%s5790 + $0xd8] sm:$0xff]
    %v5819 = vld [vmem:[%s5790 + $0xe0] sm:$0xff]
    %v5820 = vld [vmem:[%s5790 + $0xe8] sm:$0xff]
    %v5821 = vld [vmem:[%s5790 + $0xf0] sm:$0xff]
    %v5822 = vld [vmem:[%s5790 + $0xf8] sm:$0xff]
    %v5823 = vld [vmem:[%s5790 + $0x100] sm:$0xff]
    %v5824 = vld [vmem:[%s5790 + $0x108] sm:$0xff]
    %v5825 = vld [vmem:[%s5790 + $0x110] sm:$0xff]
    %v5826 = vld [vmem:[%s5790 + $0x118] sm:$0xff]
    %v5827 = vld [vmem:[%s5790 + $0x120] sm:$0xff]
    %v5828 = vld [vmem:[%s5790 + $0x128] sm:$0xff]
    %v5829 = vld [vmem:[%s5790 + $0x130] sm:$0xff]
    %v5830 = vld [vmem:[%s5790 + $0x138] sm:$0xff]
    %v5831 = vld [vmem:[%s5790 + $0x140] sm:$0xff]
    %v5832 = vld [vmem:[%s5790 + $0x148] sm:$0xff]
    %v5833 = vld [vmem:[%s5790 + $0x150] sm:$0xff]
    %v5834 = vld [vmem:[%s5790 + $0x158] sm:$0xff]
    %v5835 = vld [vmem:[%s5790 + $0x160] sm:$0xff]
    %v5836 = vld [vmem:[%s5790 + $0x168] sm:$0xff]
    %v5837 = vld [vmem:[%s5790 + $0x170] sm:$0xff]
    %v5838 = vld [vmem:[%s5790 + $0x178] sm:$0xff]
    %5839 = vmatprep.subr.mxu0 0.0
    %5840 = vmatpush1.msra.mxu0 %v5806
    %5841 = vmatprep.subr.mxu0 0.0
    %5842 = vmatpush1.msra.mxu0 %v5805
    %5843 = vmatprep.subr.mxu0 0.0
    %5844 = vmatpush1.msra.mxu0 %v5804
    %5845 = vmatprep.subr.mxu0 0.0
    %5846 = vmatpush1.msra.mxu0 %v5803
    %5847 = vmatprep.subr.mxu0 0.0
    %5848 = vmatpush1.msra.mxu0 %v5802
    %5849 = vmatprep.subr.mxu0 0.0
    %5850 = vmatpush1.msra.mxu0 %v5801
    %5851 = vmatprep.subr.mxu0 0.0
    %5852 = vmatpush1.msra.mxu0 %v5800
    %5853 = vmatprep.subr.mxu0 0.0
    %5854 = vmatpush1.msra.mxu0 %v5799
    %5855 = vmatprep.subr.mxu0 0.0
    %5856 = vmatpush1.msra.mxu0 %v5798
    %5857 = vmatprep.subr.mxu0 0.0
    %5858 = vmatpush1.msra.mxu0 %v5797
    %5859 = vmatprep.subr.mxu0 0.0
    %5860 = vmatpush1.msra.mxu0 %v5796
    %5861 = vmatprep.subr.mxu0 0.0
    %5862 = vmatpush1.msra.mxu0 %v5795
    %5863 = vmatprep.subr.mxu0 0.0
    %5864 = vmatpush1.msra.mxu0 %v5794
    %5865 = vmatprep.subr.mxu0 0.0
    %5866 = vmatpush1.msra.mxu0 %v5793
    %5867 = vmatprep.subr.mxu0 0.0
    %5868 = vmatpush1.msra.mxu0 %v5792
    %5869 = vmatprep.subr.mxu0 0.0
    %5870 = vmatpush1.msra.mxu0 %v5791
    %5871 = vmatprep.subr.mxu0 0.0
    %5872 = vmatpush2.msra.mxu0 %v5822
    %5873 = vmatprep.subr.mxu0 0.0
    %5874 = vmatpush2.msra.mxu0 %v5821
    %5875 = vmatprep.subr.mxu0 0.0
    %5876 = vmatpush2.msra.mxu0 %v5820
    %5877 = vmatprep.subr.mxu0 0.0
    %5878 = vmatpush2.msra.mxu0 %v5819
    %5879 = vmatprep.subr.mxu0 0.0
    %5880 = vmatpush2.msra.mxu0 %v5818
    %5881 = vmatprep.subr.mxu0 0.0
    %5882 = vmatpush2.msra.mxu0 %v5817
    %5883 = vmatprep.subr.mxu0 0.0
    %5884 = vmatpush2.msra.mxu0 %v5816
    %5885 = vmatprep.subr.mxu0 0.0
    %5886 = vmatpush2.msra.mxu0 %v5815
    %5887 = vmatprep.subr.mxu0 0.0
    %5888 = vmatpush2.msra.mxu0 %v5814
    %5889 = vmatprep.subr.mxu0 0.0
    %5890 = vmatpush2.msra.mxu0 %v5813
    %5891 = vmatprep.subr.mxu0 0.0
    %5892 = vmatpush2.msra.mxu0 %v5812
    %5893 = vmatprep.subr.mxu0 0.0
    %5894 = vmatpush2.msra.mxu0 %v5811
    %5895 = vmatprep.subr.mxu0 0.0
    %5896 = vmatpush2.msra.mxu0 %v5810
    %5897 = vmatprep.subr.mxu0 0.0
    %5898 = vmatpush2.msra.mxu0 %v5809
    %5899 = vmatprep.subr.mxu0 0.0
    %5900 = vmatpush2.msra.mxu0 %v5808
    %5901 = vmatprep.subr.mxu0 0.0
    %5902 = vmatpush2.msra.mxu0 %v5807
    %5903 = vmatprep.mubr.f32.mxu0 %v4599
    %5904 = vmatmul.mubr.f32.gmra.mxu0 %v4598
    %v5905 = vpop.f32.mrf.mxu0
    %v5906 = vadd.f32 0.0, %v5905
    %v5907 = vpop.f32.mrf.mxu0
    %5908 = vdwg.mxu0
    %5909 = vmatprep.subr.mxu0 0.0
    %5910 = vmatpush1.msra.mxu0 %v5838
    %5911 = vmatprep.subr.mxu0 0.0
    %5912 = vmatpush1.msra.mxu0 %v5837
    %5913 = vmatprep.subr.mxu0 0.0
    %5914 = vmatpush1.msra.mxu0 %v5836
    %5915 = vmatprep.subr.mxu0 0.0
    %5916 = vmatpush1.msra.mxu0 %v5835
    %5917 = vmatprep.subr.mxu0 0.0
    %5918 = vmatpush1.msra.mxu0 %v5834
    %5919 = vmatprep.subr.mxu0 0.0
    %5920 = vmatpush1.msra.mxu0 %v5833
    %5921 = vmatprep.subr.mxu0 0.0
    %5922 = vmatpush1.msra.mxu0 %v5832
    %5923 = vmatprep.subr.mxu0 0.0
    %5924 = vmatpush1.msra.mxu0 %v5831
    %5925 = vmatprep.subr.mxu0 0.0
    %5926 = vmatpush1.msra.mxu0 %v5830
    %5927 = vmatprep.subr.mxu0 0.0
    %5928 = vmatpush1.msra.mxu0 %v5829
    %5929 = vmatprep.subr.mxu0 0.0
    %5930 = vmatpush1.msra.mxu0 %v5828
    %5931 = vmatprep.subr.mxu0 0.0
    %5932 = vmatpush1.msra.mxu0 %v5827
    %5933 = vmatprep.subr.mxu0 0.0
    %5934 = vmatpush1.msra.mxu0 %v5826
    %5935 = vmatprep.subr.mxu0 0.0
    %5936 = vmatpush1.msra.mxu0 %v5825
    %5937 = vmatprep.subr.mxu0 0.0
    %5938 = vmatpush1.msra.mxu0 %v5824
    %5939 = vmatprep.subr.mxu0 0.0
    %5940 = vmatpush1.msra.mxu0 %v5823
    %5941 = vmatprep.subr.mxu0 0.0
    %5942 = vmatpush2.msra.mxu0 0.0
    %5943 = vmatprep.subr.mxu0 0.0
    %5944 = vmatpush2.msra.mxu0 0.0
    %5945 = vmatprep.subr.mxu0 0.0
    %5946 = vmatpush2.msra.mxu0 0.0
    %5947 = vmatprep.subr.mxu0 0.0
    %5948 = vmatpush2.msra.mxu0 0.0
    %5949 = vmatprep.subr.mxu0 0.0
    %5950 = vmatpush2.msra.mxu0 0.0
    %5951 = vmatprep.subr.mxu0 0.0
    %5952 = vmatpush2.msra.mxu0 0.0
    %5953 = vmatprep.subr.mxu0 0.0
    %5954 = vmatpush2.msra.mxu0 0.0
    %5955 = vmatprep.subr.mxu0 0.0
    %5956 = vmatpush2.msra.mxu0 0.0
    %5957 = vmatprep.subr.mxu0 0.0
    %5958 = vmatpush2.msra.mxu0 0.0
    %5959 = vmatprep.subr.mxu0 0.0
    %5960 = vmatpush2.msra.mxu0 0.0
    %5961 = vmatprep.subr.mxu0 0.0
    %5962 = vmatpush2.msra.mxu0 0.0
    %5963 = vmatprep.subr.mxu0 0.0
    %5964 = vmatpush2.msra.mxu0 0.0
    %5965 = vmatprep.subr.mxu0 0.0
    %5966 = vmatpush2.msra.mxu0 0.0
    %5967 = vmatprep.subr.mxu0 0.0
    %5968 = vmatpush2.msra.mxu0 0.0
    %5969 = vmatprep.subr.mxu0 0.0
    %5970 = vmatpush2.msra.mxu0 0.0
    %5971 = vmatprep.subr.mxu0 0.0
    %5972 = vmatpush2.msra.mxu0 0.0
    %5973 = vmatprep.mubr.f32.mxu0 0.0
    %5974 = vmatmul.mubr.f32.gmra.mxu0 %v4600
    %v5975 = vpop.f32.mrf.mxu0
    %v5976 = vadd.f32 %v5906, %v5975
    %v5977 = vpop.f32.mrf.mxu0
    %5978 = vdwg.mxu0
    %v5979 = vadd.f32 %v5789, %v5976
    %s5980 = scalar_lea.vmem [#allocation10], 1920
    %v5981 = vld [vmem:[%s5980] sm:$0xff]
    %v5982 = vld [vmem:[%s5980 + $0x8] sm:$0xff]
    %v5983 = vld [vmem:[%s5980 + $0x10] sm:$0xff]
    %v5984 = vld [vmem:[%s5980 + $0x18] sm:$0xff]
    %v5985 = vld [vmem:[%s5980 + $0x20] sm:$0xff]
    %v5986 = vld [vmem:[%s5980 + $0x28] sm:$0xff]
    %v5987 = vld [vmem:[%s5980 + $0x30] sm:$0xff]
    %v5988 = vld [vmem:[%s5980 + $0x38] sm:$0xff]
    %v5989 = vld [vmem:[%s5980 + $0x40] sm:$0xff]
    %v5990 = vld [vmem:[%s5980 + $0x48] sm:$0xff]
    %v5991 = vld [vmem:[%s5980 + $0x50] sm:$0xff]
    %v5992 = vld [vmem:[%s5980 + $0x58] sm:$0xff]
    %v5993 = vld [vmem:[%s5980 + $0x60] sm:$0xff]
    %v5994 = vld [vmem:[%s5980 + $0x68] sm:$0xff]
    %v5995 = vld [vmem:[%s5980 + $0x70] sm:$0xff]
    %v5996 = vld [vmem:[%s5980 + $0x78] sm:$0xff]
    %v5997 = vld [vmem:[%s5980 + $0x80] sm:$0xff]
    %v5998 = vld [vmem:[%s5980 + $0x88] sm:$0xff]
    %v5999 = vld [vmem:[%s5980 + $0x90] sm:$0xff]
    %v6000 = vld [vmem:[%s5980 + $0x98] sm:$0xff]
    %v6001 = vld [vmem:[%s5980 + $0xa0] sm:$0xff]
    %v6002 = vld [vmem:[%s5980 + $0xa8] sm:$0xff]
    %v6003 = vld [vmem:[%s5980 + $0xb0] sm:$0xff]
    %v6004 = vld [vmem:[%s5980 + $0xb8] sm:$0xff]
    %v6005 = vld [vmem:[%s5980 + $0xc0] sm:$0xff]
    %v6006 = vld [vmem:[%s5980 + $0xc8] sm:$0xff]
    %v6007 = vld [vmem:[%s5980 + $0xd0] sm:$0xff]
    %v6008 = vld [vmem:[%s5980 + $0xd8] sm:$0xff]
    %v6009 = vld [vmem:[%s5980 + $0xe0] sm:$0xff]
    %v6010 = vld [vmem:[%s5980 + $0xe8] sm:$0xff]
    %v6011 = vld [vmem:[%s5980 + $0xf0] sm:$0xff]
    %v6012 = vld [vmem:[%s5980 + $0xf8] sm:$0xff]
    %v6013 = vld [vmem:[%s5980 + $0x100] sm:$0xff]
    %v6014 = vld [vmem:[%s5980 + $0x108] sm:$0xff]
    %v6015 = vld [vmem:[%s5980 + $0x110] sm:$0xff]
    %v6016 = vld [vmem:[%s5980 + $0x118] sm:$0xff]
    %v6017 = vld [vmem:[%s5980 + $0x120] sm:$0xff]
    %v6018 = vld [vmem:[%s5980 + $0x128] sm:$0xff]
    %v6019 = vld [vmem:[%s5980 + $0x130] sm:$0xff]
    %v6020 = vld [vmem:[%s5980 + $0x138] sm:$0xff]
    %v6021 = vld [vmem:[%s5980 + $0x140] sm:$0xff]
    %v6022 = vld [vmem:[%s5980 + $0x148] sm:$0xff]
    %v6023 = vld [vmem:[%s5980 + $0x150] sm:$0xff]
    %v6024 = vld [vmem:[%s5980 + $0x158] sm:$0xff]
    %v6025 = vld [vmem:[%s5980 + $0x160] sm:$0xff]
    %v6026 = vld [vmem:[%s5980 + $0x168] sm:$0xff]
    %v6027 = vld [vmem:[%s5980 + $0x170] sm:$0xff]
    %v6028 = vld [vmem:[%s5980 + $0x178] sm:$0xff]
    %6029 = vmatprep.subr.mxu0 0.0
    %6030 = vmatpush1.msra.mxu0 %v5996
    %6031 = vmatprep.subr.mxu0 0.0
    %6032 = vmatpush1.msra.mxu0 %v5995
    %6033 = vmatprep.subr.mxu0 0.0
    %6034 = vmatpush1.msra.mxu0 %v5994
    %6035 = vmatprep.subr.mxu0 0.0
    %6036 = vmatpush1.msra.mxu0 %v5993
    %6037 = vmatprep.subr.mxu0 0.0
    %6038 = vmatpush1.msra.mxu0 %v5992
    %6039 = vmatprep.subr.mxu0 0.0
    %6040 = vmatpush1.msra.mxu0 %v5991
    %6041 = vmatprep.subr.mxu0 0.0
    %6042 = vmatpush1.msra.mxu0 %v5990
    %6043 = vmatprep.subr.mxu0 0.0
    %6044 = vmatpush1.msra.mxu0 %v5989
    %6045 = vmatprep.subr.mxu0 0.0
    %6046 = vmatpush1.msra.mxu0 %v5988
    %6047 = vmatprep.subr.mxu0 0.0
    %6048 = vmatpush1.msra.mxu0 %v5987
    %6049 = vmatprep.subr.mxu0 0.0
    %6050 = vmatpush1.msra.mxu0 %v5986
    %6051 = vmatprep.subr.mxu0 0.0
    %6052 = vmatpush1.msra.mxu0 %v5985
    %6053 = vmatprep.subr.mxu0 0.0
    %6054 = vmatpush1.msra.mxu0 %v5984
    %6055 = vmatprep.subr.mxu0 0.0
    %6056 = vmatpush1.msra.mxu0 %v5983
    %6057 = vmatprep.subr.mxu0 0.0
    %6058 = vmatpush1.msra.mxu0 %v5982
    %6059 = vmatprep.subr.mxu0 0.0
    %6060 = vmatpush1.msra.mxu0 %v5981
    %6061 = vmatprep.subr.mxu0 0.0
    %6062 = vmatpush2.msra.mxu0 %v6012
    %6063 = vmatprep.subr.mxu0 0.0
    %6064 = vmatpush2.msra.mxu0 %v6011
    %6065 = vmatprep.subr.mxu0 0.0
    %6066 = vmatpush2.msra.mxu0 %v6010
    %6067 = vmatprep.subr.mxu0 0.0
    %6068 = vmatpush2.msra.mxu0 %v6009
    %6069 = vmatprep.subr.mxu0 0.0
    %6070 = vmatpush2.msra.mxu0 %v6008
    %6071 = vmatprep.subr.mxu0 0.0
    %6072 = vmatpush2.msra.mxu0 %v6007
    %6073 = vmatprep.subr.mxu0 0.0
    %6074 = vmatpush2.msra.mxu0 %v6006
    %6075 = vmatprep.subr.mxu0 0.0
    %6076 = vmatpush2.msra.mxu0 %v6005
    %6077 = vmatprep.subr.mxu0 0.0
    %6078 = vmatpush2.msra.mxu0 %v6004
    %6079 = vmatprep.subr.mxu0 0.0
    %6080 = vmatpush2.msra.mxu0 %v6003
    %6081 = vmatprep.subr.mxu0 0.0
    %6082 = vmatpush2.msra.mxu0 %v6002
    %6083 = vmatprep.subr.mxu0 0.0
    %6084 = vmatpush2.msra.mxu0 %v6001
    %6085 = vmatprep.subr.mxu0 0.0
    %6086 = vmatpush2.msra.mxu0 %v6000
    %6087 = vmatprep.subr.mxu0 0.0
    %6088 = vmatpush2.msra.mxu0 %v5999
    %6089 = vmatprep.subr.mxu0 0.0
    %6090 = vmatpush2.msra.mxu0 %v5998
    %6091 = vmatprep.subr.mxu0 0.0
    %6092 = vmatpush2.msra.mxu0 %v5997
    %6093 = vmatprep.mubr.f32.mxu0 %v5031
    %6094 = vmatmul.mubr.f32.gmra.mxu0 %v5030
    %v6095 = vpop.f32.mrf.mxu0
    %v6096 = vadd.f32 0.0, %v6095
    %v6097 = vpop.f32.mrf.mxu0
    %6098 = vdwg.mxu0
    %6099 = vmatprep.subr.mxu0 0.0
    %6100 = vmatpush1.msra.mxu0 %v6028
    %6101 = vmatprep.subr.mxu0 0.0
    %6102 = vmatpush1.msra.mxu0 %v6027
    %6103 = vmatprep.subr.mxu0 0.0
    %6104 = vmatpush1.msra.mxu0 %v6026
    %6105 = vmatprep.subr.mxu0 0.0
    %6106 = vmatpush1.msra.mxu0 %v6025
    %6107 = vmatprep.subr.mxu0 0.0
    %6108 = vmatpush1.msra.mxu0 %v6024
    %6109 = vmatprep.subr.mxu0 0.0
    %6110 = vmatpush1.msra.mxu0 %v6023
    %6111 = vmatprep.subr.mxu0 0.0
    %6112 = vmatpush1.msra.mxu0 %v6022
    %6113 = vmatprep.subr.mxu0 0.0
    %6114 = vmatpush1.msra.mxu0 %v6021
    %6115 = vmatprep.subr.mxu0 0.0
    %6116 = vmatpush1.msra.mxu0 %v6020
    %6117 = vmatprep.subr.mxu0 0.0
    %6118 = vmatpush1.msra.mxu0 %v6019
    %6119 = vmatprep.subr.mxu0 0.0
    %6120 = vmatpush1.msra.mxu0 %v6018
    %6121 = vmatprep.subr.mxu0 0.0
    %6122 = vmatpush1.msra.mxu0 %v6017
    %6123 = vmatprep.subr.mxu0 0.0
    %6124 = vmatpush1.msra.mxu0 %v6016
    %6125 = vmatprep.subr.mxu0 0.0
    %6126 = vmatpush1.msra.mxu0 %v6015
    %6127 = vmatprep.subr.mxu0 0.0
    %6128 = vmatpush1.msra.mxu0 %v6014
    %6129 = vmatprep.subr.mxu0 0.0
    %6130 = vmatpush1.msra.mxu0 %v6013
    %6131 = vmatprep.subr.mxu0 0.0
    %6132 = vmatpush2.msra.mxu0 0.0
    %6133 = vmatprep.subr.mxu0 0.0
    %6134 = vmatpush2.msra.mxu0 0.0
    %6135 = vmatprep.subr.mxu0 0.0
    %6136 = vmatpush2.msra.mxu0 0.0
    %6137 = vmatprep.subr.mxu0 0.0
    %6138 = vmatpush2.msra.mxu0 0.0
    %6139 = vmatprep.subr.mxu0 0.0
    %6140 = vmatpush2.msra.mxu0 0.0
    %6141 = vmatprep.subr.mxu0 0.0
    %6142 = vmatpush2.msra.mxu0 0.0
    %6143 = vmatprep.subr.mxu0 0.0
    %6144 = vmatpush2.msra.mxu0 0.0
    %6145 = vmatprep.subr.mxu0 0.0
    %6146 = vmatpush2.msra.mxu0 0.0
    %6147 = vmatprep.subr.mxu0 0.0
    %6148 = vmatpush2.msra.mxu0 0.0
    %6149 = vmatprep.subr.mxu0 0.0
    %6150 = vmatpush2.msra.mxu0 0.0
    %6151 = vmatprep.subr.mxu0 0.0
    %6152 = vmatpush2.msra.mxu0 0.0
    %6153 = vmatprep.subr.mxu0 0.0
    %6154 = vmatpush2.msra.mxu0 0.0
    %6155 = vmatprep.subr.mxu0 0.0
    %6156 = vmatpush2.msra.mxu0 0.0
    %6157 = vmatprep.subr.mxu0 0.0
    %6158 = vmatpush2.msra.mxu0 0.0
    %6159 = vmatprep.subr.mxu0 0.0
    %6160 = vmatpush2.msra.mxu0 0.0
    %6161 = vmatprep.subr.mxu0 0.0
    %6162 = vmatpush2.msra.mxu0 0.0
    %6163 = vmatprep.mubr.f32.mxu0 0.0
    %6164 = vmatmul.mubr.f32.gmra.mxu0 %v5032
    %v6165 = vpop.f32.mrf.mxu0
    %v6166 = vadd.f32 %v6096, %v6165
    %v6167 = vpop.f32.mrf.mxu0
    %6168 = vdwg.mxu0
    %v6169 = vadd.f32 %v5979, %v6166
    %v6170 = vld [vmem:[#allocation11] sm:$0x1]
    %v6172 = vlaneseq
    %v6173 = vshrl.u32 %v6172, 7
    %v6174 = vsub.s32 0, %v6173
    %v6175 = vrot.slane %v6170, %v6174
    %v6177 = vadd.f32 %v6169, %v6175
    %v6178 = vmax.f32 %v6177, 0.0
    %v6179 = vld [vmem:[#allocation13] sm:$0xff]
    %v6180 = vld [vmem:[#allocation13 + $0x8] sm:$0xff]
    %v6181 = vld [vmem:[#allocation13 + $0x10] sm:$0xff]
    %v6182 = vld [vmem:[#allocation13 + $0x18] sm:$0xff]
    %v6183 = vld [vmem:[#allocation13 + $0x20] sm:$0xff]
    %v6184 = vld [vmem:[#allocation13 + $0x28] sm:$0xff]
    %v6185 = vld [vmem:[#allocation13 + $0x30] sm:$0xff]
    %v6186 = vld [vmem:[#allocation13 + $0x38] sm:$0xff]
    %v6187 = vld [vmem:[#allocation13 + $0x40] sm:$0xff]
    %v6188 = vld [vmem:[#allocation13 + $0x48] sm:$0xff]
    %v6189 = vld [vmem:[#allocation13 + $0x50] sm:$0xff]
    %v6190 = vld [vmem:[#allocation13 + $0x58] sm:$0xff]
    %v6191 = vld [vmem:[#allocation13 + $0x60] sm:$0xff]
    %v6192 = vld [vmem:[#allocation13 + $0x68] sm:$0xff]
    %v6193 = vld [vmem:[#allocation13 + $0x70] sm:$0xff]
    %v6194 = vld [vmem:[#allocation13 + $0x78] sm:$0xff]
    %s6195 = scalar_lea.vmem [#allocation13], 128
    %v6196 = vld [vmem:[%s6195] sm:$0xff]
    %v6197 = vld [vmem:[%s6195 + $0x8] sm:$0xff]
    %v6198 = vld [vmem:[%s6195 + $0x10] sm:$0xff]
    %v6199 = vld [vmem:[%s6195 + $0x18] sm:$0xff]
    %v6200 = vld [vmem:[%s6195 + $0x20] sm:$0xff]
    %v6201 = vld [vmem:[%s6195 + $0x28] sm:$0xff]
    %v6202 = vld [vmem:[%s6195 + $0x30] sm:$0xff]
    %v6203 = vld [vmem:[%s6195 + $0x38] sm:$0xff]
    %v6204 = vld [vmem:[%s6195 + $0x40] sm:$0xff]
    %v6205 = vld [vmem:[%s6195 + $0x48] sm:$0xff]
    %v6206 = vld [vmem:[%s6195 + $0x50] sm:$0xff]
    %v6207 = vld [vmem:[%s6195 + $0x58] sm:$0xff]
    %v6208 = vld [vmem:[%s6195 + $0x60] sm:$0xff]
    %v6209 = vld [vmem:[%s6195 + $0x68] sm:$0xff]
    %v6210 = vld [vmem:[%s6195 + $0x70] sm:$0xff]
    %v6211 = vld [vmem:[%s6195 + $0x78] sm:$0xff]
    %v6213 = vrot.slane %v6178, 2
    %6215 = vmatprep.subr.mxu0 0.0
    %6216 = vmatpush1.msra.mxu0 %v6211
    %6217 = vmatprep.subr.mxu0 0.0
    %6218 = vmatpush1.msra.mxu0 %v6210
    %6219 = vmatprep.subr.mxu0 0.0
    %6220 = vmatpush1.msra.mxu0 %v6209
    %6221 = vmatprep.subr.mxu0 0.0
    %6222 = vmatpush1.msra.mxu0 %v6208
    %6223 = vmatprep.subr.mxu0 0.0
    %6224 = vmatpush1.msra.mxu0 %v6207
    %6225 = vmatprep.subr.mxu0 0.0
    %6226 = vmatpush1.msra.mxu0 %v6206
    %6227 = vmatprep.subr.mxu0 0.0
    %6228 = vmatpush1.msra.mxu0 %v6205
    %6229 = vmatprep.subr.mxu0 0.0
    %6230 = vmatpush1.msra.mxu0 %v6204
    %6231 = vmatprep.subr.mxu0 0.0
    %6232 = vmatpush1.msra.mxu0 %v6203
    %6233 = vmatprep.subr.mxu0 0.0
    %6234 = vmatpush1.msra.mxu0 %v6202
    %6235 = vmatprep.subr.mxu0 0.0
    %6236 = vmatpush1.msra.mxu0 %v6201
    %6237 = vmatprep.subr.mxu0 0.0
    %6238 = vmatpush1.msra.mxu0 %v6200
    %6239 = vmatprep.subr.mxu0 0.0
    %6240 = vmatpush1.msra.mxu0 %v6199
    %6241 = vmatprep.subr.mxu0 0.0
    %6242 = vmatpush1.msra.mxu0 %v6198
    %6243 = vmatprep.subr.mxu0 0.0
    %6244 = vmatpush1.msra.mxu0 %v6197
    %6245 = vmatprep.subr.mxu0 0.0
    %6246 = vmatpush1.msra.mxu0 %v6196
    %6247 = vmatprep.subr.mxu0 0.0
    %6248 = vmatpush2.msra.mxu0 0.0
    %6249 = vmatprep.subr.mxu0 0.0
    %6250 = vmatpush2.msra.mxu0 0.0
    %6251 = vmatprep.subr.mxu0 0.0
    %6252 = vmatpush2.msra.mxu0 0.0
    %6253 = vmatprep.subr.mxu0 0.0
    %6254 = vmatpush2.msra.mxu0 0.0
    %6255 = vmatprep.subr.mxu0 0.0
    %6256 = vmatpush2.msra.mxu0 0.0
    %6257 = vmatprep.subr.mxu0 0.0
    %6258 = vmatpush2.msra.mxu0 0.0
    %6259 = vmatprep.subr.mxu0 0.0
    %6260 = vmatpush2.msra.mxu0 0.0
    %6261 = vmatprep.subr.mxu0 0.0
    %6262 = vmatpush2.msra.mxu0 0.0
    %6263 = vmatprep.subr.mxu0 0.0
    %6264 = vmatpush2.msra.mxu0 0.0
    %6265 = vmatprep.subr.mxu0 0.0
    %6266 = vmatpush2.msra.mxu0 0.0
    %6267 = vmatprep.subr.mxu0 0.0
    %6268 = vmatpush2.msra.mxu0 0.0
    %6269 = vmatprep.subr.mxu0 0.0
    %6270 = vmatpush2.msra.mxu0 0.0
    %6271 = vmatprep.subr.mxu0 0.0
    %6272 = vmatpush2.msra.mxu0 0.0
    %6273 = vmatprep.subr.mxu0 0.0
    %6274 = vmatpush2.msra.mxu0 0.0
    %6275 = vmatprep.subr.mxu0 0.0
    %6276 = vmatpush2.msra.mxu0 0.0
    %6277 = vmatprep.subr.mxu0 0.0
    %6278 = vmatpush2.msra.mxu0 0.0
    %6279 = vmatprep.mubr.f32.mxu0 0.0
    %6280 = vmatmul.mubr.f32.gmra.mxu0 %v6213
    %v6281 = vpop.f32.mrf.mxu0
    %v6282 = vadd.f32 0.0, %v6281
    %v6283 = vpop.f32.mrf.mxu0
    %6284 = vdwg.mxu0
    %6285 = vmatprep.subr.mxu0 0.0
    %6286 = vmatpush1.msra.mxu0 %v6194
    %6287 = vmatprep.subr.mxu0 0.0
    %6288 = vmatpush1.msra.mxu0 %v6193
    %6289 = vmatprep.subr.mxu0 0.0
    %6290 = vmatpush1.msra.mxu0 %v6192
    %6291 = vmatprep.subr.mxu0 0.0
    %6292 = vmatpush1.msra.mxu0 %v6191
    %6293 = vmatprep.subr.mxu0 0.0
    %6294 = vmatpush1.msra.mxu0 %v6190
    %6295 = vmatprep.subr.mxu0 0.0
    %6296 = vmatpush1.msra.mxu0 %v6189
    %6297 = vmatprep.subr.mxu0 0.0
    %6298 = vmatpush1.msra.mxu0 %v6188
    %6299 = vmatprep.subr.mxu0 0.0
    %6300 = vmatpush1.msra.mxu0 %v6187
    %6301 = vmatprep.subr.mxu0 0.0
    %6302 = vmatpush1.msra.mxu0 %v6186
    %6303 = vmatprep.subr.mxu0 0.0
    %6304 = vmatpush1.msra.mxu0 %v6185
    %6305 = vmatprep.subr.mxu0 0.0
    %6306 = vmatpush1.msra.mxu0 %v6184
    %6307 = vmatprep.subr.mxu0 0.0
    %6308 = vmatpush1.msra.mxu0 %v6183
    %6309 = vmatprep.subr.mxu0 0.0
    %6310 = vmatpush1.msra.mxu0 %v6182
    %6311 = vmatprep.subr.mxu0 0.0
    %6312 = vmatpush1.msra.mxu0 %v6181
    %6313 = vmatprep.subr.mxu0 0.0
    %6314 = vmatpush1.msra.mxu0 %v6180
    %6315 = vmatprep.subr.mxu0 0.0
    %6316 = vmatpush1.msra.mxu0 %v6179
    %6317 = vmatprep.subr.mxu0 0.0
    %6318 = vmatpush2.msra.mxu0 0.0
    %6319 = vmatprep.subr.mxu0 0.0
    %6320 = vmatpush2.msra.mxu0 0.0
    %6321 = vmatprep.subr.mxu0 0.0
    %6322 = vmatpush2.msra.mxu0 0.0
    %6323 = vmatprep.subr.mxu0 0.0
    %6324 = vmatpush2.msra.mxu0 0.0
    %6325 = vmatprep.subr.mxu0 0.0
    %6326 = vmatpush2.msra.mxu0 0.0
    %6327 = vmatprep.subr.mxu0 0.0
    %6328 = vmatpush2.msra.mxu0 0.0
    %6329 = vmatprep.subr.mxu0 0.0
    %6330 = vmatpush2.msra.mxu0 0.0
    %6331 = vmatprep.subr.mxu0 0.0
    %6332 = vmatpush2.msra.mxu0 0.0
    %6333 = vmatprep.subr.mxu0 0.0
    %6334 = vmatpush2.msra.mxu0 0.0
    %6335 = vmatprep.subr.mxu0 0.0
    %6336 = vmatpush2.msra.mxu0 0.0
    %6337 = vmatprep.subr.mxu0 0.0
    %6338 = vmatpush2.msra.mxu0 0.0
    %6339 = vmatprep.subr.mxu0 0.0
    %6340 = vmatpush2.msra.mxu0 0.0
    %6341 = vmatprep.subr.mxu0 0.0
    %6342 = vmatpush2.msra.mxu0 0.0
    %6343 = vmatprep.subr.mxu0 0.0
    %6344 = vmatpush2.msra.mxu0 0.0
    %6345 = vmatprep.subr.mxu0 0.0
    %6346 = vmatpush2.msra.mxu0 0.0
    %6347 = vmatprep.subr.mxu0 0.0
    %6348 = vmatpush2.msra.mxu0 0.0
    %6349 = vmatprep.mubr.f32.mxu0 0.0
    %6350 = vmatmul.mubr.f32.gmra.mxu0 %v6178
    %v6351 = vpop.f32.mrf.mxu0
    %v6352 = vadd.f32 %v6282, %v6351
    %v6353 = vpop.f32.mrf.mxu0
    %6354 = vdwg.mxu0
    %v6355 = vld [vmem:[#allocation14] sm:$0x1]
    %v6357 = vlaneseq
    %v6358 = vshrl.u32 %v6357, 7
    %v6359 = vsub.s32 0, %v6358
    %v6360 = vrot.slane %v6355, %v6359
    %v6362 = vadd.f32 %v6352, %v6360
    %v6363 = vmax.f32 %v6362, 0.0
    %v6364 = vld [vmem:[#allocation16] sm:$0xff]
    %v6365 = vld [vmem:[#allocation16 + $0x8] sm:$0xff]
    %v6366 = vld [vmem:[#allocation16 + $0x10] sm:$0xff]
    %v6367 = vld [vmem:[#allocation16 + $0x18] sm:$0xff]
    %v6368 = vld [vmem:[#allocation16 + $0x20] sm:$0xff]
    %v6369 = vld [vmem:[#allocation16 + $0x28] sm:$0xff]
    %v6370 = vld [vmem:[#allocation16 + $0x30] sm:$0xff]
    %v6371 = vld [vmem:[#allocation16 + $0x38] sm:$0xff]
    %v6372 = vld [vmem:[#allocation16 + $0x40] sm:$0xff]
    %v6373 = vld [vmem:[#allocation16 + $0x48] sm:$0xff]
    %v6374 = vld [vmem:[#allocation16 + $0x50] sm:$0xff]
    %v6375 = vld [vmem:[#allocation16 + $0x58] sm:$0xff]
    %v6376 = vld [vmem:[#allocation16 + $0x60] sm:$0xff]
    %v6377 = vld [vmem:[#allocation16 + $0x68] sm:$0xff]
    %v6378 = vld [vmem:[#allocation16 + $0x70] sm:$0xff]
    %v6379 = vld [vmem:[#allocation16 + $0x78] sm:$0xff]
    %v6380 = vld [vmem:[#allocation17] sm:$0x1]
    %v6382 = vlaneseq
    %v6383 = vshrl.u32 %v6382, 7
    %v6384 = vsub.s32 0, %v6383
    %v6385 = vrot.slane %v6380, %v6384
    %6387 = vmatprep.subr.mxu0 0.0
    %6388 = vmatpush1.msra.mxu0 %v6379
    %6389 = vmatprep.subr.mxu0 0.0
    %6390 = vmatpush1.msra.mxu0 %v6378
    %6391 = vmatprep.subr.mxu0 0.0
    %6392 = vmatpush1.msra.mxu0 %v6377
    %6393 = vmatprep.subr.mxu0 0.0
    %6394 = vmatpush1.msra.mxu0 %v6376
    %6395 = vmatprep.subr.mxu0 0.0
    %6396 = vmatpush1.msra.mxu0 %v6375
    %6397 = vmatprep.subr.mxu0 0.0
    %6398 = vmatpush1.msra.mxu0 %v6374
    %6399 = vmatprep.subr.mxu0 0.0
    %6400 = vmatpush1.msra.mxu0 %v6373
    %6401 = vmatprep.subr.mxu0 0.0
    %6402 = vmatpush1.msra.mxu0 %v6372
    %6403 = vmatprep.subr.mxu0 0.0
    %6404 = vmatpush1.msra.mxu0 %v6371
    %6405 = vmatprep.subr.mxu0 0.0
    %6406 = vmatpush1.msra.mxu0 %v6370
    %6407 = vmatprep.subr.mxu0 0.0
    %6408 = vmatpush1.msra.mxu0 %v6369
    %6409 = vmatprep.subr.mxu0 0.0
    %6410 = vmatpush1.msra.mxu0 %v6368
    %6411 = vmatprep.subr.mxu0 0.0
    %6412 = vmatpush1.msra.mxu0 %v6367
    %6413 = vmatprep.subr.mxu0 0.0
    %6414 = vmatpush1.msra.mxu0 %v6366
    %6415 = vmatprep.subr.mxu0 0.0
    %6416 = vmatpush1.msra.mxu0 %v6365
    %6417 = vmatprep.subr.mxu0 0.0
    %6418 = vmatpush1.msra.mxu0 %v6364
    %6419 = vmatprep.subr.mxu0 0.0
    %6420 = vmatpush2.msra.mxu0 0.0
    %6421 = vmatprep.subr.mxu0 0.0
    %6422 = vmatpush2.msra.mxu0 0.0
    %6423 = vmatprep.subr.mxu0 0.0
    %6424 = vmatpush2.msra.mxu0 0.0
    %6425 = vmatprep.subr.mxu0 0.0
    %6426 = vmatpush2.msra.mxu0 0.0
    %6427 = vmatprep.subr.mxu0 0.0
    %6428 = vmatpush2.msra.mxu0 0.0
    %6429 = vmatprep.subr.mxu0 0.0
    %6430 = vmatpush2.msra.mxu0 0.0
    %6431 = vmatprep.subr.mxu0 0.0
    %6432 = vmatpush2.msra.mxu0 0.0
    %6433 = vmatprep.subr.mxu0 0.0
    %6434 = vmatpush2.msra.mxu0 0.0
    %6435 = vmatprep.subr.mxu0 0.0
    %6436 = vmatpush2.msra.mxu0 0.0
    %6437 = vmatprep.subr.mxu0 0.0
    %6438 = vmatpush2.msra.mxu0 0.0
    %6439 = vmatprep.subr.mxu0 0.0
    %6440 = vmatpush2.msra.mxu0 0.0
    %6441 = vmatprep.subr.mxu0 0.0
    %6442 = vmatpush2.msra.mxu0 0.0
    %6443 = vmatprep.subr.mxu0 0.0
    %6444 = vmatpush2.msra.mxu0 0.0
    %6445 = vmatprep.subr.mxu0 0.0
    %6446 = vmatpush2.msra.mxu0 0.0
    %6447 = vmatprep.subr.mxu0 0.0
    %6448 = vmatpush2.msra.mxu0 0.0
    %6449 = vmatprep.subr.mxu0 0.0
    %6450 = vmatpush2.msra.mxu0 0.0
    %6451 = vmatprep.mubr.f32.mxu0 0.0
    %6452 = vmatmul.mubr.f32.gmra.mxu0 %v6363
    %v6453 = vpop.f32.mrf.mxu0
    %v6454 = vadd.f32 %v6385, %v6453
    %v6455 = vpop.f32.mrf.mxu0
    %6456 = vdwg.mxu0
    %v6457 = vmax.f32 %v6454, 0.0
    %v6458 = vld [vmem:[#allocation19] sm:$0xff]
    %v6459 = vld [vmem:[#allocation19 + $0x8] sm:$0xff]
    %v6460 = vld [vmem:[#allocation19 + $0x10] sm:$0xff]
    %v6461 = vld [vmem:[#allocation19 + $0x18] sm:$0xff]
    %v6462 = vld [vmem:[#allocation19 + $0x20] sm:$0xff]
    %v6463 = vld [vmem:[#allocation19 + $0x28] sm:$0xff]
    %v6464 = vld [vmem:[#allocation19 + $0x30] sm:$0xff]
    %v6465 = vld [vmem:[#allocation19 + $0x38] sm:$0xff]
    %v6466 = vld [vmem:[#allocation19 + $0x40] sm:$0xff]
    %v6467 = vld [vmem:[#allocation19 + $0x48] sm:$0xff]
    %v6468 = vld [vmem:[#allocation19 + $0x50] sm:$0xff]
    %v6469 = vld [vmem:[#allocation19 + $0x58] sm:$0xff]
    %v6470 = vld [vmem:[#allocation19 + $0x60] sm:$0xff]
    %v6471 = vld [vmem:[#allocation19 + $0x68] sm:$0xff]
    %v6472 = vld [vmem:[#allocation19 + $0x70] sm:$0xff]
    %v6473 = vld [vmem:[#allocation19 + $0x78] sm:$0xff]
    %v6474 = vld [vmem:[#allocation20] sm:$0x1]
    %v6476 = vlaneseq
    %v6477 = vshrl.u32 %v6476, 7
    %v6478 = vsub.s32 0, %v6477
    %v6479 = vrot.slane %v6474, %v6478
    %6481 = vmatprep.subr.mxu0 0.0
    %6482 = vmatpush1.msra.mxu0 %v6473
    %6483 = vmatprep.subr.mxu0 0.0
    %6484 = vmatpush1.msra.mxu0 %v6472
    %6485 = vmatprep.subr.mxu0 0.0
    %6486 = vmatpush1.msra.mxu0 %v6471
    %6487 = vmatprep.subr.mxu0 0.0
    %6488 = vmatpush1.msra.mxu0 %v6470
    %6489 = vmatprep.subr.mxu0 0.0
    %6490 = vmatpush1.msra.mxu0 %v6469
    %6491 = vmatprep.subr.mxu0 0.0
    %6492 = vmatpush1.msra.mxu0 %v6468
    %6493 = vmatprep.subr.mxu0 0.0
    %6494 = vmatpush1.msra.mxu0 %v6467
    %6495 = vmatprep.subr.mxu0 0.0
    %6496 = vmatpush1.msra.mxu0 %v6466
    %6497 = vmatprep.subr.mxu0 0.0
    %6498 = vmatpush1.msra.mxu0 %v6465
    %6499 = vmatprep.subr.mxu0 0.0
    %6500 = vmatpush1.msra.mxu0 %v6464
    %6501 = vmatprep.subr.mxu0 0.0
    %6502 = vmatpush1.msra.mxu0 %v6463
    %6503 = vmatprep.subr.mxu0 0.0
    %6504 = vmatpush1.msra.mxu0 %v6462
    %6505 = vmatprep.subr.mxu0 0.0
    %6506 = vmatpush1.msra.mxu0 %v6461
    %6507 = vmatprep.subr.mxu0 0.0
    %6508 = vmatpush1.msra.mxu0 %v6460
    %6509 = vmatprep.subr.mxu0 0.0
    %6510 = vmatpush1.msra.mxu0 %v6459
    %6511 = vmatprep.subr.mxu0 0.0
    %6512 = vmatpush1.msra.mxu0 %v6458
    %6513 = vmatprep.subr.mxu0 0.0
    %6514 = vmatpush2.msra.mxu0 0.0
    %6515 = vmatprep.subr.mxu0 0.0
    %6516 = vmatpush2.msra.mxu0 0.0
    %6517 = vmatprep.subr.mxu0 0.0
    %6518 = vmatpush2.msra.mxu0 0.0
    %6519 = vmatprep.subr.mxu0 0.0
    %6520 = vmatpush2.msra.mxu0 0.0
    %6521 = vmatprep.subr.mxu0 0.0
    %6522 = vmatpush2.msra.mxu0 0.0
    %6523 = vmatprep.subr.mxu0 0.0
    %6524 = vmatpush2.msra.mxu0 0.0
    %6525 = vmatprep.subr.mxu0 0.0
    %6526 = vmatpush2.msra.mxu0 0.0
    %6527 = vmatprep.subr.mxu0 0.0
    %6528 = vmatpush2.msra.mxu0 0.0
    %6529 = vmatprep.subr.mxu0 0.0
    %6530 = vmatpush2.msra.mxu0 0.0
    %6531 = vmatprep.subr.mxu0 0.0
    %6532 = vmatpush2.msra.mxu0 0.0
    %6533 = vmatprep.subr.mxu0 0.0
    %6534 = vmatpush2.msra.mxu0 0.0
    %6535 = vmatprep.subr.mxu0 0.0
    %6536 = vmatpush2.msra.mxu0 0.0
    %6537 = vmatprep.subr.mxu0 0.0
    %6538 = vmatpush2.msra.mxu0 0.0
    %6539 = vmatprep.subr.mxu0 0.0
    %6540 = vmatpush2.msra.mxu0 0.0
    %6541 = vmatprep.subr.mxu0 0.0
    %6542 = vmatpush2.msra.mxu0 0.0
    %6543 = vmatprep.subr.mxu0 0.0
    %6544 = vmatpush2.msra.mxu0 0.0
    %6545 = vmatprep.mubr.f32.mxu0 0.0
    %6546 = vmatmul.mubr.f32.gmra.mxu0 %v6457
    %v6547 = vpop.f32.mrf.mxu0
    %v6548 = vadd.f32 %v6479, %v6547
    %v6549 = vpop.f32.mrf.mxu0
    %6550 = vdwg.mxu0
    %v6551 = vmax.f32 %v6548, 0.0
    %v6552 = vld [vmem:[#allocation22] sm:$0xff]
    %v6553 = vld [vmem:[#allocation22 + $0x8] sm:$0xff]
    %v6554 = vld [vmem:[#allocation22 + $0x10] sm:$0xff]
    %v6555 = vld [vmem:[#allocation22 + $0x18] sm:$0xff]
    %v6556 = vld [vmem:[#allocation22 + $0x20] sm:$0xff]
    %v6557 = vld [vmem:[#allocation22 + $0x28] sm:$0xff]
    %v6558 = vld [vmem:[#allocation22 + $0x30] sm:$0xff]
    %v6559 = vld [vmem:[#allocation22 + $0x38] sm:$0xff]
    %v6560 = vld [vmem:[#allocation22 + $0x40] sm:$0xff]
    %v6561 = vld [vmem:[#allocation22 + $0x48] sm:$0xff]
    %v6562 = vld [vmem:[#allocation22 + $0x50] sm:$0xff]
    %v6563 = vld [vmem:[#allocation22 + $0x58] sm:$0xff]
    %v6564 = vld [vmem:[#allocation22 + $0x60] sm:$0xff]
    %v6565 = vld [vmem:[#allocation22 + $0x68] sm:$0xff]
    %v6566 = vld [vmem:[#allocation22 + $0x70] sm:$0xff]
    %v6567 = vld [vmem:[#allocation22 + $0x78] sm:$0xff]
    %v6568 = vld [vmem:[#allocation23] sm:$0x1]
    %v6570 = vlaneseq
    %v6571 = vshrl.u32 %v6570, 7
    %v6572 = vsub.s32 0, %v6571
    %v6573 = vrot.slane %v6568, %v6572
    %6575 = vmatprep.subr.mxu0 0.0
    %6576 = vmatpush1.msra.mxu0 %v6567
    %6577 = vmatprep.subr.mxu0 0.0
    %6578 = vmatpush1.msra.mxu0 %v6566
    %6579 = vmatprep.subr.mxu0 0.0
    %6580 = vmatpush1.msra.mxu0 %v6565
    %6581 = vmatprep.subr.mxu0 0.0
    %6582 = vmatpush1.msra.mxu0 %v6564
    %6583 = vmatprep.subr.mxu0 0.0
    %6584 = vmatpush1.msra.mxu0 %v6563
    %6585 = vmatprep.subr.mxu0 0.0
    %6586 = vmatpush1.msra.mxu0 %v6562
    %6587 = vmatprep.subr.mxu0 0.0
    %6588 = vmatpush1.msra.mxu0 %v6561
    %6589 = vmatprep.subr.mxu0 0.0
    %6590 = vmatpush1.msra.mxu0 %v6560
    %6591 = vmatprep.subr.mxu0 0.0
    %6592 = vmatpush1.msra.mxu0 %v6559
    %6593 = vmatprep.subr.mxu0 0.0
    %6594 = vmatpush1.msra.mxu0 %v6558
    %6595 = vmatprep.subr.mxu0 0.0
    %6596 = vmatpush1.msra.mxu0 %v6557
    %6597 = vmatprep.subr.mxu0 0.0
    %6598 = vmatpush1.msra.mxu0 %v6556
    %6599 = vmatprep.subr.mxu0 0.0
    %6600 = vmatpush1.msra.mxu0 %v6555
    %6601 = vmatprep.subr.mxu0 0.0
    %6602 = vmatpush1.msra.mxu0 %v6554
    %6603 = vmatprep.subr.mxu0 0.0
    %6604 = vmatpush1.msra.mxu0 %v6553
    %6605 = vmatprep.subr.mxu0 0.0
    %6606 = vmatpush1.msra.mxu0 %v6552
    %6607 = vmatprep.subr.mxu0 0.0
    %6608 = vmatpush2.msra.mxu0 0.0
    %6609 = vmatprep.subr.mxu0 0.0
    %6610 = vmatpush2.msra.mxu0 0.0
    %6611 = vmatprep.subr.mxu0 0.0
    %6612 = vmatpush2.msra.mxu0 0.0
    %6613 = vmatprep.subr.mxu0 0.0
    %6614 = vmatpush2.msra.mxu0 0.0
    %6615 = vmatprep.subr.mxu0 0.0
    %6616 = vmatpush2.msra.mxu0 0.0
    %6617 = vmatprep.subr.mxu0 0.0
    %6618 = vmatpush2.msra.mxu0 0.0
    %6619 = vmatprep.subr.mxu0 0.0
    %6620 = vmatpush2.msra.mxu0 0.0
    %6621 = vmatprep.subr.mxu0 0.0
    %6622 = vmatpush2.msra.mxu0 0.0
    %6623 = vmatprep.subr.mxu0 0.0
    %6624 = vmatpush2.msra.mxu0 0.0
    %6625 = vmatprep.subr.mxu0 0.0
    %6626 = vmatpush2.msra.mxu0 0.0
    %6627 = vmatprep.subr.mxu0 0.0
    %6628 = vmatpush2.msra.mxu0 0.0
    %6629 = vmatprep.subr.mxu0 0.0
    %6630 = vmatpush2.msra.mxu0 0.0
    %6631 = vmatprep.subr.mxu0 0.0
    %6632 = vmatpush2.msra.mxu0 0.0
    %6633 = vmatprep.subr.mxu0 0.0
    %6634 = vmatpush2.msra.mxu0 0.0
    %6635 = vmatprep.subr.mxu0 0.0
    %6636 = vmatpush2.msra.mxu0 0.0
    %6637 = vmatprep.subr.mxu0 0.0
    %6638 = vmatpush2.msra.mxu0 0.0
    %6639 = vmatprep.mubr.f32.mxu0 0.0
    %6640 = vmatmul.mubr.f32.gmra.mxu0 %v6551
    %v6641 = vpop.f32.mrf.mxu0
    %v6642 = vadd.f32 %v6573, %v6641
    %v6643 = vpop.f32.mrf.mxu0
    %6644 = vdwg.mxu0
    %6645 = vst [vmem:[#allocation25] sm:$0x3] %v6642
    // Predicated region
    $region118: #{tpu_custom_call.1} parent=1 // pred_check
      _
    $region119: #{tpu_custom_call.1} parent=1 // pred_check_branch
      %6647 = sbr.rel (0) target = $region121
    $region120: #{tpu_custom_call.1} parent=1 // pred_region
      %s6649 = ssub.s32 32, 32
      %6650 = vsyncadd [#allocation4], %s6649
      %s6652 = sshll.u32 [#allocation25], 4
      %s6653 = int_to_ptr.vmem [resolvable:$true] %s6652
      %6655 = dma.vmem_to_hbm [thread:$0]  %s6653, 32, %s15, [#allocation4]
    $region121: #{tpu_custom_call.1} parent=1 // pred_fallthru
      _
    // Predicated region
    $region122: #{tpu_custom_call.1} parent=1 // pred_check
      _
    $region123: #{tpu_custom_call.1} parent=1 // pred_check_branch
      %6657 = sbr.rel (0) target = $region125
    $region124: #{tpu_custom_call.1} parent=1 // pred_region
      %6658 = dma.done [#allocation4], 32
    $region125: #{tpu_custom_call.1} parent=1 // pred_fallthru
      _
    %6659 = vsyncpa [#allocation3], 1
    %6660 = vsyncpa [#allocation6], 1
    %6661 = vsyncpa [#allocation9], 1
    %6662 = vsyncpa [#allocation12], 1
    %6663 = vsyncpa [#allocation15], 1
    %6664 = vsyncpa [#allocation18], 1
    %6665 = vsyncpa [#allocation21], 1
    %6666 = vsyncpa [#allocation24], 1
    %6667 = vsyncpa [#allocation4], 1

</llo_original>
